<compile_context>
chip_gen: v7x
topology: tpu7x:2x2x1
jax: 0.10.0
libtpu: 0.0.40
codegen_flags: <defaults>
</compile_context>

<pallas_src>
import jax
import jax.numpy as jnp
from jax.experimental import pallas as pl
from jax.experimental.pallas import tpu as pltpu


# ----------------------------------------------------------------------------
# Static geometry (28x28x3 input; the classic LeNet sizes implied by fc6(120)).
# ----------------------------------------------------------------------------
KS = 5                          # conv kernel size
IC1, OC1 = 3, 6                 # conv1 in/out channels
OC2, OC3 = 16, 120              # conv2 / conv3 out channels
HP1 = WP1 = 32                  # conv1 padded grid side (28 + 2*pad)
G1 = HP1 * WP1                  # conv1 flat-grid rows per image (1024)
XROWS = G1 + (KS - 1) * WP1     # widened conv1 input rows per image (1152)
P1 = 14                         # pool1 grid side
G2 = P1 * P1                    # conv2 flat-grid rows per image (196)
PW1 = P1 + KS - 1               # pooled-row length needed for conv2 W-fold (18)
G2C = 200                       # conv2 rows computed (196 valid + 4 align pad)
M2 = 256 - G2                   # in2w margin rows for conv2 H-tap shifts (60)
P2 = 5                          # pool2 grid side


def _max4(a, b, c, d):
    return jnp.maximum(jnp.maximum(a, b), jnp.maximum(c, d))


# ----------------------------------------------------------------------------
# Fused per-image kernel
# ----------------------------------------------------------------------------
def _kernel(x_ref, w1, b1, w2, b2, w3, b3, w6, b6, w7, b7,
            o_ref, cv1, in2w, cv2):
    f32, bf16 = jnp.float32, jnp.bfloat16

    # ---- conv1 + ReLU: 5 H-tap matmuls, W taps pre-folded into K (K=15) ----
    acc = None
    for di in range(KS):
        d = jnp.dot(x_ref[0, pl.ds(di * WP1, G1), :], w1[di],
                    preferred_element_type=f32)
        acc = d if acc is None else acc + d
    cv1[...] = jnp.maximum(acc + b1[...], 0.0)                 # (1024, 6) f32

    # ---- pool1 (2x2/2) + gather + W-fold into conv2's input grid ----------
    # Row p of the pooled 14x14 grid: 4 strided (stride-2) reads of cv1, one
    # 4-way max, widened to 30 lanes (5 W taps x 6 ch), cast to bf16 ONCE.
    for p in range(P1):
        base = 2 * p * WP1
        pool = _max4(cv1[pl.ds(base, PW1, stride=2), :],
                     cv1[pl.ds(base + 1, PW1, stride=2), :],
                     cv1[pl.ds(base + WP1, PW1, stride=2), :],
                     cv1[pl.ds(base + WP1 + 1, PW1, stride=2), :])  # (18, 6)
        wide = jnp.concatenate([pool[dj:dj + P1, :] for dj in range(KS)],
                               axis=1)                              # (14, 30)
        in2w[pl.ds(p * P1, P1), :] = wide.astype(bf16)
    # Keep the H-tap shift margin finite (feeds only never-consumed rows).
    in2w[pl.ds(G2, M2), :] = jnp.zeros((M2, KS * OC1), bf16)

    # ---- conv2 + ReLU: 5 H-tap matmuls, K=30 -------------------------------
    acc = None
    for di in range(KS):
        d = jnp.dot(in2w[pl.ds(di * P1, G2C), :], w2[di],
                    preferred_element_type=f32)
        acc = d if acc is None else acc + d
    cv2[...] = jnp.maximum(acc + b2[...], 0.0)                 # (200, 16) f32

    # ---- pool2 + conv3 + ReLU ----------------------------------------------
    # Only one conv3 output pixel per image: each pooled row p contributes a
    # single 80-lane (5 W taps x 16 ch) operand -> 5 matmuls with K=80.
    acc3 = None
    for p in range(P2):
        base = 2 * p * P1
        pool = _max4(cv2[pl.ds(base, P2, stride=2), :],
                     cv2[pl.ds(base + 1, P2, stride=2), :],
                     cv2[pl.ds(base + P1, P2, stride=2), :],
                     cv2[pl.ds(base + P1 + 1, P2, stride=2), :])    # (5, 16)
        row = jnp.concatenate([pool[q:q + 1, :] for q in range(P2)],
                              axis=1)                               # (1, 80)
        d = jnp.dot(row.astype(bf16), w3[p], preferred_element_type=f32)
        acc3 = d if acc3 is None else acc3 + d
    z = jnp.maximum(acc3 + b3[...], 0.0)                        # (1, 120) f32

    # ---- flatten(120) -> fc6 + ReLU -> fc7 (lane-padded to 128) ------------
    h = jnp.maximum(
        jnp.dot(z.astype(bf16), w6[...], preferred_element_type=f32) + b6[...],
        0.0)
    out = jnp.dot(h.astype(bf16), w7[...], preferred_element_type=f32) + b7[...]
    # Lane-dense aligned (8, 128) store; wrapper slices row 0, lanes < 10.
    o_ref[0] = jnp.broadcast_to(out, (8, 128)).astype(o_ref.dtype)


# ----------------------------------------------------------------------------
# Parameter init (PyTorch-style, deterministic) and one-time, batch-INDEPENDENT
# layout prep (tap-folded bf16 conv weights, pre-transposed / lane-padded FCs).
# ----------------------------------------------------------------------------
def init_params(key):
    ks = jax.random.split(key, 10)

    def unif(k, shape, fan_in):
        bound = 1.0 / jnp.sqrt(fan_in)
        return jax.random.uniform(k, shape, jnp.float32, -bound, bound)

    return {
        "c1_w": unif(ks[0], (6, 3, 5, 5), 3 * 5 * 5),
        "c1_b": unif(ks[1], (6,), 3 * 5 * 5),
        "c2_w": unif(ks[2], (16, 6, 5, 5), 6 * 5 * 5),
        "c2_b": unif(ks[3], (16,), 6 * 5 * 5),
        "c3_w": unif(ks[4], (120, 16, 5, 5), 16 * 5 * 5),
        "c3_b": unif(ks[5], (120,), 16 * 5 * 5),
        "fc6_w": unif(ks[6], (84, 120), 120),
        "fc6_b": unif(ks[7], (84,), 120),
        "fc7_w": unif(ks[8], (10, 84), 84),
        "fc7_b": unif(ks[9], (10,), 84),
    }


def prepare_params(params):
    bf16 = jnp.bfloat16

    def conv_folded(w):            # (OC, IC, KH, KW) -> (KH, KW*IC, OC) bf16
        oc, ic, kh, kw = w.shape
        t = jnp.transpose(jnp.asarray(w, jnp.float32), (2, 3, 1, 0))
        return t.reshape(kh, kw * ic, oc).astype(bf16)

    def row(b):
        return jnp.asarray(b, jnp.float32).reshape(1, -1)

    w7 = jnp.asarray(params["fc7_w"], jnp.float32).T            # (84, 10)
    b7 = jnp.asarray(params["fc7_b"], jnp.float32)

    return {
        "w1": conv_folded(params["c1_w"]),                      # (5, 15, 6)
        "b1": row(params["c1_b"]),
        "w2": conv_folded(params["c2_w"]),                      # (5, 30, 16)
        "b2": row(params["c2_b"]),
        "w3": conv_folded(params["c3_w"]),                      # (5, 80, 120)
        "b3": row(params["c3_b"]),
        "w6": jnp.asarray(params["fc6_w"], jnp.float32).T.astype(bf16),
        "b6": row(params["fc6_b"]),
        "w7": jnp.pad(w7, ((0, 0), (0, 128 - w7.shape[1]))).astype(bf16),
        "b7": jnp.pad(b7, (0, 128 - b7.shape[0])).reshape(1, -1),
    }


def _const_spec(a):
    nd = a.ndim
    return pl.BlockSpec(a.shape, lambda i, _nd=nd: (0,) * _nd)


# ----------------------------------------------------------------------------
# Forward pass: tiny wrapper glue on the input + ONE gridded pallas_call
# ----------------------------------------------------------------------------
@jax.jit
def lenet_forward(x, kp):
    n = x.shape[0]

    # NCHW -> per-image flat channels-last conv1 grid (with conv1's spatial
    # padding); fold the 5 W-direction conv1 taps into the lane/K dimension.
    xt = jnp.transpose(x, (0, 2, 3, 1)).astype(jnp.float32)         # (N,28,28,3)
    xp = jnp.pad(xt, ((0, 0), (2, 2), (2, 2), (0, 0)))              # (N,32,32,3)
    xf = xp.reshape(n, G1, IC1)
    xf = jnp.pad(xf, ((0, 0), (0, XROWS + KS - 1 - G1), (0, 0)))    # (N,1156,3)
    x1w = jnp.concatenate([xf[:, dj:dj + XROWS, :] for dj in range(KS)],
                          axis=-1).astype(jnp.bfloat16)             # (N,1152,15)

    weights = (kp["w1"], kp["b1"], kp["w2"], kp["b2"], kp["w3"], kp["b3"],
               kp["w6"], kp["b6"], kp["w7"], kp["b7"])

    out = pl.pallas_call(
        _kernel,
        grid=(n,),
        out_shape=jax.ShapeDtypeStruct((n, 8, 128), jnp.float32),
        in_specs=[pl.BlockSpec((1, XROWS, KS * IC1), lambda i: (i, 0, 0))]
                 + [_const_spec(w) for w in weights],
        out_specs=pl.BlockSpec((1, 8, 128), lambda i: (i, 0, 0)),
        scratch_shapes=[
            pltpu.VMEM((G1, OC1), jnp.float32),             # conv1 out (pool1 src)
            pltpu.VMEM((G2 + M2, KS * OC1), jnp.bfloat16),  # conv2 widened input
            pltpu.VMEM((G2C, OC2), jnp.float32),            # conv2 out (pool2 src)
        ],
        compiler_params=pltpu.CompilerParams(
            dimension_semantics=("parallel",),
            vmem_limit_bytes=16 * 1024 * 1024),
    )(x1w, *weights)

    return out[:, 0, :10]


# ----------------------------------------------------------------------------
# Pure-JAX reference (f32) for a sanity check
# ----------------------------------------------------------------------------
def lenet_reference(x, params):
    def conv(x, w, b, pad):
        out = jax.lax.conv_general_dilated(
            x, w, window_strides=(1, 1), padding=((pad, pad), (pad, pad)),
            dimension_numbers=("NCHW", "OIHW", "NCHW"))
        return jax.nn.relu(out + b[None, :, None, None])

    def pool(x):
        return jax.lax.reduce_window(x, -jnp.inf, jax.lax.max,
                                     (1, 1, 2, 2), (1, 1, 2, 2), "VALID")

    out = conv(x, params["c1_w"], params["c1_b"], 2)
    out = pool(out)
    out = conv(out, params["c2_w"], params["c2_b"], 0)
    out = pool(out)
    out = conv(out, params["c3_w"], params["c3_b"], 0)
    out = out.reshape(out.shape[0], -1)
    out = jax.nn.relu(out @ params["fc6_w"].T + params["fc6_b"])
    return out @ params["fc7_w"].T + params["fc7_b"]


if __name__ == "__main__":
    key = jax.random.PRNGKey(0)
    kx, kparam = jax.random.split(key)
    # Classic LeNet geometry: 28x28 input so features collapse to (N,120,1,1).
    x = jax.random.normal(kx, (2, 3, 28, 28), dtype=jnp.float32)
    params = init_params(kparam)
    kparams = prepare_params(params)

    out = lenet_forward(x, kparams)
    out = jax.block_until_ready(out)
    assert out.shape == (2, 10), out.shape

    ref = lenet_reference(x, params)
    err = float(jnp.max(jnp.abs(out - ref)))
    assert err < 5e-2, f"max |pallas - reference| = {err}"
    print("KERNEL_OK")
</pallas_src>

<mosaic_0001>
module attributes {stable_mosaic.version = 11 : i64} {
  func.func @_kernel(%arg0: i32, %arg1: memref<1x1152x15xbf16, #tpu.memory_space<vmem>>, %arg2: memref<5x15x6xbf16, #tpu.memory_space<vmem>>, %arg3: memref<1x6xf32, #tpu.memory_space<vmem>>, %arg4: memref<5x30x16xbf16, #tpu.memory_space<vmem>>, %arg5: memref<1x16xf32, #tpu.memory_space<vmem>>, %arg6: memref<5x80x120xbf16, #tpu.memory_space<vmem>>, %arg7: memref<1x120xf32, #tpu.memory_space<vmem>>, %arg8: memref<120x84xbf16, #tpu.memory_space<vmem>>, %arg9: memref<1x84xf32, #tpu.memory_space<vmem>>, %arg10: memref<84x128xbf16, #tpu.memory_space<vmem>>, %arg11: memref<1x128xf32, #tpu.memory_space<vmem>>, %arg12: memref<1x8x128xf32, #tpu.memory_space<vmem>>, %arg13: memref<1024x6xf32, #tpu.memory_space<vmem>>, %arg14: memref<256x30xbf16, #tpu.memory_space<vmem>>, %arg15: memref<200x16xf32, #tpu.memory_space<vmem>>) attributes {dimension_semantics = [#tpu.dimension_semantics<parallel>], iteration_bounds = array<i64: 2>, scalar_prefetch = 0 : i64, scratch_operands = 3 : i64, tpu.core_type = #tpu.core_type<tc>, window_params = [{transform_indices = @transform_0, window_bounds = array<i64: 1, 1152, 15>}, {pipeline_mode = #tpu.pipeline_mode<synchronous>, transform_indices = @transform_1, window_bounds = array<i64: 5, 15, 6>}, {pipeline_mode = #tpu.pipeline_mode<synchronous>, transform_indices = @transform_2, window_bounds = array<i64: 1, 6>}, {pipeline_mode = #tpu.pipeline_mode<synchronous>, transform_indices = @transform_3, window_bounds = array<i64: 5, 30, 16>}, {pipeline_mode = #tpu.pipeline_mode<synchronous>, transform_indices = @transform_4, window_bounds = array<i64: 1, 16>}, {pipeline_mode = #tpu.pipeline_mode<synchronous>, transform_indices = @transform_5, window_bounds = array<i64: 5, 80, 120>}, {pipeline_mode = #tpu.pipeline_mode<synchronous>, transform_indices = @transform_6, window_bounds = array<i64: 1, 120>}, {pipeline_mode = #tpu.pipeline_mode<synchronous>, transform_indices = @transform_7, window_bounds = array<i64: 120, 84>}, {pipeline_mode = #tpu.pipeline_mode<synchronous>, transform_indices = @transform_8, window_bounds = array<i64: 1, 84>}, {pipeline_mode = #tpu.pipeline_mode<synchronous>, transform_indices = @transform_9, window_bounds = array<i64: 84, 128>}, {pipeline_mode = #tpu.pipeline_mode<synchronous>, transform_indices = @transform_10, window_bounds = array<i64: 1, 128>}, {transform_indices = @transform_11, window_bounds = array<i64: 1, 8, 128>}]} {
    %c0 = arith.constant 0 : index
    %c0_0 = arith.constant 0 : index
    %c0_1 = arith.constant 0 : index
    %0 = vector.load %arg1[%c0, %c0_0, %c0_1] : memref<1x1152x15xbf16, #tpu.memory_space<vmem>>, vector<1x1024x15xbf16>
    %1 = vector.shape_cast %0 : vector<1x1024x15xbf16> to vector<1024x15xbf16>
    %c0_2 = arith.constant 0 : index
    %c0_3 = arith.constant 0 : index
    %c0_4 = arith.constant 0 : index
    %2 = vector.load %arg2[%c0_2, %c0_3, %c0_4] : memref<5x15x6xbf16, #tpu.memory_space<vmem>>, vector<1x15x6xbf16>
    %3 = vector.shape_cast %2 : vector<1x15x6xbf16> to vector<15x6xbf16>
    %cst = arith.constant dense<0.000000e+00> : vector<1024x6xf32>
    %4 = tpu.matmul %1, %3, %cst {dimension_numbers = #tpu.dot_dimension_numbers<[1], [0], [0], [1], [0, 0, 1, 1], [], []>} : vector<1024x15xbf16>, vector<15x6xbf16>, vector<1024x6xf32> -> vector<1024x6xf32>
    %c0_5 = arith.constant 0 : index
    %c32 = arith.constant 32 : index
    %c0_6 = arith.constant 0 : index
    %5 = vector.load %arg1[%c0_5, %c32, %c0_6] : memref<1x1152x15xbf16, #tpu.memory_space<vmem>>, vector<1x1024x15xbf16>
    %6 = vector.shape_cast %5 : vector<1x1024x15xbf16> to vector<1024x15xbf16>
    %c1 = arith.constant 1 : index
    %c0_7 = arith.constant 0 : index
    %c0_8 = arith.constant 0 : index
    %7 = vector.load %arg2[%c1, %c0_7, %c0_8] : memref<5x15x6xbf16, #tpu.memory_space<vmem>>, vector<1x15x6xbf16>
    %8 = vector.shape_cast %7 : vector<1x15x6xbf16> to vector<15x6xbf16>
    %cst_9 = arith.constant dense<0.000000e+00> : vector<1024x6xf32>
    %9 = tpu.matmul %6, %8, %cst_9 {dimension_numbers = #tpu.dot_dimension_numbers<[1], [0], [0], [1], [0, 0, 1, 1], [], []>} : vector<1024x15xbf16>, vector<15x6xbf16>, vector<1024x6xf32> -> vector<1024x6xf32>
    %10 = arith.addf %4, %9 : vector<1024x6xf32>
    %c0_10 = arith.constant 0 : index
    %c64 = arith.constant 64 : index
    %c0_11 = arith.constant 0 : index
    %11 = vector.load %arg1[%c0_10, %c64, %c0_11] : memref<1x1152x15xbf16, #tpu.memory_space<vmem>>, vector<1x1024x15xbf16>
    %12 = vector.shape_cast %11 : vector<1x1024x15xbf16> to vector<1024x15xbf16>
    %c2 = arith.constant 2 : index
    %c0_12 = arith.constant 0 : index
    %c0_13 = arith.constant 0 : index
    %13 = vector.load %arg2[%c2, %c0_12, %c0_13] : memref<5x15x6xbf16, #tpu.memory_space<vmem>>, vector<1x15x6xbf16>
    %14 = vector.shape_cast %13 : vector<1x15x6xbf16> to vector<15x6xbf16>
    %cst_14 = arith.constant dense<0.000000e+00> : vector<1024x6xf32>
    %15 = tpu.matmul %12, %14, %cst_14 {dimension_numbers = #tpu.dot_dimension_numbers<[1], [0], [0], [1], [0, 0, 1, 1], [], []>} : vector<1024x15xbf16>, vector<15x6xbf16>, vector<1024x6xf32> -> vector<1024x6xf32>
    %16 = arith.addf %10, %15 : vector<1024x6xf32>
    %c0_15 = arith.constant 0 : index
    %c96 = arith.constant 96 : index
    %c0_16 = arith.constant 0 : index
    %17 = vector.load %arg1[%c0_15, %c96, %c0_16] : memref<1x1152x15xbf16, #tpu.memory_space<vmem>>, vector<1x1024x15xbf16>
    %18 = vector.shape_cast %17 : vector<1x1024x15xbf16> to vector<1024x15xbf16>
    %c3 = arith.constant 3 : index
    %c0_17 = arith.constant 0 : index
    %c0_18 = arith.constant 0 : index
    %19 = vector.load %arg2[%c3, %c0_17, %c0_18] : memref<5x15x6xbf16, #tpu.memory_space<vmem>>, vector<1x15x6xbf16>
    %20 = vector.shape_cast %19 : vector<1x15x6xbf16> to vector<15x6xbf16>
    %cst_19 = arith.constant dense<0.000000e+00> : vector<1024x6xf32>
    %21 = tpu.matmul %18, %20, %cst_19 {dimension_numbers = #tpu.dot_dimension_numbers<[1], [0], [0], [1], [0, 0, 1, 1], [], []>} : vector<1024x15xbf16>, vector<15x6xbf16>, vector<1024x6xf32> -> vector<1024x6xf32>
    %22 = arith.addf %16, %21 : vector<1024x6xf32>
    %c0_20 = arith.constant 0 : index
    %c128 = arith.constant 128 : index
    %c0_21 = arith.constant 0 : index
    %23 = vector.load %arg1[%c0_20, %c128, %c0_21] : memref<1x1152x15xbf16, #tpu.memory_space<vmem>>, vector<1x1024x15xbf16>
    %24 = vector.shape_cast %23 : vector<1x1024x15xbf16> to vector<1024x15xbf16>
    %c4 = arith.constant 4 : index
    %c0_22 = arith.constant 0 : index
    %c0_23 = arith.constant 0 : index
    %25 = vector.load %arg2[%c4, %c0_22, %c0_23] : memref<5x15x6xbf16, #tpu.memory_space<vmem>>, vector<1x15x6xbf16>
    %26 = vector.shape_cast %25 : vector<1x15x6xbf16> to vector<15x6xbf16>
    %cst_24 = arith.constant dense<0.000000e+00> : vector<1024x6xf32>
    %27 = tpu.matmul %24, %26, %cst_24 {dimension_numbers = #tpu.dot_dimension_numbers<[1], [0], [0], [1], [0, 0, 1, 1], [], []>} : vector<1024x15xbf16>, vector<15x6xbf16>, vector<1024x6xf32> -> vector<1024x6xf32>
    %28 = arith.addf %22, %27 : vector<1024x6xf32>
    %c0_25 = arith.constant 0 : index
    %c0_26 = arith.constant 0 : index
    %29 = vector.load %arg3[%c0_25, %c0_26] : memref<1x6xf32, #tpu.memory_space<vmem>>, vector<1x6xf32>
    %30 = vector.broadcast %29 : vector<1x6xf32> to vector<1024x6xf32>
    %31 = arith.addf %28, %30 : vector<1024x6xf32>
    %cst_27 = arith.constant 0.000000e+00 : f32
    %32 = vector.broadcast %cst_27 : f32 to vector<1024x6xf32>
    %33 = arith.maximumf %31, %32 : vector<1024x6xf32>
    %c0_28 = arith.constant 0 : index
    %c0_29 = arith.constant 0 : index
    %34 = vector.load %arg13[%c0_28, %c0_29] : memref<1024x6xf32, #tpu.memory_space<vmem>>, vector<1024x6xf32>
    tpu.vector_store %arg13[%c0_28, %c0_29], %33 {strides = array<i32>} : memref<1024x6xf32, #tpu.memory_space<vmem>>, vector<1024x6xf32>,
    %c0_30 = arith.constant 0 : index
    %c0_31 = arith.constant 0 : index
    %35 = tpu.strided_load %arg13[%c0_30, %c0_31] {strides = array<i32: 2, 1>} : memref<1024x6xf32, #tpu.memory_space<vmem>>, vector<18x6xf32>
    %c1_32 = arith.constant 1 : index
    %c0_33 = arith.constant 0 : index
    %36 = tpu.strided_load %arg13[%c1_32, %c0_33] {strides = array<i32: 2, 1>} : memref<1024x6xf32, #tpu.memory_space<vmem>>, vector<18x6xf32>
    %c32_34 = arith.constant 32 : index
    %c0_35 = arith.constant 0 : index
    %37 = tpu.strided_load %arg13[%c32_34, %c0_35] {strides = array<i32: 2, 1>} : memref<1024x6xf32, #tpu.memory_space<vmem>>, vector<18x6xf32>
    %c33 = arith.constant 33 : index
    %c0_36 = arith.constant 0 : index
    %38 = tpu.strided_load %arg13[%c33, %c0_36] {strides = array<i32: 2, 1>} : memref<1024x6xf32, #tpu.memory_space<vmem>>, vector<18x6xf32>
    %39 = arith.maximumf %35, %36 : vector<18x6xf32>
    %40 = arith.maximumf %37, %38 : vector<18x6xf32>
    %41 = arith.maximumf %39, %40 : vector<18x6xf32>
    %42 = vector.extract_strided_slice %41 {offsets = [0, 0], sizes = [14, 6], strides = [1, 1]} : vector<18x6xf32> to vector<14x6xf32>
    %43 = vector.extract_strided_slice %41 {offsets = [1, 0], sizes = [14, 6], strides = [1, 1]} : vector<18x6xf32> to vector<14x6xf32>
    %44 = vector.extract_strided_slice %41 {offsets = [2, 0], sizes = [14, 6], strides = [1, 1]} : vector<18x6xf32> to vector<14x6xf32>
    %45 = vector.extract_strided_slice %41 {offsets = [3, 0], sizes = [14, 6], strides = [1, 1]} : vector<18x6xf32> to vector<14x6xf32>
    %46 = vector.extract_strided_slice %41 {offsets = [4, 0], sizes = [14, 6], strides = [1, 1]} : vector<18x6xf32> to vector<14x6xf32>
    %47 = tpu.concatenate %42, %43, %44, %45, %46 in 1 : vector<14x6xf32>, vector<14x6xf32>, vector<14x6xf32>, vector<14x6xf32>, vector<14x6xf32> -> vector<14x30xf32>
    %48 = arith.truncf %47 : vector<14x30xf32> to vector<14x30xbf16>
    %c0_37 = arith.constant 0 : index
    %c0_38 = arith.constant 0 : index
    %49 = vector.load %arg14[%c0_37, %c0_38] : memref<256x30xbf16, #tpu.memory_space<vmem>>, vector<14x30xbf16>
    tpu.vector_store %arg14[%c0_37, %c0_38], %48 {strides = array<i32>} : memref<256x30xbf16, #tpu.memory_space<vmem>>, vector<14x30xbf16>,
    %c64_39 = arith.constant 64 : index
    %c0_40 = arith.constant 0 : index
    %50 = tpu.strided_load %arg13[%c64_39, %c0_40] {strides = array<i32: 2, 1>} : memref<1024x6xf32, #tpu.memory_space<vmem>>, vector<18x6xf32>
    %c65 = arith.constant 65 : index
    %c0_41 = arith.constant 0 : index
    %51 = tpu.strided_load %arg13[%c65, %c0_41] {strides = array<i32: 2, 1>} : memref<1024x6xf32, #tpu.memory_space<vmem>>, vector<18x6xf32>
    %c96_42 = arith.constant 96 : index
    %c0_43 = arith.constant 0 : index
    %52 = tpu.strided_load %arg13[%c96_42, %c0_43] {strides = array<i32: 2, 1>} : memref<1024x6xf32, #tpu.memory_space<vmem>>, vector<18x6xf32>
    %c97 = arith.constant 97 : index
    %c0_44 = arith.constant 0 : index
    %53 = tpu.strided_load %arg13[%c97, %c0_44] {strides = array<i32: 2, 1>} : memref<1024x6xf32, #tpu.memory_space<vmem>>, vector<18x6xf32>
    %54 = arith.maximumf %50, %51 : vector<18x6xf32>
    %55 = arith.maximumf %52, %53 : vector<18x6xf32>
    %56 = arith.maximumf %54, %55 : vector<18x6xf32>
    %57 = vector.extract_strided_slice %56 {offsets = [0, 0], sizes = [14, 6], strides = [1, 1]} : vector<18x6xf32> to vector<14x6xf32>
    %58 = vector.extract_strided_slice %56 {offsets = [1, 0], sizes = [14, 6], strides = [1, 1]} : vector<18x6xf32> to vector<14x6xf32>
    %59 = vector.extract_strided_slice %56 {offsets = [2, 0], sizes = [14, 6], strides = [1, 1]} : vector<18x6xf32> to vector<14x6xf32>
    %60 = vector.extract_strided_slice %56 {offsets = [3, 0], sizes = [14, 6], strides = [1, 1]} : vector<18x6xf32> to vector<14x6xf32>
    %61 = vector.extract_strided_slice %56 {offsets = [4, 0], sizes = [14, 6], strides = [1, 1]} : vector<18x6xf32> to vector<14x6xf32>
    %62 = tpu.concatenate %57, %58, %59, %60, %61 in 1 : vector<14x6xf32>, vector<14x6xf32>, vector<14x6xf32>, vector<14x6xf32>, vector<14x6xf32> -> vector<14x30xf32>
    %63 = arith.truncf %62 : vector<14x30xf32> to vector<14x30xbf16>
    %c14 = arith.constant 14 : index
    %c0_45 = arith.constant 0 : index
    %64 = vector.load %arg14[%c14, %c0_45] : memref<256x30xbf16, #tpu.memory_space<vmem>>, vector<14x30xbf16>
    tpu.vector_store %arg14[%c14, %c0_45], %63 {strides = array<i32>} : memref<256x30xbf16, #tpu.memory_space<vmem>>, vector<14x30xbf16>,
    %c128_46 = arith.constant 128 : index
    %c0_47 = arith.constant 0 : index
    %65 = tpu.strided_load %arg13[%c128_46, %c0_47] {strides = array<i32: 2, 1>} : memref<1024x6xf32, #tpu.memory_space<vmem>>, vector<18x6xf32>
    %c129 = arith.constant 129 : index
    %c0_48 = arith.constant 0 : index
    %66 = tpu.strided_load %arg13[%c129, %c0_48] {strides = array<i32: 2, 1>} : memref<1024x6xf32, #tpu.memory_space<vmem>>, vector<18x6xf32>
    %c160 = arith.constant 160 : index
    %c0_49 = arith.constant 0 : index
    %67 = tpu.strided_load %arg13[%c160, %c0_49] {strides = array<i32: 2, 1>} : memref<1024x6xf32, #tpu.memory_space<vmem>>, vector<18x6xf32>
    %c161 = arith.constant 161 : index
    %c0_50 = arith.constant 0 : index
    %68 = tpu.strided_load %arg13[%c161, %c0_50] {strides = array<i32: 2, 1>} : memref<1024x6xf32, #tpu.memory_space<vmem>>, vector<18x6xf32>
    %69 = arith.maximumf %65, %66 : vector<18x6xf32>
    %70 = arith.maximumf %67, %68 : vector<18x6xf32>
    %71 = arith.maximumf %69, %70 : vector<18x6xf32>
    %72 = vector.extract_strided_slice %71 {offsets = [0, 0], sizes = [14, 6], strides = [1, 1]} : vector<18x6xf32> to vector<14x6xf32>
    %73 = vector.extract_strided_slice %71 {offsets = [1, 0], sizes = [14, 6], strides = [1, 1]} : vector<18x6xf32> to vector<14x6xf32>
    %74 = vector.extract_strided_slice %71 {offsets = [2, 0], sizes = [14, 6], strides = [1, 1]} : vector<18x6xf32> to vector<14x6xf32>
    %75 = vector.extract_strided_slice %71 {offsets = [3, 0], sizes = [14, 6], strides = [1, 1]} : vector<18x6xf32> to vector<14x6xf32>
    %76 = vector.extract_strided_slice %71 {offsets = [4, 0], sizes = [14, 6], strides = [1, 1]} : vector<18x6xf32> to vector<14x6xf32>
    %77 = tpu.concatenate %72, %73, %74, %75, %76 in 1 : vector<14x6xf32>, vector<14x6xf32>, vector<14x6xf32>, vector<14x6xf32>, vector<14x6xf32> -> vector<14x30xf32>
    %78 = arith.truncf %77 : vector<14x30xf32> to vector<14x30xbf16>
    %c28 = arith.constant 28 : index
    %c0_51 = arith.constant 0 : index
    %79 = vector.load %arg14[%c28, %c0_51] : memref<256x30xbf16, #tpu.memory_space<vmem>>, vector<14x30xbf16>
    tpu.vector_store %arg14[%c28, %c0_51], %78 {strides = array<i32>} : memref<256x30xbf16, #tpu.memory_space<vmem>>, vector<14x30xbf16>,
    %c192 = arith.constant 192 : index
    %c0_52 = arith.constant 0 : index
    %80 = tpu.strided_load %arg13[%c192, %c0_52] {strides = array<i32: 2, 1>} : memref<1024x6xf32, #tpu.memory_space<vmem>>, vector<18x6xf32>
    %c193 = arith.constant 193 : index
    %c0_53 = arith.constant 0 : index
    %81 = tpu.strided_load %arg13[%c193, %c0_53] {strides = array<i32: 2, 1>} : memref<1024x6xf32, #tpu.memory_space<vmem>>, vector<18x6xf32>
    %c224 = arith.constant 224 : index
    %c0_54 = arith.constant 0 : index
    %82 = tpu.strided_load %arg13[%c224, %c0_54] {strides = array<i32: 2, 1>} : memref<1024x6xf32, #tpu.memory_space<vmem>>, vector<18x6xf32>
    %c225 = arith.constant 225 : index
    %c0_55 = arith.constant 0 : index
    %83 = tpu.strided_load %arg13[%c225, %c0_55] {strides = array<i32: 2, 1>} : memref<1024x6xf32, #tpu.memory_space<vmem>>, vector<18x6xf32>
    %84 = arith.maximumf %80, %81 : vector<18x6xf32>
    %85 = arith.maximumf %82, %83 : vector<18x6xf32>
    %86 = arith.maximumf %84, %85 : vector<18x6xf32>
    %87 = vector.extract_strided_slice %86 {offsets = [0, 0], sizes = [14, 6], strides = [1, 1]} : vector<18x6xf32> to vector<14x6xf32>
    %88 = vector.extract_strided_slice %86 {offsets = [1, 0], sizes = [14, 6], strides = [1, 1]} : vector<18x6xf32> to vector<14x6xf32>
    %89 = vector.extract_strided_slice %86 {offsets = [2, 0], sizes = [14, 6], strides = [1, 1]} : vector<18x6xf32> to vector<14x6xf32>
    %90 = vector.extract_strided_slice %86 {offsets = [3, 0], sizes = [14, 6], strides = [1, 1]} : vector<18x6xf32> to vector<14x6xf32>
    %91 = vector.extract_strided_slice %86 {offsets = [4, 0], sizes = [14, 6], strides = [1, 1]} : vector<18x6xf32> to vector<14x6xf32>
    %92 = tpu.concatenate %87, %88, %89, %90, %91 in 1 : vector<14x6xf32>, vector<14x6xf32>, vector<14x6xf32>, vector<14x6xf32>, vector<14x6xf32> -> vector<14x30xf32>
    %93 = arith.truncf %92 : vector<14x30xf32> to vector<14x30xbf16>
    %c42 = arith.constant 42 : index
    %c0_56 = arith.constant 0 : index
    %94 = vector.load %arg14[%c42, %c0_56] : memref<256x30xbf16, #tpu.memory_space<vmem>>, vector<14x30xbf16>
    tpu.vector_store %arg14[%c42, %c0_56], %93 {strides = array<i32>} : memref<256x30xbf16, #tpu.memory_space<vmem>>, vector<14x30xbf16>,
    %c256 = arith.constant 256 : index
    %c0_57 = arith.constant 0 : index
    %95 = tpu.strided_load %arg13[%c256, %c0_57] {strides = array<i32: 2, 1>} : memref<1024x6xf32, #tpu.memory_space<vmem>>, vector<18x6xf32>
    %c257 = arith.constant 257 : index
    %c0_58 = arith.constant 0 : index
    %96 = tpu.strided_load %arg13[%c257, %c0_58] {strides = array<i32: 2, 1>} : memref<1024x6xf32, #tpu.memory_space<vmem>>, vector<18x6xf32>
    %c288 = arith.constant 288 : index
    %c0_59 = arith.constant 0 : index
    %97 = tpu.strided_load %arg13[%c288, %c0_59] {strides = array<i32: 2, 1>} : memref<1024x6xf32, #tpu.memory_space<vmem>>, vector<18x6xf32>
    %c289 = arith.constant 289 : index
    %c0_60 = arith.constant 0 : index
    %98 = tpu.strided_load %arg13[%c289, %c0_60] {strides = array<i32: 2, 1>} : memref<1024x6xf32, #tpu.memory_space<vmem>>, vector<18x6xf32>
    %99 = arith.maximumf %95, %96 : vector<18x6xf32>
    %100 = arith.maximumf %97, %98 : vector<18x6xf32>
    %101 = arith.maximumf %99, %100 : vector<18x6xf32>
    %102 = vector.extract_strided_slice %101 {offsets = [0, 0], sizes = [14, 6], strides = [1, 1]} : vector<18x6xf32> to vector<14x6xf32>
    %103 = vector.extract_strided_slice %101 {offsets = [1, 0], sizes = [14, 6], strides = [1, 1]} : vector<18x6xf32> to vector<14x6xf32>
    %104 = vector.extract_strided_slice %101 {offsets = [2, 0], sizes = [14, 6], strides = [1, 1]} : vector<18x6xf32> to vector<14x6xf32>
    %105 = vector.extract_strided_slice %101 {offsets = [3, 0], sizes = [14, 6], strides = [1, 1]} : vector<18x6xf32> to vector<14x6xf32>
    %106 = vector.extract_strided_slice %101 {offsets = [4, 0], sizes = [14, 6], strides = [1, 1]} : vector<18x6xf32> to vector<14x6xf32>
    %107 = tpu.concatenate %102, %103, %104, %105, %106 in 1 : vector<14x6xf32>, vector<14x6xf32>, vector<14x6xf32>, vector<14x6xf32>, vector<14x6xf32> -> vector<14x30xf32>
    %108 = arith.truncf %107 : vector<14x30xf32> to vector<14x30xbf16>
    %c56 = arith.constant 56 : index
    %c0_61 = arith.constant 0 : index
    %109 = vector.load %arg14[%c56, %c0_61] : memref<256x30xbf16, #tpu.memory_space<vmem>>, vector<14x30xbf16>
    tpu.vector_store %arg14[%c56, %c0_61], %108 {strides = array<i32>} : memref<256x30xbf16, #tpu.memory_space<vmem>>, vector<14x30xbf16>,
    %c320 = arith.constant 320 : index
    %c0_62 = arith.constant 0 : index
    %110 = tpu.strided_load %arg13[%c320, %c0_62] {strides = array<i32: 2, 1>} : memref<1024x6xf32, #tpu.memory_space<vmem>>, vector<18x6xf32>
    %c321 = arith.constant 321 : index
    %c0_63 = arith.constant 0 : index
    %111 = tpu.strided_load %arg13[%c321, %c0_63] {strides = array<i32: 2, 1>} : memref<1024x6xf32, #tpu.memory_space<vmem>>, vector<18x6xf32>
    %c352 = arith.constant 352 : index
    %c0_64 = arith.constant 0 : index
    %112 = tpu.strided_load %arg13[%c352, %c0_64] {strides = array<i32: 2, 1>} : memref<1024x6xf32, #tpu.memory_space<vmem>>, vector<18x6xf32>
    %c353 = arith.constant 353 : index
    %c0_65 = arith.constant 0 : index
    %113 = tpu.strided_load %arg13[%c353, %c0_65] {strides = array<i32: 2, 1>} : memref<1024x6xf32, #tpu.memory_space<vmem>>, vector<18x6xf32>
    %114 = arith.maximumf %110, %111 : vector<18x6xf32>
    %115 = arith.maximumf %112, %113 : vector<18x6xf32>
    %116 = arith.maximumf %114, %115 : vector<18x6xf32>
    %117 = vector.extract_strided_slice %116 {offsets = [0, 0], sizes = [14, 6], strides = [1, 1]} : vector<18x6xf32> to vector<14x6xf32>
    %118 = vector.extract_strided_slice %116 {offsets = [1, 0], sizes = [14, 6], strides = [1, 1]} : vector<18x6xf32> to vector<14x6xf32>
    %119 = vector.extract_strided_slice %116 {offsets = [2, 0], sizes = [14, 6], strides = [1, 1]} : vector<18x6xf32> to vector<14x6xf32>
    %120 = vector.extract_strided_slice %116 {offsets = [3, 0], sizes = [14, 6], strides = [1, 1]} : vector<18x6xf32> to vector<14x6xf32>
    %121 = vector.extract_strided_slice %116 {offsets = [4, 0], sizes = [14, 6], strides = [1, 1]} : vector<18x6xf32> to vector<14x6xf32>
    %122 = tpu.concatenate %117, %118, %119, %120, %121 in 1 : vector<14x6xf32>, vector<14x6xf32>, vector<14x6xf32>, vector<14x6xf32>, vector<14x6xf32> -> vector<14x30xf32>
    %123 = arith.truncf %122 : vector<14x30xf32> to vector<14x30xbf16>
    %c70 = arith.constant 70 : index
    %c0_66 = arith.constant 0 : index
    %124 = vector.load %arg14[%c70, %c0_66] : memref<256x30xbf16, #tpu.memory_space<vmem>>, vector<14x30xbf16>
    tpu.vector_store %arg14[%c70, %c0_66], %123 {strides = array<i32>} : memref<256x30xbf16, #tpu.memory_space<vmem>>, vector<14x30xbf16>,
    %c384 = arith.constant 384 : index
    %c0_67 = arith.constant 0 : index
    %125 = tpu.strided_load %arg13[%c384, %c0_67] {strides = array<i32: 2, 1>} : memref<1024x6xf32, #tpu.memory_space<vmem>>, vector<18x6xf32>
    %c385 = arith.constant 385 : index
    %c0_68 = arith.constant 0 : index
    %126 = tpu.strided_load %arg13[%c385, %c0_68] {strides = array<i32: 2, 1>} : memref<1024x6xf32, #tpu.memory_space<vmem>>, vector<18x6xf32>
    %c416 = arith.constant 416 : index
    %c0_69 = arith.constant 0 : index
    %127 = tpu.strided_load %arg13[%c416, %c0_69] {strides = array<i32: 2, 1>} : memref<1024x6xf32, #tpu.memory_space<vmem>>, vector<18x6xf32>
    %c417 = arith.constant 417 : index
    %c0_70 = arith.constant 0 : index
    %128 = tpu.strided_load %arg13[%c417, %c0_70] {strides = array<i32: 2, 1>} : memref<1024x6xf32, #tpu.memory_space<vmem>>, vector<18x6xf32>
    %129 = arith.maximumf %125, %126 : vector<18x6xf32>
    %130 = arith.maximumf %127, %128 : vector<18x6xf32>
    %131 = arith.maximumf %129, %130 : vector<18x6xf32>
    %132 = vector.extract_strided_slice %131 {offsets = [0, 0], sizes = [14, 6], strides = [1, 1]} : vector<18x6xf32> to vector<14x6xf32>
    %133 = vector.extract_strided_slice %131 {offsets = [1, 0], sizes = [14, 6], strides = [1, 1]} : vector<18x6xf32> to vector<14x6xf32>
    %134 = vector.extract_strided_slice %131 {offsets = [2, 0], sizes = [14, 6], strides = [1, 1]} : vector<18x6xf32> to vector<14x6xf32>
    %135 = vector.extract_strided_slice %131 {offsets = [3, 0], sizes = [14, 6], strides = [1, 1]} : vector<18x6xf32> to vector<14x6xf32>
    %136 = vector.extract_strided_slice %131 {offsets = [4, 0], sizes = [14, 6], strides = [1, 1]} : vector<18x6xf32> to vector<14x6xf32>
    %137 = tpu.concatenate %132, %133, %134, %135, %136 in 1 : vector<14x6xf32>, vector<14x6xf32>, vector<14x6xf32>, vector<14x6xf32>, vector<14x6xf32> -> vector<14x30xf32>
    %138 = arith.truncf %137 : vector<14x30xf32> to vector<14x30xbf16>
    %c84 = arith.constant 84 : index
    %c0_71 = arith.constant 0 : index
    %139 = vector.load %arg14[%c84, %c0_71] : memref<256x30xbf16, #tpu.memory_space<vmem>>, vector<14x30xbf16>
    tpu.vector_store %arg14[%c84, %c0_71], %138 {strides = array<i32>} : memref<256x30xbf16, #tpu.memory_space<vmem>>, vector<14x30xbf16>,
    %c448 = arith.constant 448 : index
    %c0_72 = arith.constant 0 : index
    %140 = tpu.strided_load %arg13[%c448, %c0_72] {strides = array<i32: 2, 1>} : memref<1024x6xf32, #tpu.memory_space<vmem>>, vector<18x6xf32>
    %c449 = arith.constant 449 : index
    %c0_73 = arith.constant 0 : index
    %141 = tpu.strided_load %arg13[%c449, %c0_73] {strides = array<i32: 2, 1>} : memref<1024x6xf32, #tpu.memory_space<vmem>>, vector<18x6xf32>
    %c480 = arith.constant 480 : index
    %c0_74 = arith.constant 0 : index
    %142 = tpu.strided_load %arg13[%c480, %c0_74] {strides = array<i32: 2, 1>} : memref<1024x6xf32, #tpu.memory_space<vmem>>, vector<18x6xf32>
    %c481 = arith.constant 481 : index
    %c0_75 = arith.constant 0 : index
    %143 = tpu.strided_load %arg13[%c481, %c0_75] {strides = array<i32: 2, 1>} : memref<1024x6xf32, #tpu.memory_space<vmem>>, vector<18x6xf32>
    %144 = arith.maximumf %140, %141 : vector<18x6xf32>
    %145 = arith.maximumf %142, %143 : vector<18x6xf32>
    %146 = arith.maximumf %144, %145 : vector<18x6xf32>
    %147 = vector.extract_strided_slice %146 {offsets = [0, 0], sizes = [14, 6], strides = [1, 1]} : vector<18x6xf32> to vector<14x6xf32>
    %148 = vector.extract_strided_slice %146 {offsets = [1, 0], sizes = [14, 6], strides = [1, 1]} : vector<18x6xf32> to vector<14x6xf32>
    %149 = vector.extract_strided_slice %146 {offsets = [2, 0], sizes = [14, 6], strides = [1, 1]} : vector<18x6xf32> to vector<14x6xf32>
    %150 = vector.extract_strided_slice %146 {offsets = [3, 0], sizes = [14, 6], strides = [1, 1]} : vector<18x6xf32> to vector<14x6xf32>
    %151 = vector.extract_strided_slice %146 {offsets = [4, 0], sizes = [14, 6], strides = [1, 1]} : vector<18x6xf32> to vector<14x6xf32>
    %152 = tpu.concatenate %147, %148, %149, %150, %151 in 1 : vector<14x6xf32>, vector<14x6xf32>, vector<14x6xf32>, vector<14x6xf32>, vector<14x6xf32> -> vector<14x30xf32>
    %153 = arith.truncf %152 : vector<14x30xf32> to vector<14x30xbf16>
    %c98 = arith.constant 98 : index
    %c0_76 = arith.constant 0 : index
    %154 = vector.load %arg14[%c98, %c0_76] : memref<256x30xbf16, #tpu.memory_space<vmem>>, vector<14x30xbf16>
    tpu.vector_store %arg14[%c98, %c0_76], %153 {strides = array<i32>} : memref<256x30xbf16, #tpu.memory_space<vmem>>, vector<14x30xbf16>,
    %c512 = arith.constant 512 : index
    %c0_77 = arith.constant 0 : index
    %155 = tpu.strided_load %arg13[%c512, %c0_77] {strides = array<i32: 2, 1>} : memref<1024x6xf32, #tpu.memory_space<vmem>>, vector<18x6xf32>
    %c513 = arith.constant 513 : index
    %c0_78 = arith.constant 0 : index
    %156 = tpu.strided_load %arg13[%c513, %c0_78] {strides = array<i32: 2, 1>} : memref<1024x6xf32, #tpu.memory_space<vmem>>, vector<18x6xf32>
    %c544 = arith.constant 544 : index
    %c0_79 = arith.constant 0 : index
    %157 = tpu.strided_load %arg13[%c544, %c0_79] {strides = array<i32: 2, 1>} : memref<1024x6xf32, #tpu.memory_space<vmem>>, vector<18x6xf32>
    %c545 = arith.constant 545 : index
    %c0_80 = arith.constant 0 : index
    %158 = tpu.strided_load %arg13[%c545, %c0_80] {strides = array<i32: 2, 1>} : memref<1024x6xf32, #tpu.memory_space<vmem>>, vector<18x6xf32>
    %159 = arith.maximumf %155, %156 : vector<18x6xf32>
    %160 = arith.maximumf %157, %158 : vector<18x6xf32>
    %161 = arith.maximumf %159, %160 : vector<18x6xf32>
    %162 = vector.extract_strided_slice %161 {offsets = [0, 0], sizes = [14, 6], strides = [1, 1]} : vector<18x6xf32> to vector<14x6xf32>
    %163 = vector.extract_strided_slice %161 {offsets = [1, 0], sizes = [14, 6], strides = [1, 1]} : vector<18x6xf32> to vector<14x6xf32>
    %164 = vector.extract_strided_slice %161 {offsets = [2, 0], sizes = [14, 6], strides = [1, 1]} : vector<18x6xf32> to vector<14x6xf32>
    %165 = vector.extract_strided_slice %161 {offsets = [3, 0], sizes = [14, 6], strides = [1, 1]} : vector<18x6xf32> to vector<14x6xf32>
    %166 = vector.extract_strided_slice %161 {offsets = [4, 0], sizes = [14, 6], strides = [1, 1]} : vector<18x6xf32> to vector<14x6xf32>
    %167 = tpu.concatenate %162, %163, %164, %165, %166 in 1 : vector<14x6xf32>, vector<14x6xf32>, vector<14x6xf32>, vector<14x6xf32>, vector<14x6xf32> -> vector<14x30xf32>
    %168 = arith.truncf %167 : vector<14x30xf32> to vector<14x30xbf16>
    %c112 = arith.constant 112 : index
    %c0_81 = arith.constant 0 : index
    %169 = vector.load %arg14[%c112, %c0_81] : memref<256x30xbf16, #tpu.memory_space<vmem>>, vector<14x30xbf16>
    tpu.vector_store %arg14[%c112, %c0_81], %168 {strides = array<i32>} : memref<256x30xbf16, #tpu.memory_space<vmem>>, vector<14x30xbf16>,
    %c576 = arith.constant 576 : index
    %c0_82 = arith.constant 0 : index
    %170 = tpu.strided_load %arg13[%c576, %c0_82] {strides = array<i32: 2, 1>} : memref<1024x6xf32, #tpu.memory_space<vmem>>, vector<18x6xf32>
    %c577 = arith.constant 577 : index
    %c0_83 = arith.constant 0 : index
    %171 = tpu.strided_load %arg13[%c577, %c0_83] {strides = array<i32: 2, 1>} : memref<1024x6xf32, #tpu.memory_space<vmem>>, vector<18x6xf32>
    %c608 = arith.constant 608 : index
    %c0_84 = arith.constant 0 : index
    %172 = tpu.strided_load %arg13[%c608, %c0_84] {strides = array<i32: 2, 1>} : memref<1024x6xf32, #tpu.memory_space<vmem>>, vector<18x6xf32>
    %c609 = arith.constant 609 : index
    %c0_85 = arith.constant 0 : index
    %173 = tpu.strided_load %arg13[%c609, %c0_85] {strides = array<i32: 2, 1>} : memref<1024x6xf32, #tpu.memory_space<vmem>>, vector<18x6xf32>
    %174 = arith.maximumf %170, %171 : vector<18x6xf32>
    %175 = arith.maximumf %172, %173 : vector<18x6xf32>
    %176 = arith.maximumf %174, %175 : vector<18x6xf32>
    %177 = vector.extract_strided_slice %176 {offsets = [0, 0], sizes = [14, 6], strides = [1, 1]} : vector<18x6xf32> to vector<14x6xf32>
    %178 = vector.extract_strided_slice %176 {offsets = [1, 0], sizes = [14, 6], strides = [1, 1]} : vector<18x6xf32> to vector<14x6xf32>
    %179 = vector.extract_strided_slice %176 {offsets = [2, 0], sizes = [14, 6], strides = [1, 1]} : vector<18x6xf32> to vector<14x6xf32>
    %180 = vector.extract_strided_slice %176 {offsets = [3, 0], sizes = [14, 6], strides = [1, 1]} : vector<18x6xf32> to vector<14x6xf32>
    %181 = vector.extract_strided_slice %176 {offsets = [4, 0], sizes = [14, 6], strides = [1, 1]} : vector<18x6xf32> to vector<14x6xf32>
    %182 = tpu.concatenate %177, %178, %179, %180, %181 in 1 : vector<14x6xf32>, vector<14x6xf32>, vector<14x6xf32>, vector<14x6xf32>, vector<14x6xf32> -> vector<14x30xf32>
    %183 = arith.truncf %182 : vector<14x30xf32> to vector<14x30xbf16>
    %c126 = arith.constant 126 : index
    %c0_86 = arith.constant 0 : index
    %184 = vector.load %arg14[%c126, %c0_86] : memref<256x30xbf16, #tpu.memory_space<vmem>>, vector<14x30xbf16>
    tpu.vector_store %arg14[%c126, %c0_86], %183 {strides = array<i32>} : memref<256x30xbf16, #tpu.memory_space<vmem>>, vector<14x30xbf16>,
    %c640 = arith.constant 640 : index
    %c0_87 = arith.constant 0 : index
    %185 = tpu.strided_load %arg13[%c640, %c0_87] {strides = array<i32: 2, 1>} : memref<1024x6xf32, #tpu.memory_space<vmem>>, vector<18x6xf32>
    %c641 = arith.constant 641 : index
    %c0_88 = arith.constant 0 : index
    %186 = tpu.strided_load %arg13[%c641, %c0_88] {strides = array<i32: 2, 1>} : memref<1024x6xf32, #tpu.memory_space<vmem>>, vector<18x6xf32>
    %c672 = arith.constant 672 : index
    %c0_89 = arith.constant 0 : index
    %187 = tpu.strided_load %arg13[%c672, %c0_89] {strides = array<i32: 2, 1>} : memref<1024x6xf32, #tpu.memory_space<vmem>>, vector<18x6xf32>
    %c673 = arith.constant 673 : index
    %c0_90 = arith.constant 0 : index
    %188 = tpu.strided_load %arg13[%c673, %c0_90] {strides = array<i32: 2, 1>} : memref<1024x6xf32, #tpu.memory_space<vmem>>, vector<18x6xf32>
    %189 = arith.maximumf %185, %186 : vector<18x6xf32>
    %190 = arith.maximumf %187, %188 : vector<18x6xf32>
    %191 = arith.maximumf %189, %190 : vector<18x6xf32>
    %192 = vector.extract_strided_slice %191 {offsets = [0, 0], sizes = [14, 6], strides = [1, 1]} : vector<18x6xf32> to vector<14x6xf32>
    %193 = vector.extract_strided_slice %191 {offsets = [1, 0], sizes = [14, 6], strides = [1, 1]} : vector<18x6xf32> to vector<14x6xf32>
    %194 = vector.extract_strided_slice %191 {offsets = [2, 0], sizes = [14, 6], strides = [1, 1]} : vector<18x6xf32> to vector<14x6xf32>
    %195 = vector.extract_strided_slice %191 {offsets = [3, 0], sizes = [14, 6], strides = [1, 1]} : vector<18x6xf32> to vector<14x6xf32>
    %196 = vector.extract_strided_slice %191 {offsets = [4, 0], sizes = [14, 6], strides = [1, 1]} : vector<18x6xf32> to vector<14x6xf32>
    %197 = tpu.concatenate %192, %193, %194, %195, %196 in 1 : vector<14x6xf32>, vector<14x6xf32>, vector<14x6xf32>, vector<14x6xf32>, vector<14x6xf32> -> vector<14x30xf32>
    %198 = arith.truncf %197 : vector<14x30xf32> to vector<14x30xbf16>
    %c140 = arith.constant 140 : index
    %c0_91 = arith.constant 0 : index
    %199 = vector.load %arg14[%c140, %c0_91] : memref<256x30xbf16, #tpu.memory_space<vmem>>, vector<14x30xbf16>
    tpu.vector_store %arg14[%c140, %c0_91], %198 {strides = array<i32>} : memref<256x30xbf16, #tpu.memory_space<vmem>>, vector<14x30xbf16>,
    %c704 = arith.constant 704 : index
    %c0_92 = arith.constant 0 : index
    %200 = tpu.strided_load %arg13[%c704, %c0_92] {strides = array<i32: 2, 1>} : memref<1024x6xf32, #tpu.memory_space<vmem>>, vector<18x6xf32>
    %c705 = arith.constant 705 : index
    %c0_93 = arith.constant 0 : index
    %201 = tpu.strided_load %arg13[%c705, %c0_93] {strides = array<i32: 2, 1>} : memref<1024x6xf32, #tpu.memory_space<vmem>>, vector<18x6xf32>
    %c736 = arith.constant 736 : index
    %c0_94 = arith.constant 0 : index
    %202 = tpu.strided_load %arg13[%c736, %c0_94] {strides = array<i32: 2, 1>} : memref<1024x6xf32, #tpu.memory_space<vmem>>, vector<18x6xf32>
    %c737 = arith.constant 737 : index
    %c0_95 = arith.constant 0 : index
    %203 = tpu.strided_load %arg13[%c737, %c0_95] {strides = array<i32: 2, 1>} : memref<1024x6xf32, #tpu.memory_space<vmem>>, vector<18x6xf32>
    %204 = arith.maximumf %200, %201 : vector<18x6xf32>
    %205 = arith.maximumf %202, %203 : vector<18x6xf32>
    %206 = arith.maximumf %204, %205 : vector<18x6xf32>
    %207 = vector.extract_strided_slice %206 {offsets = [0, 0], sizes = [14, 6], strides = [1, 1]} : vector<18x6xf32> to vector<14x6xf32>
    %208 = vector.extract_strided_slice %206 {offsets = [1, 0], sizes = [14, 6], strides = [1, 1]} : vector<18x6xf32> to vector<14x6xf32>
    %209 = vector.extract_strided_slice %206 {offsets = [2, 0], sizes = [14, 6], strides = [1, 1]} : vector<18x6xf32> to vector<14x6xf32>
    %210 = vector.extract_strided_slice %206 {offsets = [3, 0], sizes = [14, 6], strides = [1, 1]} : vector<18x6xf32> to vector<14x6xf32>
    %211 = vector.extract_strided_slice %206 {offsets = [4, 0], sizes = [14, 6], strides = [1, 1]} : vector<18x6xf32> to vector<14x6xf32>
    %212 = tpu.concatenate %207, %208, %209, %210, %211 in 1 : vector<14x6xf32>, vector<14x6xf32>, vector<14x6xf32>, vector<14x6xf32>, vector<14x6xf32> -> vector<14x30xf32>
    %213 = arith.truncf %212 : vector<14x30xf32> to vector<14x30xbf16>
    %c154 = arith.constant 154 : index
    %c0_96 = arith.constant 0 : index
    %214 = vector.load %arg14[%c154, %c0_96] : memref<256x30xbf16, #tpu.memory_space<vmem>>, vector<14x30xbf16>
    tpu.vector_store %arg14[%c154, %c0_96], %213 {strides = array<i32>} : memref<256x30xbf16, #tpu.memory_space<vmem>>, vector<14x30xbf16>,
    %c768 = arith.constant 768 : index
    %c0_97 = arith.constant 0 : index
    %215 = tpu.strided_load %arg13[%c768, %c0_97] {strides = array<i32: 2, 1>} : memref<1024x6xf32, #tpu.memory_space<vmem>>, vector<18x6xf32>
    %c769 = arith.constant 769 : index
    %c0_98 = arith.constant 0 : index
    %216 = tpu.strided_load %arg13[%c769, %c0_98] {strides = array<i32: 2, 1>} : memref<1024x6xf32, #tpu.memory_space<vmem>>, vector<18x6xf32>
    %c800 = arith.constant 800 : index
    %c0_99 = arith.constant 0 : index
    %217 = tpu.strided_load %arg13[%c800, %c0_99] {strides = array<i32: 2, 1>} : memref<1024x6xf32, #tpu.memory_space<vmem>>, vector<18x6xf32>
    %c801 = arith.constant 801 : index
    %c0_100 = arith.constant 0 : index
    %218 = tpu.strided_load %arg13[%c801, %c0_100] {strides = array<i32: 2, 1>} : memref<1024x6xf32, #tpu.memory_space<vmem>>, vector<18x6xf32>
    %219 = arith.maximumf %215, %216 : vector<18x6xf32>
    %220 = arith.maximumf %217, %218 : vector<18x6xf32>
    %221 = arith.maximumf %219, %220 : vector<18x6xf32>
    %222 = vector.extract_strided_slice %221 {offsets = [0, 0], sizes = [14, 6], strides = [1, 1]} : vector<18x6xf32> to vector<14x6xf32>
    %223 = vector.extract_strided_slice %221 {offsets = [1, 0], sizes = [14, 6], strides = [1, 1]} : vector<18x6xf32> to vector<14x6xf32>
    %224 = vector.extract_strided_slice %221 {offsets = [2, 0], sizes = [14, 6], strides = [1, 1]} : vector<18x6xf32> to vector<14x6xf32>
    %225 = vector.extract_strided_slice %221 {offsets = [3, 0], sizes = [14, 6], strides = [1, 1]} : vector<18x6xf32> to vector<14x6xf32>
    %226 = vector.extract_strided_slice %221 {offsets = [4, 0], sizes = [14, 6], strides = [1, 1]} : vector<18x6xf32> to vector<14x6xf32>
    %227 = tpu.concatenate %222, %223, %224, %225, %226 in 1 : vector<14x6xf32>, vector<14x6xf32>, vector<14x6xf32>, vector<14x6xf32>, vector<14x6xf32> -> vector<14x30xf32>
    %228 = arith.truncf %227 : vector<14x30xf32> to vector<14x30xbf16>
    %c168 = arith.constant 168 : index
    %c0_101 = arith.constant 0 : index
    %229 = vector.load %arg14[%c168, %c0_101] : memref<256x30xbf16, #tpu.memory_space<vmem>>, vector<14x30xbf16>
    tpu.vector_store %arg14[%c168, %c0_101], %228 {strides = array<i32>} : memref<256x30xbf16, #tpu.memory_space<vmem>>, vector<14x30xbf16>,
    %c832 = arith.constant 832 : index
    %c0_102 = arith.constant 0 : index
    %230 = tpu.strided_load %arg13[%c832, %c0_102] {strides = array<i32: 2, 1>} : memref<1024x6xf32, #tpu.memory_space<vmem>>, vector<18x6xf32>
    %c833 = arith.constant 833 : index
    %c0_103 = arith.constant 0 : index
    %231 = tpu.strided_load %arg13[%c833, %c0_103] {strides = array<i32: 2, 1>} : memref<1024x6xf32, #tpu.memory_space<vmem>>, vector<18x6xf32>
    %c864 = arith.constant 864 : index
    %c0_104 = arith.constant 0 : index
    %232 = tpu.strided_load %arg13[%c864, %c0_104] {strides = array<i32: 2, 1>} : memref<1024x6xf32, #tpu.memory_space<vmem>>, vector<18x6xf32>
    %c865 = arith.constant 865 : index
    %c0_105 = arith.constant 0 : index
    %233 = tpu.strided_load %arg13[%c865, %c0_105] {strides = array<i32: 2, 1>} : memref<1024x6xf32, #tpu.memory_space<vmem>>, vector<18x6xf32>
    %234 = arith.maximumf %230, %231 : vector<18x6xf32>
    %235 = arith.maximumf %232, %233 : vector<18x6xf32>
    %236 = arith.maximumf %234, %235 : vector<18x6xf32>
    %237 = vector.extract_strided_slice %236 {offsets = [0, 0], sizes = [14, 6], strides = [1, 1]} : vector<18x6xf32> to vector<14x6xf32>
    %238 = vector.extract_strided_slice %236 {offsets = [1, 0], sizes = [14, 6], strides = [1, 1]} : vector<18x6xf32> to vector<14x6xf32>
    %239 = vector.extract_strided_slice %236 {offsets = [2, 0], sizes = [14, 6], strides = [1, 1]} : vector<18x6xf32> to vector<14x6xf32>
    %240 = vector.extract_strided_slice %236 {offsets = [3, 0], sizes = [14, 6], strides = [1, 1]} : vector<18x6xf32> to vector<14x6xf32>
    %241 = vector.extract_strided_slice %236 {offsets = [4, 0], sizes = [14, 6], strides = [1, 1]} : vector<18x6xf32> to vector<14x6xf32>
    %242 = tpu.concatenate %237, %238, %239, %240, %241 in 1 : vector<14x6xf32>, vector<14x6xf32>, vector<14x6xf32>, vector<14x6xf32>, vector<14x6xf32> -> vector<14x30xf32>
    %243 = arith.truncf %242 : vector<14x30xf32> to vector<14x30xbf16>
    %c182 = arith.constant 182 : index
    %c0_106 = arith.constant 0 : index
    %244 = vector.load %arg14[%c182, %c0_106] : memref<256x30xbf16, #tpu.memory_space<vmem>>, vector<14x30xbf16>
    tpu.vector_store %arg14[%c182, %c0_106], %243 {strides = array<i32>} : memref<256x30xbf16, #tpu.memory_space<vmem>>, vector<14x30xbf16>,
    %cst_107 = arith.constant 0.000000e+00 : bf16
    %245 = vector.broadcast %cst_107 : bf16 to vector<60x30xbf16>
    %c196 = arith.constant 196 : index
    %c0_108 = arith.constant 0 : index
    %246 = vector.load %arg14[%c196, %c0_108] : memref<256x30xbf16, #tpu.memory_space<vmem>>, vector<60x30xbf16>
    tpu.vector_store %arg14[%c196, %c0_108], %245 {strides = array<i32>} : memref<256x30xbf16, #tpu.memory_space<vmem>>, vector<60x30xbf16>,
    %c0_109 = arith.constant 0 : index
    %c0_110 = arith.constant 0 : index
    %247 = vector.load %arg14[%c0_109, %c0_110] : memref<256x30xbf16, #tpu.memory_space<vmem>>, vector<200x30xbf16>
    %c0_111 = arith.constant 0 : index
    %c0_112 = arith.constant 0 : index
    %c0_113 = arith.constant 0 : index
    %248 = vector.load %arg4[%c0_111, %c0_112, %c0_113] : memref<5x30x16xbf16, #tpu.memory_space<vmem>>, vector<1x30x16xbf16>
    %249 = vector.shape_cast %248 : vector<1x30x16xbf16> to vector<30x16xbf16>
    %cst_114 = arith.constant dense<0.000000e+00> : vector<200x16xf32>
    %250 = tpu.matmul %247, %249, %cst_114 {dimension_numbers = #tpu.dot_dimension_numbers<[1], [0], [0], [1], [0, 0, 1, 1], [], []>} : vector<200x30xbf16>, vector<30x16xbf16>, vector<200x16xf32> -> vector<200x16xf32>
    %c14_115 = arith.constant 14 : index
    %c0_116 = arith.constant 0 : index
    %251 = vector.load %arg14[%c14_115, %c0_116] : memref<256x30xbf16, #tpu.memory_space<vmem>>, vector<200x30xbf16>
    %c1_117 = arith.constant 1 : index
    %c0_118 = arith.constant 0 : index
    %c0_119 = arith.constant 0 : index
    %252 = vector.load %arg4[%c1_117, %c0_118, %c0_119] : memref<5x30x16xbf16, #tpu.memory_space<vmem>>, vector<1x30x16xbf16>
    %253 = vector.shape_cast %252 : vector<1x30x16xbf16> to vector<30x16xbf16>
    %cst_120 = arith.constant dense<0.000000e+00> : vector<200x16xf32>
    %254 = tpu.matmul %251, %253, %cst_120 {dimension_numbers = #tpu.dot_dimension_numbers<[1], [0], [0], [1], [0, 0, 1, 1], [], []>} : vector<200x30xbf16>, vector<30x16xbf16>, vector<200x16xf32> -> vector<200x16xf32>
    %255 = arith.addf %250, %254 : vector<200x16xf32>
    %c28_121 = arith.constant 28 : index
    %c0_122 = arith.constant 0 : index
    %256 = vector.load %arg14[%c28_121, %c0_122] : memref<256x30xbf16, #tpu.memory_space<vmem>>, vector<200x30xbf16>
    %c2_123 = arith.constant 2 : index
    %c0_124 = arith.constant 0 : index
    %c0_125 = arith.constant 0 : index
    %257 = vector.load %arg4[%c2_123, %c0_124, %c0_125] : memref<5x30x16xbf16, #tpu.memory_space<vmem>>, vector<1x30x16xbf16>
    %258 = vector.shape_cast %257 : vector<1x30x16xbf16> to vector<30x16xbf16>
    %cst_126 = arith.constant dense<0.000000e+00> : vector<200x16xf32>
    %259 = tpu.matmul %256, %258, %cst_126 {dimension_numbers = #tpu.dot_dimension_numbers<[1], [0], [0], [1], [0, 0, 1, 1], [], []>} : vector<200x30xbf16>, vector<30x16xbf16>, vector<200x16xf32> -> vector<200x16xf32>
    %260 = arith.addf %255, %259 : vector<200x16xf32>
    %c42_127 = arith.constant 42 : index
    %c0_128 = arith.constant 0 : index
    %261 = vector.load %arg14[%c42_127, %c0_128] : memref<256x30xbf16, #tpu.memory_space<vmem>>, vector<200x30xbf16>
    %c3_129 = arith.constant 3 : index
    %c0_130 = arith.constant 0 : index
    %c0_131 = arith.constant 0 : index
    %262 = vector.load %arg4[%c3_129, %c0_130, %c0_131] : memref<5x30x16xbf16, #tpu.memory_space<vmem>>, vector<1x30x16xbf16>
    %263 = vector.shape_cast %262 : vector<1x30x16xbf16> to vector<30x16xbf16>
    %cst_132 = arith.constant dense<0.000000e+00> : vector<200x16xf32>
    %264 = tpu.matmul %261, %263, %cst_132 {dimension_numbers = #tpu.dot_dimension_numbers<[1], [0], [0], [1], [0, 0, 1, 1], [], []>} : vector<200x30xbf16>, vector<30x16xbf16>, vector<200x16xf32> -> vector<200x16xf32>
    %265 = arith.addf %260, %264 : vector<200x16xf32>
    %c56_133 = arith.constant 56 : index
    %c0_134 = arith.constant 0 : index
    %266 = vector.load %arg14[%c56_133, %c0_134] : memref<256x30xbf16, #tpu.memory_space<vmem>>, vector<200x30xbf16>
    %c4_135 = arith.constant 4 : index
    %c0_136 = arith.constant 0 : index
    %c0_137 = arith.constant 0 : index
    %267 = vector.load %arg4[%c4_135, %c0_136, %c0_137] : memref<5x30x16xbf16, #tpu.memory_space<vmem>>, vector<1x30x16xbf16>
    %268 = vector.shape_cast %267 : vector<1x30x16xbf16> to vector<30x16xbf16>
    %cst_138 = arith.constant dense<0.000000e+00> : vector<200x16xf32>
    %269 = tpu.matmul %266, %268, %cst_138 {dimension_numbers = #tpu.dot_dimension_numbers<[1], [0], [0], [1], [0, 0, 1, 1], [], []>} : vector<200x30xbf16>, vector<30x16xbf16>, vector<200x16xf32> -> vector<200x16xf32>
    %270 = arith.addf %265, %269 : vector<200x16xf32>
    %c0_139 = arith.constant 0 : index
    %c0_140 = arith.constant 0 : index
    %271 = vector.load %arg5[%c0_139, %c0_140] : memref<1x16xf32, #tpu.memory_space<vmem>>, vector<1x16xf32>
    %272 = vector.broadcast %271 : vector<1x16xf32> to vector<200x16xf32>
    %273 = arith.addf %270, %272 : vector<200x16xf32>
    %cst_141 = arith.constant 0.000000e+00 : f32
    %274 = vector.broadcast %cst_141 : f32 to vector<200x16xf32>
    %275 = arith.maximumf %273, %274 : vector<200x16xf32>
    %c0_142 = arith.constant 0 : index
    %c0_143 = arith.constant 0 : index
    %276 = vector.load %arg15[%c0_142, %c0_143] : memref<200x16xf32, #tpu.memory_space<vmem>>, vector<200x16xf32>
    tpu.vector_store %arg15[%c0_142, %c0_143], %275 {strides = array<i32>} : memref<200x16xf32, #tpu.memory_space<vmem>>, vector<200x16xf32>,
    %c0_144 = arith.constant 0 : index
    %c0_145 = arith.constant 0 : index
    %277 = tpu.strided_load %arg15[%c0_144, %c0_145] {strides = array<i32: 2, 1>} : memref<200x16xf32, #tpu.memory_space<vmem>>, vector<5x16xf32>
    %c1_146 = arith.constant 1 : index
    %c0_147 = arith.constant 0 : index
    %278 = tpu.strided_load %arg15[%c1_146, %c0_147] {strides = array<i32: 2, 1>} : memref<200x16xf32, #tpu.memory_space<vmem>>, vector<5x16xf32>
    %c14_148 = arith.constant 14 : index
    %c0_149 = arith.constant 0 : index
    %279 = tpu.strided_load %arg15[%c14_148, %c0_149] {strides = array<i32: 2, 1>} : memref<200x16xf32, #tpu.memory_space<vmem>>, vector<5x16xf32>
    %c15 = arith.constant 15 : index
    %c0_150 = arith.constant 0 : index
    %280 = tpu.strided_load %arg15[%c15, %c0_150] {strides = array<i32: 2, 1>} : memref<200x16xf32, #tpu.memory_space<vmem>>, vector<5x16xf32>
    %281 = arith.maximumf %277, %278 : vector<5x16xf32>
    %282 = arith.maximumf %279, %280 : vector<5x16xf32>
    %283 = arith.maximumf %281, %282 : vector<5x16xf32>
    %284 = vector.extract_strided_slice %283 {offsets = [0, 0], sizes = [1, 16], strides = [1, 1]} : vector<5x16xf32> to vector<1x16xf32>
    %285 = vector.extract_strided_slice %283 {offsets = [1, 0], sizes = [1, 16], strides = [1, 1]} : vector<5x16xf32> to vector<1x16xf32>
    %286 = vector.extract_strided_slice %283 {offsets = [2, 0], sizes = [1, 16], strides = [1, 1]} : vector<5x16xf32> to vector<1x16xf32>
    %287 = vector.extract_strided_slice %283 {offsets = [3, 0], sizes = [1, 16], strides = [1, 1]} : vector<5x16xf32> to vector<1x16xf32>
    %288 = vector.extract_strided_slice %283 {offsets = [4, 0], sizes = [1, 16], strides = [1, 1]} : vector<5x16xf32> to vector<1x16xf32>
    %289 = tpu.concatenate %284, %285, %286, %287, %288 in 1 : vector<1x16xf32>, vector<1x16xf32>, vector<1x16xf32>, vector<1x16xf32>, vector<1x16xf32> -> vector<1x80xf32>
    %290 = arith.truncf %289 : vector<1x80xf32> to vector<1x80xbf16>
    %c0_151 = arith.constant 0 : index
    %c0_152 = arith.constant 0 : index
    %c0_153 = arith.constant 0 : index
    %291 = vector.load %arg6[%c0_151, %c0_152, %c0_153] : memref<5x80x120xbf16, #tpu.memory_space<vmem>>, vector<1x80x120xbf16>
    %292 = vector.shape_cast %291 : vector<1x80x120xbf16> to vector<80x120xbf16>
    %cst_154 = arith.constant dense<0.000000e+00> : vector<1x120xf32>
    %293 = tpu.matmul %290, %292, %cst_154 {dimension_numbers = #tpu.dot_dimension_numbers<[1], [0], [0], [1], [0, 0, 1, 1], [], []>} : vector<1x80xbf16>, vector<80x120xbf16>, vector<1x120xf32> -> vector<1x120xf32>
    %c28_155 = arith.constant 28 : index
    %c0_156 = arith.constant 0 : index
    %294 = tpu.strided_load %arg15[%c28_155, %c0_156] {strides = array<i32: 2, 1>} : memref<200x16xf32, #tpu.memory_space<vmem>>, vector<5x16xf32>
    %c29 = arith.constant 29 : index
    %c0_157 = arith.constant 0 : index
    %295 = tpu.strided_load %arg15[%c29, %c0_157] {strides = array<i32: 2, 1>} : memref<200x16xf32, #tpu.memory_space<vmem>>, vector<5x16xf32>
    %c42_158 = arith.constant 42 : index
    %c0_159 = arith.constant 0 : index
    %296 = tpu.strided_load %arg15[%c42_158, %c0_159] {strides = array<i32: 2, 1>} : memref<200x16xf32, #tpu.memory_space<vmem>>, vector<5x16xf32>
    %c43 = arith.constant 43 : index
    %c0_160 = arith.constant 0 : index
    %297 = tpu.strided_load %arg15[%c43, %c0_160] {strides = array<i32: 2, 1>} : memref<200x16xf32, #tpu.memory_space<vmem>>, vector<5x16xf32>
    %298 = arith.maximumf %294, %295 : vector<5x16xf32>
    %299 = arith.maximumf %296, %297 : vector<5x16xf32>
    %300 = arith.maximumf %298, %299 : vector<5x16xf32>
    %301 = vector.extract_strided_slice %300 {offsets = [0, 0], sizes = [1, 16], strides = [1, 1]} : vector<5x16xf32> to vector<1x16xf32>
    %302 = vector.extract_strided_slice %300 {offsets = [1, 0], sizes = [1, 16], strides = [1, 1]} : vector<5x16xf32> to vector<1x16xf32>
    %303 = vector.extract_strided_slice %300 {offsets = [2, 0], sizes = [1, 16], strides = [1, 1]} : vector<5x16xf32> to vector<1x16xf32>
    %304 = vector.extract_strided_slice %300 {offsets = [3, 0], sizes = [1, 16], strides = [1, 1]} : vector<5x16xf32> to vector<1x16xf32>
    %305 = vector.extract_strided_slice %300 {offsets = [4, 0], sizes = [1, 16], strides = [1, 1]} : vector<5x16xf32> to vector<1x16xf32>
    %306 = tpu.concatenate %301, %302, %303, %304, %305 in 1 : vector<1x16xf32>, vector<1x16xf32>, vector<1x16xf32>, vector<1x16xf32>, vector<1x16xf32> -> vector<1x80xf32>
    %307 = arith.truncf %306 : vector<1x80xf32> to vector<1x80xbf16>
    %c1_161 = arith.constant 1 : index
    %c0_162 = arith.constant 0 : index
    %c0_163 = arith.constant 0 : index
    %308 = vector.load %arg6[%c1_161, %c0_162, %c0_163] : memref<5x80x120xbf16, #tpu.memory_space<vmem>>, vector<1x80x120xbf16>
    %309 = vector.shape_cast %308 : vector<1x80x120xbf16> to vector<80x120xbf16>
    %cst_164 = arith.constant dense<0.000000e+00> : vector<1x120xf32>
    %310 = tpu.matmul %307, %309, %cst_164 {dimension_numbers = #tpu.dot_dimension_numbers<[1], [0], [0], [1], [0, 0, 1, 1], [], []>} : vector<1x80xbf16>, vector<80x120xbf16>, vector<1x120xf32> -> vector<1x120xf32>
    %311 = arith.addf %293, %310 : vector<1x120xf32>
    %c56_165 = arith.constant 56 : index
    %c0_166 = arith.constant 0 : index
    %312 = tpu.strided_load %arg15[%c56_165, %c0_166] {strides = array<i32: 2, 1>} : memref<200x16xf32, #tpu.memory_space<vmem>>, vector<5x16xf32>
    %c57 = arith.constant 57 : index
    %c0_167 = arith.constant 0 : index
    %313 = tpu.strided_load %arg15[%c57, %c0_167] {strides = array<i32: 2, 1>} : memref<200x16xf32, #tpu.memory_space<vmem>>, vector<5x16xf32>
    %c70_168 = arith.constant 70 : index
    %c0_169 = arith.constant 0 : index
    %314 = tpu.strided_load %arg15[%c70_168, %c0_169] {strides = array<i32: 2, 1>} : memref<200x16xf32, #tpu.memory_space<vmem>>, vector<5x16xf32>
    %c71 = arith.constant 71 : index
    %c0_170 = arith.constant 0 : index
    %315 = tpu.strided_load %arg15[%c71, %c0_170] {strides = array<i32: 2, 1>} : memref<200x16xf32, #tpu.memory_space<vmem>>, vector<5x16xf32>
    %316 = arith.maximumf %312, %313 : vector<5x16xf32>
    %317 = arith.maximumf %314, %315 : vector<5x16xf32>
    %318 = arith.maximumf %316, %317 : vector<5x16xf32>
    %319 = vector.extract_strided_slice %318 {offsets = [0, 0], sizes = [1, 16], strides = [1, 1]} : vector<5x16xf32> to vector<1x16xf32>
    %320 = vector.extract_strided_slice %318 {offsets = [1, 0], sizes = [1, 16], strides = [1, 1]} : vector<5x16xf32> to vector<1x16xf32>
    %321 = vector.extract_strided_slice %318 {offsets = [2, 0], sizes = [1, 16], strides = [1, 1]} : vector<5x16xf32> to vector<1x16xf32>
    %322 = vector.extract_strided_slice %318 {offsets = [3, 0], sizes = [1, 16], strides = [1, 1]} : vector<5x16xf32> to vector<1x16xf32>
    %323 = vector.extract_strided_slice %318 {offsets = [4, 0], sizes = [1, 16], strides = [1, 1]} : vector<5x16xf32> to vector<1x16xf32>
    %324 = tpu.concatenate %319, %320, %321, %322, %323 in 1 : vector<1x16xf32>, vector<1x16xf32>, vector<1x16xf32>, vector<1x16xf32>, vector<1x16xf32> -> vector<1x80xf32>
    %325 = arith.truncf %324 : vector<1x80xf32> to vector<1x80xbf16>
    %c2_171 = arith.constant 2 : index
    %c0_172 = arith.constant 0 : index
    %c0_173 = arith.constant 0 : index
    %326 = vector.load %arg6[%c2_171, %c0_172, %c0_173] : memref<5x80x120xbf16, #tpu.memory_space<vmem>>, vector<1x80x120xbf16>
    %327 = vector.shape_cast %326 : vector<1x80x120xbf16> to vector<80x120xbf16>
    %cst_174 = arith.constant dense<0.000000e+00> : vector<1x120xf32>
    %328 = tpu.matmul %325, %327, %cst_174 {dimension_numbers = #tpu.dot_dimension_numbers<[1], [0], [0], [1], [0, 0, 1, 1], [], []>} : vector<1x80xbf16>, vector<80x120xbf16>, vector<1x120xf32> -> vector<1x120xf32>
    %329 = arith.addf %311, %328 : vector<1x120xf32>
    %c84_175 = arith.constant 84 : index
    %c0_176 = arith.constant 0 : index
    %330 = tpu.strided_load %arg15[%c84_175, %c0_176] {strides = array<i32: 2, 1>} : memref<200x16xf32, #tpu.memory_space<vmem>>, vector<5x16xf32>
    %c85 = arith.constant 85 : index
    %c0_177 = arith.constant 0 : index
    %331 = tpu.strided_load %arg15[%c85, %c0_177] {strides = array<i32: 2, 1>} : memref<200x16xf32, #tpu.memory_space<vmem>>, vector<5x16xf32>
    %c98_178 = arith.constant 98 : index
    %c0_179 = arith.constant 0 : index
    %332 = tpu.strided_load %arg15[%c98_178, %c0_179] {strides = array<i32: 2, 1>} : memref<200x16xf32, #tpu.memory_space<vmem>>, vector<5x16xf32>
    %c99 = arith.constant 99 : index
    %c0_180 = arith.constant 0 : index
    %333 = tpu.strided_load %arg15[%c99, %c0_180] {strides = array<i32: 2, 1>} : memref<200x16xf32, #tpu.memory_space<vmem>>, vector<5x16xf32>
    %334 = arith.maximumf %330, %331 : vector<5x16xf32>
    %335 = arith.maximumf %332, %333 : vector<5x16xf32>
    %336 = arith.maximumf %334, %335 : vector<5x16xf32>
    %337 = vector.extract_strided_slice %336 {offsets = [0, 0], sizes = [1, 16], strides = [1, 1]} : vector<5x16xf32> to vector<1x16xf32>
    %338 = vector.extract_strided_slice %336 {offsets = [1, 0], sizes = [1, 16], strides = [1, 1]} : vector<5x16xf32> to vector<1x16xf32>
    %339 = vector.extract_strided_slice %336 {offsets = [2, 0], sizes = [1, 16], strides = [1, 1]} : vector<5x16xf32> to vector<1x16xf32>
    %340 = vector.extract_strided_slice %336 {offsets = [3, 0], sizes = [1, 16], strides = [1, 1]} : vector<5x16xf32> to vector<1x16xf32>
    %341 = vector.extract_strided_slice %336 {offsets = [4, 0], sizes = [1, 16], strides = [1, 1]} : vector<5x16xf32> to vector<1x16xf32>
    %342 = tpu.concatenate %337, %338, %339, %340, %341 in 1 : vector<1x16xf32>, vector<1x16xf32>, vector<1x16xf32>, vector<1x16xf32>, vector<1x16xf32> -> vector<1x80xf32>
    %343 = arith.truncf %342 : vector<1x80xf32> to vector<1x80xbf16>
    %c3_181 = arith.constant 3 : index
    %c0_182 = arith.constant 0 : index
    %c0_183 = arith.constant 0 : index
    %344 = vector.load %arg6[%c3_181, %c0_182, %c0_183] : memref<5x80x120xbf16, #tpu.memory_space<vmem>>, vector<1x80x120xbf16>
    %345 = vector.shape_cast %344 : vector<1x80x120xbf16> to vector<80x120xbf16>
    %cst_184 = arith.constant dense<0.000000e+00> : vector<1x120xf32>
    %346 = tpu.matmul %343, %345, %cst_184 {dimension_numbers = #tpu.dot_dimension_numbers<[1], [0], [0], [1], [0, 0, 1, 1], [], []>} : vector<1x80xbf16>, vector<80x120xbf16>, vector<1x120xf32> -> vector<1x120xf32>
    %347 = arith.addf %329, %346 : vector<1x120xf32>
    %c112_185 = arith.constant 112 : index
    %c0_186 = arith.constant 0 : index
    %348 = tpu.strided_load %arg15[%c112_185, %c0_186] {strides = array<i32: 2, 1>} : memref<200x16xf32, #tpu.memory_space<vmem>>, vector<5x16xf32>
    %c113 = arith.constant 113 : index
    %c0_187 = arith.constant 0 : index
    %349 = tpu.strided_load %arg15[%c113, %c0_187] {strides = array<i32: 2, 1>} : memref<200x16xf32, #tpu.memory_space<vmem>>, vector<5x16xf32>
    %c126_188 = arith.constant 126 : index
    %c0_189 = arith.constant 0 : index
    %350 = tpu.strided_load %arg15[%c126_188, %c0_189] {strides = array<i32: 2, 1>} : memref<200x16xf32, #tpu.memory_space<vmem>>, vector<5x16xf32>
    %c127 = arith.constant 127 : index
    %c0_190 = arith.constant 0 : index
    %351 = tpu.strided_load %arg15[%c127, %c0_190] {strides = array<i32: 2, 1>} : memref<200x16xf32, #tpu.memory_space<vmem>>, vector<5x16xf32>
    %352 = arith.maximumf %348, %349 : vector<5x16xf32>
    %353 = arith.maximumf %350, %351 : vector<5x16xf32>
    %354 = arith.maximumf %352, %353 : vector<5x16xf32>
    %355 = vector.extract_strided_slice %354 {offsets = [0, 0], sizes = [1, 16], strides = [1, 1]} : vector<5x16xf32> to vector<1x16xf32>
    %356 = vector.extract_strided_slice %354 {offsets = [1, 0], sizes = [1, 16], strides = [1, 1]} : vector<5x16xf32> to vector<1x16xf32>
    %357 = vector.extract_strided_slice %354 {offsets = [2, 0], sizes = [1, 16], strides = [1, 1]} : vector<5x16xf32> to vector<1x16xf32>
    %358 = vector.extract_strided_slice %354 {offsets = [3, 0], sizes = [1, 16], strides = [1, 1]} : vector<5x16xf32> to vector<1x16xf32>
    %359 = vector.extract_strided_slice %354 {offsets = [4, 0], sizes = [1, 16], strides = [1, 1]} : vector<5x16xf32> to vector<1x16xf32>
    %360 = tpu.concatenate %355, %356, %357, %358, %359 in 1 : vector<1x16xf32>, vector<1x16xf32>, vector<1x16xf32>, vector<1x16xf32>, vector<1x16xf32> -> vector<1x80xf32>
    %361 = arith.truncf %360 : vector<1x80xf32> to vector<1x80xbf16>
    %c4_191 = arith.constant 4 : index
    %c0_192 = arith.constant 0 : index
    %c0_193 = arith.constant 0 : index
    %362 = vector.load %arg6[%c4_191, %c0_192, %c0_193] : memref<5x80x120xbf16, #tpu.memory_space<vmem>>, vector<1x80x120xbf16>
    %363 = vector.shape_cast %362 : vector<1x80x120xbf16> to vector<80x120xbf16>
    %cst_194 = arith.constant dense<0.000000e+00> : vector<1x120xf32>
    %364 = tpu.matmul %361, %363, %cst_194 {dimension_numbers = #tpu.dot_dimension_numbers<[1], [0], [0], [1], [0, 0, 1, 1], [], []>} : vector<1x80xbf16>, vector<80x120xbf16>, vector<1x120xf32> -> vector<1x120xf32>
    %365 = arith.addf %347, %364 : vector<1x120xf32>
    %c0_195 = arith.constant 0 : index
    %c0_196 = arith.constant 0 : index
    %366 = vector.load %arg7[%c0_195, %c0_196] : memref<1x120xf32, #tpu.memory_space<vmem>>, vector<1x120xf32>
    %367 = arith.addf %365, %366 : vector<1x120xf32>
    %cst_197 = arith.constant 0.000000e+00 : f32
    %368 = vector.broadcast %cst_197 : f32 to vector<1x120xf32>
    %369 = arith.maximumf %367, %368 : vector<1x120xf32>
    %370 = arith.truncf %369 : vector<1x120xf32> to vector<1x120xbf16>
    %c0_198 = arith.constant 0 : index
    %c0_199 = arith.constant 0 : index
    %371 = vector.load %arg8[%c0_198, %c0_199] : memref<120x84xbf16, #tpu.memory_space<vmem>>, vector<120x84xbf16>
    %cst_200 = arith.constant dense<0.000000e+00> : vector<1x84xf32>
    %372 = tpu.matmul %370, %371, %cst_200 {dimension_numbers = #tpu.dot_dimension_numbers<[1], [0], [0], [1], [0, 0, 1, 1], [], []>} : vector<1x120xbf16>, vector<120x84xbf16>, vector<1x84xf32> -> vector<1x84xf32>
    %c0_201 = arith.constant 0 : index
    %c0_202 = arith.constant 0 : index
    %373 = vector.load %arg9[%c0_201, %c0_202] : memref<1x84xf32, #tpu.memory_space<vmem>>, vector<1x84xf32>
    %374 = arith.addf %372, %373 : vector<1x84xf32>
    %cst_203 = arith.constant 0.000000e+00 : f32
    %375 = vector.broadcast %cst_203 : f32 to vector<1x84xf32>
    %376 = arith.maximumf %374, %375 : vector<1x84xf32>
    %377 = arith.truncf %376 : vector<1x84xf32> to vector<1x84xbf16>
    %c0_204 = arith.constant 0 : index
    %c0_205 = arith.constant 0 : index
    %378 = vector.load %arg10[%c0_204, %c0_205] : memref<84x128xbf16, #tpu.memory_space<vmem>>, vector<84x128xbf16>
    %cst_206 = arith.constant dense<0.000000e+00> : vector<1x128xf32>
    %379 = tpu.matmul %377, %378, %cst_206 {dimension_numbers = #tpu.dot_dimension_numbers<[1], [0], [0], [1], [0, 0, 1, 1], [], []>} : vector<1x84xbf16>, vector<84x128xbf16>, vector<1x128xf32> -> vector<1x128xf32>
    %c0_207 = arith.constant 0 : index
    %c0_208 = arith.constant 0 : index
    %380 = vector.load %arg11[%c0_207, %c0_208] : memref<1x128xf32, #tpu.memory_space<vmem>>, vector<1x128xf32>
    %381 = arith.addf %379, %380 : vector<1x128xf32>
    %382 = vector.shape_cast %381 : vector<1x128xf32> to vector<1x128xf32>
    %383 = vector.broadcast %382 : vector<1x128xf32> to vector<8x128xf32>
    %c0_209 = arith.constant 0 : index
    %c0_210 = arith.constant 0 : index
    %c0_211 = arith.constant 0 : index
    %384 = vector.load %arg12[%c0_209, %c0_210, %c0_211] : memref<1x8x128xf32, #tpu.memory_space<vmem>>, vector<1x8x128xf32>
    %385 = vector.shape_cast %384 : vector<1x8x128xf32> to vector<8x128xf32>
    %386 = vector.shape_cast %383 : vector<8x128xf32> to vector<1x8x128xf32>
    tpu.vector_store %arg12[%c0_209, %c0_210, %c0_211], %386 {strides = array<i32>} : memref<1x8x128xf32, #tpu.memory_space<vmem>>, vector<1x8x128xf32>,
    return
  }
  func.func @transform_0(%arg0: i32) -> (i32, i32, i32) {
    %c0_i32 = arith.constant 0 : i32
    %c0_i32_0 = arith.constant 0 : i32
    %c0_i32_1 = arith.constant 0 : i32
    return %arg0, %c0_i32, %c0_i32_0 : i32, i32, i32
  }
  func.func @transform_1(%arg0: i32) -> (i32, i32, i32) {
    %c0_i32 = arith.constant 0 : i32
    %c0_i32_0 = arith.constant 0 : i32
    %c0_i32_1 = arith.constant 0 : i32
    %c0_i32_2 = arith.constant 0 : i32
    return %c0_i32, %c0_i32_0, %c0_i32_1 : i32, i32, i32
  }
  func.func @transform_2(%arg0: i32) -> (i32, i32) {
    %c0_i32 = arith.constant 0 : i32
    %c0_i32_0 = arith.constant 0 : i32
    %c0_i32_1 = arith.constant 0 : i32
    return %c0_i32, %c0_i32_0 : i32, i32
  }
  func.func @transform_3(%arg0: i32) -> (i32, i32, i32) {
    %c0_i32 = arith.constant 0 : i32
    %c0_i32_0 = arith.constant 0 : i32
    %c0_i32_1 = arith.constant 0 : i32
    %c0_i32_2 = arith.constant 0 : i32
    return %c0_i32, %c0_i32_0, %c0_i32_1 : i32, i32, i32
  }
  func.func @transform_4(%arg0: i32) -> (i32, i32) {
    %c0_i32 = arith.constant 0 : i32
    %c0_i32_0 = arith.constant 0 : i32
    %c0_i32_1 = arith.constant 0 : i32
    return %c0_i32, %c0_i32_0 : i32, i32
  }
  func.func @transform_5(%arg0: i32) -> (i32, i32, i32) {
    %c0_i32 = arith.constant 0 : i32
    %c0_i32_0 = arith.constant 0 : i32
    %c0_i32_1 = arith.constant 0 : i32
    %c0_i32_2 = arith.constant 0 : i32
    return %c0_i32, %c0_i32_0, %c0_i32_1 : i32, i32, i32
  }
  func.func @transform_6(%arg0: i32) -> (i32, i32) {
    %c0_i32 = arith.constant 0 : i32
    %c0_i32_0 = arith.constant 0 : i32
    %c0_i32_1 = arith.constant 0 : i32
    return %c0_i32, %c0_i32_0 : i32, i32
  }
  func.func @transform_7(%arg0: i32) -> (i32, i32) {
    %c0_i32 = arith.constant 0 : i32
    %c0_i32_0 = arith.constant 0 : i32
    %c0_i32_1 = arith.constant 0 : i32
    return %c0_i32, %c0_i32_0 : i32, i32
  }
  func.func @transform_8(%arg0: i32) -> (i32, i32) {
    %c0_i32 = arith.constant 0 : i32
    %c0_i32_0 = arith.constant 0 : i32
    %c0_i32_1 = arith.constant 0 : i32
    return %c0_i32, %c0_i32_0 : i32, i32
  }
  func.func @transform_9(%arg0: i32) -> (i32, i32) {
    %c0_i32 = arith.constant 0 : i32
    %c0_i32_0 = arith.constant 0 : i32
    %c0_i32_1 = arith.constant 0 : i32
    return %c0_i32, %c0_i32_0 : i32, i32
  }
  func.func @transform_10(%arg0: i32) -> (i32, i32) {
    %c0_i32 = arith.constant 0 : i32
    %c0_i32_0 = arith.constant 0 : i32
    %c0_i32_1 = arith.constant 0 : i32
    return %c0_i32, %c0_i32_0 : i32, i32
  }
  func.func @transform_11(%arg0: i32) -> (i32, i32, i32) {
    %c0_i32 = arith.constant 0 : i32
    %c0_i32_0 = arith.constant 0 : i32
    %c0_i32_1 = arith.constant 0 : i32
    return %arg0, %c0_i32, %c0_i32_0 : i32, i32, i32
  }
}

</mosaic_0001>

<llo_original>
// kernel: lenet_forward.1
$region0: #{lenet_forward.1}
  #allocation0 [shape = 'u32[]', space=smem, size = 0x4, offset = 0x4, fixed_abs, tag = 'smem constant byte address 0x4 - core index']
  #allocation1 [shape = 'u32[144,128]{1,0:T(1,128)}', space=vmem, size = 0x12000, scoped, tag = 'internal scratch']
  #allocation2 [shape = 'f32[1024,6]{1,0:T(8,128)}', space=vmem, size = 0x80000, scoped, tag = 'scratch operand']
  #allocation3 [shape = 'bf16[256,30]{1,0:T(16,128)(2,1)}', space=vmem, size = 0x10000, scoped, tag = 'scratch operand']
  #allocation4 [shape = 'f32[200,16]{1,0:T(8,128)}', space=vmem, size = 0x19000, scoped, tag = 'scratch operand']
  %s0 = inlined_call_operand.vmem [shape: bf16[2,1152,15], index: 0, kind: input, shape index: {}]
  %s1 = inlined_call_operand.vmem [shape: bf16[5,15,6], index: 1, kind: input, shape index: {}]
  %s2 = inlined_call_operand.vmem [shape: f32[1,6], index: 2, kind: input, shape index: {}]
  %s3 = inlined_call_operand.vmem [shape: bf16[5,30,16], index: 3, kind: input, shape index: {}]
  %s4 = inlined_call_operand.vmem [shape: f32[1,16], index: 4, kind: input, shape index: {}]
  %s5 = inlined_call_operand.vmem [shape: bf16[5,80,120], index: 5, kind: input, shape index: {}]
  %s6 = inlined_call_operand.vmem [shape: f32[1,120], index: 6, kind: input, shape index: {}]
  %s7 = inlined_call_operand.vmem [shape: bf16[120,84], index: 7, kind: input, shape index: {}]
  %s8 = inlined_call_operand.vmem [shape: f32[1,84], index: 8, kind: input, shape index: {}]
  %s9 = inlined_call_operand.vmem [shape: bf16[84,128], index: 9, kind: input, shape index: {}]
  %s10 = inlined_call_operand.vmem [shape: f32[1,128], index: 10, kind: input, shape index: {}]
  %s11 = inlined_call_operand.vmem [shape: f32[2,8,128], index: 11, kind: output, shape index: {}]
  %s12 = sld [smem:[#allocation0]]
  $region77: #{lenet_forward.1} parent=0
    _
  %s14 = ssub.s32 1, %s12
  %s15 = scalar_select 0, %s14, %s12
  loop: start=0, step=1, limit=4
  $region2: #{lenet_forward.1} parent=0 // loop_pre_header
    _
  $region3: #{lenet_forward.1} parent=0 // loop_header
    %s17 = sphi 0, %s21
    %p18 = scmp.ge.s32.totalorder %s17, 4
    %s27 = sphi 0, %s29
    %s30 = sphi 0, %s27
    %s31 = sphi 0, %s30
    %s47 = sphi 0, %s31
    %s51 = sphi 0, %s51
    %s53 = sphi 0, %s51
    %s54 = sphi 0, %s53
    %s68 = sphi 0, %s54
    %s72 = sphi 0, %s72
    %s74 = sphi 0, %s72
    %s75 = sphi 0, %s74
    %s89 = sphi 0, %s75
    %s93 = sphi 0, %s93
    %s95 = sphi 0, %s93
    %s96 = sphi 0, %s95
    %s110 = sphi 0, %s96
    %s114 = sphi 0, %s114
    %s116 = sphi 0, %s114
    %s117 = sphi 0, %s116
    %s131 = sphi 0, %s117
    %s135 = sphi 0, %s135
    %s137 = sphi 0, %s135
    %s138 = sphi 0, %s137
    %s152 = sphi 0, %s138
    %s156 = sphi 0, %s156
    %s158 = sphi 0, %s156
    %s159 = sphi 0, %s158
    %s173 = sphi 0, %s159
    %s177 = sphi 0, %s177
    %s179 = sphi 0, %s177
    %s180 = sphi 0, %s179
    %s194 = sphi 0, %s180
    %s198 = sphi 0, %s198
    %s200 = sphi 0, %s198
    %s201 = sphi 0, %s200
    %s215 = sphi 0, %s201
    %s219 = sphi 0, %s219
    %s221 = sphi 0, %s219
    %s222 = sphi 0, %s221
    %s236 = sphi 0, %s222
    %s240 = sphi 0, %s240
    %s242 = sphi 0, %s240
    %s243 = sphi 0, %s242
    %s257 = sphi 0, %s243
    %s263 = sphi 0, %s265
    %s266 = sphi 0, %s263
    %s267 = sphi 0, %s266
    %s283 = sphi 0, %s267
  $region4: #{lenet_forward.1} parent=0 // loop_header_branch
    %20 = sbr.rel (%p18) target = $region8
  $region5: #{lenet_forward.1} parent=0 // loop_body
    %s22 = ssub.s32 %s17, 1
    %s23 = ssub.s32 %s17, 2
    %s24 = sadd.s32 %s17, 1
    %s25 = ssub.s32 %s17, %s24
    %p26 = scmp.eq.s32.totalorder %s25, 0
    %s28 = sadd.s32 %s27, 1
    %s29 = scalar_select %p26, %s27, %s28
    %p32 = pneg %p26
    %p33 = scmp.eq.s32.totalorder %s17, 1
    %p34 = por %p32, %p33
    %p35 = scmp.ne.s32.totalorder %s27, %s30
    %p36 = scmp.eq.s32.totalorder %s17, 0
    %p37 = por %p35, %p36
    %p38 = scmp.ne.s32.totalorder %s27, %s30
    %p39 = scmp.eq.s32.totalorder %s22, 1
    %p40 = por %p38, %p39
    %p41 = scmp.ne.s32.totalorder %s30, %s31
    %p42 = scmp.eq.s32.totalorder %s22, 0
    %p43 = por %p41, %p42
    %p44 = scmp.ne.s32.totalorder %s30, %s31
    %p45 = scmp.eq.s32.totalorder %s23, 1
    %p46 = por %p44, %p45
    %p48 = scmp.ne.s32.totalorder %s31, %s47
    %p49 = scmp.eq.s32.totalorder %s23, 0
    %p50 = por %p48, %p49
    %s52 = sadd.s32 %s51, 1
    %p55 = scmp.eq.s32.totalorder %s17, 1
    %p56 = scmp.ne.s32.totalorder %s51, %s53
    %p57 = scmp.eq.s32.totalorder %s17, 0
    %p58 = por %p56, %p57
    %p59 = scmp.ne.s32.totalorder %s51, %s53
    %p60 = scmp.eq.s32.totalorder %s22, 1
    %p61 = por %p59, %p60
    %p62 = scmp.ne.s32.totalorder %s53, %s54
    %p63 = scmp.eq.s32.totalorder %s22, 0
    %p64 = por %p62, %p63
    %p65 = scmp.ne.s32.totalorder %s53, %s54
    %p66 = scmp.eq.s32.totalorder %s23, 1
    %p67 = por %p65, %p66
    %p69 = scmp.ne.s32.totalorder %s54, %s68
    %p70 = scmp.eq.s32.totalorder %s23, 0
    %p71 = por %p69, %p70
    %s73 = sadd.s32 %s72, 1
    %p76 = scmp.eq.s32.totalorder %s17, 1
    %p77 = scmp.ne.s32.totalorder %s72, %s74
    %p78 = scmp.eq.s32.totalorder %s17, 0
    %p79 = por %p77, %p78
    %p80 = scmp.ne.s32.totalorder %s72, %s74
    %p81 = scmp.eq.s32.totalorder %s22, 1
    %p82 = por %p80, %p81
    %p83 = scmp.ne.s32.totalorder %s74, %s75
    %p84 = scmp.eq.s32.totalorder %s22, 0
    %p85 = por %p83, %p84
    %p86 = scmp.ne.s32.totalorder %s74, %s75
    %p87 = scmp.eq.s32.totalorder %s23, 1
    %p88 = por %p86, %p87
    %p90 = scmp.ne.s32.totalorder %s75, %s89
    %p91 = scmp.eq.s32.totalorder %s23, 0
    %p92 = por %p90, %p91
    %s94 = sadd.s32 %s93, 1
    %p97 = scmp.eq.s32.totalorder %s17, 1
    %p98 = scmp.ne.s32.totalorder %s93, %s95
    %p99 = scmp.eq.s32.totalorder %s17, 0
    %p100 = por %p98, %p99
    %p101 = scmp.ne.s32.totalorder %s93, %s95
    %p102 = scmp.eq.s32.totalorder %s22, 1
    %p103 = por %p101, %p102
    %p104 = scmp.ne.s32.totalorder %s95, %s96
    %p105 = scmp.eq.s32.totalorder %s22, 0
    %p106 = por %p104, %p105
    %p107 = scmp.ne.s32.totalorder %s95, %s96
    %p108 = scmp.eq.s32.totalorder %s23, 1
    %p109 = por %p107, %p108
    %p111 = scmp.ne.s32.totalorder %s96, %s110
    %p112 = scmp.eq.s32.totalorder %s23, 0
    %p113 = por %p111, %p112
    %s115 = sadd.s32 %s114, 1
    %p118 = scmp.eq.s32.totalorder %s17, 1
    %p119 = scmp.ne.s32.totalorder %s114, %s116
    %p120 = scmp.eq.s32.totalorder %s17, 0
    %p121 = por %p119, %p120
    %p122 = scmp.ne.s32.totalorder %s114, %s116
    %p123 = scmp.eq.s32.totalorder %s22, 1
    %p124 = por %p122, %p123
    %p125 = scmp.ne.s32.totalorder %s116, %s117
    %p126 = scmp.eq.s32.totalorder %s22, 0
    %p127 = por %p125, %p126
    %p128 = scmp.ne.s32.totalorder %s116, %s117
    %p129 = scmp.eq.s32.totalorder %s23, 1
    %p130 = por %p128, %p129
    %p132 = scmp.ne.s32.totalorder %s117, %s131
    %p133 = scmp.eq.s32.totalorder %s23, 0
    %p134 = por %p132, %p133
    %s136 = sadd.s32 %s135, 1
    %p139 = scmp.eq.s32.totalorder %s17, 1
    %p140 = scmp.ne.s32.totalorder %s135, %s137
    %p141 = scmp.eq.s32.totalorder %s17, 0
    %p142 = por %p140, %p141
    %p143 = scmp.ne.s32.totalorder %s135, %s137
    %p144 = scmp.eq.s32.totalorder %s22, 1
    %p145 = por %p143, %p144
    %p146 = scmp.ne.s32.totalorder %s137, %s138
    %p147 = scmp.eq.s32.totalorder %s22, 0
    %p148 = por %p146, %p147
    %p149 = scmp.ne.s32.totalorder %s137, %s138
    %p150 = scmp.eq.s32.totalorder %s23, 1
    %p151 = por %p149, %p150
    %p153 = scmp.ne.s32.totalorder %s138, %s152
    %p154 = scmp.eq.s32.totalorder %s23, 0
    %p155 = por %p153, %p154
    %s157 = sadd.s32 %s156, 1
    %p160 = scmp.eq.s32.totalorder %s17, 1
    %p161 = scmp.ne.s32.totalorder %s156, %s158
    %p162 = scmp.eq.s32.totalorder %s17, 0
    %p163 = por %p161, %p162
    %p164 = scmp.ne.s32.totalorder %s156, %s158
    %p165 = scmp.eq.s32.totalorder %s22, 1
    %p166 = por %p164, %p165
    %p167 = scmp.ne.s32.totalorder %s158, %s159
    %p168 = scmp.eq.s32.totalorder %s22, 0
    %p169 = por %p167, %p168
    %p170 = scmp.ne.s32.totalorder %s158, %s159
    %p171 = scmp.eq.s32.totalorder %s23, 1
    %p172 = por %p170, %p171
    %p174 = scmp.ne.s32.totalorder %s159, %s173
    %p175 = scmp.eq.s32.totalorder %s23, 0
    %p176 = por %p174, %p175
    %s178 = sadd.s32 %s177, 1
    %p181 = scmp.eq.s32.totalorder %s17, 1
    %p182 = scmp.ne.s32.totalorder %s177, %s179
    %p183 = scmp.eq.s32.totalorder %s17, 0
    %p184 = por %p182, %p183
    %p185 = scmp.ne.s32.totalorder %s177, %s179
    %p186 = scmp.eq.s32.totalorder %s22, 1
    %p187 = por %p185, %p186
    %p188 = scmp.ne.s32.totalorder %s179, %s180
    %p189 = scmp.eq.s32.totalorder %s22, 0
    %p190 = por %p188, %p189
    %p191 = scmp.ne.s32.totalorder %s179, %s180
    %p192 = scmp.eq.s32.totalorder %s23, 1
    %p193 = por %p191, %p192
    %p195 = scmp.ne.s32.totalorder %s180, %s194
    %p196 = scmp.eq.s32.totalorder %s23, 0
    %p197 = por %p195, %p196
    %s199 = sadd.s32 %s198, 1
    %p202 = scmp.eq.s32.totalorder %s17, 1
    %p203 = scmp.ne.s32.totalorder %s198, %s200
    %p204 = scmp.eq.s32.totalorder %s17, 0
    %p205 = por %p203, %p204
    %p206 = scmp.ne.s32.totalorder %s198, %s200
    %p207 = scmp.eq.s32.totalorder %s22, 1
    %p208 = por %p206, %p207
    %p209 = scmp.ne.s32.totalorder %s200, %s201
    %p210 = scmp.eq.s32.totalorder %s22, 0
    %p211 = por %p209, %p210
    %p212 = scmp.ne.s32.totalorder %s200, %s201
    %p213 = scmp.eq.s32.totalorder %s23, 1
    %p214 = por %p212, %p213
    %p216 = scmp.ne.s32.totalorder %s201, %s215
    %p217 = scmp.eq.s32.totalorder %s23, 0
    %p218 = por %p216, %p217
    %s220 = sadd.s32 %s219, 1
    %p223 = scmp.eq.s32.totalorder %s17, 1
    %p224 = scmp.ne.s32.totalorder %s219, %s221
    %p225 = scmp.eq.s32.totalorder %s17, 0
    %p226 = por %p224, %p225
    %p227 = scmp.ne.s32.totalorder %s219, %s221
    %p228 = scmp.eq.s32.totalorder %s22, 1
    %p229 = por %p227, %p228
    %p230 = scmp.ne.s32.totalorder %s221, %s222
    %p231 = scmp.eq.s32.totalorder %s22, 0
    %p232 = por %p230, %p231
    %p233 = scmp.ne.s32.totalorder %s221, %s222
    %p234 = scmp.eq.s32.totalorder %s23, 1
    %p235 = por %p233, %p234
    %p237 = scmp.ne.s32.totalorder %s222, %s236
    %p238 = scmp.eq.s32.totalorder %s23, 0
    %p239 = por %p237, %p238
    %s241 = sadd.s32 %s240, 1
    %p244 = scmp.eq.s32.totalorder %s17, 1
    %p245 = scmp.ne.s32.totalorder %s240, %s242
    %p246 = scmp.eq.s32.totalorder %s17, 0
    %p247 = por %p245, %p246
    %p248 = scmp.ne.s32.totalorder %s240, %s242
    %p249 = scmp.eq.s32.totalorder %s22, 1
    %p250 = por %p248, %p249
    %p251 = scmp.ne.s32.totalorder %s242, %s243
    %p252 = scmp.eq.s32.totalorder %s22, 0
    %p253 = por %p251, %p252
    %p254 = scmp.ne.s32.totalorder %s242, %s243
    %p255 = scmp.eq.s32.totalorder %s23, 1
    %p256 = por %p254, %p255
    %p258 = scmp.ne.s32.totalorder %s243, %s257
    %p259 = scmp.eq.s32.totalorder %s23, 0
    %p260 = por %p258, %p259
    %s261 = ssub.s32 %s17, %s24
    %p262 = scmp.eq.s32.totalorder %s261, 0
    %s264 = sadd.s32 %s263, 1
    %s265 = scalar_select %p262, %s263, %s264
    %p268 = pneg %p262
    %p269 = scmp.eq.s32.totalorder %s17, 1
    %p270 = por %p268, %p269
    %p271 = scmp.ne.s32.totalorder %s263, %s266
    %p272 = scmp.eq.s32.totalorder %s17, 0
    %p273 = por %p271, %p272
    %p274 = scmp.ne.s32.totalorder %s263, %s266
    %p275 = scmp.eq.s32.totalorder %s22, 1
    %p276 = por %p274, %p275
    %p277 = scmp.ne.s32.totalorder %s266, %s267
    %p278 = scmp.eq.s32.totalorder %s22, 0
    %p279 = por %p277, %p278
    %p280 = scmp.ne.s32.totalorder %s266, %s267
    %p281 = scmp.eq.s32.totalorder %s23, 1
    %p282 = por %p280, %p281
    %p284 = scmp.ne.s32.totalorder %s267, %s283
    %p285 = scmp.eq.s32.totalorder %s23, 0
    %p286 = por %p284, %p285
    %p287 = scmp.le.s32.totalorder 1, %s17
    %p288 = scmp.lt.s32.totalorder %s17, 3
    %p289 = pnand %p287, %p288
    %p290 = pneg %p289
    // Predicated region
    $region9: #{lenet_forward.1} parent=5 // pred_check
      _
    $region10: #{lenet_forward.1} parent=5 // pred_check_branch
      %292 = sbr.rel (%p289) target = $region12
    $region11: #{lenet_forward.1} parent=5 // pred_region
      %s293 = ssub.s32 %s17, 1
      // Predicated region
      $region13: #{lenet_forward.1} parent=11 // pred_check
        %p294 = pneg %p64
      $region14: #{lenet_forward.1} parent=11 // pred_check_branch
        %296 = sbr.rel (%p294) target = $region16
      $region15: #{lenet_forward.1} parent=11 // pred_region
        _
      $region16: #{lenet_forward.1} parent=11 // pred_fallthru
        _
      // Predicated region
      $region17: #{lenet_forward.1} parent=11 // pred_check
        %p297 = pneg %p85
      $region18: #{lenet_forward.1} parent=11 // pred_check_branch
        %299 = sbr.rel (%p297) target = $region20
      $region19: #{lenet_forward.1} parent=11 // pred_region
        _
      $region20: #{lenet_forward.1} parent=11 // pred_fallthru
        _
      // Predicated region
      $region21: #{lenet_forward.1} parent=11 // pred_check
        %p300 = pneg %p106
      $region22: #{lenet_forward.1} parent=11 // pred_check_branch
        %302 = sbr.rel (%p300) target = $region24
      $region23: #{lenet_forward.1} parent=11 // pred_region
        _
      $region24: #{lenet_forward.1} parent=11 // pred_fallthru
        _
      // Predicated region
      $region25: #{lenet_forward.1} parent=11 // pred_check
        %p303 = pneg %p127
      $region26: #{lenet_forward.1} parent=11 // pred_check_branch
        %305 = sbr.rel (%p303) target = $region28
      $region27: #{lenet_forward.1} parent=11 // pred_region
        _
      $region28: #{lenet_forward.1} parent=11 // pred_fallthru
        _
      // Predicated region
      $region29: #{lenet_forward.1} parent=11 // pred_check
        %p306 = pneg %p148
      $region30: #{lenet_forward.1} parent=11 // pred_check_branch
        %308 = sbr.rel (%p306) target = $region32
      $region31: #{lenet_forward.1} parent=11 // pred_region
        _
      $region32: #{lenet_forward.1} parent=11 // pred_fallthru
        _
      // Predicated region
      $region33: #{lenet_forward.1} parent=11 // pred_check
        %p309 = pneg %p169
      $region34: #{lenet_forward.1} parent=11 // pred_check_branch
        %311 = sbr.rel (%p309) target = $region36
      $region35: #{lenet_forward.1} parent=11 // pred_region
        _
      $region36: #{lenet_forward.1} parent=11 // pred_fallthru
        _
      // Predicated region
      $region37: #{lenet_forward.1} parent=11 // pred_check
        %p312 = pneg %p190
      $region38: #{lenet_forward.1} parent=11 // pred_check_branch
        %314 = sbr.rel (%p312) target = $region40
      $region39: #{lenet_forward.1} parent=11 // pred_region
        _
      $region40: #{lenet_forward.1} parent=11 // pred_fallthru
        _
      // Predicated region
      $region41: #{lenet_forward.1} parent=11 // pred_check
        %p315 = pneg %p211
      $region42: #{lenet_forward.1} parent=11 // pred_check_branch
        %317 = sbr.rel (%p315) target = $region44
      $region43: #{lenet_forward.1} parent=11 // pred_region
        _
      $region44: #{lenet_forward.1} parent=11 // pred_fallthru
        _
      // Predicated region
      $region45: #{lenet_forward.1} parent=11 // pred_check
        %p318 = pneg %p232
      $region46: #{lenet_forward.1} parent=11 // pred_check_branch
        %320 = sbr.rel (%p318) target = $region48
      $region47: #{lenet_forward.1} parent=11 // pred_region
        _
      $region48: #{lenet_forward.1} parent=11 // pred_fallthru
        _
      // Predicated region
      $region49: #{lenet_forward.1} parent=11 // pred_check
        %p321 = pneg %p253
      $region50: #{lenet_forward.1} parent=11 // pred_check_branch
        %323 = sbr.rel (%p321) target = $region52
      $region51: #{lenet_forward.1} parent=11 // pred_region
        _
      $region52: #{lenet_forward.1} parent=11 // pred_fallthru
        _
    $region12: #{lenet_forward.1} parent=5 // pred_fallthru
      _
    %p324 = scmp.lt.s32.totalorder %s17, 2
    // Predicated region
    $region53: #{lenet_forward.1} parent=5 // pred_check
      %p325 = pneg %p324
    $region54: #{lenet_forward.1} parent=5 // pred_check_branch
      %327 = sbr.rel (%p325) target = $region56
    $region55: #{lenet_forward.1} parent=5 // pred_region
      // Predicated region
      $region57: #{lenet_forward.1} parent=55 // pred_check
        %p328 = pneg %p37
      $region58: #{lenet_forward.1} parent=55 // pred_check_branch
        %330 = sbr.rel (%p328) target = $region60
      $region59: #{lenet_forward.1} parent=55 // pred_region
        %p331 = scmp.lt.s32.totalorder %s17, 1
        %s332 = scalar_select %p331, %s17, 1
        %s333 = smul.addr %s332, 144
        %s334 = smul.addr %s333, 4
        %s335 = scalar_lea.vmem %s0, %s334
      $region60: #{lenet_forward.1} parent=55 // pred_fallthru
        _
    $region56: #{lenet_forward.1} parent=5 // pred_fallthru
      _
    %p336 = scmp.le.s32.totalorder 1, %s17
    %p337 = scmp.lt.s32.totalorder %s17, 3
    %p338 = pnand %p336, %p337
    %p339 = pneg %p338
    // Predicated region
    $region61: #{lenet_forward.1} parent=5 // pred_check
      _
    $region62: #{lenet_forward.1} parent=5 // pred_check_branch
      %341 = sbr.rel (%p338) target = $region64
    $region63: #{lenet_forward.1} parent=5 // pred_region
      %s342 = ssub.s32 %s17, 1
      %p343 = scmp.lt.s32.totalorder %s22, 1
      %s344 = scalar_select %p343, %s22, 1
      %s345 = smul.addr %s344, 144
      %s346 = smul.addr %s345, 4
      %s347 = scalar_lea.vmem %s0, %s346
      %p348 = pneg %p43
      %p349 = pneg %p40
      %p350 = pneg %p64
      %p351 = pneg %p61
      %p352 = pneg %p85
      %p353 = pneg %p82
      %p354 = pneg %p106
      %p355 = pneg %p103
      %p356 = pneg %p127
      %p357 = pneg %p124
      %p358 = pneg %p148
      %p359 = pneg %p145
      %p360 = pneg %p169
      %p361 = pneg %p166
      %p362 = pneg %p190
      %p363 = pneg %p187
      %p364 = pneg %p211
      %p365 = pneg %p208
      %p366 = pneg %p232
      %p367 = pneg %p229
      %p368 = pneg %p253
      %p369 = pneg %p250
      %p370 = pneg %p279
      %p371 = pneg %p276
      %p372 = scmp.lt.s32.totalorder %s22, 1
      %s373 = scalar_select %p372, %s22, 1
      %s374 = smul.addr %s373, 8
      %s375 = scalar_lea.vmem %s11, %s374
      %p376 = scmp.lt.s32.totalorder %s22, 1
      %s377 = scalar_select %p376, %s22, 1
      %s378 = smul.addr %s377, 144
      %s379 = smul.addr %s378, 4
      %s380 = scalar_lea.vmem %s0, %s379
      %p381 = scmp.lt.s32.totalorder %s22, 1
      %s382 = scalar_select %p381, %s22, 1
      %s383 = smul.addr %s382, 8
      %s384 = scalar_lea.vmem %s11, %s383
      %v386 = vld [vmem:[%s380] sm:$0xf]
      %v387 = vld [vmem:[%s380 + $0x4] sm:$0xf]
      %v388 = vld [vmem:[%s380 + $0x8] sm:$0xf]
      %v389 = vld [vmem:[%s380 + $0xc] sm:$0xf]
      %v390 = vld [vmem:[%s380 + $0x10] sm:$0xf]
      %v391 = vld [vmem:[%s380 + $0x14] sm:$0xf]
      %v392 = vld [vmem:[%s380 + $0x18] sm:$0xf]
      %v393 = vld [vmem:[%s380 + $0x1c] sm:$0xf]
      %v394 = vld [vmem:[%s380 + $0x20] sm:$0xf]
      %v395 = vld [vmem:[%s380 + $0x24] sm:$0xf]
      %v396 = vld [vmem:[%s380 + $0x28] sm:$0xf]
      %v397 = vld [vmem:[%s380 + $0x2c] sm:$0xf]
      %v398 = vld [vmem:[%s380 + $0x30] sm:$0xf]
      %v399 = vld [vmem:[%s380 + $0x34] sm:$0xf]
      %v400 = vld [vmem:[%s380 + $0x38] sm:$0xf]
      %v401 = vld [vmem:[%s380 + $0x3c] sm:$0xf]
      %v402 = vld [vmem:[%s380 + $0x40] sm:$0xf]
      %v403 = vld [vmem:[%s380 + $0x44] sm:$0xf]
      %v404 = vld [vmem:[%s380 + $0x48] sm:$0xf]
      %v405 = vld [vmem:[%s380 + $0x4c] sm:$0xf]
      %v406 = vld [vmem:[%s380 + $0x50] sm:$0xf]
      %v407 = vld [vmem:[%s380 + $0x54] sm:$0xf]
      %v408 = vld [vmem:[%s380 + $0x58] sm:$0xf]
      %v409 = vld [vmem:[%s380 + $0x5c] sm:$0xf]
      %v410 = vld [vmem:[%s380 + $0x60] sm:$0xf]
      %v411 = vld [vmem:[%s380 + $0x64] sm:$0xf]
      %v412 = vld [vmem:[%s380 + $0x68] sm:$0xf]
      %v413 = vld [vmem:[%s380 + $0x6c] sm:$0xf]
      %v414 = vld [vmem:[%s380 + $0x70] sm:$0xf]
      %v415 = vld [vmem:[%s380 + $0x74] sm:$0xf]
      %v416 = vld [vmem:[%s380 + $0x78] sm:$0xf]
      %v417 = vld [vmem:[%s380 + $0x7c] sm:$0xf]
      %v418 = vld [vmem:[%s380 + $0x80] sm:$0xf]
      %v419 = vld [vmem:[%s380 + $0x84] sm:$0xf]
      %v420 = vld [vmem:[%s380 + $0x88] sm:$0xf]
      %v421 = vld [vmem:[%s380 + $0x8c] sm:$0xf]
      %v422 = vld [vmem:[%s380 + $0x90] sm:$0xf]
      %v423 = vld [vmem:[%s380 + $0x94] sm:$0xf]
      %v424 = vld [vmem:[%s380 + $0x98] sm:$0xf]
      %v425 = vld [vmem:[%s380 + $0x9c] sm:$0xf]
      %v426 = vld [vmem:[%s380 + $0xa0] sm:$0xf]
      %v427 = vld [vmem:[%s380 + $0xa4] sm:$0xf]
      %v428 = vld [vmem:[%s380 + $0xa8] sm:$0xf]
      %v429 = vld [vmem:[%s380 + $0xac] sm:$0xf]
      %v430 = vld [vmem:[%s380 + $0xb0] sm:$0xf]
      %v431 = vld [vmem:[%s380 + $0xb4] sm:$0xf]
      %v432 = vld [vmem:[%s380 + $0xb8] sm:$0xf]
      %v433 = vld [vmem:[%s380 + $0xbc] sm:$0xf]
      %v434 = vld [vmem:[%s380 + $0xc0] sm:$0xf]
      %v435 = vld [vmem:[%s380 + $0xc4] sm:$0xf]
      %v436 = vld [vmem:[%s380 + $0xc8] sm:$0xf]
      %v437 = vld [vmem:[%s380 + $0xcc] sm:$0xf]
      %v438 = vld [vmem:[%s380 + $0xd0] sm:$0xf]
      %v439 = vld [vmem:[%s380 + $0xd4] sm:$0xf]
      %v440 = vld [vmem:[%s380 + $0xd8] sm:$0xf]
      %v441 = vld [vmem:[%s380 + $0xdc] sm:$0xf]
      %v442 = vld [vmem:[%s380 + $0xe0] sm:$0xf]
      %v443 = vld [vmem:[%s380 + $0xe4] sm:$0xf]
      %v444 = vld [vmem:[%s380 + $0xe8] sm:$0xf]
      %v445 = vld [vmem:[%s380 + $0xec] sm:$0xf]
      %v446 = vld [vmem:[%s380 + $0xf0] sm:$0xf]
      %v447 = vld [vmem:[%s380 + $0xf4] sm:$0xf]
      %v448 = vld [vmem:[%s380 + $0xf8] sm:$0xf]
      %v449 = vld [vmem:[%s380 + $0xfc] sm:$0xf]
      %v450 = vld [vmem:[%s380 + $0x100] sm:$0xf]
      %v451 = vld [vmem:[%s380 + $0x104] sm:$0xf]
      %v452 = vld [vmem:[%s380 + $0x108] sm:$0xf]
      %v453 = vld [vmem:[%s380 + $0x10c] sm:$0xf]
      %v454 = vld [vmem:[%s380 + $0x110] sm:$0xf]
      %v455 = vld [vmem:[%s380 + $0x114] sm:$0xf]
      %v456 = vld [vmem:[%s380 + $0x118] sm:$0xf]
      %v457 = vld [vmem:[%s380 + $0x11c] sm:$0xf]
      %v458 = vld [vmem:[%s380 + $0x120] sm:$0xf]
      %v459 = vld [vmem:[%s380 + $0x124] sm:$0xf]
      %v460 = vld [vmem:[%s380 + $0x128] sm:$0xf]
      %v461 = vld [vmem:[%s380 + $0x12c] sm:$0xf]
      %v462 = vld [vmem:[%s380 + $0x130] sm:$0xf]
      %v463 = vld [vmem:[%s380 + $0x134] sm:$0xf]
      %v464 = vld [vmem:[%s380 + $0x138] sm:$0xf]
      %v465 = vld [vmem:[%s380 + $0x13c] sm:$0xf]
      %v466 = vld [vmem:[%s380 + $0x140] sm:$0xf]
      %v467 = vld [vmem:[%s380 + $0x144] sm:$0xf]
      %v468 = vld [vmem:[%s380 + $0x148] sm:$0xf]
      %v469 = vld [vmem:[%s380 + $0x14c] sm:$0xf]
      %v470 = vld [vmem:[%s380 + $0x150] sm:$0xf]
      %v471 = vld [vmem:[%s380 + $0x154] sm:$0xf]
      %v472 = vld [vmem:[%s380 + $0x158] sm:$0xf]
      %v473 = vld [vmem:[%s380 + $0x15c] sm:$0xf]
      %v474 = vld [vmem:[%s380 + $0x160] sm:$0xf]
      %v475 = vld [vmem:[%s380 + $0x164] sm:$0xf]
      %v476 = vld [vmem:[%s380 + $0x168] sm:$0xf]
      %v477 = vld [vmem:[%s380 + $0x16c] sm:$0xf]
      %v478 = vld [vmem:[%s380 + $0x170] sm:$0xf]
      %v479 = vld [vmem:[%s380 + $0x174] sm:$0xf]
      %v480 = vld [vmem:[%s380 + $0x178] sm:$0xf]
      %v481 = vld [vmem:[%s380 + $0x17c] sm:$0xf]
      %v482 = vld [vmem:[%s380 + $0x180] sm:$0xf]
      %v483 = vld [vmem:[%s380 + $0x184] sm:$0xf]
      %v484 = vld [vmem:[%s380 + $0x188] sm:$0xf]
      %v485 = vld [vmem:[%s380 + $0x18c] sm:$0xf]
      %v486 = vld [vmem:[%s380 + $0x190] sm:$0xf]
      %v487 = vld [vmem:[%s380 + $0x194] sm:$0xf]
      %v488 = vld [vmem:[%s380 + $0x198] sm:$0xf]
      %v489 = vld [vmem:[%s380 + $0x19c] sm:$0xf]
      %v490 = vld [vmem:[%s380 + $0x1a0] sm:$0xf]
      %v491 = vld [vmem:[%s380 + $0x1a4] sm:$0xf]
      %v492 = vld [vmem:[%s380 + $0x1a8] sm:$0xf]
      %v493 = vld [vmem:[%s380 + $0x1ac] sm:$0xf]
      %v494 = vld [vmem:[%s380 + $0x1b0] sm:$0xf]
      %v495 = vld [vmem:[%s380 + $0x1b4] sm:$0xf]
      %v496 = vld [vmem:[%s380 + $0x1b8] sm:$0xf]
      %v497 = vld [vmem:[%s380 + $0x1bc] sm:$0xf]
      %v498 = vld [vmem:[%s380 + $0x1c0] sm:$0xf]
      %v499 = vld [vmem:[%s380 + $0x1c4] sm:$0xf]
      %v500 = vld [vmem:[%s380 + $0x1c8] sm:$0xf]
      %v501 = vld [vmem:[%s380 + $0x1cc] sm:$0xf]
      %v502 = vld [vmem:[%s380 + $0x1d0] sm:$0xf]
      %v503 = vld [vmem:[%s380 + $0x1d4] sm:$0xf]
      %v504 = vld [vmem:[%s380 + $0x1d8] sm:$0xf]
      %v505 = vld [vmem:[%s380 + $0x1dc] sm:$0xf]
      %v506 = vld [vmem:[%s380 + $0x1e0] sm:$0xf]
      %v507 = vld [vmem:[%s380 + $0x1e4] sm:$0xf]
      %v508 = vld [vmem:[%s380 + $0x1e8] sm:$0xf]
      %v509 = vld [vmem:[%s380 + $0x1ec] sm:$0xf]
      %v510 = vld [vmem:[%s380 + $0x1f0] sm:$0xf]
      %v511 = vld [vmem:[%s380 + $0x1f4] sm:$0xf]
      %v512 = vld [vmem:[%s380 + $0x1f8] sm:$0xf]
      %v513 = vld [vmem:[%s380 + $0x1fc] sm:$0xf]
      %v514 = vld [vmem:[%s1] sm:$0xf]
      %v515 = vld [vmem:[%s1 + $0x4] sm:$0xf]
      %v516 = vld [vmem:[%s380 + $0x200] sm:$0xf]
      %v517 = vld [vmem:[%s380 + $0x204] sm:$0xf]
      %v518 = vld [vmem:[%s380 + $0x208] sm:$0xf]
      %v519 = vld [vmem:[%s380 + $0x20c] sm:$0xf]
      %s520 = scalar_lea.vmem %s1, 8
      %v521 = vld [vmem:[%s520] sm:$0xf]
      %v522 = vld [vmem:[%s520 + $0x4] sm:$0xf]
      %v651 = vunpack.c.l.b16 %v390
      %v652 = vunpack.c.l.b16 %v391
      %v653 = vunpack.c.l.b16 %v392
      %v654 = vunpack.c.l.b16 %v393
      %v655 = vunpack.c.l.b16 %v394
      %v656 = vunpack.c.l.b16 %v395
      %v657 = vunpack.c.l.b16 %v396
      %v658 = vunpack.c.l.b16 %v397
      %v659 = vunpack.c.l.b16 %v398
      %v660 = vunpack.c.l.b16 %v399
      %v661 = vunpack.c.l.b16 %v400
      %v662 = vunpack.c.l.b16 %v401
      %v663 = vunpack.c.l.b16 %v402
      %v664 = vunpack.c.l.b16 %v403
      %v665 = vunpack.c.l.b16 %v404
      %v666 = vunpack.c.l.b16 %v405
      %v667 = vunpack.c.l.b16 %v406
      %v668 = vunpack.c.l.b16 %v407
      %v669 = vunpack.c.l.b16 %v408
      %v670 = vunpack.c.l.b16 %v409
      %v671 = vunpack.c.l.b16 %v410
      %v672 = vunpack.c.l.b16 %v411
      %v673 = vunpack.c.l.b16 %v412
      %v674 = vunpack.c.l.b16 %v413
      %v675 = vunpack.c.l.b16 %v414
      %v676 = vunpack.c.l.b16 %v415
      %v677 = vunpack.c.l.b16 %v416
      %v678 = vunpack.c.l.b16 %v417
      %v679 = vunpack.c.l.b16 %v418
      %v680 = vunpack.c.l.b16 %v419
      %v681 = vunpack.c.l.b16 %v420
      %v682 = vunpack.c.l.b16 %v421
      %v683 = vunpack.c.l.b16 %v422
      %v684 = vunpack.c.l.b16 %v423
      %v685 = vunpack.c.l.b16 %v424
      %v686 = vunpack.c.l.b16 %v425
      %v687 = vunpack.c.l.b16 %v426
      %v688 = vunpack.c.l.b16 %v427
      %v689 = vunpack.c.l.b16 %v428
      %v690 = vunpack.c.l.b16 %v429
      %v691 = vunpack.c.l.b16 %v430
      %v692 = vunpack.c.l.b16 %v431
      %v693 = vunpack.c.l.b16 %v432
      %v694 = vunpack.c.l.b16 %v433
      %v695 = vunpack.c.l.b16 %v434
      %v696 = vunpack.c.l.b16 %v435
      %v697 = vunpack.c.l.b16 %v436
      %v698 = vunpack.c.l.b16 %v437
      %v699 = vunpack.c.l.b16 %v438
      %v700 = vunpack.c.l.b16 %v439
      %v701 = vunpack.c.l.b16 %v440
      %v702 = vunpack.c.l.b16 %v441
      %v703 = vunpack.c.l.b16 %v442
      %v704 = vunpack.c.l.b16 %v443
      %v705 = vunpack.c.l.b16 %v444
      %v706 = vunpack.c.l.b16 %v445
      %v707 = vunpack.c.l.b16 %v446
      %v708 = vunpack.c.l.b16 %v447
      %v709 = vunpack.c.l.b16 %v448
      %v710 = vunpack.c.l.b16 %v449
      %v711 = vunpack.c.l.b16 %v450
      %v712 = vunpack.c.l.b16 %v451
      %v713 = vunpack.c.l.b16 %v452
      %v714 = vunpack.c.l.b16 %v453
      %v715 = vunpack.c.l.b16 %v454
      %v716 = vunpack.c.l.b16 %v455
      %v717 = vunpack.c.l.b16 %v456
      %v718 = vunpack.c.l.b16 %v457
      %v719 = vunpack.c.l.b16 %v458
      %v720 = vunpack.c.l.b16 %v459
      %v721 = vunpack.c.l.b16 %v460
      %v722 = vunpack.c.l.b16 %v461
      %v723 = vunpack.c.l.b16 %v462
      %v724 = vunpack.c.l.b16 %v463
      %v725 = vunpack.c.l.b16 %v464
      %v726 = vunpack.c.l.b16 %v465
      %v727 = vunpack.c.l.b16 %v466
      %v728 = vunpack.c.l.b16 %v467
      %v729 = vunpack.c.l.b16 %v468
      %v730 = vunpack.c.l.b16 %v469
      %v731 = vunpack.c.l.b16 %v470
      %v732 = vunpack.c.l.b16 %v471
      %v733 = vunpack.c.l.b16 %v472
      %v734 = vunpack.c.l.b16 %v473
      %v735 = vunpack.c.l.b16 %v474
      %v736 = vunpack.c.l.b16 %v475
      %v737 = vunpack.c.l.b16 %v476
      %v738 = vunpack.c.l.b16 %v477
      %v739 = vunpack.c.l.b16 %v478
      %v740 = vunpack.c.l.b16 %v479
      %v741 = vunpack.c.l.b16 %v480
      %v742 = vunpack.c.l.b16 %v481
      %v743 = vunpack.c.l.b16 %v482
      %v744 = vunpack.c.l.b16 %v483
      %v745 = vunpack.c.l.b16 %v484
      %v746 = vunpack.c.l.b16 %v485
      %v747 = vunpack.c.l.b16 %v486
      %v748 = vunpack.c.l.b16 %v487
      %v749 = vunpack.c.l.b16 %v488
      %v750 = vunpack.c.l.b16 %v489
      %v751 = vunpack.c.l.b16 %v490
      %v752 = vunpack.c.l.b16 %v491
      %v753 = vunpack.c.l.b16 %v492
      %v754 = vunpack.c.l.b16 %v493
      %v755 = vunpack.c.l.b16 %v494
      %v756 = vunpack.c.l.b16 %v495
      %v757 = vunpack.c.l.b16 %v496
      %v758 = vunpack.c.l.b16 %v497
      %v759 = vunpack.c.l.b16 %v498
      %v760 = vunpack.c.l.b16 %v499
      %v761 = vunpack.c.l.b16 %v500
      %v762 = vunpack.c.l.b16 %v501
      %v763 = vunpack.c.l.b16 %v502
      %v764 = vunpack.c.l.b16 %v503
      %v765 = vunpack.c.l.b16 %v504
      %v766 = vunpack.c.l.b16 %v505
      %v767 = vunpack.c.l.b16 %v506
      %v768 = vunpack.c.l.b16 %v507
      %v769 = vunpack.c.l.b16 %v508
      %v770 = vunpack.c.l.b16 %v509
      %v771 = vunpack.c.l.b16 %v510
      %v772 = vunpack.c.l.b16 %v511
      %v773 = vunpack.c.l.b16 %v512
      %v774 = vunpack.c.l.b16 %v513
      %v775 = vunpack.c.l.b16 %v516
      %v776 = vunpack.c.l.b16 %v517
      %v777 = vunpack.c.l.b16 %v518
      %v778 = vunpack.c.l.b16 %v519
      %v779 = vpack.c.b16 %v652, %v651
      %v780 = vpack.c.b16 %v654, %v653
      %v781 = vpack.c.b16 %v656, %v655
      %v782 = vpack.c.b16 %v658, %v657
      %v783 = vpack.c.b16 %v660, %v659
      %v784 = vpack.c.b16 %v662, %v661
      %v785 = vpack.c.b16 %v664, %v663
      %v786 = vpack.c.b16 %v666, %v665
      %v787 = vpack.c.b16 %v668, %v667
      %v788 = vpack.c.b16 %v670, %v669
      %v789 = vpack.c.b16 %v672, %v671
      %v790 = vpack.c.b16 %v674, %v673
      %v791 = vpack.c.b16 %v676, %v675
      %v792 = vpack.c.b16 %v678, %v677
      %v793 = vpack.c.b16 %v680, %v679
      %v794 = vpack.c.b16 %v682, %v681
      %v795 = vpack.c.b16 %v684, %v683
      %v796 = vpack.c.b16 %v686, %v685
      %v797 = vpack.c.b16 %v688, %v687
      %v798 = vpack.c.b16 %v690, %v689
      %v799 = vpack.c.b16 %v692, %v691
      %v800 = vpack.c.b16 %v694, %v693
      %v801 = vpack.c.b16 %v696, %v695
      %v802 = vpack.c.b16 %v698, %v697
      %v803 = vpack.c.b16 %v700, %v699
      %v804 = vpack.c.b16 %v702, %v701
      %v805 = vpack.c.b16 %v704, %v703
      %v806 = vpack.c.b16 %v706, %v705
      %v807 = vpack.c.b16 %v708, %v707
      %v808 = vpack.c.b16 %v710, %v709
      %v809 = vpack.c.b16 %v712, %v711
      %v810 = vpack.c.b16 %v714, %v713
      %v811 = vpack.c.b16 %v716, %v715
      %v812 = vpack.c.b16 %v718, %v717
      %v813 = vpack.c.b16 %v720, %v719
      %v814 = vpack.c.b16 %v722, %v721
      %v815 = vpack.c.b16 %v724, %v723
      %v816 = vpack.c.b16 %v726, %v725
      %v817 = vpack.c.b16 %v728, %v727
      %v818 = vpack.c.b16 %v730, %v729
      %v819 = vpack.c.b16 %v732, %v731
      %v820 = vpack.c.b16 %v734, %v733
      %v821 = vpack.c.b16 %v736, %v735
      %v822 = vpack.c.b16 %v738, %v737
      %v823 = vpack.c.b16 %v740, %v739
      %v824 = vpack.c.b16 %v742, %v741
      %v825 = vpack.c.b16 %v744, %v743
      %v826 = vpack.c.b16 %v746, %v745
      %v827 = vpack.c.b16 %v748, %v747
      %v828 = vpack.c.b16 %v750, %v749
      %v829 = vpack.c.b16 %v752, %v751
      %v830 = vpack.c.b16 %v754, %v753
      %v831 = vpack.c.b16 %v756, %v755
      %v832 = vpack.c.b16 %v758, %v757
      %v833 = vpack.c.b16 %v760, %v759
      %v834 = vpack.c.b16 %v762, %v761
      %v835 = vpack.c.b16 %v764, %v763
      %v836 = vpack.c.b16 %v766, %v765
      %v837 = vpack.c.b16 %v768, %v767
      %v838 = vpack.c.b16 %v770, %v769
      %v839 = vpack.c.b16 %v772, %v771
      %v840 = vpack.c.b16 %v774, %v773
      %v841 = vpack.c.b16 %v776, %v775
      %v842 = vpack.c.b16 %v778, %v777
      %v845 = vunpack.c.l.b16 %v521
      %v846 = vunpack.c.l.b16 %v522
      %v847 = vpack.c.b16 %v846, %v845
      %vm848 = vcmask 121856
      %v850 = vsel %vm848, %v779, 0
      %v853 = vsel %vm848, %v780, 0
      %v856 = vsel %vm848, %v781, 0
      %v859 = vsel %vm848, %v782, 0
      %v862 = vsel %vm848, %v783, 0
      %v865 = vsel %vm848, %v784, 0
      %v868 = vsel %vm848, %v785, 0
      %v871 = vsel %vm848, %v786, 0
      %v874 = vsel %vm848, %v787, 0
      %v877 = vsel %vm848, %v788, 0
      %v880 = vsel %vm848, %v789, 0
      %v883 = vsel %vm848, %v790, 0
      %v886 = vsel %vm848, %v791, 0
      %v889 = vsel %vm848, %v792, 0
      %v892 = vsel %vm848, %v793, 0
      %v895 = vsel %vm848, %v794, 0
      %v898 = vsel %vm848, %v795, 0
      %v901 = vsel %vm848, %v796, 0
      %v904 = vsel %vm848, %v797, 0
      %v907 = vsel %vm848, %v798, 0
      %v910 = vsel %vm848, %v799, 0
      %v913 = vsel %vm848, %v800, 0
      %v916 = vsel %vm848, %v801, 0
      %v919 = vsel %vm848, %v802, 0
      %v922 = vsel %vm848, %v803, 0
      %v925 = vsel %vm848, %v804, 0
      %v928 = vsel %vm848, %v805, 0
      %v931 = vsel %vm848, %v806, 0
      %v934 = vsel %vm848, %v807, 0
      %v937 = vsel %vm848, %v808, 0
      %v940 = vsel %vm848, %v809, 0
      %v943 = vsel %vm848, %v810, 0
      %v946 = vsel %vm848, %v811, 0
      %v949 = vsel %vm848, %v812, 0
      %v952 = vsel %vm848, %v813, 0
      %v955 = vsel %vm848, %v814, 0
      %v958 = vsel %vm848, %v815, 0
      %v961 = vsel %vm848, %v816, 0
      %v964 = vsel %vm848, %v817, 0
      %v967 = vsel %vm848, %v818, 0
      %v970 = vsel %vm848, %v819, 0
      %v973 = vsel %vm848, %v820, 0
      %v976 = vsel %vm848, %v821, 0
      %v979 = vsel %vm848, %v822, 0
      %v982 = vsel %vm848, %v823, 0
      %v985 = vsel %vm848, %v824, 0
      %v988 = vsel %vm848, %v825, 0
      %v991 = vsel %vm848, %v826, 0
      %v994 = vsel %vm848, %v827, 0
      %v997 = vsel %vm848, %v828, 0
      %v1000 = vsel %vm848, %v829, 0
      %v1003 = vsel %vm848, %v830, 0
      %v1006 = vsel %vm848, %v831, 0
      %v1009 = vsel %vm848, %v832, 0
      %v1012 = vsel %vm848, %v833, 0
      %v1015 = vsel %vm848, %v834, 0
      %v1018 = vsel %vm848, %v835, 0
      %v1021 = vsel %vm848, %v836, 0
      %v1024 = vsel %vm848, %v837, 0
      %v1027 = vsel %vm848, %v838, 0
      %v1030 = vsel %vm848, %v839, 0
      %v1033 = vsel %vm848, %v840, 0
      %v1036 = vsel %vm848, %v841, 0
      %v1039 = vsel %vm848, %v842, 0
      %vm1041 = vcmask 1046528
      %vm1042 = vcmask 1047552
      %v1043 = vsel %vm1041, 4294967295, 65535
      %v1044 = vsel %vm1042, %v1043, 0
      %v1046 = vand.u32 %v847, %v1044
      %1048 = vmatprep.subr.bf16.mxu0 0
      %1049 = vmatpush1.bf16.msra.mxu0 %v1046
      %1050 = vmatprep.subr.bf16.mxu0 0
      %1051 = vmatpush1.bf16.msra.mxu0 0
      %1052 = vmatprep.subr.bf16.mxu0 0
      %1053 = vmatpush1.bf16.msra.mxu0 0
      %1054 = vmatprep.subr.bf16.mxu0 0
      %1055 = vmatpush1.bf16.msra.mxu0 0
      %1056 = vmatprep.subr.bf16.mxu0 0
      %1057 = vmatpush1.bf16.msra.mxu0 0
      %1058 = vmatprep.subr.bf16.mxu0 0
      %1059 = vmatpush1.bf16.msra.mxu0 0
      %1060 = vmatprep.subr.bf16.mxu0 0
      %1061 = vmatpush1.bf16.msra.mxu0 0
      %1062 = vmatprep.subr.bf16.mxu0 0
      %1063 = vmatpush1.bf16.msra.mxu0 0
      %1064 = vmatprep.subr.bf16.mxu0 0
      %1065 = vmatpush1.bf16.msra.mxu0 0
      %1066 = vmatprep.subr.bf16.mxu0 0
      %1067 = vmatpush1.bf16.msra.mxu0 0
      %1068 = vmatprep.subr.bf16.mxu0 0
      %1069 = vmatpush1.bf16.msra.mxu0 0
      %1070 = vmatprep.subr.bf16.mxu0 0
      %1071 = vmatpush1.bf16.msra.mxu0 0
      %1072 = vmatprep.subr.bf16.mxu0 0
      %1073 = vmatpush1.bf16.msra.mxu0 0
      %1074 = vmatprep.subr.bf16.mxu0 0
      %1075 = vmatpush1.bf16.msra.mxu0 0
      %1076 = vmatprep.subr.bf16.mxu0 0
      %1077 = vmatpush1.bf16.msra.mxu0 0
      %1078 = vmatprep.subr.bf16.mxu0 0
      %1079 = vmatpush1.bf16.msra.mxu0 0
      %1080 = vmatprep.mubr.bf16.mxu0 0
      %1081 = vmatmul.mubr.bf16.gmra.mrb[0].mxu0 %v850
      %v1082 = vpop.f32.mrb[0].mxu0
      %v1083 = vadd.f32 0.0, %v1082
      %v1084 = vpop.f32.mrb[0].mxu0
      %v1085 = vpop.f32.mrb[0].mxu0
      %v1086 = vadd.f32 0.0, %v1085
      %v1087 = vpop.f32.mrb[0].mxu0
      %1088 = vmatprep.mubr.bf16.mxu0 0
      %1089 = vmatmul.mubr.bf16.gmra.mrb[0].mxu0 %v853
      %v1090 = vpop.f32.mrb[0].mxu0
      %v1091 = vadd.f32 0.0, %v1090
      %v1092 = vpop.f32.mrb[0].mxu0
      %v1093 = vpop.f32.mrb[0].mxu0
      %v1094 = vadd.f32 0.0, %v1093
      %v1095 = vpop.f32.mrb[0].mxu0
      %1096 = vmatprep.mubr.bf16.mxu0 0
      %1097 = vmatmul.mubr.bf16.gmra.mrb[0].mxu0 %v856
      %v1098 = vpop.f32.mrb[0].mxu0
      %v1099 = vadd.f32 0.0, %v1098
      %v1100 = vpop.f32.mrb[0].mxu0
      %v1101 = vpop.f32.mrb[0].mxu0
      %v1102 = vadd.f32 0.0, %v1101
      %v1103 = vpop.f32.mrb[0].mxu0
      %1104 = vmatprep.mubr.bf16.mxu0 0
      %1105 = vmatmul.mubr.bf16.gmra.mrb[0].mxu0 %v859
      %v1106 = vpop.f32.mrb[0].mxu0
      %v1107 = vadd.f32 0.0, %v1106
      %v1108 = vpop.f32.mrb[0].mxu0
      %v1109 = vpop.f32.mrb[0].mxu0
      %v1110 = vadd.f32 0.0, %v1109
      %v1111 = vpop.f32.mrb[0].mxu0
      %1112 = vmatprep.mubr.bf16.mxu0 0
      %1113 = vmatmul.mubr.bf16.gmra.mrb[0].mxu0 %v862
      %v1114 = vpop.f32.mrb[0].mxu0
      %v1115 = vadd.f32 0.0, %v1114
      %v1116 = vpop.f32.mrb[0].mxu0
      %v1117 = vpop.f32.mrb[0].mxu0
      %v1118 = vadd.f32 0.0, %v1117
      %v1119 = vpop.f32.mrb[0].mxu0
      %1120 = vmatprep.mubr.bf16.mxu0 0
      %1121 = vmatmul.mubr.bf16.gmra.mrb[0].mxu0 %v865
      %v1122 = vpop.f32.mrb[0].mxu0
      %v1123 = vadd.f32 0.0, %v1122
      %v1124 = vpop.f32.mrb[0].mxu0
      %v1125 = vpop.f32.mrb[0].mxu0
      %v1126 = vadd.f32 0.0, %v1125
      %v1127 = vpop.f32.mrb[0].mxu0
      %1128 = vmatprep.mubr.bf16.mxu0 0
      %1129 = vmatmul.mubr.bf16.gmra.mrb[0].mxu0 %v868
      %v1130 = vpop.f32.mrb[0].mxu0
      %v1131 = vadd.f32 0.0, %v1130
      %v1132 = vpop.f32.mrb[0].mxu0
      %v1133 = vpop.f32.mrb[0].mxu0
      %v1134 = vadd.f32 0.0, %v1133
      %v1135 = vpop.f32.mrb[0].mxu0
      %1136 = vmatprep.mubr.bf16.mxu0 0
      %1137 = vmatmul.mubr.bf16.gmra.mrb[0].mxu0 %v871
      %v1138 = vpop.f32.mrb[0].mxu0
      %v1139 = vadd.f32 0.0, %v1138
      %v1140 = vpop.f32.mrb[0].mxu0
      %v1141 = vpop.f32.mrb[0].mxu0
      %v1142 = vadd.f32 0.0, %v1141
      %v1143 = vpop.f32.mrb[0].mxu0
      %1144 = vmatprep.mubr.bf16.mxu0 0
      %1145 = vmatmul.mubr.bf16.gmra.mrb[0].mxu0 %v874
      %v1146 = vpop.f32.mrb[0].mxu0
      %v1147 = vadd.f32 0.0, %v1146
      %v1148 = vpop.f32.mrb[0].mxu0
      %v1149 = vpop.f32.mrb[0].mxu0
      %v1150 = vadd.f32 0.0, %v1149
      %v1151 = vpop.f32.mrb[0].mxu0
      %1152 = vmatprep.mubr.bf16.mxu0 0
      %1153 = vmatmul.mubr.bf16.gmra.mrb[0].mxu0 %v877
      %v1154 = vpop.f32.mrb[0].mxu0
      %v1155 = vadd.f32 0.0, %v1154
      %v1156 = vpop.f32.mrb[0].mxu0
      %v1157 = vpop.f32.mrb[0].mxu0
      %v1158 = vadd.f32 0.0, %v1157
      %v1159 = vpop.f32.mrb[0].mxu0
      %1160 = vmatprep.mubr.bf16.mxu0 0
      %1161 = vmatmul.mubr.bf16.gmra.mrb[0].mxu0 %v880
      %v1162 = vpop.f32.mrb[0].mxu0
      %v1163 = vadd.f32 0.0, %v1162
      %v1164 = vpop.f32.mrb[0].mxu0
      %v1165 = vpop.f32.mrb[0].mxu0
      %v1166 = vadd.f32 0.0, %v1165
      %v1167 = vpop.f32.mrb[0].mxu0
      %1168 = vmatprep.mubr.bf16.mxu0 0
      %1169 = vmatmul.mubr.bf16.gmra.mrb[0].mxu0 %v883
      %v1170 = vpop.f32.mrb[0].mxu0
      %v1171 = vadd.f32 0.0, %v1170
      %v1172 = vpop.f32.mrb[0].mxu0
      %v1173 = vpop.f32.mrb[0].mxu0
      %v1174 = vadd.f32 0.0, %v1173
      %v1175 = vpop.f32.mrb[0].mxu0
      %1176 = vmatprep.mubr.bf16.mxu0 0
      %1177 = vmatmul.mubr.bf16.gmra.mrb[0].mxu0 %v886
      %v1178 = vpop.f32.mrb[0].mxu0
      %v1179 = vadd.f32 0.0, %v1178
      %v1180 = vpop.f32.mrb[0].mxu0
      %v1181 = vpop.f32.mrb[0].mxu0
      %v1182 = vadd.f32 0.0, %v1181
      %v1183 = vpop.f32.mrb[0].mxu0
      %1184 = vmatprep.mubr.bf16.mxu0 0
      %1185 = vmatmul.mubr.bf16.gmra.mrb[0].mxu0 %v889
      %v1186 = vpop.f32.mrb[0].mxu0
      %v1187 = vadd.f32 0.0, %v1186
      %v1188 = vpop.f32.mrb[0].mxu0
      %v1189 = vpop.f32.mrb[0].mxu0
      %v1190 = vadd.f32 0.0, %v1189
      %v1191 = vpop.f32.mrb[0].mxu0
      %1192 = vmatprep.mubr.bf16.mxu0 0
      %1193 = vmatmul.mubr.bf16.gmra.mrb[0].mxu0 %v892
      %v1194 = vpop.f32.mrb[0].mxu0
      %v1195 = vadd.f32 0.0, %v1194
      %v1196 = vpop.f32.mrb[0].mxu0
      %v1197 = vpop.f32.mrb[0].mxu0
      %v1198 = vadd.f32 0.0, %v1197
      %v1199 = vpop.f32.mrb[0].mxu0
      %1200 = vmatprep.mubr.bf16.mxu0 0
      %1201 = vmatmul.mubr.bf16.gmra.mrb[0].mxu0 %v895
      %v1202 = vpop.f32.mrb[0].mxu0
      %v1203 = vadd.f32 0.0, %v1202
      %v1204 = vpop.f32.mrb[0].mxu0
      %v1205 = vpop.f32.mrb[0].mxu0
      %v1206 = vadd.f32 0.0, %v1205
      %v1207 = vpop.f32.mrb[0].mxu0
      %1208 = vmatprep.mubr.bf16.mxu0 0
      %1209 = vmatmul.mubr.bf16.gmra.mrb[0].mxu0 %v898
      %v1210 = vpop.f32.mrb[0].mxu0
      %v1211 = vadd.f32 0.0, %v1210
      %v1212 = vpop.f32.mrb[0].mxu0
      %v1213 = vpop.f32.mrb[0].mxu0
      %v1214 = vadd.f32 0.0, %v1213
      %v1215 = vpop.f32.mrb[0].mxu0
      %1216 = vmatprep.mubr.bf16.mxu0 0
      %1217 = vmatmul.mubr.bf16.gmra.mrb[0].mxu0 %v901
      %v1218 = vpop.f32.mrb[0].mxu0
      %v1219 = vadd.f32 0.0, %v1218
      %v1220 = vpop.f32.mrb[0].mxu0
      %v1221 = vpop.f32.mrb[0].mxu0
      %v1222 = vadd.f32 0.0, %v1221
      %v1223 = vpop.f32.mrb[0].mxu0
      %1224 = vmatprep.mubr.bf16.mxu0 0
      %1225 = vmatmul.mubr.bf16.gmra.mrb[0].mxu0 %v904
      %v1226 = vpop.f32.mrb[0].mxu0
      %v1227 = vadd.f32 0.0, %v1226
      %v1228 = vpop.f32.mrb[0].mxu0
      %v1229 = vpop.f32.mrb[0].mxu0
      %v1230 = vadd.f32 0.0, %v1229
      %v1231 = vpop.f32.mrb[0].mxu0
      %1232 = vmatprep.mubr.bf16.mxu0 0
      %1233 = vmatmul.mubr.bf16.gmra.mrb[0].mxu0 %v907
      %v1234 = vpop.f32.mrb[0].mxu0
      %v1235 = vadd.f32 0.0, %v1234
      %v1236 = vpop.f32.mrb[0].mxu0
      %v1237 = vpop.f32.mrb[0].mxu0
      %v1238 = vadd.f32 0.0, %v1237
      %v1239 = vpop.f32.mrb[0].mxu0
      %1240 = vmatprep.mubr.bf16.mxu0 0
      %1241 = vmatmul.mubr.bf16.gmra.mrb[0].mxu0 %v910
      %v1242 = vpop.f32.mrb[0].mxu0
      %v1243 = vadd.f32 0.0, %v1242
      %v1244 = vpop.f32.mrb[0].mxu0
      %v1245 = vpop.f32.mrb[0].mxu0
      %v1246 = vadd.f32 0.0, %v1245
      %v1247 = vpop.f32.mrb[0].mxu0
      %1248 = vmatprep.mubr.bf16.mxu0 0
      %1249 = vmatmul.mubr.bf16.gmra.mrb[0].mxu0 %v913
      %v1250 = vpop.f32.mrb[0].mxu0
      %v1251 = vadd.f32 0.0, %v1250
      %v1252 = vpop.f32.mrb[0].mxu0
      %v1253 = vpop.f32.mrb[0].mxu0
      %v1254 = vadd.f32 0.0, %v1253
      %v1255 = vpop.f32.mrb[0].mxu0
      %1256 = vmatprep.mubr.bf16.mxu0 0
      %1257 = vmatmul.mubr.bf16.gmra.mrb[0].mxu0 %v916
      %v1258 = vpop.f32.mrb[0].mxu0
      %v1259 = vadd.f32 0.0, %v1258
      %v1260 = vpop.f32.mrb[0].mxu0
      %v1261 = vpop.f32.mrb[0].mxu0
      %v1262 = vadd.f32 0.0, %v1261
      %v1263 = vpop.f32.mrb[0].mxu0
      %1264 = vmatprep.mubr.bf16.mxu0 0
      %1265 = vmatmul.mubr.bf16.gmra.mrb[0].mxu0 %v919
      %v1266 = vpop.f32.mrb[0].mxu0
      %v1267 = vadd.f32 0.0, %v1266
      %v1268 = vpop.f32.mrb[0].mxu0
      %v1269 = vpop.f32.mrb[0].mxu0
      %v1270 = vadd.f32 0.0, %v1269
      %v1271 = vpop.f32.mrb[0].mxu0
      %1272 = vmatprep.mubr.bf16.mxu0 0
      %1273 = vmatmul.mubr.bf16.gmra.mrb[0].mxu0 %v922
      %v1274 = vpop.f32.mrb[0].mxu0
      %v1275 = vadd.f32 0.0, %v1274
      %v1276 = vpop.f32.mrb[0].mxu0
      %v1277 = vpop.f32.mrb[0].mxu0
      %v1278 = vadd.f32 0.0, %v1277
      %v1279 = vpop.f32.mrb[0].mxu0
      %1280 = vmatprep.mubr.bf16.mxu0 0
      %1281 = vmatmul.mubr.bf16.gmra.mrb[0].mxu0 %v925
      %v1282 = vpop.f32.mrb[0].mxu0
      %v1283 = vadd.f32 0.0, %v1282
      %v1284 = vpop.f32.mrb[0].mxu0
      %v1285 = vpop.f32.mrb[0].mxu0
      %v1286 = vadd.f32 0.0, %v1285
      %v1287 = vpop.f32.mrb[0].mxu0
      %1288 = vmatprep.mubr.bf16.mxu0 0
      %1289 = vmatmul.mubr.bf16.gmra.mrb[0].mxu0 %v928
      %v1290 = vpop.f32.mrb[0].mxu0
      %v1291 = vadd.f32 0.0, %v1290
      %v1292 = vpop.f32.mrb[0].mxu0
      %v1293 = vpop.f32.mrb[0].mxu0
      %v1294 = vadd.f32 0.0, %v1293
      %v1295 = vpop.f32.mrb[0].mxu0
      %1296 = vmatprep.mubr.bf16.mxu0 0
      %1297 = vmatmul.mubr.bf16.gmra.mrb[0].mxu0 %v931
      %v1298 = vpop.f32.mrb[0].mxu0
      %v1299 = vadd.f32 0.0, %v1298
      %v1300 = vpop.f32.mrb[0].mxu0
      %v1301 = vpop.f32.mrb[0].mxu0
      %v1302 = vadd.f32 0.0, %v1301
      %v1303 = vpop.f32.mrb[0].mxu0
      %1304 = vmatprep.mubr.bf16.mxu0 0
      %1305 = vmatmul.mubr.bf16.gmra.mrb[0].mxu0 %v934
      %v1306 = vpop.f32.mrb[0].mxu0
      %v1307 = vadd.f32 0.0, %v1306
      %v1308 = vpop.f32.mrb[0].mxu0
      %v1309 = vpop.f32.mrb[0].mxu0
      %v1310 = vadd.f32 0.0, %v1309
      %v1311 = vpop.f32.mrb[0].mxu0
      %1312 = vmatprep.mubr.bf16.mxu0 0
      %1313 = vmatmul.mubr.bf16.gmra.mrb[0].mxu0 %v937
      %v1314 = vpop.f32.mrb[0].mxu0
      %v1315 = vadd.f32 0.0, %v1314
      %v1316 = vpop.f32.mrb[0].mxu0
      %v1317 = vpop.f32.mrb[0].mxu0
      %v1318 = vadd.f32 0.0, %v1317
      %v1319 = vpop.f32.mrb[0].mxu0
      %1320 = vmatprep.mubr.bf16.mxu0 0
      %1321 = vmatmul.mubr.bf16.gmra.mrb[0].mxu0 %v940
      %v1322 = vpop.f32.mrb[0].mxu0
      %v1323 = vadd.f32 0.0, %v1322
      %v1324 = vpop.f32.mrb[0].mxu0
      %v1325 = vpop.f32.mrb[0].mxu0
      %v1326 = vadd.f32 0.0, %v1325
      %v1327 = vpop.f32.mrb[0].mxu0
      %1328 = vmatprep.mubr.bf16.mxu0 0
      %1329 = vmatmul.mubr.bf16.gmra.mrb[0].mxu0 %v943
      %v1330 = vpop.f32.mrb[0].mxu0
      %v1331 = vadd.f32 0.0, %v1330
      %v1332 = vpop.f32.mrb[0].mxu0
      %v1333 = vpop.f32.mrb[0].mxu0
      %v1334 = vadd.f32 0.0, %v1333
      %v1335 = vpop.f32.mrb[0].mxu0
      %1336 = vmatprep.mubr.bf16.mxu0 0
      %1337 = vmatmul.mubr.bf16.gmra.mrb[0].mxu0 %v946
      %v1338 = vpop.f32.mrb[0].mxu0
      %v1339 = vadd.f32 0.0, %v1338
      %v1340 = vpop.f32.mrb[0].mxu0
      %v1341 = vpop.f32.mrb[0].mxu0
      %v1342 = vadd.f32 0.0, %v1341
      %v1343 = vpop.f32.mrb[0].mxu0
      %1344 = vmatprep.mubr.bf16.mxu0 0
      %1345 = vmatmul.mubr.bf16.gmra.mrb[0].mxu0 %v949
      %v1346 = vpop.f32.mrb[0].mxu0
      %v1347 = vadd.f32 0.0, %v1346
      %v1348 = vpop.f32.mrb[0].mxu0
      %v1349 = vpop.f32.mrb[0].mxu0
      %v1350 = vadd.f32 0.0, %v1349
      %v1351 = vpop.f32.mrb[0].mxu0
      %1352 = vmatprep.mubr.bf16.mxu0 0
      %1353 = vmatmul.mubr.bf16.gmra.mrb[0].mxu0 %v952
      %v1354 = vpop.f32.mrb[0].mxu0
      %v1355 = vadd.f32 0.0, %v1354
      %v1356 = vpop.f32.mrb[0].mxu0
      %v1357 = vpop.f32.mrb[0].mxu0
      %v1358 = vadd.f32 0.0, %v1357
      %v1359 = vpop.f32.mrb[0].mxu0
      %1360 = vmatprep.mubr.bf16.mxu0 0
      %1361 = vmatmul.mubr.bf16.gmra.mrb[0].mxu0 %v955
      %v1362 = vpop.f32.mrb[0].mxu0
      %v1363 = vadd.f32 0.0, %v1362
      %v1364 = vpop.f32.mrb[0].mxu0
      %v1365 = vpop.f32.mrb[0].mxu0
      %v1366 = vadd.f32 0.0, %v1365
      %v1367 = vpop.f32.mrb[0].mxu0
      %1368 = vmatprep.mubr.bf16.mxu0 0
      %1369 = vmatmul.mubr.bf16.gmra.mrb[0].mxu0 %v958
      %v1370 = vpop.f32.mrb[0].mxu0
      %v1371 = vadd.f32 0.0, %v1370
      %v1372 = vpop.f32.mrb[0].mxu0
      %v1373 = vpop.f32.mrb[0].mxu0
      %v1374 = vadd.f32 0.0, %v1373
      %v1375 = vpop.f32.mrb[0].mxu0
      %1376 = vmatprep.mubr.bf16.mxu0 0
      %1377 = vmatmul.mubr.bf16.gmra.mrb[0].mxu0 %v961
      %v1378 = vpop.f32.mrb[0].mxu0
      %v1379 = vadd.f32 0.0, %v1378
      %v1380 = vpop.f32.mrb[0].mxu0
      %v1381 = vpop.f32.mrb[0].mxu0
      %v1382 = vadd.f32 0.0, %v1381
      %v1383 = vpop.f32.mrb[0].mxu0
      %1384 = vmatprep.mubr.bf16.mxu0 0
      %1385 = vmatmul.mubr.bf16.gmra.mrb[0].mxu0 %v964
      %v1386 = vpop.f32.mrb[0].mxu0
      %v1387 = vadd.f32 0.0, %v1386
      %v1388 = vpop.f32.mrb[0].mxu0
      %v1389 = vpop.f32.mrb[0].mxu0
      %v1390 = vadd.f32 0.0, %v1389
      %v1391 = vpop.f32.mrb[0].mxu0
      %1392 = vmatprep.mubr.bf16.mxu0 0
      %1393 = vmatmul.mubr.bf16.gmra.mrb[0].mxu0 %v967
      %v1394 = vpop.f32.mrb[0].mxu0
      %v1395 = vadd.f32 0.0, %v1394
      %v1396 = vpop.f32.mrb[0].mxu0
      %v1397 = vpop.f32.mrb[0].mxu0
      %v1398 = vadd.f32 0.0, %v1397
      %v1399 = vpop.f32.mrb[0].mxu0
      %1400 = vmatprep.mubr.bf16.mxu0 0
      %1401 = vmatmul.mubr.bf16.gmra.mrb[0].mxu0 %v970
      %v1402 = vpop.f32.mrb[0].mxu0
      %v1403 = vadd.f32 0.0, %v1402
      %v1404 = vpop.f32.mrb[0].mxu0
      %v1405 = vpop.f32.mrb[0].mxu0
      %v1406 = vadd.f32 0.0, %v1405
      %v1407 = vpop.f32.mrb[0].mxu0
      %1408 = vmatprep.mubr.bf16.mxu0 0
      %1409 = vmatmul.mubr.bf16.gmra.mrb[0].mxu0 %v973
      %v1410 = vpop.f32.mrb[0].mxu0
      %v1411 = vadd.f32 0.0, %v1410
      %v1412 = vpop.f32.mrb[0].mxu0
      %v1413 = vpop.f32.mrb[0].mxu0
      %v1414 = vadd.f32 0.0, %v1413
      %v1415 = vpop.f32.mrb[0].mxu0
      %1416 = vmatprep.mubr.bf16.mxu0 0
      %1417 = vmatmul.mubr.bf16.gmra.mrb[0].mxu0 %v976
      %v1418 = vpop.f32.mrb[0].mxu0
      %v1419 = vadd.f32 0.0, %v1418
      %v1420 = vpop.f32.mrb[0].mxu0
      %v1421 = vpop.f32.mrb[0].mxu0
      %v1422 = vadd.f32 0.0, %v1421
      %v1423 = vpop.f32.mrb[0].mxu0
      %1424 = vmatprep.mubr.bf16.mxu0 0
      %1425 = vmatmul.mubr.bf16.gmra.mrb[0].mxu0 %v979
      %v1426 = vpop.f32.mrb[0].mxu0
      %v1427 = vadd.f32 0.0, %v1426
      %v1428 = vpop.f32.mrb[0].mxu0
      %v1429 = vpop.f32.mrb[0].mxu0
      %v1430 = vadd.f32 0.0, %v1429
      %v1431 = vpop.f32.mrb[0].mxu0
      %1432 = vmatprep.mubr.bf16.mxu0 0
      %1433 = vmatmul.mubr.bf16.gmra.mrb[0].mxu0 %v982
      %v1434 = vpop.f32.mrb[0].mxu0
      %v1435 = vadd.f32 0.0, %v1434
      %v1436 = vpop.f32.mrb[0].mxu0
      %v1437 = vpop.f32.mrb[0].mxu0
      %v1438 = vadd.f32 0.0, %v1437
      %v1439 = vpop.f32.mrb[0].mxu0
      %1440 = vmatprep.mubr.bf16.mxu0 0
      %1441 = vmatmul.mubr.bf16.gmra.mrb[0].mxu0 %v985
      %v1442 = vpop.f32.mrb[0].mxu0
      %v1443 = vadd.f32 0.0, %v1442
      %v1444 = vpop.f32.mrb[0].mxu0
      %v1445 = vpop.f32.mrb[0].mxu0
      %v1446 = vadd.f32 0.0, %v1445
      %v1447 = vpop.f32.mrb[0].mxu0
      %1448 = vmatprep.mubr.bf16.mxu0 0
      %1449 = vmatmul.mubr.bf16.gmra.mrb[0].mxu0 %v988
      %v1450 = vpop.f32.mrb[0].mxu0
      %v1451 = vadd.f32 0.0, %v1450
      %v1452 = vpop.f32.mrb[0].mxu0
      %v1453 = vpop.f32.mrb[0].mxu0
      %v1454 = vadd.f32 0.0, %v1453
      %v1455 = vpop.f32.mrb[0].mxu0
      %1456 = vmatprep.mubr.bf16.mxu0 0
      %1457 = vmatmul.mubr.bf16.gmra.mrb[0].mxu0 %v991
      %v1458 = vpop.f32.mrb[0].mxu0
      %v1459 = vadd.f32 0.0, %v1458
      %v1460 = vpop.f32.mrb[0].mxu0
      %v1461 = vpop.f32.mrb[0].mxu0
      %v1462 = vadd.f32 0.0, %v1461
      %v1463 = vpop.f32.mrb[0].mxu0
      %1464 = vmatprep.mubr.bf16.mxu0 0
      %1465 = vmatmul.mubr.bf16.gmra.mrb[0].mxu0 %v994
      %v1466 = vpop.f32.mrb[0].mxu0
      %v1467 = vadd.f32 0.0, %v1466
      %v1468 = vpop.f32.mrb[0].mxu0
      %v1469 = vpop.f32.mrb[0].mxu0
      %v1470 = vadd.f32 0.0, %v1469
      %v1471 = vpop.f32.mrb[0].mxu0
      %1472 = vmatprep.mubr.bf16.mxu0 0
      %1473 = vmatmul.mubr.bf16.gmra.mrb[0].mxu0 %v997
      %v1474 = vpop.f32.mrb[0].mxu0
      %v1475 = vadd.f32 0.0, %v1474
      %v1476 = vpop.f32.mrb[0].mxu0
      %v1477 = vpop.f32.mrb[0].mxu0
      %v1478 = vadd.f32 0.0, %v1477
      %v1479 = vpop.f32.mrb[0].mxu0
      %1480 = vmatprep.mubr.bf16.mxu0 0
      %1481 = vmatmul.mubr.bf16.gmra.mrb[0].mxu0 %v1000
      %v1482 = vpop.f32.mrb[0].mxu0
      %v1483 = vadd.f32 0.0, %v1482
      %v1484 = vpop.f32.mrb[0].mxu0
      %v1485 = vpop.f32.mrb[0].mxu0
      %v1486 = vadd.f32 0.0, %v1485
      %v1487 = vpop.f32.mrb[0].mxu0
      %1488 = vmatprep.mubr.bf16.mxu0 0
      %1489 = vmatmul.mubr.bf16.gmra.mrb[0].mxu0 %v1003
      %v1490 = vpop.f32.mrb[0].mxu0
      %v1491 = vadd.f32 0.0, %v1490
      %v1492 = vpop.f32.mrb[0].mxu0
      %v1493 = vpop.f32.mrb[0].mxu0
      %v1494 = vadd.f32 0.0, %v1493
      %v1495 = vpop.f32.mrb[0].mxu0
      %1496 = vmatprep.mubr.bf16.mxu0 0
      %1497 = vmatmul.mubr.bf16.gmra.mrb[0].mxu0 %v1006
      %v1498 = vpop.f32.mrb[0].mxu0
      %v1499 = vadd.f32 0.0, %v1498
      %v1500 = vpop.f32.mrb[0].mxu0
      %v1501 = vpop.f32.mrb[0].mxu0
      %v1502 = vadd.f32 0.0, %v1501
      %v1503 = vpop.f32.mrb[0].mxu0
      %1504 = vmatprep.mubr.bf16.mxu0 0
      %1505 = vmatmul.mubr.bf16.gmra.mrb[0].mxu0 %v1009
      %v1506 = vpop.f32.mrb[0].mxu0
      %v1507 = vadd.f32 0.0, %v1506
      %v1508 = vpop.f32.mrb[0].mxu0
      %v1509 = vpop.f32.mrb[0].mxu0
      %v1510 = vadd.f32 0.0, %v1509
      %v1511 = vpop.f32.mrb[0].mxu0
      %1512 = vmatprep.mubr.bf16.mxu0 0
      %1513 = vmatmul.mubr.bf16.gmra.mrb[0].mxu0 %v1012
      %v1514 = vpop.f32.mrb[0].mxu0
      %v1515 = vadd.f32 0.0, %v1514
      %v1516 = vpop.f32.mrb[0].mxu0
      %v1517 = vpop.f32.mrb[0].mxu0
      %v1518 = vadd.f32 0.0, %v1517
      %v1519 = vpop.f32.mrb[0].mxu0
      %1520 = vmatprep.mubr.bf16.mxu0 0
      %1521 = vmatmul.mubr.bf16.gmra.mrb[0].mxu0 %v1015
      %v1522 = vpop.f32.mrb[0].mxu0
      %v1523 = vadd.f32 0.0, %v1522
      %v1524 = vpop.f32.mrb[0].mxu0
      %v1525 = vpop.f32.mrb[0].mxu0
      %v1526 = vadd.f32 0.0, %v1525
      %v1527 = vpop.f32.mrb[0].mxu0
      %1528 = vmatprep.mubr.bf16.mxu0 0
      %1529 = vmatmul.mubr.bf16.gmra.mrb[0].mxu0 %v1018
      %v1530 = vpop.f32.mrb[0].mxu0
      %v1531 = vadd.f32 0.0, %v1530
      %v1532 = vpop.f32.mrb[0].mxu0
      %v1533 = vpop.f32.mrb[0].mxu0
      %v1534 = vadd.f32 0.0, %v1533
      %v1535 = vpop.f32.mrb[0].mxu0
      %1536 = vmatprep.mubr.bf16.mxu0 0
      %1537 = vmatmul.mubr.bf16.gmra.mrb[0].mxu0 %v1021
      %v1538 = vpop.f32.mrb[0].mxu0
      %v1539 = vadd.f32 0.0, %v1538
      %v1540 = vpop.f32.mrb[0].mxu0
      %v1541 = vpop.f32.mrb[0].mxu0
      %v1542 = vadd.f32 0.0, %v1541
      %v1543 = vpop.f32.mrb[0].mxu0
      %1544 = vmatprep.mubr.bf16.mxu0 0
      %1545 = vmatmul.mubr.bf16.gmra.mrb[0].mxu0 %v1024
      %v1546 = vpop.f32.mrb[0].mxu0
      %v1547 = vadd.f32 0.0, %v1546
      %v1548 = vpop.f32.mrb[0].mxu0
      %v1549 = vpop.f32.mrb[0].mxu0
      %v1550 = vadd.f32 0.0, %v1549
      %v1551 = vpop.f32.mrb[0].mxu0
      %1552 = vmatprep.mubr.bf16.mxu0 0
      %1553 = vmatmul.mubr.bf16.gmra.mrb[0].mxu0 %v1027
      %v1554 = vpop.f32.mrb[0].mxu0
      %v1555 = vadd.f32 0.0, %v1554
      %v1556 = vpop.f32.mrb[0].mxu0
      %v1557 = vpop.f32.mrb[0].mxu0
      %v1558 = vadd.f32 0.0, %v1557
      %v1559 = vpop.f32.mrb[0].mxu0
      %1560 = vmatprep.mubr.bf16.mxu0 0
      %1561 = vmatmul.mubr.bf16.gmra.mrb[0].mxu0 %v1030
      %v1562 = vpop.f32.mrb[0].mxu0
      %v1563 = vadd.f32 0.0, %v1562
      %v1564 = vpop.f32.mrb[0].mxu0
      %v1565 = vpop.f32.mrb[0].mxu0
      %v1566 = vadd.f32 0.0, %v1565
      %v1567 = vpop.f32.mrb[0].mxu0
      %1568 = vmatprep.mubr.bf16.mxu0 0
      %1569 = vmatmul.mubr.bf16.gmra.mrb[0].mxu0 %v1033
      %v1570 = vpop.f32.mrb[0].mxu0
      %v1571 = vadd.f32 0.0, %v1570
      %v1572 = vpop.f32.mrb[0].mxu0
      %v1573 = vpop.f32.mrb[0].mxu0
      %v1574 = vadd.f32 0.0, %v1573
      %v1575 = vpop.f32.mrb[0].mxu0
      %1576 = vmatprep.mubr.bf16.mxu0 0
      %1577 = vmatmul.mubr.bf16.gmra.mrb[0].mxu0 %v1036
      %v1578 = vpop.f32.mrb[0].mxu0
      %v1579 = vadd.f32 0.0, %v1578
      %v1580 = vpop.f32.mrb[0].mxu0
      %v1581 = vpop.f32.mrb[0].mxu0
      %v1582 = vadd.f32 0.0, %v1581
      %v1583 = vpop.f32.mrb[0].mxu0
      %1584 = vmatprep.mubr.bf16.mxu0 0
      %1585 = vmatmul.mubr.bf16.gmra.mrb[0].mxu0 %v1039
      %v1586 = vpop.f32.mrb[0].mxu0
      %v1587 = vadd.f32 0.0, %v1586
      %v1588 = vpop.f32.mrb[0].mxu0
      %v1589 = vpop.f32.mrb[0].mxu0
      %v1590 = vadd.f32 0.0, %v1589
      %v1591 = vpop.f32.mrb[0].mxu0
      %1592 = vdwg.mxu0
      %v1597 = vunpack.c.l.b16 %v386
      %v1598 = vunpack.c.l.b16 %v387
      %v1599 = vunpack.c.l.b16 %v388
      %v1600 = vunpack.c.l.b16 %v389
      %v1601 = vpack.c.b16 %v1598, %v1597
      %v1602 = vpack.c.b16 %v1600, %v1599
      %v1605 = vunpack.c.l.b16 %v514
      %v1606 = vunpack.c.l.b16 %v515
      %v1607 = vpack.c.b16 %v1606, %v1605
      %v1609 = vsel %vm848, %v1601, 0
      %v1612 = vsel %vm848, %v1602, 0
      %v1615 = vand.u32 %v1607, %v1044
      %1617 = vmatprep.subr.bf16.mxu0 0
      %1618 = vmatpush1.bf16.msra.mxu0 %v1615
      %1619 = vmatprep.subr.bf16.mxu0 0
      %1620 = vmatpush1.bf16.msra.mxu0 0
      %1621 = vmatprep.subr.bf16.mxu0 0
      %1622 = vmatpush1.bf16.msra.mxu0 0
      %1623 = vmatprep.subr.bf16.mxu0 0
      %1624 = vmatpush1.bf16.msra.mxu0 0
      %1625 = vmatprep.subr.bf16.mxu0 0
      %1626 = vmatpush1.bf16.msra.mxu0 0
      %1627 = vmatprep.subr.bf16.mxu0 0
      %1628 = vmatpush1.bf16.msra.mxu0 0
      %1629 = vmatprep.subr.bf16.mxu0 0
      %1630 = vmatpush1.bf16.msra.mxu0 0
      %1631 = vmatprep.subr.bf16.mxu0 0
      %1632 = vmatpush1.bf16.msra.mxu0 0
      %1633 = vmatprep.subr.bf16.mxu0 0
      %1634 = vmatpush1.bf16.msra.mxu0 0
      %1635 = vmatprep.subr.bf16.mxu0 0
      %1636 = vmatpush1.bf16.msra.mxu0 0
      %1637 = vmatprep.subr.bf16.mxu0 0
      %1638 = vmatpush1.bf16.msra.mxu0 0
      %1639 = vmatprep.subr.bf16.mxu0 0
      %1640 = vmatpush1.bf16.msra.mxu0 0
      %1641 = vmatprep.subr.bf16.mxu0 0
      %1642 = vmatpush1.bf16.msra.mxu0 0
      %1643 = vmatprep.subr.bf16.mxu0 0
      %1644 = vmatpush1.bf16.msra.mxu0 0
      %1645 = vmatprep.subr.bf16.mxu0 0
      %1646 = vmatpush1.bf16.msra.mxu0 0
      %1647 = vmatprep.subr.bf16.mxu0 0
      %1648 = vmatpush1.bf16.msra.mxu0 0
      %1649 = vmatprep.mubr.bf16.mxu0 0
      %1650 = vmatmul.mubr.bf16.gmra.mrb[0].mxu0 %v1609
      %v1651 = vpop.f32.mrb[0].mxu0
      %v1652 = vadd.f32 %v1083, %v1651
      %v1653 = vpop.f32.mrb[0].mxu0
      %v1654 = vpop.f32.mrb[0].mxu0
      %v1655 = vadd.f32 %v1086, %v1654
      %v1656 = vpop.f32.mrb[0].mxu0
      %1657 = vmatprep.mubr.bf16.mxu0 0
      %1658 = vmatmul.mubr.bf16.gmra.mrb[0].mxu0 %v1612
      %v1659 = vpop.f32.mrb[0].mxu0
      %v1660 = vadd.f32 %v1091, %v1659
      %v1661 = vpop.f32.mrb[0].mxu0
      %v1662 = vpop.f32.mrb[0].mxu0
      %v1663 = vadd.f32 %v1094, %v1662
      %v1664 = vpop.f32.mrb[0].mxu0
      %1665 = vmatprep.mubr.bf16.mxu0 0
      %1666 = vmatmul.mubr.bf16.gmra.mrb[0].mxu0 %v850
      %v1667 = vpop.f32.mrb[0].mxu0
      %v1668 = vadd.f32 %v1099, %v1667
      %v1669 = vpop.f32.mrb[0].mxu0
      %v1670 = vpop.f32.mrb[0].mxu0
      %v1671 = vadd.f32 %v1102, %v1670
      %v1672 = vpop.f32.mrb[0].mxu0
      %1673 = vmatprep.mubr.bf16.mxu0 0
      %1674 = vmatmul.mubr.bf16.gmra.mrb[0].mxu0 %v853
      %v1675 = vpop.f32.mrb[0].mxu0
      %v1676 = vadd.f32 %v1107, %v1675
      %v1677 = vpop.f32.mrb[0].mxu0
      %v1678 = vpop.f32.mrb[0].mxu0
      %v1679 = vadd.f32 %v1110, %v1678
      %v1680 = vpop.f32.mrb[0].mxu0
      %1681 = vmatprep.mubr.bf16.mxu0 0
      %1682 = vmatmul.mubr.bf16.gmra.mrb[0].mxu0 %v856
      %v1683 = vpop.f32.mrb[0].mxu0
      %v1684 = vadd.f32 %v1115, %v1683
      %v1685 = vpop.f32.mrb[0].mxu0
      %v1686 = vpop.f32.mrb[0].mxu0
      %v1687 = vadd.f32 %v1118, %v1686
      %v1688 = vpop.f32.mrb[0].mxu0
      %1689 = vmatprep.mubr.bf16.mxu0 0
      %1690 = vmatmul.mubr.bf16.gmra.mrb[0].mxu0 %v859
      %v1691 = vpop.f32.mrb[0].mxu0
      %v1692 = vadd.f32 %v1123, %v1691
      %v1693 = vpop.f32.mrb[0].mxu0
      %v1694 = vpop.f32.mrb[0].mxu0
      %v1695 = vadd.f32 %v1126, %v1694
      %v1696 = vpop.f32.mrb[0].mxu0
      %1697 = vmatprep.mubr.bf16.mxu0 0
      %1698 = vmatmul.mubr.bf16.gmra.mrb[0].mxu0 %v862
      %v1699 = vpop.f32.mrb[0].mxu0
      %v1700 = vadd.f32 %v1131, %v1699
      %v1701 = vpop.f32.mrb[0].mxu0
      %v1702 = vpop.f32.mrb[0].mxu0
      %v1703 = vadd.f32 %v1134, %v1702
      %v1704 = vpop.f32.mrb[0].mxu0
      %1705 = vmatprep.mubr.bf16.mxu0 0
      %1706 = vmatmul.mubr.bf16.gmra.mrb[0].mxu0 %v865
      %v1707 = vpop.f32.mrb[0].mxu0
      %v1708 = vadd.f32 %v1139, %v1707
      %v1709 = vpop.f32.mrb[0].mxu0
      %v1710 = vpop.f32.mrb[0].mxu0
      %v1711 = vadd.f32 %v1142, %v1710
      %v1712 = vpop.f32.mrb[0].mxu0
      %1713 = vmatprep.mubr.bf16.mxu0 0
      %1714 = vmatmul.mubr.bf16.gmra.mrb[0].mxu0 %v868
      %v1715 = vpop.f32.mrb[0].mxu0
      %v1716 = vadd.f32 %v1147, %v1715
      %v1717 = vpop.f32.mrb[0].mxu0
      %v1718 = vpop.f32.mrb[0].mxu0
      %v1719 = vadd.f32 %v1150, %v1718
      %v1720 = vpop.f32.mrb[0].mxu0
      %1721 = vmatprep.mubr.bf16.mxu0 0
      %1722 = vmatmul.mubr.bf16.gmra.mrb[0].mxu0 %v871
      %v1723 = vpop.f32.mrb[0].mxu0
      %v1724 = vadd.f32 %v1155, %v1723
      %v1725 = vpop.f32.mrb[0].mxu0
      %v1726 = vpop.f32.mrb[0].mxu0
      %v1727 = vadd.f32 %v1158, %v1726
      %v1728 = vpop.f32.mrb[0].mxu0
      %1729 = vmatprep.mubr.bf16.mxu0 0
      %1730 = vmatmul.mubr.bf16.gmra.mrb[0].mxu0 %v874
      %v1731 = vpop.f32.mrb[0].mxu0
      %v1732 = vadd.f32 %v1163, %v1731
      %v1733 = vpop.f32.mrb[0].mxu0
      %v1734 = vpop.f32.mrb[0].mxu0
      %v1735 = vadd.f32 %v1166, %v1734
      %v1736 = vpop.f32.mrb[0].mxu0
      %1737 = vmatprep.mubr.bf16.mxu0 0
      %1738 = vmatmul.mubr.bf16.gmra.mrb[0].mxu0 %v877
      %v1739 = vpop.f32.mrb[0].mxu0
      %v1740 = vadd.f32 %v1171, %v1739
      %v1741 = vpop.f32.mrb[0].mxu0
      %v1742 = vpop.f32.mrb[0].mxu0
      %v1743 = vadd.f32 %v1174, %v1742
      %v1744 = vpop.f32.mrb[0].mxu0
      %1745 = vmatprep.mubr.bf16.mxu0 0
      %1746 = vmatmul.mubr.bf16.gmra.mrb[0].mxu0 %v880
      %v1747 = vpop.f32.mrb[0].mxu0
      %v1748 = vadd.f32 %v1179, %v1747
      %v1749 = vpop.f32.mrb[0].mxu0
      %v1750 = vpop.f32.mrb[0].mxu0
      %v1751 = vadd.f32 %v1182, %v1750
      %v1752 = vpop.f32.mrb[0].mxu0
      %1753 = vmatprep.mubr.bf16.mxu0 0
      %1754 = vmatmul.mubr.bf16.gmra.mrb[0].mxu0 %v883
      %v1755 = vpop.f32.mrb[0].mxu0
      %v1756 = vadd.f32 %v1187, %v1755
      %v1757 = vpop.f32.mrb[0].mxu0
      %v1758 = vpop.f32.mrb[0].mxu0
      %v1759 = vadd.f32 %v1190, %v1758
      %v1760 = vpop.f32.mrb[0].mxu0
      %1761 = vmatprep.mubr.bf16.mxu0 0
      %1762 = vmatmul.mubr.bf16.gmra.mrb[0].mxu0 %v886
      %v1763 = vpop.f32.mrb[0].mxu0
      %v1764 = vadd.f32 %v1195, %v1763
      %v1765 = vpop.f32.mrb[0].mxu0
      %v1766 = vpop.f32.mrb[0].mxu0
      %v1767 = vadd.f32 %v1198, %v1766
      %v1768 = vpop.f32.mrb[0].mxu0
      %1769 = vmatprep.mubr.bf16.mxu0 0
      %1770 = vmatmul.mubr.bf16.gmra.mrb[0].mxu0 %v889
      %v1771 = vpop.f32.mrb[0].mxu0
      %v1772 = vadd.f32 %v1203, %v1771
      %v1773 = vpop.f32.mrb[0].mxu0
      %v1774 = vpop.f32.mrb[0].mxu0
      %v1775 = vadd.f32 %v1206, %v1774
      %v1776 = vpop.f32.mrb[0].mxu0
      %1777 = vmatprep.mubr.bf16.mxu0 0
      %1778 = vmatmul.mubr.bf16.gmra.mrb[0].mxu0 %v892
      %v1779 = vpop.f32.mrb[0].mxu0
      %v1780 = vadd.f32 %v1211, %v1779
      %v1781 = vpop.f32.mrb[0].mxu0
      %v1782 = vpop.f32.mrb[0].mxu0
      %v1783 = vadd.f32 %v1214, %v1782
      %v1784 = vpop.f32.mrb[0].mxu0
      %1785 = vmatprep.mubr.bf16.mxu0 0
      %1786 = vmatmul.mubr.bf16.gmra.mrb[0].mxu0 %v895
      %v1787 = vpop.f32.mrb[0].mxu0
      %v1788 = vadd.f32 %v1219, %v1787
      %v1789 = vpop.f32.mrb[0].mxu0
      %v1790 = vpop.f32.mrb[0].mxu0
      %v1791 = vadd.f32 %v1222, %v1790
      %v1792 = vpop.f32.mrb[0].mxu0
      %1793 = vmatprep.mubr.bf16.mxu0 0
      %1794 = vmatmul.mubr.bf16.gmra.mrb[0].mxu0 %v898
      %v1795 = vpop.f32.mrb[0].mxu0
      %v1796 = vadd.f32 %v1227, %v1795
      %v1797 = vpop.f32.mrb[0].mxu0
      %v1798 = vpop.f32.mrb[0].mxu0
      %v1799 = vadd.f32 %v1230, %v1798
      %v1800 = vpop.f32.mrb[0].mxu0
      %1801 = vmatprep.mubr.bf16.mxu0 0
      %1802 = vmatmul.mubr.bf16.gmra.mrb[0].mxu0 %v901
      %v1803 = vpop.f32.mrb[0].mxu0
      %v1804 = vadd.f32 %v1235, %v1803
      %v1805 = vpop.f32.mrb[0].mxu0
      %v1806 = vpop.f32.mrb[0].mxu0
      %v1807 = vadd.f32 %v1238, %v1806
      %v1808 = vpop.f32.mrb[0].mxu0
      %1809 = vmatprep.mubr.bf16.mxu0 0
      %1810 = vmatmul.mubr.bf16.gmra.mrb[0].mxu0 %v904
      %v1811 = vpop.f32.mrb[0].mxu0
      %v1812 = vadd.f32 %v1243, %v1811
      %v1813 = vpop.f32.mrb[0].mxu0
      %v1814 = vpop.f32.mrb[0].mxu0
      %v1815 = vadd.f32 %v1246, %v1814
      %v1816 = vpop.f32.mrb[0].mxu0
      %1817 = vmatprep.mubr.bf16.mxu0 0
      %1818 = vmatmul.mubr.bf16.gmra.mrb[0].mxu0 %v907
      %v1819 = vpop.f32.mrb[0].mxu0
      %v1820 = vadd.f32 %v1251, %v1819
      %v1821 = vpop.f32.mrb[0].mxu0
      %v1822 = vpop.f32.mrb[0].mxu0
      %v1823 = vadd.f32 %v1254, %v1822
      %v1824 = vpop.f32.mrb[0].mxu0
      %1825 = vmatprep.mubr.bf16.mxu0 0
      %1826 = vmatmul.mubr.bf16.gmra.mrb[0].mxu0 %v910
      %v1827 = vpop.f32.mrb[0].mxu0
      %v1828 = vadd.f32 %v1259, %v1827
      %v1829 = vpop.f32.mrb[0].mxu0
      %v1830 = vpop.f32.mrb[0].mxu0
      %v1831 = vadd.f32 %v1262, %v1830
      %v1832 = vpop.f32.mrb[0].mxu0
      %1833 = vmatprep.mubr.bf16.mxu0 0
      %1834 = vmatmul.mubr.bf16.gmra.mrb[0].mxu0 %v913
      %v1835 = vpop.f32.mrb[0].mxu0
      %v1836 = vadd.f32 %v1267, %v1835
      %v1837 = vpop.f32.mrb[0].mxu0
      %v1838 = vpop.f32.mrb[0].mxu0
      %v1839 = vadd.f32 %v1270, %v1838
      %v1840 = vpop.f32.mrb[0].mxu0
      %1841 = vmatprep.mubr.bf16.mxu0 0
      %1842 = vmatmul.mubr.bf16.gmra.mrb[0].mxu0 %v916
      %v1843 = vpop.f32.mrb[0].mxu0
      %v1844 = vadd.f32 %v1275, %v1843
      %v1845 = vpop.f32.mrb[0].mxu0
      %v1846 = vpop.f32.mrb[0].mxu0
      %v1847 = vadd.f32 %v1278, %v1846
      %v1848 = vpop.f32.mrb[0].mxu0
      %1849 = vmatprep.mubr.bf16.mxu0 0
      %1850 = vmatmul.mubr.bf16.gmra.mrb[0].mxu0 %v919
      %v1851 = vpop.f32.mrb[0].mxu0
      %v1852 = vadd.f32 %v1283, %v1851
      %v1853 = vpop.f32.mrb[0].mxu0
      %v1854 = vpop.f32.mrb[0].mxu0
      %v1855 = vadd.f32 %v1286, %v1854
      %v1856 = vpop.f32.mrb[0].mxu0
      %1857 = vmatprep.mubr.bf16.mxu0 0
      %1858 = vmatmul.mubr.bf16.gmra.mrb[0].mxu0 %v922
      %v1859 = vpop.f32.mrb[0].mxu0
      %v1860 = vadd.f32 %v1291, %v1859
      %v1861 = vpop.f32.mrb[0].mxu0
      %v1862 = vpop.f32.mrb[0].mxu0
      %v1863 = vadd.f32 %v1294, %v1862
      %v1864 = vpop.f32.mrb[0].mxu0
      %1865 = vmatprep.mubr.bf16.mxu0 0
      %1866 = vmatmul.mubr.bf16.gmra.mrb[0].mxu0 %v925
      %v1867 = vpop.f32.mrb[0].mxu0
      %v1868 = vadd.f32 %v1299, %v1867
      %v1869 = vpop.f32.mrb[0].mxu0
      %v1870 = vpop.f32.mrb[0].mxu0
      %v1871 = vadd.f32 %v1302, %v1870
      %v1872 = vpop.f32.mrb[0].mxu0
      %1873 = vmatprep.mubr.bf16.mxu0 0
      %1874 = vmatmul.mubr.bf16.gmra.mrb[0].mxu0 %v928
      %v1875 = vpop.f32.mrb[0].mxu0
      %v1876 = vadd.f32 %v1307, %v1875
      %v1877 = vpop.f32.mrb[0].mxu0
      %v1878 = vpop.f32.mrb[0].mxu0
      %v1879 = vadd.f32 %v1310, %v1878
      %v1880 = vpop.f32.mrb[0].mxu0
      %1881 = vmatprep.mubr.bf16.mxu0 0
      %1882 = vmatmul.mubr.bf16.gmra.mrb[0].mxu0 %v931
      %v1883 = vpop.f32.mrb[0].mxu0
      %v1884 = vadd.f32 %v1315, %v1883
      %v1885 = vpop.f32.mrb[0].mxu0
      %v1886 = vpop.f32.mrb[0].mxu0
      %v1887 = vadd.f32 %v1318, %v1886
      %v1888 = vpop.f32.mrb[0].mxu0
      %1889 = vmatprep.mubr.bf16.mxu0 0
      %1890 = vmatmul.mubr.bf16.gmra.mrb[0].mxu0 %v934
      %v1891 = vpop.f32.mrb[0].mxu0
      %v1892 = vadd.f32 %v1323, %v1891
      %v1893 = vpop.f32.mrb[0].mxu0
      %v1894 = vpop.f32.mrb[0].mxu0
      %v1895 = vadd.f32 %v1326, %v1894
      %v1896 = vpop.f32.mrb[0].mxu0
      %1897 = vmatprep.mubr.bf16.mxu0 0
      %1898 = vmatmul.mubr.bf16.gmra.mrb[0].mxu0 %v937
      %v1899 = vpop.f32.mrb[0].mxu0
      %v1900 = vadd.f32 %v1331, %v1899
      %v1901 = vpop.f32.mrb[0].mxu0
      %v1902 = vpop.f32.mrb[0].mxu0
      %v1903 = vadd.f32 %v1334, %v1902
      %v1904 = vpop.f32.mrb[0].mxu0
      %1905 = vmatprep.mubr.bf16.mxu0 0
      %1906 = vmatmul.mubr.bf16.gmra.mrb[0].mxu0 %v940
      %v1907 = vpop.f32.mrb[0].mxu0
      %v1908 = vadd.f32 %v1339, %v1907
      %v1909 = vpop.f32.mrb[0].mxu0
      %v1910 = vpop.f32.mrb[0].mxu0
      %v1911 = vadd.f32 %v1342, %v1910
      %v1912 = vpop.f32.mrb[0].mxu0
      %1913 = vmatprep.mubr.bf16.mxu0 0
      %1914 = vmatmul.mubr.bf16.gmra.mrb[0].mxu0 %v943
      %v1915 = vpop.f32.mrb[0].mxu0
      %v1916 = vadd.f32 %v1347, %v1915
      %v1917 = vpop.f32.mrb[0].mxu0
      %v1918 = vpop.f32.mrb[0].mxu0
      %v1919 = vadd.f32 %v1350, %v1918
      %v1920 = vpop.f32.mrb[0].mxu0
      %1921 = vmatprep.mubr.bf16.mxu0 0
      %1922 = vmatmul.mubr.bf16.gmra.mrb[0].mxu0 %v946
      %v1923 = vpop.f32.mrb[0].mxu0
      %v1924 = vadd.f32 %v1355, %v1923
      %v1925 = vpop.f32.mrb[0].mxu0
      %v1926 = vpop.f32.mrb[0].mxu0
      %v1927 = vadd.f32 %v1358, %v1926
      %v1928 = vpop.f32.mrb[0].mxu0
      %1929 = vmatprep.mubr.bf16.mxu0 0
      %1930 = vmatmul.mubr.bf16.gmra.mrb[0].mxu0 %v949
      %v1931 = vpop.f32.mrb[0].mxu0
      %v1932 = vadd.f32 %v1363, %v1931
      %v1933 = vpop.f32.mrb[0].mxu0
      %v1934 = vpop.f32.mrb[0].mxu0
      %v1935 = vadd.f32 %v1366, %v1934
      %v1936 = vpop.f32.mrb[0].mxu0
      %1937 = vmatprep.mubr.bf16.mxu0 0
      %1938 = vmatmul.mubr.bf16.gmra.mrb[0].mxu0 %v952
      %v1939 = vpop.f32.mrb[0].mxu0
      %v1940 = vadd.f32 %v1371, %v1939
      %v1941 = vpop.f32.mrb[0].mxu0
      %v1942 = vpop.f32.mrb[0].mxu0
      %v1943 = vadd.f32 %v1374, %v1942
      %v1944 = vpop.f32.mrb[0].mxu0
      %1945 = vmatprep.mubr.bf16.mxu0 0
      %1946 = vmatmul.mubr.bf16.gmra.mrb[0].mxu0 %v955
      %v1947 = vpop.f32.mrb[0].mxu0
      %v1948 = vadd.f32 %v1379, %v1947
      %v1949 = vpop.f32.mrb[0].mxu0
      %v1950 = vpop.f32.mrb[0].mxu0
      %v1951 = vadd.f32 %v1382, %v1950
      %v1952 = vpop.f32.mrb[0].mxu0
      %1953 = vmatprep.mubr.bf16.mxu0 0
      %1954 = vmatmul.mubr.bf16.gmra.mrb[0].mxu0 %v958
      %v1955 = vpop.f32.mrb[0].mxu0
      %v1956 = vadd.f32 %v1387, %v1955
      %v1957 = vpop.f32.mrb[0].mxu0
      %v1958 = vpop.f32.mrb[0].mxu0
      %v1959 = vadd.f32 %v1390, %v1958
      %v1960 = vpop.f32.mrb[0].mxu0
      %1961 = vmatprep.mubr.bf16.mxu0 0
      %1962 = vmatmul.mubr.bf16.gmra.mrb[0].mxu0 %v961
      %v1963 = vpop.f32.mrb[0].mxu0
      %v1964 = vadd.f32 %v1395, %v1963
      %v1965 = vpop.f32.mrb[0].mxu0
      %v1966 = vpop.f32.mrb[0].mxu0
      %v1967 = vadd.f32 %v1398, %v1966
      %v1968 = vpop.f32.mrb[0].mxu0
      %1969 = vmatprep.mubr.bf16.mxu0 0
      %1970 = vmatmul.mubr.bf16.gmra.mrb[0].mxu0 %v964
      %v1971 = vpop.f32.mrb[0].mxu0
      %v1972 = vadd.f32 %v1403, %v1971
      %v1973 = vpop.f32.mrb[0].mxu0
      %v1974 = vpop.f32.mrb[0].mxu0
      %v1975 = vadd.f32 %v1406, %v1974
      %v1976 = vpop.f32.mrb[0].mxu0
      %1977 = vmatprep.mubr.bf16.mxu0 0
      %1978 = vmatmul.mubr.bf16.gmra.mrb[0].mxu0 %v967
      %v1979 = vpop.f32.mrb[0].mxu0
      %v1980 = vadd.f32 %v1411, %v1979
      %v1981 = vpop.f32.mrb[0].mxu0
      %v1982 = vpop.f32.mrb[0].mxu0
      %v1983 = vadd.f32 %v1414, %v1982
      %v1984 = vpop.f32.mrb[0].mxu0
      %1985 = vmatprep.mubr.bf16.mxu0 0
      %1986 = vmatmul.mubr.bf16.gmra.mrb[0].mxu0 %v970
      %v1987 = vpop.f32.mrb[0].mxu0
      %v1988 = vadd.f32 %v1419, %v1987
      %v1989 = vpop.f32.mrb[0].mxu0
      %v1990 = vpop.f32.mrb[0].mxu0
      %v1991 = vadd.f32 %v1422, %v1990
      %v1992 = vpop.f32.mrb[0].mxu0
      %1993 = vmatprep.mubr.bf16.mxu0 0
      %1994 = vmatmul.mubr.bf16.gmra.mrb[0].mxu0 %v973
      %v1995 = vpop.f32.mrb[0].mxu0
      %v1996 = vadd.f32 %v1427, %v1995
      %v1997 = vpop.f32.mrb[0].mxu0
      %v1998 = vpop.f32.mrb[0].mxu0
      %v1999 = vadd.f32 %v1430, %v1998
      %v2000 = vpop.f32.mrb[0].mxu0
      %2001 = vmatprep.mubr.bf16.mxu0 0
      %2002 = vmatmul.mubr.bf16.gmra.mrb[0].mxu0 %v976
      %v2003 = vpop.f32.mrb[0].mxu0
      %v2004 = vadd.f32 %v1435, %v2003
      %v2005 = vpop.f32.mrb[0].mxu0
      %v2006 = vpop.f32.mrb[0].mxu0
      %v2007 = vadd.f32 %v1438, %v2006
      %v2008 = vpop.f32.mrb[0].mxu0
      %2009 = vmatprep.mubr.bf16.mxu0 0
      %2010 = vmatmul.mubr.bf16.gmra.mrb[0].mxu0 %v979
      %v2011 = vpop.f32.mrb[0].mxu0
      %v2012 = vadd.f32 %v1443, %v2011
      %v2013 = vpop.f32.mrb[0].mxu0
      %v2014 = vpop.f32.mrb[0].mxu0
      %v2015 = vadd.f32 %v1446, %v2014
      %v2016 = vpop.f32.mrb[0].mxu0
      %2017 = vmatprep.mubr.bf16.mxu0 0
      %2018 = vmatmul.mubr.bf16.gmra.mrb[0].mxu0 %v982
      %v2019 = vpop.f32.mrb[0].mxu0
      %v2020 = vadd.f32 %v1451, %v2019
      %v2021 = vpop.f32.mrb[0].mxu0
      %v2022 = vpop.f32.mrb[0].mxu0
      %v2023 = vadd.f32 %v1454, %v2022
      %v2024 = vpop.f32.mrb[0].mxu0
      %2025 = vmatprep.mubr.bf16.mxu0 0
      %2026 = vmatmul.mubr.bf16.gmra.mrb[0].mxu0 %v985
      %v2027 = vpop.f32.mrb[0].mxu0
      %v2028 = vadd.f32 %v1459, %v2027
      %v2029 = vpop.f32.mrb[0].mxu0
      %v2030 = vpop.f32.mrb[0].mxu0
      %v2031 = vadd.f32 %v1462, %v2030
      %v2032 = vpop.f32.mrb[0].mxu0
      %2033 = vmatprep.mubr.bf16.mxu0 0
      %2034 = vmatmul.mubr.bf16.gmra.mrb[0].mxu0 %v988
      %v2035 = vpop.f32.mrb[0].mxu0
      %v2036 = vadd.f32 %v1467, %v2035
      %v2037 = vpop.f32.mrb[0].mxu0
      %v2038 = vpop.f32.mrb[0].mxu0
      %v2039 = vadd.f32 %v1470, %v2038
      %v2040 = vpop.f32.mrb[0].mxu0
      %2041 = vmatprep.mubr.bf16.mxu0 0
      %2042 = vmatmul.mubr.bf16.gmra.mrb[0].mxu0 %v991
      %v2043 = vpop.f32.mrb[0].mxu0
      %v2044 = vadd.f32 %v1475, %v2043
      %v2045 = vpop.f32.mrb[0].mxu0
      %v2046 = vpop.f32.mrb[0].mxu0
      %v2047 = vadd.f32 %v1478, %v2046
      %v2048 = vpop.f32.mrb[0].mxu0
      %2049 = vmatprep.mubr.bf16.mxu0 0
      %2050 = vmatmul.mubr.bf16.gmra.mrb[0].mxu0 %v994
      %v2051 = vpop.f32.mrb[0].mxu0
      %v2052 = vadd.f32 %v1483, %v2051
      %v2053 = vpop.f32.mrb[0].mxu0
      %v2054 = vpop.f32.mrb[0].mxu0
      %v2055 = vadd.f32 %v1486, %v2054
      %v2056 = vpop.f32.mrb[0].mxu0
      %2057 = vmatprep.mubr.bf16.mxu0 0
      %2058 = vmatmul.mubr.bf16.gmra.mrb[0].mxu0 %v997
      %v2059 = vpop.f32.mrb[0].mxu0
      %v2060 = vadd.f32 %v1491, %v2059
      %v2061 = vpop.f32.mrb[0].mxu0
      %v2062 = vpop.f32.mrb[0].mxu0
      %v2063 = vadd.f32 %v1494, %v2062
      %v2064 = vpop.f32.mrb[0].mxu0
      %2065 = vmatprep.mubr.bf16.mxu0 0
      %2066 = vmatmul.mubr.bf16.gmra.mrb[0].mxu0 %v1000
      %v2067 = vpop.f32.mrb[0].mxu0
      %v2068 = vadd.f32 %v1499, %v2067
      %v2069 = vpop.f32.mrb[0].mxu0
      %v2070 = vpop.f32.mrb[0].mxu0
      %v2071 = vadd.f32 %v1502, %v2070
      %v2072 = vpop.f32.mrb[0].mxu0
      %2073 = vmatprep.mubr.bf16.mxu0 0
      %2074 = vmatmul.mubr.bf16.gmra.mrb[0].mxu0 %v1003
      %v2075 = vpop.f32.mrb[0].mxu0
      %v2076 = vadd.f32 %v1507, %v2075
      %v2077 = vpop.f32.mrb[0].mxu0
      %v2078 = vpop.f32.mrb[0].mxu0
      %v2079 = vadd.f32 %v1510, %v2078
      %v2080 = vpop.f32.mrb[0].mxu0
      %2081 = vmatprep.mubr.bf16.mxu0 0
      %2082 = vmatmul.mubr.bf16.gmra.mrb[0].mxu0 %v1006
      %v2083 = vpop.f32.mrb[0].mxu0
      %v2084 = vadd.f32 %v1515, %v2083
      %v2085 = vpop.f32.mrb[0].mxu0
      %v2086 = vpop.f32.mrb[0].mxu0
      %v2087 = vadd.f32 %v1518, %v2086
      %v2088 = vpop.f32.mrb[0].mxu0
      %2089 = vmatprep.mubr.bf16.mxu0 0
      %2090 = vmatmul.mubr.bf16.gmra.mrb[0].mxu0 %v1009
      %v2091 = vpop.f32.mrb[0].mxu0
      %v2092 = vadd.f32 %v1523, %v2091
      %v2093 = vpop.f32.mrb[0].mxu0
      %v2094 = vpop.f32.mrb[0].mxu0
      %v2095 = vadd.f32 %v1526, %v2094
      %v2096 = vpop.f32.mrb[0].mxu0
      %2097 = vmatprep.mubr.bf16.mxu0 0
      %2098 = vmatmul.mubr.bf16.gmra.mrb[0].mxu0 %v1012
      %v2099 = vpop.f32.mrb[0].mxu0
      %v2100 = vadd.f32 %v1531, %v2099
      %v2101 = vpop.f32.mrb[0].mxu0
      %v2102 = vpop.f32.mrb[0].mxu0
      %v2103 = vadd.f32 %v1534, %v2102
      %v2104 = vpop.f32.mrb[0].mxu0
      %2105 = vmatprep.mubr.bf16.mxu0 0
      %2106 = vmatmul.mubr.bf16.gmra.mrb[0].mxu0 %v1015
      %v2107 = vpop.f32.mrb[0].mxu0
      %v2108 = vadd.f32 %v1539, %v2107
      %v2109 = vpop.f32.mrb[0].mxu0
      %v2110 = vpop.f32.mrb[0].mxu0
      %v2111 = vadd.f32 %v1542, %v2110
      %v2112 = vpop.f32.mrb[0].mxu0
      %2113 = vmatprep.mubr.bf16.mxu0 0
      %2114 = vmatmul.mubr.bf16.gmra.mrb[0].mxu0 %v1018
      %v2115 = vpop.f32.mrb[0].mxu0
      %v2116 = vadd.f32 %v1547, %v2115
      %v2117 = vpop.f32.mrb[0].mxu0
      %v2118 = vpop.f32.mrb[0].mxu0
      %v2119 = vadd.f32 %v1550, %v2118
      %v2120 = vpop.f32.mrb[0].mxu0
      %2121 = vmatprep.mubr.bf16.mxu0 0
      %2122 = vmatmul.mubr.bf16.gmra.mrb[0].mxu0 %v1021
      %v2123 = vpop.f32.mrb[0].mxu0
      %v2124 = vadd.f32 %v1555, %v2123
      %v2125 = vpop.f32.mrb[0].mxu0
      %v2126 = vpop.f32.mrb[0].mxu0
      %v2127 = vadd.f32 %v1558, %v2126
      %v2128 = vpop.f32.mrb[0].mxu0
      %2129 = vmatprep.mubr.bf16.mxu0 0
      %2130 = vmatmul.mubr.bf16.gmra.mrb[0].mxu0 %v1024
      %v2131 = vpop.f32.mrb[0].mxu0
      %v2132 = vadd.f32 %v1563, %v2131
      %v2133 = vpop.f32.mrb[0].mxu0
      %v2134 = vpop.f32.mrb[0].mxu0
      %v2135 = vadd.f32 %v1566, %v2134
      %v2136 = vpop.f32.mrb[0].mxu0
      %2137 = vmatprep.mubr.bf16.mxu0 0
      %2138 = vmatmul.mubr.bf16.gmra.mrb[0].mxu0 %v1027
      %v2139 = vpop.f32.mrb[0].mxu0
      %v2140 = vadd.f32 %v1571, %v2139
      %v2141 = vpop.f32.mrb[0].mxu0
      %v2142 = vpop.f32.mrb[0].mxu0
      %v2143 = vadd.f32 %v1574, %v2142
      %v2144 = vpop.f32.mrb[0].mxu0
      %2145 = vmatprep.mubr.bf16.mxu0 0
      %2146 = vmatmul.mubr.bf16.gmra.mrb[0].mxu0 %v1030
      %v2147 = vpop.f32.mrb[0].mxu0
      %v2148 = vadd.f32 %v1579, %v2147
      %v2149 = vpop.f32.mrb[0].mxu0
      %v2150 = vpop.f32.mrb[0].mxu0
      %v2151 = vadd.f32 %v1582, %v2150
      %v2152 = vpop.f32.mrb[0].mxu0
      %2153 = vmatprep.mubr.bf16.mxu0 0
      %2154 = vmatmul.mubr.bf16.gmra.mrb[0].mxu0 %v1033
      %v2155 = vpop.f32.mrb[0].mxu0
      %v2156 = vadd.f32 %v1587, %v2155
      %v2157 = vpop.f32.mrb[0].mxu0
      %v2158 = vpop.f32.mrb[0].mxu0
      %v2159 = vadd.f32 %v1590, %v2158
      %v2160 = vpop.f32.mrb[0].mxu0
      %2161 = vdwg.mxu0
      %v2162 = vld [vmem:[%s380 + $0x20] sm:$0xf]
      %v2163 = vld [vmem:[%s380 + $0x24] sm:$0xf]
      %v2164 = vld [vmem:[%s380 + $0x28] sm:$0xf]
      %v2165 = vld [vmem:[%s380 + $0x2c] sm:$0xf]
      %v2166 = vld [vmem:[%s380 + $0x30] sm:$0xf]
      %v2167 = vld [vmem:[%s380 + $0x34] sm:$0xf]
      %v2168 = vld [vmem:[%s380 + $0x38] sm:$0xf]
      %v2169 = vld [vmem:[%s380 + $0x3c] sm:$0xf]
      %v2170 = vld [vmem:[%s380 + $0x40] sm:$0xf]
      %v2171 = vld [vmem:[%s380 + $0x44] sm:$0xf]
      %v2172 = vld [vmem:[%s380 + $0x48] sm:$0xf]
      %v2173 = vld [vmem:[%s380 + $0x4c] sm:$0xf]
      %v2174 = vld [vmem:[%s380 + $0x50] sm:$0xf]
      %v2175 = vld [vmem:[%s380 + $0x54] sm:$0xf]
      %v2176 = vld [vmem:[%s380 + $0x58] sm:$0xf]
      %v2177 = vld [vmem:[%s380 + $0x5c] sm:$0xf]
      %v2178 = vld [vmem:[%s380 + $0x60] sm:$0xf]
      %v2179 = vld [vmem:[%s380 + $0x64] sm:$0xf]
      %v2180 = vld [vmem:[%s380 + $0x68] sm:$0xf]
      %v2181 = vld [vmem:[%s380 + $0x6c] sm:$0xf]
      %v2182 = vld [vmem:[%s380 + $0x70] sm:$0xf]
      %v2183 = vld [vmem:[%s380 + $0x74] sm:$0xf]
      %v2184 = vld [vmem:[%s380 + $0x78] sm:$0xf]
      %v2185 = vld [vmem:[%s380 + $0x7c] sm:$0xf]
      %v2186 = vld [vmem:[%s380 + $0x80] sm:$0xf]
      %v2187 = vld [vmem:[%s380 + $0x84] sm:$0xf]
      %v2188 = vld [vmem:[%s380 + $0x88] sm:$0xf]
      %v2189 = vld [vmem:[%s380 + $0x8c] sm:$0xf]
      %v2190 = vld [vmem:[%s380 + $0x90] sm:$0xf]
      %v2191 = vld [vmem:[%s380 + $0x94] sm:$0xf]
      %v2192 = vld [vmem:[%s380 + $0x98] sm:$0xf]
      %v2193 = vld [vmem:[%s380 + $0x9c] sm:$0xf]
      %v2194 = vld [vmem:[%s380 + $0xa0] sm:$0xf]
      %v2195 = vld [vmem:[%s380 + $0xa4] sm:$0xf]
      %v2196 = vld [vmem:[%s380 + $0xa8] sm:$0xf]
      %v2197 = vld [vmem:[%s380 + $0xac] sm:$0xf]
      %v2198 = vld [vmem:[%s380 + $0xb0] sm:$0xf]
      %v2199 = vld [vmem:[%s380 + $0xb4] sm:$0xf]
      %v2200 = vld [vmem:[%s380 + $0xb8] sm:$0xf]
      %v2201 = vld [vmem:[%s380 + $0xbc] sm:$0xf]
      %v2202 = vld [vmem:[%s380 + $0xc0] sm:$0xf]
      %v2203 = vld [vmem:[%s380 + $0xc4] sm:$0xf]
      %v2204 = vld [vmem:[%s380 + $0xc8] sm:$0xf]
      %v2205 = vld [vmem:[%s380 + $0xcc] sm:$0xf]
      %v2206 = vld [vmem:[%s380 + $0xd0] sm:$0xf]
      %v2207 = vld [vmem:[%s380 + $0xd4] sm:$0xf]
      %v2208 = vld [vmem:[%s380 + $0xd8] sm:$0xf]
      %v2209 = vld [vmem:[%s380 + $0xdc] sm:$0xf]
      %v2210 = vld [vmem:[%s380 + $0xe0] sm:$0xf]
      %v2211 = vld [vmem:[%s380 + $0xe4] sm:$0xf]
      %v2212 = vld [vmem:[%s380 + $0xe8] sm:$0xf]
      %v2213 = vld [vmem:[%s380 + $0xec] sm:$0xf]
      %v2214 = vld [vmem:[%s380 + $0xf0] sm:$0xf]
      %v2215 = vld [vmem:[%s380 + $0xf4] sm:$0xf]
      %v2216 = vld [vmem:[%s380 + $0xf8] sm:$0xf]
      %v2217 = vld [vmem:[%s380 + $0xfc] sm:$0xf]
      %v2218 = vld [vmem:[%s380 + $0x100] sm:$0xf]
      %v2219 = vld [vmem:[%s380 + $0x104] sm:$0xf]
      %v2220 = vld [vmem:[%s380 + $0x108] sm:$0xf]
      %v2221 = vld [vmem:[%s380 + $0x10c] sm:$0xf]
      %v2222 = vld [vmem:[%s380 + $0x110] sm:$0xf]
      %v2223 = vld [vmem:[%s380 + $0x114] sm:$0xf]
      %v2224 = vld [vmem:[%s380 + $0x118] sm:$0xf]
      %v2225 = vld [vmem:[%s380 + $0x11c] sm:$0xf]
      %v2226 = vld [vmem:[%s380 + $0x120] sm:$0xf]
      %v2227 = vld [vmem:[%s380 + $0x124] sm:$0xf]
      %v2228 = vld [vmem:[%s380 + $0x128] sm:$0xf]
      %v2229 = vld [vmem:[%s380 + $0x12c] sm:$0xf]
      %v2230 = vld [vmem:[%s380 + $0x130] sm:$0xf]
      %v2231 = vld [vmem:[%s380 + $0x134] sm:$0xf]
      %v2232 = vld [vmem:[%s380 + $0x138] sm:$0xf]
      %v2233 = vld [vmem:[%s380 + $0x13c] sm:$0xf]
      %v2234 = vld [vmem:[%s380 + $0x140] sm:$0xf]
      %v2235 = vld [vmem:[%s380 + $0x144] sm:$0xf]
      %v2236 = vld [vmem:[%s380 + $0x148] sm:$0xf]
      %v2237 = vld [vmem:[%s380 + $0x14c] sm:$0xf]
      %v2238 = vld [vmem:[%s380 + $0x150] sm:$0xf]
      %v2239 = vld [vmem:[%s380 + $0x154] sm:$0xf]
      %v2240 = vld [vmem:[%s380 + $0x158] sm:$0xf]
      %v2241 = vld [vmem:[%s380 + $0x15c] sm:$0xf]
      %v2242 = vld [vmem:[%s380 + $0x160] sm:$0xf]
      %v2243 = vld [vmem:[%s380 + $0x164] sm:$0xf]
      %v2244 = vld [vmem:[%s380 + $0x168] sm:$0xf]
      %v2245 = vld [vmem:[%s380 + $0x16c] sm:$0xf]
      %v2246 = vld [vmem:[%s380 + $0x170] sm:$0xf]
      %v2247 = vld [vmem:[%s380 + $0x174] sm:$0xf]
      %v2248 = vld [vmem:[%s380 + $0x178] sm:$0xf]
      %v2249 = vld [vmem:[%s380 + $0x17c] sm:$0xf]
      %v2250 = vld [vmem:[%s380 + $0x180] sm:$0xf]
      %v2251 = vld [vmem:[%s380 + $0x184] sm:$0xf]
      %v2252 = vld [vmem:[%s380 + $0x188] sm:$0xf]
      %v2253 = vld [vmem:[%s380 + $0x18c] sm:$0xf]
      %v2254 = vld [vmem:[%s380 + $0x190] sm:$0xf]
      %v2255 = vld [vmem:[%s380 + $0x194] sm:$0xf]
      %v2256 = vld [vmem:[%s380 + $0x198] sm:$0xf]
      %v2257 = vld [vmem:[%s380 + $0x19c] sm:$0xf]
      %v2258 = vld [vmem:[%s380 + $0x1a0] sm:$0xf]
      %v2259 = vld [vmem:[%s380 + $0x1a4] sm:$0xf]
      %v2260 = vld [vmem:[%s380 + $0x1a8] sm:$0xf]
      %v2261 = vld [vmem:[%s380 + $0x1ac] sm:$0xf]
      %v2262 = vld [vmem:[%s380 + $0x1b0] sm:$0xf]
      %v2263 = vld [vmem:[%s380 + $0x1b4] sm:$0xf]
      %v2264 = vld [vmem:[%s380 + $0x1b8] sm:$0xf]
      %v2265 = vld [vmem:[%s380 + $0x1bc] sm:$0xf]
      %v2266 = vld [vmem:[%s380 + $0x1c0] sm:$0xf]
      %v2267 = vld [vmem:[%s380 + $0x1c4] sm:$0xf]
      %v2268 = vld [vmem:[%s380 + $0x1c8] sm:$0xf]
      %v2269 = vld [vmem:[%s380 + $0x1cc] sm:$0xf]
      %v2270 = vld [vmem:[%s380 + $0x1d0] sm:$0xf]
      %v2271 = vld [vmem:[%s380 + $0x1d4] sm:$0xf]
      %v2272 = vld [vmem:[%s380 + $0x1d8] sm:$0xf]
      %v2273 = vld [vmem:[%s380 + $0x1dc] sm:$0xf]
      %v2274 = vld [vmem:[%s380 + $0x1e0] sm:$0xf]
      %v2275 = vld [vmem:[%s380 + $0x1e4] sm:$0xf]
      %v2276 = vld [vmem:[%s380 + $0x1e8] sm:$0xf]
      %v2277 = vld [vmem:[%s380 + $0x1ec] sm:$0xf]
      %v2278 = vld [vmem:[%s380 + $0x1f0] sm:$0xf]
      %v2279 = vld [vmem:[%s380 + $0x1f4] sm:$0xf]
      %v2280 = vld [vmem:[%s380 + $0x1f8] sm:$0xf]
      %v2281 = vld [vmem:[%s380 + $0x1fc] sm:$0xf]
      %v2282 = vld [vmem:[%s380 + $0x200] sm:$0xf]
      %v2283 = vld [vmem:[%s380 + $0x204] sm:$0xf]
      %v2284 = vld [vmem:[%s380 + $0x208] sm:$0xf]
      %v2285 = vld [vmem:[%s380 + $0x20c] sm:$0xf]
      %v2286 = vld [vmem:[%s380 + $0x210] sm:$0xf]
      %v2287 = vld [vmem:[%s380 + $0x214] sm:$0xf]
      %v2288 = vld [vmem:[%s380 + $0x218] sm:$0xf]
      %v2289 = vld [vmem:[%s380 + $0x21c] sm:$0xf]
      %s2290 = scalar_lea.vmem %s1, 16
      %v2291 = vld [vmem:[%s2290] sm:$0xf]
      %v2292 = vld [vmem:[%s2290 + $0x4] sm:$0xf]
      %v2421 = vunpack.c.l.b16 %v2162
      %v2422 = vunpack.c.l.b16 %v2163
      %v2423 = vunpack.c.l.b16 %v2164
      %v2424 = vunpack.c.l.b16 %v2165
      %v2425 = vunpack.c.l.b16 %v2166
      %v2426 = vunpack.c.l.b16 %v2167
      %v2427 = vunpack.c.l.b16 %v2168
      %v2428 = vunpack.c.l.b16 %v2169
      %v2429 = vunpack.c.l.b16 %v2170
      %v2430 = vunpack.c.l.b16 %v2171
      %v2431 = vunpack.c.l.b16 %v2172
      %v2432 = vunpack.c.l.b16 %v2173
      %v2433 = vunpack.c.l.b16 %v2174
      %v2434 = vunpack.c.l.b16 %v2175
      %v2435 = vunpack.c.l.b16 %v2176
      %v2436 = vunpack.c.l.b16 %v2177
      %v2437 = vunpack.c.l.b16 %v2178
      %v2438 = vunpack.c.l.b16 %v2179
      %v2439 = vunpack.c.l.b16 %v2180
      %v2440 = vunpack.c.l.b16 %v2181
      %v2441 = vunpack.c.l.b16 %v2182
      %v2442 = vunpack.c.l.b16 %v2183
      %v2443 = vunpack.c.l.b16 %v2184
      %v2444 = vunpack.c.l.b16 %v2185
      %v2445 = vunpack.c.l.b16 %v2186
      %v2446 = vunpack.c.l.b16 %v2187
      %v2447 = vunpack.c.l.b16 %v2188
      %v2448 = vunpack.c.l.b16 %v2189
      %v2449 = vunpack.c.l.b16 %v2190
      %v2450 = vunpack.c.l.b16 %v2191
      %v2451 = vunpack.c.l.b16 %v2192
      %v2452 = vunpack.c.l.b16 %v2193
      %v2453 = vunpack.c.l.b16 %v2194
      %v2454 = vunpack.c.l.b16 %v2195
      %v2455 = vunpack.c.l.b16 %v2196
      %v2456 = vunpack.c.l.b16 %v2197
      %v2457 = vunpack.c.l.b16 %v2198
      %v2458 = vunpack.c.l.b16 %v2199
      %v2459 = vunpack.c.l.b16 %v2200
      %v2460 = vunpack.c.l.b16 %v2201
      %v2461 = vunpack.c.l.b16 %v2202
      %v2462 = vunpack.c.l.b16 %v2203
      %v2463 = vunpack.c.l.b16 %v2204
      %v2464 = vunpack.c.l.b16 %v2205
      %v2465 = vunpack.c.l.b16 %v2206
      %v2466 = vunpack.c.l.b16 %v2207
      %v2467 = vunpack.c.l.b16 %v2208
      %v2468 = vunpack.c.l.b16 %v2209
      %v2469 = vunpack.c.l.b16 %v2210
      %v2470 = vunpack.c.l.b16 %v2211
      %v2471 = vunpack.c.l.b16 %v2212
      %v2472 = vunpack.c.l.b16 %v2213
      %v2473 = vunpack.c.l.b16 %v2214
      %v2474 = vunpack.c.l.b16 %v2215
      %v2475 = vunpack.c.l.b16 %v2216
      %v2476 = vunpack.c.l.b16 %v2217
      %v2477 = vunpack.c.l.b16 %v2218
      %v2478 = vunpack.c.l.b16 %v2219
      %v2479 = vunpack.c.l.b16 %v2220
      %v2480 = vunpack.c.l.b16 %v2221
      %v2481 = vunpack.c.l.b16 %v2222
      %v2482 = vunpack.c.l.b16 %v2223
      %v2483 = vunpack.c.l.b16 %v2224
      %v2484 = vunpack.c.l.b16 %v2225
      %v2485 = vunpack.c.l.b16 %v2226
      %v2486 = vunpack.c.l.b16 %v2227
      %v2487 = vunpack.c.l.b16 %v2228
      %v2488 = vunpack.c.l.b16 %v2229
      %v2489 = vunpack.c.l.b16 %v2230
      %v2490 = vunpack.c.l.b16 %v2231
      %v2491 = vunpack.c.l.b16 %v2232
      %v2492 = vunpack.c.l.b16 %v2233
      %v2493 = vunpack.c.l.b16 %v2234
      %v2494 = vunpack.c.l.b16 %v2235
      %v2495 = vunpack.c.l.b16 %v2236
      %v2496 = vunpack.c.l.b16 %v2237
      %v2497 = vunpack.c.l.b16 %v2238
      %v2498 = vunpack.c.l.b16 %v2239
      %v2499 = vunpack.c.l.b16 %v2240
      %v2500 = vunpack.c.l.b16 %v2241
      %v2501 = vunpack.c.l.b16 %v2242
      %v2502 = vunpack.c.l.b16 %v2243
      %v2503 = vunpack.c.l.b16 %v2244
      %v2504 = vunpack.c.l.b16 %v2245
      %v2505 = vunpack.c.l.b16 %v2246
      %v2506 = vunpack.c.l.b16 %v2247
      %v2507 = vunpack.c.l.b16 %v2248
      %v2508 = vunpack.c.l.b16 %v2249
      %v2509 = vunpack.c.l.b16 %v2250
      %v2510 = vunpack.c.l.b16 %v2251
      %v2511 = vunpack.c.l.b16 %v2252
      %v2512 = vunpack.c.l.b16 %v2253
      %v2513 = vunpack.c.l.b16 %v2254
      %v2514 = vunpack.c.l.b16 %v2255
      %v2515 = vunpack.c.l.b16 %v2256
      %v2516 = vunpack.c.l.b16 %v2257
      %v2517 = vunpack.c.l.b16 %v2258
      %v2518 = vunpack.c.l.b16 %v2259
      %v2519 = vunpack.c.l.b16 %v2260
      %v2520 = vunpack.c.l.b16 %v2261
      %v2521 = vunpack.c.l.b16 %v2262
      %v2522 = vunpack.c.l.b16 %v2263
      %v2523 = vunpack.c.l.b16 %v2264
      %v2524 = vunpack.c.l.b16 %v2265
      %v2525 = vunpack.c.l.b16 %v2266
      %v2526 = vunpack.c.l.b16 %v2267
      %v2527 = vunpack.c.l.b16 %v2268
      %v2528 = vunpack.c.l.b16 %v2269
      %v2529 = vunpack.c.l.b16 %v2270
      %v2530 = vunpack.c.l.b16 %v2271
      %v2531 = vunpack.c.l.b16 %v2272
      %v2532 = vunpack.c.l.b16 %v2273
      %v2533 = vunpack.c.l.b16 %v2274
      %v2534 = vunpack.c.l.b16 %v2275
      %v2535 = vunpack.c.l.b16 %v2276
      %v2536 = vunpack.c.l.b16 %v2277
      %v2537 = vunpack.c.l.b16 %v2278
      %v2538 = vunpack.c.l.b16 %v2279
      %v2539 = vunpack.c.l.b16 %v2280
      %v2540 = vunpack.c.l.b16 %v2281
      %v2541 = vunpack.c.l.b16 %v2282
      %v2542 = vunpack.c.l.b16 %v2283
      %v2543 = vunpack.c.l.b16 %v2284
      %v2544 = vunpack.c.l.b16 %v2285
      %v2545 = vunpack.c.l.b16 %v2286
      %v2546 = vunpack.c.l.b16 %v2287
      %v2547 = vunpack.c.l.b16 %v2288
      %v2548 = vunpack.c.l.b16 %v2289
      %v2549 = vpack.c.b16 %v2422, %v2421
      %v2550 = vpack.c.b16 %v2424, %v2423
      %v2551 = vpack.c.b16 %v2426, %v2425
      %v2552 = vpack.c.b16 %v2428, %v2427
      %v2553 = vpack.c.b16 %v2430, %v2429
      %v2554 = vpack.c.b16 %v2432, %v2431
      %v2555 = vpack.c.b16 %v2434, %v2433
      %v2556 = vpack.c.b16 %v2436, %v2435
      %v2557 = vpack.c.b16 %v2438, %v2437
      %v2558 = vpack.c.b16 %v2440, %v2439
      %v2559 = vpack.c.b16 %v2442, %v2441
      %v2560 = vpack.c.b16 %v2444, %v2443
      %v2561 = vpack.c.b16 %v2446, %v2445
      %v2562 = vpack.c.b16 %v2448, %v2447
      %v2563 = vpack.c.b16 %v2450, %v2449
      %v2564 = vpack.c.b16 %v2452, %v2451
      %v2565 = vpack.c.b16 %v2454, %v2453
      %v2566 = vpack.c.b16 %v2456, %v2455
      %v2567 = vpack.c.b16 %v2458, %v2457
      %v2568 = vpack.c.b16 %v2460, %v2459
      %v2569 = vpack.c.b16 %v2462, %v2461
      %v2570 = vpack.c.b16 %v2464, %v2463
      %v2571 = vpack.c.b16 %v2466, %v2465
      %v2572 = vpack.c.b16 %v2468, %v2467
      %v2573 = vpack.c.b16 %v2470, %v2469
      %v2574 = vpack.c.b16 %v2472, %v2471
      %v2575 = vpack.c.b16 %v2474, %v2473
      %v2576 = vpack.c.b16 %v2476, %v2475
      %v2577 = vpack.c.b16 %v2478, %v2477
      %v2578 = vpack.c.b16 %v2480, %v2479
      %v2579 = vpack.c.b16 %v2482, %v2481
      %v2580 = vpack.c.b16 %v2484, %v2483
      %v2581 = vpack.c.b16 %v2486, %v2485
      %v2582 = vpack.c.b16 %v2488, %v2487
      %v2583 = vpack.c.b16 %v2490, %v2489
      %v2584 = vpack.c.b16 %v2492, %v2491
      %v2585 = vpack.c.b16 %v2494, %v2493
      %v2586 = vpack.c.b16 %v2496, %v2495
      %v2587 = vpack.c.b16 %v2498, %v2497
      %v2588 = vpack.c.b16 %v2500, %v2499
      %v2589 = vpack.c.b16 %v2502, %v2501
      %v2590 = vpack.c.b16 %v2504, %v2503
      %v2591 = vpack.c.b16 %v2506, %v2505
      %v2592 = vpack.c.b16 %v2508, %v2507
      %v2593 = vpack.c.b16 %v2510, %v2509
      %v2594 = vpack.c.b16 %v2512, %v2511
      %v2595 = vpack.c.b16 %v2514, %v2513
      %v2596 = vpack.c.b16 %v2516, %v2515
      %v2597 = vpack.c.b16 %v2518, %v2517
      %v2598 = vpack.c.b16 %v2520, %v2519
      %v2599 = vpack.c.b16 %v2522, %v2521
      %v2600 = vpack.c.b16 %v2524, %v2523
      %v2601 = vpack.c.b16 %v2526, %v2525
      %v2602 = vpack.c.b16 %v2528, %v2527
      %v2603 = vpack.c.b16 %v2530, %v2529
      %v2604 = vpack.c.b16 %v2532, %v2531
      %v2605 = vpack.c.b16 %v2534, %v2533
      %v2606 = vpack.c.b16 %v2536, %v2535
      %v2607 = vpack.c.b16 %v2538, %v2537
      %v2608 = vpack.c.b16 %v2540, %v2539
      %v2609 = vpack.c.b16 %v2542, %v2541
      %v2610 = vpack.c.b16 %v2544, %v2543
      %v2611 = vpack.c.b16 %v2546, %v2545
      %v2612 = vpack.c.b16 %v2548, %v2547
      %v2615 = vunpack.c.l.b16 %v2291
      %v2616 = vunpack.c.l.b16 %v2292
      %v2617 = vpack.c.b16 %v2616, %v2615
      %v2619 = vsel %vm848, %v2549, 0
      %v2622 = vsel %vm848, %v2550, 0
      %v2625 = vsel %vm848, %v2551, 0
      %v2628 = vsel %vm848, %v2552, 0
      %v2631 = vsel %vm848, %v2553, 0
      %v2634 = vsel %vm848, %v2554, 0
      %v2637 = vsel %vm848, %v2555, 0
      %v2640 = vsel %vm848, %v2556, 0
      %v2643 = vsel %vm848, %v2557, 0
      %v2646 = vsel %vm848, %v2558, 0
      %v2649 = vsel %vm848, %v2559, 0
      %v2652 = vsel %vm848, %v2560, 0
      %v2655 = vsel %vm848, %v2561, 0
      %v2658 = vsel %vm848, %v2562, 0
      %v2661 = vsel %vm848, %v2563, 0
      %v2664 = vsel %vm848, %v2564, 0
      %v2667 = vsel %vm848, %v2565, 0
      %v2670 = vsel %vm848, %v2566, 0
      %v2673 = vsel %vm848, %v2567, 0
      %v2676 = vsel %vm848, %v2568, 0
      %v2679 = vsel %vm848, %v2569, 0
      %v2682 = vsel %vm848, %v2570, 0
      %v2685 = vsel %vm848, %v2571, 0
      %v2688 = vsel %vm848, %v2572, 0
      %v2691 = vsel %vm848, %v2573, 0
      %v2694 = vsel %vm848, %v2574, 0
      %v2697 = vsel %vm848, %v2575, 0
      %v2700 = vsel %vm848, %v2576, 0
      %v2703 = vsel %vm848, %v2577, 0
      %v2706 = vsel %vm848, %v2578, 0
      %v2709 = vsel %vm848, %v2579, 0
      %v2712 = vsel %vm848, %v2580, 0
      %v2715 = vsel %vm848, %v2581, 0
      %v2718 = vsel %vm848, %v2582, 0
      %v2721 = vsel %vm848, %v2583, 0
      %v2724 = vsel %vm848, %v2584, 0
      %v2727 = vsel %vm848, %v2585, 0
      %v2730 = vsel %vm848, %v2586, 0
      %v2733 = vsel %vm848, %v2587, 0
      %v2736 = vsel %vm848, %v2588, 0
      %v2739 = vsel %vm848, %v2589, 0
      %v2742 = vsel %vm848, %v2590, 0
      %v2745 = vsel %vm848, %v2591, 0
      %v2748 = vsel %vm848, %v2592, 0
      %v2751 = vsel %vm848, %v2593, 0
      %v2754 = vsel %vm848, %v2594, 0
      %v2757 = vsel %vm848, %v2595, 0
      %v2760 = vsel %vm848, %v2596, 0
      %v2763 = vsel %vm848, %v2597, 0
      %v2766 = vsel %vm848, %v2598, 0
      %v2769 = vsel %vm848, %v2599, 0
      %v2772 = vsel %vm848, %v2600, 0
      %v2775 = vsel %vm848, %v2601, 0
      %v2778 = vsel %vm848, %v2602, 0
      %v2781 = vsel %vm848, %v2603, 0
      %v2784 = vsel %vm848, %v2604, 0
      %v2787 = vsel %vm848, %v2605, 0
      %v2790 = vsel %vm848, %v2606, 0
      %v2793 = vsel %vm848, %v2607, 0
      %v2796 = vsel %vm848, %v2608, 0
      %v2799 = vsel %vm848, %v2609, 0
      %v2802 = vsel %vm848, %v2610, 0
      %v2805 = vsel %vm848, %v2611, 0
      %v2808 = vsel %vm848, %v2612, 0
      %v2811 = vand.u32 %v2617, %v1044
      %2813 = vmatprep.subr.bf16.mxu0 0
      %2814 = vmatpush1.bf16.msra.mxu0 %v2811
      %2815 = vmatprep.subr.bf16.mxu0 0
      %2816 = vmatpush1.bf16.msra.mxu0 0
      %2817 = vmatprep.subr.bf16.mxu0 0
      %2818 = vmatpush1.bf16.msra.mxu0 0
      %2819 = vmatprep.subr.bf16.mxu0 0
      %2820 = vmatpush1.bf16.msra.mxu0 0
      %2821 = vmatprep.subr.bf16.mxu0 0
      %2822 = vmatpush1.bf16.msra.mxu0 0
      %2823 = vmatprep.subr.bf16.mxu0 0
      %2824 = vmatpush1.bf16.msra.mxu0 0
      %2825 = vmatprep.subr.bf16.mxu0 0
      %2826 = vmatpush1.bf16.msra.mxu0 0
      %2827 = vmatprep.subr.bf16.mxu0 0
      %2828 = vmatpush1.bf16.msra.mxu0 0
      %2829 = vmatprep.subr.bf16.mxu0 0
      %2830 = vmatpush1.bf16.msra.mxu0 0
      %2831 = vmatprep.subr.bf16.mxu0 0
      %2832 = vmatpush1.bf16.msra.mxu0 0
      %2833 = vmatprep.subr.bf16.mxu0 0
      %2834 = vmatpush1.bf16.msra.mxu0 0
      %2835 = vmatprep.subr.bf16.mxu0 0
      %2836 = vmatpush1.bf16.msra.mxu0 0
      %2837 = vmatprep.subr.bf16.mxu0 0
      %2838 = vmatpush1.bf16.msra.mxu0 0
      %2839 = vmatprep.subr.bf16.mxu0 0
      %2840 = vmatpush1.bf16.msra.mxu0 0
      %2841 = vmatprep.subr.bf16.mxu0 0
      %2842 = vmatpush1.bf16.msra.mxu0 0
      %2843 = vmatprep.subr.bf16.mxu0 0
      %2844 = vmatpush1.bf16.msra.mxu0 0
      %2845 = vmatprep.mubr.bf16.mxu0 0
      %2846 = vmatmul.mubr.bf16.gmra.mrb[0].mxu0 %v2619
      %v2847 = vpop.f32.mrb[0].mxu0
      %v2848 = vadd.f32 0.0, %v2847
      %v2849 = vpop.f32.mrb[0].mxu0
      %v2850 = vpop.f32.mrb[0].mxu0
      %v2851 = vadd.f32 0.0, %v2850
      %v2852 = vpop.f32.mrb[0].mxu0
      %2853 = vmatprep.mubr.bf16.mxu0 0
      %2854 = vmatmul.mubr.bf16.gmra.mrb[0].mxu0 %v2622
      %v2855 = vpop.f32.mrb[0].mxu0
      %v2856 = vadd.f32 0.0, %v2855
      %v2857 = vpop.f32.mrb[0].mxu0
      %v2858 = vpop.f32.mrb[0].mxu0
      %v2859 = vadd.f32 0.0, %v2858
      %v2860 = vpop.f32.mrb[0].mxu0
      %2861 = vmatprep.mubr.bf16.mxu0 0
      %2862 = vmatmul.mubr.bf16.gmra.mrb[0].mxu0 %v2625
      %v2863 = vpop.f32.mrb[0].mxu0
      %v2864 = vadd.f32 0.0, %v2863
      %v2865 = vpop.f32.mrb[0].mxu0
      %v2866 = vpop.f32.mrb[0].mxu0
      %v2867 = vadd.f32 0.0, %v2866
      %v2868 = vpop.f32.mrb[0].mxu0
      %2869 = vmatprep.mubr.bf16.mxu0 0
      %2870 = vmatmul.mubr.bf16.gmra.mrb[0].mxu0 %v2628
      %v2871 = vpop.f32.mrb[0].mxu0
      %v2872 = vadd.f32 0.0, %v2871
      %v2873 = vpop.f32.mrb[0].mxu0
      %v2874 = vpop.f32.mrb[0].mxu0
      %v2875 = vadd.f32 0.0, %v2874
      %v2876 = vpop.f32.mrb[0].mxu0
      %2877 = vmatprep.mubr.bf16.mxu0 0
      %2878 = vmatmul.mubr.bf16.gmra.mrb[0].mxu0 %v2631
      %v2879 = vpop.f32.mrb[0].mxu0
      %v2880 = vadd.f32 0.0, %v2879
      %v2881 = vpop.f32.mrb[0].mxu0
      %v2882 = vpop.f32.mrb[0].mxu0
      %v2883 = vadd.f32 0.0, %v2882
      %v2884 = vpop.f32.mrb[0].mxu0
      %2885 = vmatprep.mubr.bf16.mxu0 0
      %2886 = vmatmul.mubr.bf16.gmra.mrb[0].mxu0 %v2634
      %v2887 = vpop.f32.mrb[0].mxu0
      %v2888 = vadd.f32 0.0, %v2887
      %v2889 = vpop.f32.mrb[0].mxu0
      %v2890 = vpop.f32.mrb[0].mxu0
      %v2891 = vadd.f32 0.0, %v2890
      %v2892 = vpop.f32.mrb[0].mxu0
      %2893 = vmatprep.mubr.bf16.mxu0 0
      %2894 = vmatmul.mubr.bf16.gmra.mrb[0].mxu0 %v2637
      %v2895 = vpop.f32.mrb[0].mxu0
      %v2896 = vadd.f32 0.0, %v2895
      %v2897 = vpop.f32.mrb[0].mxu0
      %v2898 = vpop.f32.mrb[0].mxu0
      %v2899 = vadd.f32 0.0, %v2898
      %v2900 = vpop.f32.mrb[0].mxu0
      %2901 = vmatprep.mubr.bf16.mxu0 0
      %2902 = vmatmul.mubr.bf16.gmra.mrb[0].mxu0 %v2640
      %v2903 = vpop.f32.mrb[0].mxu0
      %v2904 = vadd.f32 0.0, %v2903
      %v2905 = vpop.f32.mrb[0].mxu0
      %v2906 = vpop.f32.mrb[0].mxu0
      %v2907 = vadd.f32 0.0, %v2906
      %v2908 = vpop.f32.mrb[0].mxu0
      %2909 = vmatprep.mubr.bf16.mxu0 0
      %2910 = vmatmul.mubr.bf16.gmra.mrb[0].mxu0 %v2643
      %v2911 = vpop.f32.mrb[0].mxu0
      %v2912 = vadd.f32 0.0, %v2911
      %v2913 = vpop.f32.mrb[0].mxu0
      %v2914 = vpop.f32.mrb[0].mxu0
      %v2915 = vadd.f32 0.0, %v2914
      %v2916 = vpop.f32.mrb[0].mxu0
      %2917 = vmatprep.mubr.bf16.mxu0 0
      %2918 = vmatmul.mubr.bf16.gmra.mrb[0].mxu0 %v2646
      %v2919 = vpop.f32.mrb[0].mxu0
      %v2920 = vadd.f32 0.0, %v2919
      %v2921 = vpop.f32.mrb[0].mxu0
      %v2922 = vpop.f32.mrb[0].mxu0
      %v2923 = vadd.f32 0.0, %v2922
      %v2924 = vpop.f32.mrb[0].mxu0
      %2925 = vmatprep.mubr.bf16.mxu0 0
      %2926 = vmatmul.mubr.bf16.gmra.mrb[0].mxu0 %v2649
      %v2927 = vpop.f32.mrb[0].mxu0
      %v2928 = vadd.f32 0.0, %v2927
      %v2929 = vpop.f32.mrb[0].mxu0
      %v2930 = vpop.f32.mrb[0].mxu0
      %v2931 = vadd.f32 0.0, %v2930
      %v2932 = vpop.f32.mrb[0].mxu0
      %2933 = vmatprep.mubr.bf16.mxu0 0
      %2934 = vmatmul.mubr.bf16.gmra.mrb[0].mxu0 %v2652
      %v2935 = vpop.f32.mrb[0].mxu0
      %v2936 = vadd.f32 0.0, %v2935
      %v2937 = vpop.f32.mrb[0].mxu0
      %v2938 = vpop.f32.mrb[0].mxu0
      %v2939 = vadd.f32 0.0, %v2938
      %v2940 = vpop.f32.mrb[0].mxu0
      %2941 = vmatprep.mubr.bf16.mxu0 0
      %2942 = vmatmul.mubr.bf16.gmra.mrb[0].mxu0 %v2655
      %v2943 = vpop.f32.mrb[0].mxu0
      %v2944 = vadd.f32 0.0, %v2943
      %v2945 = vpop.f32.mrb[0].mxu0
      %v2946 = vpop.f32.mrb[0].mxu0
      %v2947 = vadd.f32 0.0, %v2946
      %v2948 = vpop.f32.mrb[0].mxu0
      %2949 = vmatprep.mubr.bf16.mxu0 0
      %2950 = vmatmul.mubr.bf16.gmra.mrb[0].mxu0 %v2658
      %v2951 = vpop.f32.mrb[0].mxu0
      %v2952 = vadd.f32 0.0, %v2951
      %v2953 = vpop.f32.mrb[0].mxu0
      %v2954 = vpop.f32.mrb[0].mxu0
      %v2955 = vadd.f32 0.0, %v2954
      %v2956 = vpop.f32.mrb[0].mxu0
      %2957 = vmatprep.mubr.bf16.mxu0 0
      %2958 = vmatmul.mubr.bf16.gmra.mrb[0].mxu0 %v2661
      %v2959 = vpop.f32.mrb[0].mxu0
      %v2960 = vadd.f32 0.0, %v2959
      %v2961 = vpop.f32.mrb[0].mxu0
      %v2962 = vpop.f32.mrb[0].mxu0
      %v2963 = vadd.f32 0.0, %v2962
      %v2964 = vpop.f32.mrb[0].mxu0
      %2965 = vmatprep.mubr.bf16.mxu0 0
      %2966 = vmatmul.mubr.bf16.gmra.mrb[0].mxu0 %v2664
      %v2967 = vpop.f32.mrb[0].mxu0
      %v2968 = vadd.f32 0.0, %v2967
      %v2969 = vpop.f32.mrb[0].mxu0
      %v2970 = vpop.f32.mrb[0].mxu0
      %v2971 = vadd.f32 0.0, %v2970
      %v2972 = vpop.f32.mrb[0].mxu0
      %2973 = vmatprep.mubr.bf16.mxu0 0
      %2974 = vmatmul.mubr.bf16.gmra.mrb[0].mxu0 %v2667
      %v2975 = vpop.f32.mrb[0].mxu0
      %v2976 = vadd.f32 0.0, %v2975
      %v2977 = vpop.f32.mrb[0].mxu0
      %v2978 = vpop.f32.mrb[0].mxu0
      %v2979 = vadd.f32 0.0, %v2978
      %v2980 = vpop.f32.mrb[0].mxu0
      %2981 = vmatprep.mubr.bf16.mxu0 0
      %2982 = vmatmul.mubr.bf16.gmra.mrb[0].mxu0 %v2670
      %v2983 = vpop.f32.mrb[0].mxu0
      %v2984 = vadd.f32 0.0, %v2983
      %v2985 = vpop.f32.mrb[0].mxu0
      %v2986 = vpop.f32.mrb[0].mxu0
      %v2987 = vadd.f32 0.0, %v2986
      %v2988 = vpop.f32.mrb[0].mxu0
      %2989 = vmatprep.mubr.bf16.mxu0 0
      %2990 = vmatmul.mubr.bf16.gmra.mrb[0].mxu0 %v2673
      %v2991 = vpop.f32.mrb[0].mxu0
      %v2992 = vadd.f32 0.0, %v2991
      %v2993 = vpop.f32.mrb[0].mxu0
      %v2994 = vpop.f32.mrb[0].mxu0
      %v2995 = vadd.f32 0.0, %v2994
      %v2996 = vpop.f32.mrb[0].mxu0
      %2997 = vmatprep.mubr.bf16.mxu0 0
      %2998 = vmatmul.mubr.bf16.gmra.mrb[0].mxu0 %v2676
      %v2999 = vpop.f32.mrb[0].mxu0
      %v3000 = vadd.f32 0.0, %v2999
      %v3001 = vpop.f32.mrb[0].mxu0
      %v3002 = vpop.f32.mrb[0].mxu0
      %v3003 = vadd.f32 0.0, %v3002
      %v3004 = vpop.f32.mrb[0].mxu0
      %3005 = vmatprep.mubr.bf16.mxu0 0
      %3006 = vmatmul.mubr.bf16.gmra.mrb[0].mxu0 %v2679
      %v3007 = vpop.f32.mrb[0].mxu0
      %v3008 = vadd.f32 0.0, %v3007
      %v3009 = vpop.f32.mrb[0].mxu0
      %v3010 = vpop.f32.mrb[0].mxu0
      %v3011 = vadd.f32 0.0, %v3010
      %v3012 = vpop.f32.mrb[0].mxu0
      %3013 = vmatprep.mubr.bf16.mxu0 0
      %3014 = vmatmul.mubr.bf16.gmra.mrb[0].mxu0 %v2682
      %v3015 = vpop.f32.mrb[0].mxu0
      %v3016 = vadd.f32 0.0, %v3015
      %v3017 = vpop.f32.mrb[0].mxu0
      %v3018 = vpop.f32.mrb[0].mxu0
      %v3019 = vadd.f32 0.0, %v3018
      %v3020 = vpop.f32.mrb[0].mxu0
      %3021 = vmatprep.mubr.bf16.mxu0 0
      %3022 = vmatmul.mubr.bf16.gmra.mrb[0].mxu0 %v2685
      %v3023 = vpop.f32.mrb[0].mxu0
      %v3024 = vadd.f32 0.0, %v3023
      %v3025 = vpop.f32.mrb[0].mxu0
      %v3026 = vpop.f32.mrb[0].mxu0
      %v3027 = vadd.f32 0.0, %v3026
      %v3028 = vpop.f32.mrb[0].mxu0
      %3029 = vmatprep.mubr.bf16.mxu0 0
      %3030 = vmatmul.mubr.bf16.gmra.mrb[0].mxu0 %v2688
      %v3031 = vpop.f32.mrb[0].mxu0
      %v3032 = vadd.f32 0.0, %v3031
      %v3033 = vpop.f32.mrb[0].mxu0
      %v3034 = vpop.f32.mrb[0].mxu0
      %v3035 = vadd.f32 0.0, %v3034
      %v3036 = vpop.f32.mrb[0].mxu0
      %3037 = vmatprep.mubr.bf16.mxu0 0
      %3038 = vmatmul.mubr.bf16.gmra.mrb[0].mxu0 %v2691
      %v3039 = vpop.f32.mrb[0].mxu0
      %v3040 = vadd.f32 0.0, %v3039
      %v3041 = vpop.f32.mrb[0].mxu0
      %v3042 = vpop.f32.mrb[0].mxu0
      %v3043 = vadd.f32 0.0, %v3042
      %v3044 = vpop.f32.mrb[0].mxu0
      %3045 = vmatprep.mubr.bf16.mxu0 0
      %3046 = vmatmul.mubr.bf16.gmra.mrb[0].mxu0 %v2694
      %v3047 = vpop.f32.mrb[0].mxu0
      %v3048 = vadd.f32 0.0, %v3047
      %v3049 = vpop.f32.mrb[0].mxu0
      %v3050 = vpop.f32.mrb[0].mxu0
      %v3051 = vadd.f32 0.0, %v3050
      %v3052 = vpop.f32.mrb[0].mxu0
      %3053 = vmatprep.mubr.bf16.mxu0 0
      %3054 = vmatmul.mubr.bf16.gmra.mrb[0].mxu0 %v2697
      %v3055 = vpop.f32.mrb[0].mxu0
      %v3056 = vadd.f32 0.0, %v3055
      %v3057 = vpop.f32.mrb[0].mxu0
      %v3058 = vpop.f32.mrb[0].mxu0
      %v3059 = vadd.f32 0.0, %v3058
      %v3060 = vpop.f32.mrb[0].mxu0
      %3061 = vmatprep.mubr.bf16.mxu0 0
      %3062 = vmatmul.mubr.bf16.gmra.mrb[0].mxu0 %v2700
      %v3063 = vpop.f32.mrb[0].mxu0
      %v3064 = vadd.f32 0.0, %v3063
      %v3065 = vpop.f32.mrb[0].mxu0
      %v3066 = vpop.f32.mrb[0].mxu0
      %v3067 = vadd.f32 0.0, %v3066
      %v3068 = vpop.f32.mrb[0].mxu0
      %3069 = vmatprep.mubr.bf16.mxu0 0
      %3070 = vmatmul.mubr.bf16.gmra.mrb[0].mxu0 %v2703
      %v3071 = vpop.f32.mrb[0].mxu0
      %v3072 = vadd.f32 0.0, %v3071
      %v3073 = vpop.f32.mrb[0].mxu0
      %v3074 = vpop.f32.mrb[0].mxu0
      %v3075 = vadd.f32 0.0, %v3074
      %v3076 = vpop.f32.mrb[0].mxu0
      %3077 = vmatprep.mubr.bf16.mxu0 0
      %3078 = vmatmul.mubr.bf16.gmra.mrb[0].mxu0 %v2706
      %v3079 = vpop.f32.mrb[0].mxu0
      %v3080 = vadd.f32 0.0, %v3079
      %v3081 = vpop.f32.mrb[0].mxu0
      %v3082 = vpop.f32.mrb[0].mxu0
      %v3083 = vadd.f32 0.0, %v3082
      %v3084 = vpop.f32.mrb[0].mxu0
      %3085 = vmatprep.mubr.bf16.mxu0 0
      %3086 = vmatmul.mubr.bf16.gmra.mrb[0].mxu0 %v2709
      %v3087 = vpop.f32.mrb[0].mxu0
      %v3088 = vadd.f32 0.0, %v3087
      %v3089 = vpop.f32.mrb[0].mxu0
      %v3090 = vpop.f32.mrb[0].mxu0
      %v3091 = vadd.f32 0.0, %v3090
      %v3092 = vpop.f32.mrb[0].mxu0
      %3093 = vmatprep.mubr.bf16.mxu0 0
      %3094 = vmatmul.mubr.bf16.gmra.mrb[0].mxu0 %v2712
      %v3095 = vpop.f32.mrb[0].mxu0
      %v3096 = vadd.f32 0.0, %v3095
      %v3097 = vpop.f32.mrb[0].mxu0
      %v3098 = vpop.f32.mrb[0].mxu0
      %v3099 = vadd.f32 0.0, %v3098
      %v3100 = vpop.f32.mrb[0].mxu0
      %3101 = vmatprep.mubr.bf16.mxu0 0
      %3102 = vmatmul.mubr.bf16.gmra.mrb[0].mxu0 %v2715
      %v3103 = vpop.f32.mrb[0].mxu0
      %v3104 = vadd.f32 0.0, %v3103
      %v3105 = vpop.f32.mrb[0].mxu0
      %v3106 = vpop.f32.mrb[0].mxu0
      %v3107 = vadd.f32 0.0, %v3106
      %v3108 = vpop.f32.mrb[0].mxu0
      %3109 = vmatprep.mubr.bf16.mxu0 0
      %3110 = vmatmul.mubr.bf16.gmra.mrb[0].mxu0 %v2718
      %v3111 = vpop.f32.mrb[0].mxu0
      %v3112 = vadd.f32 0.0, %v3111
      %v3113 = vpop.f32.mrb[0].mxu0
      %v3114 = vpop.f32.mrb[0].mxu0
      %v3115 = vadd.f32 0.0, %v3114
      %v3116 = vpop.f32.mrb[0].mxu0
      %3117 = vmatprep.mubr.bf16.mxu0 0
      %3118 = vmatmul.mubr.bf16.gmra.mrb[0].mxu0 %v2721
      %v3119 = vpop.f32.mrb[0].mxu0
      %v3120 = vadd.f32 0.0, %v3119
      %v3121 = vpop.f32.mrb[0].mxu0
      %v3122 = vpop.f32.mrb[0].mxu0
      %v3123 = vadd.f32 0.0, %v3122
      %v3124 = vpop.f32.mrb[0].mxu0
      %3125 = vmatprep.mubr.bf16.mxu0 0
      %3126 = vmatmul.mubr.bf16.gmra.mrb[0].mxu0 %v2724
      %v3127 = vpop.f32.mrb[0].mxu0
      %v3128 = vadd.f32 0.0, %v3127
      %v3129 = vpop.f32.mrb[0].mxu0
      %v3130 = vpop.f32.mrb[0].mxu0
      %v3131 = vadd.f32 0.0, %v3130
      %v3132 = vpop.f32.mrb[0].mxu0
      %3133 = vmatprep.mubr.bf16.mxu0 0
      %3134 = vmatmul.mubr.bf16.gmra.mrb[0].mxu0 %v2727
      %v3135 = vpop.f32.mrb[0].mxu0
      %v3136 = vadd.f32 0.0, %v3135
      %v3137 = vpop.f32.mrb[0].mxu0
      %v3138 = vpop.f32.mrb[0].mxu0
      %v3139 = vadd.f32 0.0, %v3138
      %v3140 = vpop.f32.mrb[0].mxu0
      %3141 = vmatprep.mubr.bf16.mxu0 0
      %3142 = vmatmul.mubr.bf16.gmra.mrb[0].mxu0 %v2730
      %v3143 = vpop.f32.mrb[0].mxu0
      %v3144 = vadd.f32 0.0, %v3143
      %v3145 = vpop.f32.mrb[0].mxu0
      %v3146 = vpop.f32.mrb[0].mxu0
      %v3147 = vadd.f32 0.0, %v3146
      %v3148 = vpop.f32.mrb[0].mxu0
      %3149 = vmatprep.mubr.bf16.mxu0 0
      %3150 = vmatmul.mubr.bf16.gmra.mrb[0].mxu0 %v2733
      %v3151 = vpop.f32.mrb[0].mxu0
      %v3152 = vadd.f32 0.0, %v3151
      %v3153 = vpop.f32.mrb[0].mxu0
      %v3154 = vpop.f32.mrb[0].mxu0
      %v3155 = vadd.f32 0.0, %v3154
      %v3156 = vpop.f32.mrb[0].mxu0
      %3157 = vmatprep.mubr.bf16.mxu0 0
      %3158 = vmatmul.mubr.bf16.gmra.mrb[0].mxu0 %v2736
      %v3159 = vpop.f32.mrb[0].mxu0
      %v3160 = vadd.f32 0.0, %v3159
      %v3161 = vpop.f32.mrb[0].mxu0
      %v3162 = vpop.f32.mrb[0].mxu0
      %v3163 = vadd.f32 0.0, %v3162
      %v3164 = vpop.f32.mrb[0].mxu0
      %3165 = vmatprep.mubr.bf16.mxu0 0
      %3166 = vmatmul.mubr.bf16.gmra.mrb[0].mxu0 %v2739
      %v3167 = vpop.f32.mrb[0].mxu0
      %v3168 = vadd.f32 0.0, %v3167
      %v3169 = vpop.f32.mrb[0].mxu0
      %v3170 = vpop.f32.mrb[0].mxu0
      %v3171 = vadd.f32 0.0, %v3170
      %v3172 = vpop.f32.mrb[0].mxu0
      %3173 = vmatprep.mubr.bf16.mxu0 0
      %3174 = vmatmul.mubr.bf16.gmra.mrb[0].mxu0 %v2742
      %v3175 = vpop.f32.mrb[0].mxu0
      %v3176 = vadd.f32 0.0, %v3175
      %v3177 = vpop.f32.mrb[0].mxu0
      %v3178 = vpop.f32.mrb[0].mxu0
      %v3179 = vadd.f32 0.0, %v3178
      %v3180 = vpop.f32.mrb[0].mxu0
      %3181 = vmatprep.mubr.bf16.mxu0 0
      %3182 = vmatmul.mubr.bf16.gmra.mrb[0].mxu0 %v2745
      %v3183 = vpop.f32.mrb[0].mxu0
      %v3184 = vadd.f32 0.0, %v3183
      %v3185 = vpop.f32.mrb[0].mxu0
      %v3186 = vpop.f32.mrb[0].mxu0
      %v3187 = vadd.f32 0.0, %v3186
      %v3188 = vpop.f32.mrb[0].mxu0
      %3189 = vmatprep.mubr.bf16.mxu0 0
      %3190 = vmatmul.mubr.bf16.gmra.mrb[0].mxu0 %v2748
      %v3191 = vpop.f32.mrb[0].mxu0
      %v3192 = vadd.f32 0.0, %v3191
      %v3193 = vpop.f32.mrb[0].mxu0
      %v3194 = vpop.f32.mrb[0].mxu0
      %v3195 = vadd.f32 0.0, %v3194
      %v3196 = vpop.f32.mrb[0].mxu0
      %3197 = vmatprep.mubr.bf16.mxu0 0
      %3198 = vmatmul.mubr.bf16.gmra.mrb[0].mxu0 %v2751
      %v3199 = vpop.f32.mrb[0].mxu0
      %v3200 = vadd.f32 0.0, %v3199
      %v3201 = vpop.f32.mrb[0].mxu0
      %v3202 = vpop.f32.mrb[0].mxu0
      %v3203 = vadd.f32 0.0, %v3202
      %v3204 = vpop.f32.mrb[0].mxu0
      %3205 = vmatprep.mubr.bf16.mxu0 0
      %3206 = vmatmul.mubr.bf16.gmra.mrb[0].mxu0 %v2754
      %v3207 = vpop.f32.mrb[0].mxu0
      %v3208 = vadd.f32 0.0, %v3207
      %v3209 = vpop.f32.mrb[0].mxu0
      %v3210 = vpop.f32.mrb[0].mxu0
      %v3211 = vadd.f32 0.0, %v3210
      %v3212 = vpop.f32.mrb[0].mxu0
      %3213 = vmatprep.mubr.bf16.mxu0 0
      %3214 = vmatmul.mubr.bf16.gmra.mrb[0].mxu0 %v2757
      %v3215 = vpop.f32.mrb[0].mxu0
      %v3216 = vadd.f32 0.0, %v3215
      %v3217 = vpop.f32.mrb[0].mxu0
      %v3218 = vpop.f32.mrb[0].mxu0
      %v3219 = vadd.f32 0.0, %v3218
      %v3220 = vpop.f32.mrb[0].mxu0
      %3221 = vmatprep.mubr.bf16.mxu0 0
      %3222 = vmatmul.mubr.bf16.gmra.mrb[0].mxu0 %v2760
      %v3223 = vpop.f32.mrb[0].mxu0
      %v3224 = vadd.f32 0.0, %v3223
      %v3225 = vpop.f32.mrb[0].mxu0
      %v3226 = vpop.f32.mrb[0].mxu0
      %v3227 = vadd.f32 0.0, %v3226
      %v3228 = vpop.f32.mrb[0].mxu0
      %3229 = vmatprep.mubr.bf16.mxu0 0
      %3230 = vmatmul.mubr.bf16.gmra.mrb[0].mxu0 %v2763
      %v3231 = vpop.f32.mrb[0].mxu0
      %v3232 = vadd.f32 0.0, %v3231
      %v3233 = vpop.f32.mrb[0].mxu0
      %v3234 = vpop.f32.mrb[0].mxu0
      %v3235 = vadd.f32 0.0, %v3234
      %v3236 = vpop.f32.mrb[0].mxu0
      %3237 = vmatprep.mubr.bf16.mxu0 0
      %3238 = vmatmul.mubr.bf16.gmra.mrb[0].mxu0 %v2766
      %v3239 = vpop.f32.mrb[0].mxu0
      %v3240 = vadd.f32 0.0, %v3239
      %v3241 = vpop.f32.mrb[0].mxu0
      %v3242 = vpop.f32.mrb[0].mxu0
      %v3243 = vadd.f32 0.0, %v3242
      %v3244 = vpop.f32.mrb[0].mxu0
      %3245 = vmatprep.mubr.bf16.mxu0 0
      %3246 = vmatmul.mubr.bf16.gmra.mrb[0].mxu0 %v2769
      %v3247 = vpop.f32.mrb[0].mxu0
      %v3248 = vadd.f32 0.0, %v3247
      %v3249 = vpop.f32.mrb[0].mxu0
      %v3250 = vpop.f32.mrb[0].mxu0
      %v3251 = vadd.f32 0.0, %v3250
      %v3252 = vpop.f32.mrb[0].mxu0
      %3253 = vmatprep.mubr.bf16.mxu0 0
      %3254 = vmatmul.mubr.bf16.gmra.mrb[0].mxu0 %v2772
      %v3255 = vpop.f32.mrb[0].mxu0
      %v3256 = vadd.f32 0.0, %v3255
      %v3257 = vpop.f32.mrb[0].mxu0
      %v3258 = vpop.f32.mrb[0].mxu0
      %v3259 = vadd.f32 0.0, %v3258
      %v3260 = vpop.f32.mrb[0].mxu0
      %3261 = vmatprep.mubr.bf16.mxu0 0
      %3262 = vmatmul.mubr.bf16.gmra.mrb[0].mxu0 %v2775
      %v3263 = vpop.f32.mrb[0].mxu0
      %v3264 = vadd.f32 0.0, %v3263
      %v3265 = vpop.f32.mrb[0].mxu0
      %v3266 = vpop.f32.mrb[0].mxu0
      %v3267 = vadd.f32 0.0, %v3266
      %v3268 = vpop.f32.mrb[0].mxu0
      %3269 = vmatprep.mubr.bf16.mxu0 0
      %3270 = vmatmul.mubr.bf16.gmra.mrb[0].mxu0 %v2778
      %v3271 = vpop.f32.mrb[0].mxu0
      %v3272 = vadd.f32 0.0, %v3271
      %v3273 = vpop.f32.mrb[0].mxu0
      %v3274 = vpop.f32.mrb[0].mxu0
      %v3275 = vadd.f32 0.0, %v3274
      %v3276 = vpop.f32.mrb[0].mxu0
      %3277 = vmatprep.mubr.bf16.mxu0 0
      %3278 = vmatmul.mubr.bf16.gmra.mrb[0].mxu0 %v2781
      %v3279 = vpop.f32.mrb[0].mxu0
      %v3280 = vadd.f32 0.0, %v3279
      %v3281 = vpop.f32.mrb[0].mxu0
      %v3282 = vpop.f32.mrb[0].mxu0
      %v3283 = vadd.f32 0.0, %v3282
      %v3284 = vpop.f32.mrb[0].mxu0
      %3285 = vmatprep.mubr.bf16.mxu0 0
      %3286 = vmatmul.mubr.bf16.gmra.mrb[0].mxu0 %v2784
      %v3287 = vpop.f32.mrb[0].mxu0
      %v3288 = vadd.f32 0.0, %v3287
      %v3289 = vpop.f32.mrb[0].mxu0
      %v3290 = vpop.f32.mrb[0].mxu0
      %v3291 = vadd.f32 0.0, %v3290
      %v3292 = vpop.f32.mrb[0].mxu0
      %3293 = vmatprep.mubr.bf16.mxu0 0
      %3294 = vmatmul.mubr.bf16.gmra.mrb[0].mxu0 %v2787
      %v3295 = vpop.f32.mrb[0].mxu0
      %v3296 = vadd.f32 0.0, %v3295
      %v3297 = vpop.f32.mrb[0].mxu0
      %v3298 = vpop.f32.mrb[0].mxu0
      %v3299 = vadd.f32 0.0, %v3298
      %v3300 = vpop.f32.mrb[0].mxu0
      %3301 = vmatprep.mubr.bf16.mxu0 0
      %3302 = vmatmul.mubr.bf16.gmra.mrb[0].mxu0 %v2790
      %v3303 = vpop.f32.mrb[0].mxu0
      %v3304 = vadd.f32 0.0, %v3303
      %v3305 = vpop.f32.mrb[0].mxu0
      %v3306 = vpop.f32.mrb[0].mxu0
      %v3307 = vadd.f32 0.0, %v3306
      %v3308 = vpop.f32.mrb[0].mxu0
      %3309 = vmatprep.mubr.bf16.mxu0 0
      %3310 = vmatmul.mubr.bf16.gmra.mrb[0].mxu0 %v2793
      %v3311 = vpop.f32.mrb[0].mxu0
      %v3312 = vadd.f32 0.0, %v3311
      %v3313 = vpop.f32.mrb[0].mxu0
      %v3314 = vpop.f32.mrb[0].mxu0
      %v3315 = vadd.f32 0.0, %v3314
      %v3316 = vpop.f32.mrb[0].mxu0
      %3317 = vmatprep.mubr.bf16.mxu0 0
      %3318 = vmatmul.mubr.bf16.gmra.mrb[0].mxu0 %v2796
      %v3319 = vpop.f32.mrb[0].mxu0
      %v3320 = vadd.f32 0.0, %v3319
      %v3321 = vpop.f32.mrb[0].mxu0
      %v3322 = vpop.f32.mrb[0].mxu0
      %v3323 = vadd.f32 0.0, %v3322
      %v3324 = vpop.f32.mrb[0].mxu0
      %3325 = vmatprep.mubr.bf16.mxu0 0
      %3326 = vmatmul.mubr.bf16.gmra.mrb[0].mxu0 %v2799
      %v3327 = vpop.f32.mrb[0].mxu0
      %v3328 = vadd.f32 0.0, %v3327
      %v3329 = vpop.f32.mrb[0].mxu0
      %v3330 = vpop.f32.mrb[0].mxu0
      %v3331 = vadd.f32 0.0, %v3330
      %v3332 = vpop.f32.mrb[0].mxu0
      %3333 = vmatprep.mubr.bf16.mxu0 0
      %3334 = vmatmul.mubr.bf16.gmra.mrb[0].mxu0 %v2802
      %v3335 = vpop.f32.mrb[0].mxu0
      %v3336 = vadd.f32 0.0, %v3335
      %v3337 = vpop.f32.mrb[0].mxu0
      %v3338 = vpop.f32.mrb[0].mxu0
      %v3339 = vadd.f32 0.0, %v3338
      %v3340 = vpop.f32.mrb[0].mxu0
      %3341 = vmatprep.mubr.bf16.mxu0 0
      %3342 = vmatmul.mubr.bf16.gmra.mrb[0].mxu0 %v2805
      %v3343 = vpop.f32.mrb[0].mxu0
      %v3344 = vadd.f32 0.0, %v3343
      %v3345 = vpop.f32.mrb[0].mxu0
      %v3346 = vpop.f32.mrb[0].mxu0
      %v3347 = vadd.f32 0.0, %v3346
      %v3348 = vpop.f32.mrb[0].mxu0
      %3349 = vmatprep.mubr.bf16.mxu0 0
      %3350 = vmatmul.mubr.bf16.gmra.mrb[0].mxu0 %v2808
      %v3351 = vpop.f32.mrb[0].mxu0
      %v3352 = vadd.f32 0.0, %v3351
      %v3353 = vpop.f32.mrb[0].mxu0
      %v3354 = vpop.f32.mrb[0].mxu0
      %v3355 = vadd.f32 0.0, %v3354
      %v3356 = vpop.f32.mrb[0].mxu0
      %3357 = vdwg.mxu0
      %v3358 = vadd.f32 %v1652, %v2848
      %v3359 = vadd.f32 %v1655, %v2851
      %v3360 = vadd.f32 %v1660, %v2856
      %v3361 = vadd.f32 %v1663, %v2859
      %v3362 = vadd.f32 %v1668, %v2864
      %v3363 = vadd.f32 %v1671, %v2867
      %v3364 = vadd.f32 %v1676, %v2872
      %v3365 = vadd.f32 %v1679, %v2875
      %v3366 = vadd.f32 %v1684, %v2880
      %v3367 = vadd.f32 %v1687, %v2883
      %v3368 = vadd.f32 %v1692, %v2888
      %v3369 = vadd.f32 %v1695, %v2891
      %v3370 = vadd.f32 %v1700, %v2896
      %v3371 = vadd.f32 %v1703, %v2899
      %v3372 = vadd.f32 %v1708, %v2904
      %v3373 = vadd.f32 %v1711, %v2907
      %v3374 = vadd.f32 %v1716, %v2912
      %v3375 = vadd.f32 %v1719, %v2915
      %v3376 = vadd.f32 %v1724, %v2920
      %v3377 = vadd.f32 %v1727, %v2923
      %v3378 = vadd.f32 %v1732, %v2928
      %v3379 = vadd.f32 %v1735, %v2931
      %v3380 = vadd.f32 %v1740, %v2936
      %v3381 = vadd.f32 %v1743, %v2939
      %v3382 = vadd.f32 %v1748, %v2944
      %v3383 = vadd.f32 %v1751, %v2947
      %v3384 = vadd.f32 %v1756, %v2952
      %v3385 = vadd.f32 %v1759, %v2955
      %v3386 = vadd.f32 %v1764, %v2960
      %v3387 = vadd.f32 %v1767, %v2963
      %v3388 = vadd.f32 %v1772, %v2968
      %v3389 = vadd.f32 %v1775, %v2971
      %v3390 = vadd.f32 %v1780, %v2976
      %v3391 = vadd.f32 %v1783, %v2979
      %v3392 = vadd.f32 %v1788, %v2984
      %v3393 = vadd.f32 %v1791, %v2987
      %v3394 = vadd.f32 %v1796, %v2992
      %v3395 = vadd.f32 %v1799, %v2995
      %v3396 = vadd.f32 %v1804, %v3000
      %v3397 = vadd.f32 %v1807, %v3003
      %v3398 = vadd.f32 %v1812, %v3008
      %v3399 = vadd.f32 %v1815, %v3011
      %v3400 = vadd.f32 %v1820, %v3016
      %v3401 = vadd.f32 %v1823, %v3019
      %v3402 = vadd.f32 %v1828, %v3024
      %v3403 = vadd.f32 %v1831, %v3027
      %v3404 = vadd.f32 %v1836, %v3032
      %v3405 = vadd.f32 %v1839, %v3035
      %v3406 = vadd.f32 %v1844, %v3040
      %v3407 = vadd.f32 %v1847, %v3043
      %v3408 = vadd.f32 %v1852, %v3048
      %v3409 = vadd.f32 %v1855, %v3051
      %v3410 = vadd.f32 %v1860, %v3056
      %v3411 = vadd.f32 %v1863, %v3059
      %v3412 = vadd.f32 %v1868, %v3064
      %v3413 = vadd.f32 %v1871, %v3067
      %v3414 = vadd.f32 %v1876, %v3072
      %v3415 = vadd.f32 %v1879, %v3075
      %v3416 = vadd.f32 %v1884, %v3080
      %v3417 = vadd.f32 %v1887, %v3083
      %v3418 = vadd.f32 %v1892, %v3088
      %v3419 = vadd.f32 %v1895, %v3091
      %v3420 = vadd.f32 %v1900, %v3096
      %v3421 = vadd.f32 %v1903, %v3099
      %v3422 = vadd.f32 %v1908, %v3104
      %v3423 = vadd.f32 %v1911, %v3107
      %v3424 = vadd.f32 %v1916, %v3112
      %v3425 = vadd.f32 %v1919, %v3115
      %v3426 = vadd.f32 %v1924, %v3120
      %v3427 = vadd.f32 %v1927, %v3123
      %v3428 = vadd.f32 %v1932, %v3128
      %v3429 = vadd.f32 %v1935, %v3131
      %v3430 = vadd.f32 %v1940, %v3136
      %v3431 = vadd.f32 %v1943, %v3139
      %v3432 = vadd.f32 %v1948, %v3144
      %v3433 = vadd.f32 %v1951, %v3147
      %v3434 = vadd.f32 %v1956, %v3152
      %v3435 = vadd.f32 %v1959, %v3155
      %v3436 = vadd.f32 %v1964, %v3160
      %v3437 = vadd.f32 %v1967, %v3163
      %v3438 = vadd.f32 %v1972, %v3168
      %v3439 = vadd.f32 %v1975, %v3171
      %v3440 = vadd.f32 %v1980, %v3176
      %v3441 = vadd.f32 %v1983, %v3179
      %v3442 = vadd.f32 %v1988, %v3184
      %v3443 = vadd.f32 %v1991, %v3187
      %v3444 = vadd.f32 %v1996, %v3192
      %v3445 = vadd.f32 %v1999, %v3195
      %v3446 = vadd.f32 %v2004, %v3200
      %v3447 = vadd.f32 %v2007, %v3203
      %v3448 = vadd.f32 %v2012, %v3208
      %v3449 = vadd.f32 %v2015, %v3211
      %v3450 = vadd.f32 %v2020, %v3216
      %v3451 = vadd.f32 %v2023, %v3219
      %v3452 = vadd.f32 %v2028, %v3224
      %v3453 = vadd.f32 %v2031, %v3227
      %v3454 = vadd.f32 %v2036, %v3232
      %v3455 = vadd.f32 %v2039, %v3235
      %v3456 = vadd.f32 %v2044, %v3240
      %v3457 = vadd.f32 %v2047, %v3243
      %v3458 = vadd.f32 %v2052, %v3248
      %v3459 = vadd.f32 %v2055, %v3251
      %v3460 = vadd.f32 %v2060, %v3256
      %v3461 = vadd.f32 %v2063, %v3259
      %v3462 = vadd.f32 %v2068, %v3264
      %v3463 = vadd.f32 %v2071, %v3267
      %v3464 = vadd.f32 %v2076, %v3272
      %v3465 = vadd.f32 %v2079, %v3275
      %v3466 = vadd.f32 %v2084, %v3280
      %v3467 = vadd.f32 %v2087, %v3283
      %v3468 = vadd.f32 %v2092, %v3288
      %v3469 = vadd.f32 %v2095, %v3291
      %v3470 = vadd.f32 %v2100, %v3296
      %v3471 = vadd.f32 %v2103, %v3299
      %v3472 = vadd.f32 %v2108, %v3304
      %v3473 = vadd.f32 %v2111, %v3307
      %v3474 = vadd.f32 %v2116, %v3312
      %v3475 = vadd.f32 %v2119, %v3315
      %v3476 = vadd.f32 %v2124, %v3320
      %v3477 = vadd.f32 %v2127, %v3323
      %v3478 = vadd.f32 %v2132, %v3328
      %v3479 = vadd.f32 %v2135, %v3331
      %v3480 = vadd.f32 %v2140, %v3336
      %v3481 = vadd.f32 %v2143, %v3339
      %v3482 = vadd.f32 %v2148, %v3344
      %v3483 = vadd.f32 %v2151, %v3347
      %v3484 = vadd.f32 %v2156, %v3352
      %v3485 = vadd.f32 %v2159, %v3355
      %v3486 = vld [vmem:[%s380 + $0x30] sm:$0xf]
      %v3487 = vld [vmem:[%s380 + $0x34] sm:$0xf]
      %v3488 = vld [vmem:[%s380 + $0x38] sm:$0xf]
      %v3489 = vld [vmem:[%s380 + $0x3c] sm:$0xf]
      %v3490 = vld [vmem:[%s380 + $0x40] sm:$0xf]
      %v3491 = vld [vmem:[%s380 + $0x44] sm:$0xf]
      %v3492 = vld [vmem:[%s380 + $0x48] sm:$0xf]
      %v3493 = vld [vmem:[%s380 + $0x4c] sm:$0xf]
      %v3494 = vld [vmem:[%s380 + $0x50] sm:$0xf]
      %v3495 = vld [vmem:[%s380 + $0x54] sm:$0xf]
      %v3496 = vld [vmem:[%s380 + $0x58] sm:$0xf]
      %v3497 = vld [vmem:[%s380 + $0x5c] sm:$0xf]
      %v3498 = vld [vmem:[%s380 + $0x60] sm:$0xf]
      %v3499 = vld [vmem:[%s380 + $0x64] sm:$0xf]
      %v3500 = vld [vmem:[%s380 + $0x68] sm:$0xf]
      %v3501 = vld [vmem:[%s380 + $0x6c] sm:$0xf]
      %v3502 = vld [vmem:[%s380 + $0x70] sm:$0xf]
      %v3503 = vld [vmem:[%s380 + $0x74] sm:$0xf]
      %v3504 = vld [vmem:[%s380 + $0x78] sm:$0xf]
      %v3505 = vld [vmem:[%s380 + $0x7c] sm:$0xf]
      %v3506 = vld [vmem:[%s380 + $0x80] sm:$0xf]
      %v3507 = vld [vmem:[%s380 + $0x84] sm:$0xf]
      %v3508 = vld [vmem:[%s380 + $0x88] sm:$0xf]
      %v3509 = vld [vmem:[%s380 + $0x8c] sm:$0xf]
      %v3510 = vld [vmem:[%s380 + $0x90] sm:$0xf]
      %v3511 = vld [vmem:[%s380 + $0x94] sm:$0xf]
      %v3512 = vld [vmem:[%s380 + $0x98] sm:$0xf]
      %v3513 = vld [vmem:[%s380 + $0x9c] sm:$0xf]
      %v3514 = vld [vmem:[%s380 + $0xa0] sm:$0xf]
      %v3515 = vld [vmem:[%s380 + $0xa4] sm:$0xf]
      %v3516 = vld [vmem:[%s380 + $0xa8] sm:$0xf]
      %v3517 = vld [vmem:[%s380 + $0xac] sm:$0xf]
      %v3518 = vld [vmem:[%s380 + $0xb0] sm:$0xf]
      %v3519 = vld [vmem:[%s380 + $0xb4] sm:$0xf]
      %v3520 = vld [vmem:[%s380 + $0xb8] sm:$0xf]
      %v3521 = vld [vmem:[%s380 + $0xbc] sm:$0xf]
      %v3522 = vld [vmem:[%s380 + $0xc0] sm:$0xf]
      %v3523 = vld [vmem:[%s380 + $0xc4] sm:$0xf]
      %v3524 = vld [vmem:[%s380 + $0xc8] sm:$0xf]
      %v3525 = vld [vmem:[%s380 + $0xcc] sm:$0xf]
      %v3526 = vld [vmem:[%s380 + $0xd0] sm:$0xf]
      %v3527 = vld [vmem:[%s380 + $0xd4] sm:$0xf]
      %v3528 = vld [vmem:[%s380 + $0xd8] sm:$0xf]
      %v3529 = vld [vmem:[%s380 + $0xdc] sm:$0xf]
      %v3530 = vld [vmem:[%s380 + $0xe0] sm:$0xf]
      %v3531 = vld [vmem:[%s380 + $0xe4] sm:$0xf]
      %v3532 = vld [vmem:[%s380 + $0xe8] sm:$0xf]
      %v3533 = vld [vmem:[%s380 + $0xec] sm:$0xf]
      %v3534 = vld [vmem:[%s380 + $0xf0] sm:$0xf]
      %v3535 = vld [vmem:[%s380 + $0xf4] sm:$0xf]
      %v3536 = vld [vmem:[%s380 + $0xf8] sm:$0xf]
      %v3537 = vld [vmem:[%s380 + $0xfc] sm:$0xf]
      %v3538 = vld [vmem:[%s380 + $0x100] sm:$0xf]
      %v3539 = vld [vmem:[%s380 + $0x104] sm:$0xf]
      %v3540 = vld [vmem:[%s380 + $0x108] sm:$0xf]
      %v3541 = vld [vmem:[%s380 + $0x10c] sm:$0xf]
      %v3542 = vld [vmem:[%s380 + $0x110] sm:$0xf]
      %v3543 = vld [vmem:[%s380 + $0x114] sm:$0xf]
      %v3544 = vld [vmem:[%s380 + $0x118] sm:$0xf]
      %v3545 = vld [vmem:[%s380 + $0x11c] sm:$0xf]
      %v3546 = vld [vmem:[%s380 + $0x120] sm:$0xf]
      %v3547 = vld [vmem:[%s380 + $0x124] sm:$0xf]
      %v3548 = vld [vmem:[%s380 + $0x128] sm:$0xf]
      %v3549 = vld [vmem:[%s380 + $0x12c] sm:$0xf]
      %v3550 = vld [vmem:[%s380 + $0x130] sm:$0xf]
      %v3551 = vld [vmem:[%s380 + $0x134] sm:$0xf]
      %v3552 = vld [vmem:[%s380 + $0x138] sm:$0xf]
      %v3553 = vld [vmem:[%s380 + $0x13c] sm:$0xf]
      %v3554 = vld [vmem:[%s380 + $0x140] sm:$0xf]
      %v3555 = vld [vmem:[%s380 + $0x144] sm:$0xf]
      %v3556 = vld [vmem:[%s380 + $0x148] sm:$0xf]
      %v3557 = vld [vmem:[%s380 + $0x14c] sm:$0xf]
      %v3558 = vld [vmem:[%s380 + $0x150] sm:$0xf]
      %v3559 = vld [vmem:[%s380 + $0x154] sm:$0xf]
      %v3560 = vld [vmem:[%s380 + $0x158] sm:$0xf]
      %v3561 = vld [vmem:[%s380 + $0x15c] sm:$0xf]
      %v3562 = vld [vmem:[%s380 + $0x160] sm:$0xf]
      %v3563 = vld [vmem:[%s380 + $0x164] sm:$0xf]
      %v3564 = vld [vmem:[%s380 + $0x168] sm:$0xf]
      %v3565 = vld [vmem:[%s380 + $0x16c] sm:$0xf]
      %v3566 = vld [vmem:[%s380 + $0x170] sm:$0xf]
      %v3567 = vld [vmem:[%s380 + $0x174] sm:$0xf]
      %v3568 = vld [vmem:[%s380 + $0x178] sm:$0xf]
      %v3569 = vld [vmem:[%s380 + $0x17c] sm:$0xf]
      %v3570 = vld [vmem:[%s380 + $0x180] sm:$0xf]
      %v3571 = vld [vmem:[%s380 + $0x184] sm:$0xf]
      %v3572 = vld [vmem:[%s380 + $0x188] sm:$0xf]
      %v3573 = vld [vmem:[%s380 + $0x18c] sm:$0xf]
      %v3574 = vld [vmem:[%s380 + $0x190] sm:$0xf]
      %v3575 = vld [vmem:[%s380 + $0x194] sm:$0xf]
      %v3576 = vld [vmem:[%s380 + $0x198] sm:$0xf]
      %v3577 = vld [vmem:[%s380 + $0x19c] sm:$0xf]
      %v3578 = vld [vmem:[%s380 + $0x1a0] sm:$0xf]
      %v3579 = vld [vmem:[%s380 + $0x1a4] sm:$0xf]
      %v3580 = vld [vmem:[%s380 + $0x1a8] sm:$0xf]
      %v3581 = vld [vmem:[%s380 + $0x1ac] sm:$0xf]
      %v3582 = vld [vmem:[%s380 + $0x1b0] sm:$0xf]
      %v3583 = vld [vmem:[%s380 + $0x1b4] sm:$0xf]
      %v3584 = vld [vmem:[%s380 + $0x1b8] sm:$0xf]
      %v3585 = vld [vmem:[%s380 + $0x1bc] sm:$0xf]
      %v3586 = vld [vmem:[%s380 + $0x1c0] sm:$0xf]
      %v3587 = vld [vmem:[%s380 + $0x1c4] sm:$0xf]
      %v3588 = vld [vmem:[%s380 + $0x1c8] sm:$0xf]
      %v3589 = vld [vmem:[%s380 + $0x1cc] sm:$0xf]
      %v3590 = vld [vmem:[%s380 + $0x1d0] sm:$0xf]
      %v3591 = vld [vmem:[%s380 + $0x1d4] sm:$0xf]
      %v3592 = vld [vmem:[%s380 + $0x1d8] sm:$0xf]
      %v3593 = vld [vmem:[%s380 + $0x1dc] sm:$0xf]
      %v3594 = vld [vmem:[%s380 + $0x1e0] sm:$0xf]
      %v3595 = vld [vmem:[%s380 + $0x1e4] sm:$0xf]
      %v3596 = vld [vmem:[%s380 + $0x1e8] sm:$0xf]
      %v3597 = vld [vmem:[%s380 + $0x1ec] sm:$0xf]
      %v3598 = vld [vmem:[%s380 + $0x1f0] sm:$0xf]
      %v3599 = vld [vmem:[%s380 + $0x1f4] sm:$0xf]
      %v3600 = vld [vmem:[%s380 + $0x1f8] sm:$0xf]
      %v3601 = vld [vmem:[%s380 + $0x1fc] sm:$0xf]
      %v3602 = vld [vmem:[%s380 + $0x200] sm:$0xf]
      %v3603 = vld [vmem:[%s380 + $0x204] sm:$0xf]
      %v3604 = vld [vmem:[%s380 + $0x208] sm:$0xf]
      %v3605 = vld [vmem:[%s380 + $0x20c] sm:$0xf]
      %v3606 = vld [vmem:[%s380 + $0x210] sm:$0xf]
      %v3607 = vld [vmem:[%s380 + $0x214] sm:$0xf]
      %v3608 = vld [vmem:[%s380 + $0x218] sm:$0xf]
      %v3609 = vld [vmem:[%s380 + $0x21c] sm:$0xf]
      %v3610 = vld [vmem:[%s380 + $0x220] sm:$0xf]
      %v3611 = vld [vmem:[%s380 + $0x224] sm:$0xf]
      %v3612 = vld [vmem:[%s380 + $0x228] sm:$0xf]
      %v3613 = vld [vmem:[%s380 + $0x22c] sm:$0xf]
      %s3614 = scalar_lea.vmem %s1, 24
      %v3615 = vld [vmem:[%s3614] sm:$0xf]
      %v3616 = vld [vmem:[%s3614 + $0x4] sm:$0xf]
      %v3745 = vunpack.c.l.b16 %v3486
      %v3746 = vunpack.c.l.b16 %v3487
      %v3747 = vunpack.c.l.b16 %v3488
      %v3748 = vunpack.c.l.b16 %v3489
      %v3749 = vunpack.c.l.b16 %v3490
      %v3750 = vunpack.c.l.b16 %v3491
      %v3751 = vunpack.c.l.b16 %v3492
      %v3752 = vunpack.c.l.b16 %v3493
      %v3753 = vunpack.c.l.b16 %v3494
      %v3754 = vunpack.c.l.b16 %v3495
      %v3755 = vunpack.c.l.b16 %v3496
      %v3756 = vunpack.c.l.b16 %v3497
      %v3757 = vunpack.c.l.b16 %v3498
      %v3758 = vunpack.c.l.b16 %v3499
      %v3759 = vunpack.c.l.b16 %v3500
      %v3760 = vunpack.c.l.b16 %v3501
      %v3761 = vunpack.c.l.b16 %v3502
      %v3762 = vunpack.c.l.b16 %v3503
      %v3763 = vunpack.c.l.b16 %v3504
      %v3764 = vunpack.c.l.b16 %v3505
      %v3765 = vunpack.c.l.b16 %v3506
      %v3766 = vunpack.c.l.b16 %v3507
      %v3767 = vunpack.c.l.b16 %v3508
      %v3768 = vunpack.c.l.b16 %v3509
      %v3769 = vunpack.c.l.b16 %v3510
      %v3770 = vunpack.c.l.b16 %v3511
      %v3771 = vunpack.c.l.b16 %v3512
      %v3772 = vunpack.c.l.b16 %v3513
      %v3773 = vunpack.c.l.b16 %v3514
      %v3774 = vunpack.c.l.b16 %v3515
      %v3775 = vunpack.c.l.b16 %v3516
      %v3776 = vunpack.c.l.b16 %v3517
      %v3777 = vunpack.c.l.b16 %v3518
      %v3778 = vunpack.c.l.b16 %v3519
      %v3779 = vunpack.c.l.b16 %v3520
      %v3780 = vunpack.c.l.b16 %v3521
      %v3781 = vunpack.c.l.b16 %v3522
      %v3782 = vunpack.c.l.b16 %v3523
      %v3783 = vunpack.c.l.b16 %v3524
      %v3784 = vunpack.c.l.b16 %v3525
      %v3785 = vunpack.c.l.b16 %v3526
      %v3786 = vunpack.c.l.b16 %v3527
      %v3787 = vunpack.c.l.b16 %v3528
      %v3788 = vunpack.c.l.b16 %v3529
      %v3789 = vunpack.c.l.b16 %v3530
      %v3790 = vunpack.c.l.b16 %v3531
      %v3791 = vunpack.c.l.b16 %v3532
      %v3792 = vunpack.c.l.b16 %v3533
      %v3793 = vunpack.c.l.b16 %v3534
      %v3794 = vunpack.c.l.b16 %v3535
      %v3795 = vunpack.c.l.b16 %v3536
      %v3796 = vunpack.c.l.b16 %v3537
      %v3797 = vunpack.c.l.b16 %v3538
      %v3798 = vunpack.c.l.b16 %v3539
      %v3799 = vunpack.c.l.b16 %v3540
      %v3800 = vunpack.c.l.b16 %v3541
      %v3801 = vunpack.c.l.b16 %v3542
      %v3802 = vunpack.c.l.b16 %v3543
      %v3803 = vunpack.c.l.b16 %v3544
      %v3804 = vunpack.c.l.b16 %v3545
      %v3805 = vunpack.c.l.b16 %v3546
      %v3806 = vunpack.c.l.b16 %v3547
      %v3807 = vunpack.c.l.b16 %v3548
      %v3808 = vunpack.c.l.b16 %v3549
      %v3809 = vunpack.c.l.b16 %v3550
      %v3810 = vunpack.c.l.b16 %v3551
      %v3811 = vunpack.c.l.b16 %v3552
      %v3812 = vunpack.c.l.b16 %v3553
      %v3813 = vunpack.c.l.b16 %v3554
      %v3814 = vunpack.c.l.b16 %v3555
      %v3815 = vunpack.c.l.b16 %v3556
      %v3816 = vunpack.c.l.b16 %v3557
      %v3817 = vunpack.c.l.b16 %v3558
      %v3818 = vunpack.c.l.b16 %v3559
      %v3819 = vunpack.c.l.b16 %v3560
      %v3820 = vunpack.c.l.b16 %v3561
      %v3821 = vunpack.c.l.b16 %v3562
      %v3822 = vunpack.c.l.b16 %v3563
      %v3823 = vunpack.c.l.b16 %v3564
      %v3824 = vunpack.c.l.b16 %v3565
      %v3825 = vunpack.c.l.b16 %v3566
      %v3826 = vunpack.c.l.b16 %v3567
      %v3827 = vunpack.c.l.b16 %v3568
      %v3828 = vunpack.c.l.b16 %v3569
      %v3829 = vunpack.c.l.b16 %v3570
      %v3830 = vunpack.c.l.b16 %v3571
      %v3831 = vunpack.c.l.b16 %v3572
      %v3832 = vunpack.c.l.b16 %v3573
      %v3833 = vunpack.c.l.b16 %v3574
      %v3834 = vunpack.c.l.b16 %v3575
      %v3835 = vunpack.c.l.b16 %v3576
      %v3836 = vunpack.c.l.b16 %v3577
      %v3837 = vunpack.c.l.b16 %v3578
      %v3838 = vunpack.c.l.b16 %v3579
      %v3839 = vunpack.c.l.b16 %v3580
      %v3840 = vunpack.c.l.b16 %v3581
      %v3841 = vunpack.c.l.b16 %v3582
      %v3842 = vunpack.c.l.b16 %v3583
      %v3843 = vunpack.c.l.b16 %v3584
      %v3844 = vunpack.c.l.b16 %v3585
      %v3845 = vunpack.c.l.b16 %v3586
      %v3846 = vunpack.c.l.b16 %v3587
      %v3847 = vunpack.c.l.b16 %v3588
      %v3848 = vunpack.c.l.b16 %v3589
      %v3849 = vunpack.c.l.b16 %v3590
      %v3850 = vunpack.c.l.b16 %v3591
      %v3851 = vunpack.c.l.b16 %v3592
      %v3852 = vunpack.c.l.b16 %v3593
      %v3853 = vunpack.c.l.b16 %v3594
      %v3854 = vunpack.c.l.b16 %v3595
      %v3855 = vunpack.c.l.b16 %v3596
      %v3856 = vunpack.c.l.b16 %v3597
      %v3857 = vunpack.c.l.b16 %v3598
      %v3858 = vunpack.c.l.b16 %v3599
      %v3859 = vunpack.c.l.b16 %v3600
      %v3860 = vunpack.c.l.b16 %v3601
      %v3861 = vunpack.c.l.b16 %v3602
      %v3862 = vunpack.c.l.b16 %v3603
      %v3863 = vunpack.c.l.b16 %v3604
      %v3864 = vunpack.c.l.b16 %v3605
      %v3865 = vunpack.c.l.b16 %v3606
      %v3866 = vunpack.c.l.b16 %v3607
      %v3867 = vunpack.c.l.b16 %v3608
      %v3868 = vunpack.c.l.b16 %v3609
      %v3869 = vunpack.c.l.b16 %v3610
      %v3870 = vunpack.c.l.b16 %v3611
      %v3871 = vunpack.c.l.b16 %v3612
      %v3872 = vunpack.c.l.b16 %v3613
      %v3873 = vpack.c.b16 %v3746, %v3745
      %v3874 = vpack.c.b16 %v3748, %v3747
      %v3875 = vpack.c.b16 %v3750, %v3749
      %v3876 = vpack.c.b16 %v3752, %v3751
      %v3877 = vpack.c.b16 %v3754, %v3753
      %v3878 = vpack.c.b16 %v3756, %v3755
      %v3879 = vpack.c.b16 %v3758, %v3757
      %v3880 = vpack.c.b16 %v3760, %v3759
      %v3881 = vpack.c.b16 %v3762, %v3761
      %v3882 = vpack.c.b16 %v3764, %v3763
      %v3883 = vpack.c.b16 %v3766, %v3765
      %v3884 = vpack.c.b16 %v3768, %v3767
      %v3885 = vpack.c.b16 %v3770, %v3769
      %v3886 = vpack.c.b16 %v3772, %v3771
      %v3887 = vpack.c.b16 %v3774, %v3773
      %v3888 = vpack.c.b16 %v3776, %v3775
      %v3889 = vpack.c.b16 %v3778, %v3777
      %v3890 = vpack.c.b16 %v3780, %v3779
      %v3891 = vpack.c.b16 %v3782, %v3781
      %v3892 = vpack.c.b16 %v3784, %v3783
      %v3893 = vpack.c.b16 %v3786, %v3785
      %v3894 = vpack.c.b16 %v3788, %v3787
      %v3895 = vpack.c.b16 %v3790, %v3789
      %v3896 = vpack.c.b16 %v3792, %v3791
      %v3897 = vpack.c.b16 %v3794, %v3793
      %v3898 = vpack.c.b16 %v3796, %v3795
      %v3899 = vpack.c.b16 %v3798, %v3797
      %v3900 = vpack.c.b16 %v3800, %v3799
      %v3901 = vpack.c.b16 %v3802, %v3801
      %v3902 = vpack.c.b16 %v3804, %v3803
      %v3903 = vpack.c.b16 %v3806, %v3805
      %v3904 = vpack.c.b16 %v3808, %v3807
      %v3905 = vpack.c.b16 %v3810, %v3809
      %v3906 = vpack.c.b16 %v3812, %v3811
      %v3907 = vpack.c.b16 %v3814, %v3813
      %v3908 = vpack.c.b16 %v3816, %v3815
      %v3909 = vpack.c.b16 %v3818, %v3817
      %v3910 = vpack.c.b16 %v3820, %v3819
      %v3911 = vpack.c.b16 %v3822, %v3821
      %v3912 = vpack.c.b16 %v3824, %v3823
      %v3913 = vpack.c.b16 %v3826, %v3825
      %v3914 = vpack.c.b16 %v3828, %v3827
      %v3915 = vpack.c.b16 %v3830, %v3829
      %v3916 = vpack.c.b16 %v3832, %v3831
      %v3917 = vpack.c.b16 %v3834, %v3833
      %v3918 = vpack.c.b16 %v3836, %v3835
      %v3919 = vpack.c.b16 %v3838, %v3837
      %v3920 = vpack.c.b16 %v3840, %v3839
      %v3921 = vpack.c.b16 %v3842, %v3841
      %v3922 = vpack.c.b16 %v3844, %v3843
      %v3923 = vpack.c.b16 %v3846, %v3845
      %v3924 = vpack.c.b16 %v3848, %v3847
      %v3925 = vpack.c.b16 %v3850, %v3849
      %v3926 = vpack.c.b16 %v3852, %v3851
      %v3927 = vpack.c.b16 %v3854, %v3853
      %v3928 = vpack.c.b16 %v3856, %v3855
      %v3929 = vpack.c.b16 %v3858, %v3857
      %v3930 = vpack.c.b16 %v3860, %v3859
      %v3931 = vpack.c.b16 %v3862, %v3861
      %v3932 = vpack.c.b16 %v3864, %v3863
      %v3933 = vpack.c.b16 %v3866, %v3865
      %v3934 = vpack.c.b16 %v3868, %v3867
      %v3935 = vpack.c.b16 %v3870, %v3869
      %v3936 = vpack.c.b16 %v3872, %v3871
      %v3939 = vunpack.c.l.b16 %v3615
      %v3940 = vunpack.c.l.b16 %v3616
      %v3941 = vpack.c.b16 %v3940, %v3939
      %v3943 = vsel %vm848, %v3873, 0
      %v3946 = vsel %vm848, %v3874, 0
      %v3949 = vsel %vm848, %v3875, 0
      %v3952 = vsel %vm848, %v3876, 0
      %v3955 = vsel %vm848, %v3877, 0
      %v3958 = vsel %vm848, %v3878, 0
      %v3961 = vsel %vm848, %v3879, 0
      %v3964 = vsel %vm848, %v3880, 0
      %v3967 = vsel %vm848, %v3881, 0
      %v3970 = vsel %vm848, %v3882, 0
      %v3973 = vsel %vm848, %v3883, 0
      %v3976 = vsel %vm848, %v3884, 0
      %v3979 = vsel %vm848, %v3885, 0
      %v3982 = vsel %vm848, %v3886, 0
      %v3985 = vsel %vm848, %v3887, 0
      %v3988 = vsel %vm848, %v3888, 0
      %v3991 = vsel %vm848, %v3889, 0
      %v3994 = vsel %vm848, %v3890, 0
      %v3997 = vsel %vm848, %v3891, 0
      %v4000 = vsel %vm848, %v3892, 0
      %v4003 = vsel %vm848, %v3893, 0
      %v4006 = vsel %vm848, %v3894, 0
      %v4009 = vsel %vm848, %v3895, 0
      %v4012 = vsel %vm848, %v3896, 0
      %v4015 = vsel %vm848, %v3897, 0
      %v4018 = vsel %vm848, %v3898, 0
      %v4021 = vsel %vm848, %v3899, 0
      %v4024 = vsel %vm848, %v3900, 0
      %v4027 = vsel %vm848, %v3901, 0
      %v4030 = vsel %vm848, %v3902, 0
      %v4033 = vsel %vm848, %v3903, 0
      %v4036 = vsel %vm848, %v3904, 0
      %v4039 = vsel %vm848, %v3905, 0
      %v4042 = vsel %vm848, %v3906, 0
      %v4045 = vsel %vm848, %v3907, 0
      %v4048 = vsel %vm848, %v3908, 0
      %v4051 = vsel %vm848, %v3909, 0
      %v4054 = vsel %vm848, %v3910, 0
      %v4057 = vsel %vm848, %v3911, 0
      %v4060 = vsel %vm848, %v3912, 0
      %v4063 = vsel %vm848, %v3913, 0
      %v4066 = vsel %vm848, %v3914, 0
      %v4069 = vsel %vm848, %v3915, 0
      %v4072 = vsel %vm848, %v3916, 0
      %v4075 = vsel %vm848, %v3917, 0
      %v4078 = vsel %vm848, %v3918, 0
      %v4081 = vsel %vm848, %v3919, 0
      %v4084 = vsel %vm848, %v3920, 0
      %v4087 = vsel %vm848, %v3921, 0
      %v4090 = vsel %vm848, %v3922, 0
      %v4093 = vsel %vm848, %v3923, 0
      %v4096 = vsel %vm848, %v3924, 0
      %v4099 = vsel %vm848, %v3925, 0
      %v4102 = vsel %vm848, %v3926, 0
      %v4105 = vsel %vm848, %v3927, 0
      %v4108 = vsel %vm848, %v3928, 0
      %v4111 = vsel %vm848, %v3929, 0
      %v4114 = vsel %vm848, %v3930, 0
      %v4117 = vsel %vm848, %v3931, 0
      %v4120 = vsel %vm848, %v3932, 0
      %v4123 = vsel %vm848, %v3933, 0
      %v4126 = vsel %vm848, %v3934, 0
      %v4129 = vsel %vm848, %v3935, 0
      %v4132 = vsel %vm848, %v3936, 0
      %v4135 = vand.u32 %v3941, %v1044
      %4137 = vmatprep.subr.bf16.mxu0 0
      %4138 = vmatpush1.bf16.msra.mxu0 %v4135
      %4139 = vmatprep.subr.bf16.mxu0 0
      %4140 = vmatpush1.bf16.msra.mxu0 0
      %4141 = vmatprep.subr.bf16.mxu0 0
      %4142 = vmatpush1.bf16.msra.mxu0 0
      %4143 = vmatprep.subr.bf16.mxu0 0
      %4144 = vmatpush1.bf16.msra.mxu0 0
      %4145 = vmatprep.subr.bf16.mxu0 0
      %4146 = vmatpush1.bf16.msra.mxu0 0
      %4147 = vmatprep.subr.bf16.mxu0 0
      %4148 = vmatpush1.bf16.msra.mxu0 0
      %4149 = vmatprep.subr.bf16.mxu0 0
      %4150 = vmatpush1.bf16.msra.mxu0 0
      %4151 = vmatprep.subr.bf16.mxu0 0
      %4152 = vmatpush1.bf16.msra.mxu0 0
      %4153 = vmatprep.subr.bf16.mxu0 0
      %4154 = vmatpush1.bf16.msra.mxu0 0
      %4155 = vmatprep.subr.bf16.mxu0 0
      %4156 = vmatpush1.bf16.msra.mxu0 0
      %4157 = vmatprep.subr.bf16.mxu0 0
      %4158 = vmatpush1.bf16.msra.mxu0 0
      %4159 = vmatprep.subr.bf16.mxu0 0
      %4160 = vmatpush1.bf16.msra.mxu0 0
      %4161 = vmatprep.subr.bf16.mxu0 0
      %4162 = vmatpush1.bf16.msra.mxu0 0
      %4163 = vmatprep.subr.bf16.mxu0 0
      %4164 = vmatpush1.bf16.msra.mxu0 0
      %4165 = vmatprep.subr.bf16.mxu0 0
      %4166 = vmatpush1.bf16.msra.mxu0 0
      %4167 = vmatprep.subr.bf16.mxu0 0
      %4168 = vmatpush1.bf16.msra.mxu0 0
      %4169 = vmatprep.mubr.bf16.mxu0 0
      %4170 = vmatmul.mubr.bf16.gmra.mrb[0].mxu0 %v3943
      %v4171 = vpop.f32.mrb[0].mxu0
      %v4172 = vadd.f32 0.0, %v4171
      %v4173 = vpop.f32.mrb[0].mxu0
      %v4174 = vpop.f32.mrb[0].mxu0
      %v4175 = vadd.f32 0.0, %v4174
      %v4176 = vpop.f32.mrb[0].mxu0
      %4177 = vmatprep.mubr.bf16.mxu0 0
      %4178 = vmatmul.mubr.bf16.gmra.mrb[0].mxu0 %v3946
      %v4179 = vpop.f32.mrb[0].mxu0
      %v4180 = vadd.f32 0.0, %v4179
      %v4181 = vpop.f32.mrb[0].mxu0
      %v4182 = vpop.f32.mrb[0].mxu0
      %v4183 = vadd.f32 0.0, %v4182
      %v4184 = vpop.f32.mrb[0].mxu0
      %4185 = vmatprep.mubr.bf16.mxu0 0
      %4186 = vmatmul.mubr.bf16.gmra.mrb[0].mxu0 %v3949
      %v4187 = vpop.f32.mrb[0].mxu0
      %v4188 = vadd.f32 0.0, %v4187
      %v4189 = vpop.f32.mrb[0].mxu0
      %v4190 = vpop.f32.mrb[0].mxu0
      %v4191 = vadd.f32 0.0, %v4190
      %v4192 = vpop.f32.mrb[0].mxu0
      %4193 = vmatprep.mubr.bf16.mxu0 0
      %4194 = vmatmul.mubr.bf16.gmra.mrb[0].mxu0 %v3952
      %v4195 = vpop.f32.mrb[0].mxu0
      %v4196 = vadd.f32 0.0, %v4195
      %v4197 = vpop.f32.mrb[0].mxu0
      %v4198 = vpop.f32.mrb[0].mxu0
      %v4199 = vadd.f32 0.0, %v4198
      %v4200 = vpop.f32.mrb[0].mxu0
      %4201 = vmatprep.mubr.bf16.mxu0 0
      %4202 = vmatmul.mubr.bf16.gmra.mrb[0].mxu0 %v3955
      %v4203 = vpop.f32.mrb[0].mxu0
      %v4204 = vadd.f32 0.0, %v4203
      %v4205 = vpop.f32.mrb[0].mxu0
      %v4206 = vpop.f32.mrb[0].mxu0
      %v4207 = vadd.f32 0.0, %v4206
      %v4208 = vpop.f32.mrb[0].mxu0
      %4209 = vmatprep.mubr.bf16.mxu0 0
      %4210 = vmatmul.mubr.bf16.gmra.mrb[0].mxu0 %v3958
      %v4211 = vpop.f32.mrb[0].mxu0
      %v4212 = vadd.f32 0.0, %v4211
      %v4213 = vpop.f32.mrb[0].mxu0
      %v4214 = vpop.f32.mrb[0].mxu0
      %v4215 = vadd.f32 0.0, %v4214
      %v4216 = vpop.f32.mrb[0].mxu0
      %4217 = vmatprep.mubr.bf16.mxu0 0
      %4218 = vmatmul.mubr.bf16.gmra.mrb[0].mxu0 %v3961
      %v4219 = vpop.f32.mrb[0].mxu0
      %v4220 = vadd.f32 0.0, %v4219
      %v4221 = vpop.f32.mrb[0].mxu0
      %v4222 = vpop.f32.mrb[0].mxu0
      %v4223 = vadd.f32 0.0, %v4222
      %v4224 = vpop.f32.mrb[0].mxu0
      %4225 = vmatprep.mubr.bf16.mxu0 0
      %4226 = vmatmul.mubr.bf16.gmra.mrb[0].mxu0 %v3964
      %v4227 = vpop.f32.mrb[0].mxu0
      %v4228 = vadd.f32 0.0, %v4227
      %v4229 = vpop.f32.mrb[0].mxu0
      %v4230 = vpop.f32.mrb[0].mxu0
      %v4231 = vadd.f32 0.0, %v4230
      %v4232 = vpop.f32.mrb[0].mxu0
      %4233 = vmatprep.mubr.bf16.mxu0 0
      %4234 = vmatmul.mubr.bf16.gmra.mrb[0].mxu0 %v3967
      %v4235 = vpop.f32.mrb[0].mxu0
      %v4236 = vadd.f32 0.0, %v4235
      %v4237 = vpop.f32.mrb[0].mxu0
      %v4238 = vpop.f32.mrb[0].mxu0
      %v4239 = vadd.f32 0.0, %v4238
      %v4240 = vpop.f32.mrb[0].mxu0
      %4241 = vmatprep.mubr.bf16.mxu0 0
      %4242 = vmatmul.mubr.bf16.gmra.mrb[0].mxu0 %v3970
      %v4243 = vpop.f32.mrb[0].mxu0
      %v4244 = vadd.f32 0.0, %v4243
      %v4245 = vpop.f32.mrb[0].mxu0
      %v4246 = vpop.f32.mrb[0].mxu0
      %v4247 = vadd.f32 0.0, %v4246
      %v4248 = vpop.f32.mrb[0].mxu0
      %4249 = vmatprep.mubr.bf16.mxu0 0
      %4250 = vmatmul.mubr.bf16.gmra.mrb[0].mxu0 %v3973
      %v4251 = vpop.f32.mrb[0].mxu0
      %v4252 = vadd.f32 0.0, %v4251
      %v4253 = vpop.f32.mrb[0].mxu0
      %v4254 = vpop.f32.mrb[0].mxu0
      %v4255 = vadd.f32 0.0, %v4254
      %v4256 = vpop.f32.mrb[0].mxu0
      %4257 = vmatprep.mubr.bf16.mxu0 0
      %4258 = vmatmul.mubr.bf16.gmra.mrb[0].mxu0 %v3976
      %v4259 = vpop.f32.mrb[0].mxu0
      %v4260 = vadd.f32 0.0, %v4259
      %v4261 = vpop.f32.mrb[0].mxu0
      %v4262 = vpop.f32.mrb[0].mxu0
      %v4263 = vadd.f32 0.0, %v4262
      %v4264 = vpop.f32.mrb[0].mxu0
      %4265 = vmatprep.mubr.bf16.mxu0 0
      %4266 = vmatmul.mubr.bf16.gmra.mrb[0].mxu0 %v3979
      %v4267 = vpop.f32.mrb[0].mxu0
      %v4268 = vadd.f32 0.0, %v4267
      %v4269 = vpop.f32.mrb[0].mxu0
      %v4270 = vpop.f32.mrb[0].mxu0
      %v4271 = vadd.f32 0.0, %v4270
      %v4272 = vpop.f32.mrb[0].mxu0
      %4273 = vmatprep.mubr.bf16.mxu0 0
      %4274 = vmatmul.mubr.bf16.gmra.mrb[0].mxu0 %v3982
      %v4275 = vpop.f32.mrb[0].mxu0
      %v4276 = vadd.f32 0.0, %v4275
      %v4277 = vpop.f32.mrb[0].mxu0
      %v4278 = vpop.f32.mrb[0].mxu0
      %v4279 = vadd.f32 0.0, %v4278
      %v4280 = vpop.f32.mrb[0].mxu0
      %4281 = vmatprep.mubr.bf16.mxu0 0
      %4282 = vmatmul.mubr.bf16.gmra.mrb[0].mxu0 %v3985
      %v4283 = vpop.f32.mrb[0].mxu0
      %v4284 = vadd.f32 0.0, %v4283
      %v4285 = vpop.f32.mrb[0].mxu0
      %v4286 = vpop.f32.mrb[0].mxu0
      %v4287 = vadd.f32 0.0, %v4286
      %v4288 = vpop.f32.mrb[0].mxu0
      %4289 = vmatprep.mubr.bf16.mxu0 0
      %4290 = vmatmul.mubr.bf16.gmra.mrb[0].mxu0 %v3988
      %v4291 = vpop.f32.mrb[0].mxu0
      %v4292 = vadd.f32 0.0, %v4291
      %v4293 = vpop.f32.mrb[0].mxu0
      %v4294 = vpop.f32.mrb[0].mxu0
      %v4295 = vadd.f32 0.0, %v4294
      %v4296 = vpop.f32.mrb[0].mxu0
      %4297 = vmatprep.mubr.bf16.mxu0 0
      %4298 = vmatmul.mubr.bf16.gmra.mrb[0].mxu0 %v3991
      %v4299 = vpop.f32.mrb[0].mxu0
      %v4300 = vadd.f32 0.0, %v4299
      %v4301 = vpop.f32.mrb[0].mxu0
      %v4302 = vpop.f32.mrb[0].mxu0
      %v4303 = vadd.f32 0.0, %v4302
      %v4304 = vpop.f32.mrb[0].mxu0
      %4305 = vmatprep.mubr.bf16.mxu0 0
      %4306 = vmatmul.mubr.bf16.gmra.mrb[0].mxu0 %v3994
      %v4307 = vpop.f32.mrb[0].mxu0
      %v4308 = vadd.f32 0.0, %v4307
      %v4309 = vpop.f32.mrb[0].mxu0
      %v4310 = vpop.f32.mrb[0].mxu0
      %v4311 = vadd.f32 0.0, %v4310
      %v4312 = vpop.f32.mrb[0].mxu0
      %4313 = vmatprep.mubr.bf16.mxu0 0
      %4314 = vmatmul.mubr.bf16.gmra.mrb[0].mxu0 %v3997
      %v4315 = vpop.f32.mrb[0].mxu0
      %v4316 = vadd.f32 0.0, %v4315
      %v4317 = vpop.f32.mrb[0].mxu0
      %v4318 = vpop.f32.mrb[0].mxu0
      %v4319 = vadd.f32 0.0, %v4318
      %v4320 = vpop.f32.mrb[0].mxu0
      %4321 = vmatprep.mubr.bf16.mxu0 0
      %4322 = vmatmul.mubr.bf16.gmra.mrb[0].mxu0 %v4000
      %v4323 = vpop.f32.mrb[0].mxu0
      %v4324 = vadd.f32 0.0, %v4323
      %v4325 = vpop.f32.mrb[0].mxu0
      %v4326 = vpop.f32.mrb[0].mxu0
      %v4327 = vadd.f32 0.0, %v4326
      %v4328 = vpop.f32.mrb[0].mxu0
      %4329 = vmatprep.mubr.bf16.mxu0 0
      %4330 = vmatmul.mubr.bf16.gmra.mrb[0].mxu0 %v4003
      %v4331 = vpop.f32.mrb[0].mxu0
      %v4332 = vadd.f32 0.0, %v4331
      %v4333 = vpop.f32.mrb[0].mxu0
      %v4334 = vpop.f32.mrb[0].mxu0
      %v4335 = vadd.f32 0.0, %v4334
      %v4336 = vpop.f32.mrb[0].mxu0
      %4337 = vmatprep.mubr.bf16.mxu0 0
      %4338 = vmatmul.mubr.bf16.gmra.mrb[0].mxu0 %v4006
      %v4339 = vpop.f32.mrb[0].mxu0
      %v4340 = vadd.f32 0.0, %v4339
      %v4341 = vpop.f32.mrb[0].mxu0
      %v4342 = vpop.f32.mrb[0].mxu0
      %v4343 = vadd.f32 0.0, %v4342
      %v4344 = vpop.f32.mrb[0].mxu0
      %4345 = vmatprep.mubr.bf16.mxu0 0
      %4346 = vmatmul.mubr.bf16.gmra.mrb[0].mxu0 %v4009
      %v4347 = vpop.f32.mrb[0].mxu0
      %v4348 = vadd.f32 0.0, %v4347
      %v4349 = vpop.f32.mrb[0].mxu0
      %v4350 = vpop.f32.mrb[0].mxu0
      %v4351 = vadd.f32 0.0, %v4350
      %v4352 = vpop.f32.mrb[0].mxu0
      %4353 = vmatprep.mubr.bf16.mxu0 0
      %4354 = vmatmul.mubr.bf16.gmra.mrb[0].mxu0 %v4012
      %v4355 = vpop.f32.mrb[0].mxu0
      %v4356 = vadd.f32 0.0, %v4355
      %v4357 = vpop.f32.mrb[0].mxu0
      %v4358 = vpop.f32.mrb[0].mxu0
      %v4359 = vadd.f32 0.0, %v4358
      %v4360 = vpop.f32.mrb[0].mxu0
      %4361 = vmatprep.mubr.bf16.mxu0 0
      %4362 = vmatmul.mubr.bf16.gmra.mrb[0].mxu0 %v4015
      %v4363 = vpop.f32.mrb[0].mxu0
      %v4364 = vadd.f32 0.0, %v4363
      %v4365 = vpop.f32.mrb[0].mxu0
      %v4366 = vpop.f32.mrb[0].mxu0
      %v4367 = vadd.f32 0.0, %v4366
      %v4368 = vpop.f32.mrb[0].mxu0
      %4369 = vmatprep.mubr.bf16.mxu0 0
      %4370 = vmatmul.mubr.bf16.gmra.mrb[0].mxu0 %v4018
      %v4371 = vpop.f32.mrb[0].mxu0
      %v4372 = vadd.f32 0.0, %v4371
      %v4373 = vpop.f32.mrb[0].mxu0
      %v4374 = vpop.f32.mrb[0].mxu0
      %v4375 = vadd.f32 0.0, %v4374
      %v4376 = vpop.f32.mrb[0].mxu0
      %4377 = vmatprep.mubr.bf16.mxu0 0
      %4378 = vmatmul.mubr.bf16.gmra.mrb[0].mxu0 %v4021
      %v4379 = vpop.f32.mrb[0].mxu0
      %v4380 = vadd.f32 0.0, %v4379
      %v4381 = vpop.f32.mrb[0].mxu0
      %v4382 = vpop.f32.mrb[0].mxu0
      %v4383 = vadd.f32 0.0, %v4382
      %v4384 = vpop.f32.mrb[0].mxu0
      %4385 = vmatprep.mubr.bf16.mxu0 0
      %4386 = vmatmul.mubr.bf16.gmra.mrb[0].mxu0 %v4024
      %v4387 = vpop.f32.mrb[0].mxu0
      %v4388 = vadd.f32 0.0, %v4387
      %v4389 = vpop.f32.mrb[0].mxu0
      %v4390 = vpop.f32.mrb[0].mxu0
      %v4391 = vadd.f32 0.0, %v4390
      %v4392 = vpop.f32.mrb[0].mxu0
      %4393 = vmatprep.mubr.bf16.mxu0 0
      %4394 = vmatmul.mubr.bf16.gmra.mrb[0].mxu0 %v4027
      %v4395 = vpop.f32.mrb[0].mxu0
      %v4396 = vadd.f32 0.0, %v4395
      %v4397 = vpop.f32.mrb[0].mxu0
      %v4398 = vpop.f32.mrb[0].mxu0
      %v4399 = vadd.f32 0.0, %v4398
      %v4400 = vpop.f32.mrb[0].mxu0
      %4401 = vmatprep.mubr.bf16.mxu0 0
      %4402 = vmatmul.mubr.bf16.gmra.mrb[0].mxu0 %v4030
      %v4403 = vpop.f32.mrb[0].mxu0
      %v4404 = vadd.f32 0.0, %v4403
      %v4405 = vpop.f32.mrb[0].mxu0
      %v4406 = vpop.f32.mrb[0].mxu0
      %v4407 = vadd.f32 0.0, %v4406
      %v4408 = vpop.f32.mrb[0].mxu0
      %4409 = vmatprep.mubr.bf16.mxu0 0
      %4410 = vmatmul.mubr.bf16.gmra.mrb[0].mxu0 %v4033
      %v4411 = vpop.f32.mrb[0].mxu0
      %v4412 = vadd.f32 0.0, %v4411
      %v4413 = vpop.f32.mrb[0].mxu0
      %v4414 = vpop.f32.mrb[0].mxu0
      %v4415 = vadd.f32 0.0, %v4414
      %v4416 = vpop.f32.mrb[0].mxu0
      %4417 = vmatprep.mubr.bf16.mxu0 0
      %4418 = vmatmul.mubr.bf16.gmra.mrb[0].mxu0 %v4036
      %v4419 = vpop.f32.mrb[0].mxu0
      %v4420 = vadd.f32 0.0, %v4419
      %v4421 = vpop.f32.mrb[0].mxu0
      %v4422 = vpop.f32.mrb[0].mxu0
      %v4423 = vadd.f32 0.0, %v4422
      %v4424 = vpop.f32.mrb[0].mxu0
      %4425 = vmatprep.mubr.bf16.mxu0 0
      %4426 = vmatmul.mubr.bf16.gmra.mrb[0].mxu0 %v4039
      %v4427 = vpop.f32.mrb[0].mxu0
      %v4428 = vadd.f32 0.0, %v4427
      %v4429 = vpop.f32.mrb[0].mxu0
      %v4430 = vpop.f32.mrb[0].mxu0
      %v4431 = vadd.f32 0.0, %v4430
      %v4432 = vpop.f32.mrb[0].mxu0
      %4433 = vmatprep.mubr.bf16.mxu0 0
      %4434 = vmatmul.mubr.bf16.gmra.mrb[0].mxu0 %v4042
      %v4435 = vpop.f32.mrb[0].mxu0
      %v4436 = vadd.f32 0.0, %v4435
      %v4437 = vpop.f32.mrb[0].mxu0
      %v4438 = vpop.f32.mrb[0].mxu0
      %v4439 = vadd.f32 0.0, %v4438
      %v4440 = vpop.f32.mrb[0].mxu0
      %4441 = vmatprep.mubr.bf16.mxu0 0
      %4442 = vmatmul.mubr.bf16.gmra.mrb[0].mxu0 %v4045
      %v4443 = vpop.f32.mrb[0].mxu0
      %v4444 = vadd.f32 0.0, %v4443
      %v4445 = vpop.f32.mrb[0].mxu0
      %v4446 = vpop.f32.mrb[0].mxu0
      %v4447 = vadd.f32 0.0, %v4446
      %v4448 = vpop.f32.mrb[0].mxu0
      %4449 = vmatprep.mubr.bf16.mxu0 0
      %4450 = vmatmul.mubr.bf16.gmra.mrb[0].mxu0 %v4048
      %v4451 = vpop.f32.mrb[0].mxu0
      %v4452 = vadd.f32 0.0, %v4451
      %v4453 = vpop.f32.mrb[0].mxu0
      %v4454 = vpop.f32.mrb[0].mxu0
      %v4455 = vadd.f32 0.0, %v4454
      %v4456 = vpop.f32.mrb[0].mxu0
      %4457 = vmatprep.mubr.bf16.mxu0 0
      %4458 = vmatmul.mubr.bf16.gmra.mrb[0].mxu0 %v4051
      %v4459 = vpop.f32.mrb[0].mxu0
      %v4460 = vadd.f32 0.0, %v4459
      %v4461 = vpop.f32.mrb[0].mxu0
      %v4462 = vpop.f32.mrb[0].mxu0
      %v4463 = vadd.f32 0.0, %v4462
      %v4464 = vpop.f32.mrb[0].mxu0
      %4465 = vmatprep.mubr.bf16.mxu0 0
      %4466 = vmatmul.mubr.bf16.gmra.mrb[0].mxu0 %v4054
      %v4467 = vpop.f32.mrb[0].mxu0
      %v4468 = vadd.f32 0.0, %v4467
      %v4469 = vpop.f32.mrb[0].mxu0
      %v4470 = vpop.f32.mrb[0].mxu0
      %v4471 = vadd.f32 0.0, %v4470
      %v4472 = vpop.f32.mrb[0].mxu0
      %4473 = vmatprep.mubr.bf16.mxu0 0
      %4474 = vmatmul.mubr.bf16.gmra.mrb[0].mxu0 %v4057
      %v4475 = vpop.f32.mrb[0].mxu0
      %v4476 = vadd.f32 0.0, %v4475
      %v4477 = vpop.f32.mrb[0].mxu0
      %v4478 = vpop.f32.mrb[0].mxu0
      %v4479 = vadd.f32 0.0, %v4478
      %v4480 = vpop.f32.mrb[0].mxu0
      %4481 = vmatprep.mubr.bf16.mxu0 0
      %4482 = vmatmul.mubr.bf16.gmra.mrb[0].mxu0 %v4060
      %v4483 = vpop.f32.mrb[0].mxu0
      %v4484 = vadd.f32 0.0, %v4483
      %v4485 = vpop.f32.mrb[0].mxu0
      %v4486 = vpop.f32.mrb[0].mxu0
      %v4487 = vadd.f32 0.0, %v4486
      %v4488 = vpop.f32.mrb[0].mxu0
      %4489 = vmatprep.mubr.bf16.mxu0 0
      %4490 = vmatmul.mubr.bf16.gmra.mrb[0].mxu0 %v4063
      %v4491 = vpop.f32.mrb[0].mxu0
      %v4492 = vadd.f32 0.0, %v4491
      %v4493 = vpop.f32.mrb[0].mxu0
      %v4494 = vpop.f32.mrb[0].mxu0
      %v4495 = vadd.f32 0.0, %v4494
      %v4496 = vpop.f32.mrb[0].mxu0
      %4497 = vmatprep.mubr.bf16.mxu0 0
      %4498 = vmatmul.mubr.bf16.gmra.mrb[0].mxu0 %v4066
      %v4499 = vpop.f32.mrb[0].mxu0
      %v4500 = vadd.f32 0.0, %v4499
      %v4501 = vpop.f32.mrb[0].mxu0
      %v4502 = vpop.f32.mrb[0].mxu0
      %v4503 = vadd.f32 0.0, %v4502
      %v4504 = vpop.f32.mrb[0].mxu0
      %4505 = vmatprep.mubr.bf16.mxu0 0
      %4506 = vmatmul.mubr.bf16.gmra.mrb[0].mxu0 %v4069
      %v4507 = vpop.f32.mrb[0].mxu0
      %v4508 = vadd.f32 0.0, %v4507
      %v4509 = vpop.f32.mrb[0].mxu0
      %v4510 = vpop.f32.mrb[0].mxu0
      %v4511 = vadd.f32 0.0, %v4510
      %v4512 = vpop.f32.mrb[0].mxu0
      %4513 = vmatprep.mubr.bf16.mxu0 0
      %4514 = vmatmul.mubr.bf16.gmra.mrb[0].mxu0 %v4072
      %v4515 = vpop.f32.mrb[0].mxu0
      %v4516 = vadd.f32 0.0, %v4515
      %v4517 = vpop.f32.mrb[0].mxu0
      %v4518 = vpop.f32.mrb[0].mxu0
      %v4519 = vadd.f32 0.0, %v4518
      %v4520 = vpop.f32.mrb[0].mxu0
      %4521 = vmatprep.mubr.bf16.mxu0 0
      %4522 = vmatmul.mubr.bf16.gmra.mrb[0].mxu0 %v4075
      %v4523 = vpop.f32.mrb[0].mxu0
      %v4524 = vadd.f32 0.0, %v4523
      %v4525 = vpop.f32.mrb[0].mxu0
      %v4526 = vpop.f32.mrb[0].mxu0
      %v4527 = vadd.f32 0.0, %v4526
      %v4528 = vpop.f32.mrb[0].mxu0
      %4529 = vmatprep.mubr.bf16.mxu0 0
      %4530 = vmatmul.mubr.bf16.gmra.mrb[0].mxu0 %v4078
      %v4531 = vpop.f32.mrb[0].mxu0
      %v4532 = vadd.f32 0.0, %v4531
      %v4533 = vpop.f32.mrb[0].mxu0
      %v4534 = vpop.f32.mrb[0].mxu0
      %v4535 = vadd.f32 0.0, %v4534
      %v4536 = vpop.f32.mrb[0].mxu0
      %4537 = vmatprep.mubr.bf16.mxu0 0
      %4538 = vmatmul.mubr.bf16.gmra.mrb[0].mxu0 %v4081
      %v4539 = vpop.f32.mrb[0].mxu0
      %v4540 = vadd.f32 0.0, %v4539
      %v4541 = vpop.f32.mrb[0].mxu0
      %v4542 = vpop.f32.mrb[0].mxu0
      %v4543 = vadd.f32 0.0, %v4542
      %v4544 = vpop.f32.mrb[0].mxu0
      %4545 = vmatprep.mubr.bf16.mxu0 0
      %4546 = vmatmul.mubr.bf16.gmra.mrb[0].mxu0 %v4084
      %v4547 = vpop.f32.mrb[0].mxu0
      %v4548 = vadd.f32 0.0, %v4547
      %v4549 = vpop.f32.mrb[0].mxu0
      %v4550 = vpop.f32.mrb[0].mxu0
      %v4551 = vadd.f32 0.0, %v4550
      %v4552 = vpop.f32.mrb[0].mxu0
      %4553 = vmatprep.mubr.bf16.mxu0 0
      %4554 = vmatmul.mubr.bf16.gmra.mrb[0].mxu0 %v4087
      %v4555 = vpop.f32.mrb[0].mxu0
      %v4556 = vadd.f32 0.0, %v4555
      %v4557 = vpop.f32.mrb[0].mxu0
      %v4558 = vpop.f32.mrb[0].mxu0
      %v4559 = vadd.f32 0.0, %v4558
      %v4560 = vpop.f32.mrb[0].mxu0
      %4561 = vmatprep.mubr.bf16.mxu0 0
      %4562 = vmatmul.mubr.bf16.gmra.mrb[0].mxu0 %v4090
      %v4563 = vpop.f32.mrb[0].mxu0
      %v4564 = vadd.f32 0.0, %v4563
      %v4565 = vpop.f32.mrb[0].mxu0
      %v4566 = vpop.f32.mrb[0].mxu0
      %v4567 = vadd.f32 0.0, %v4566
      %v4568 = vpop.f32.mrb[0].mxu0
      %4569 = vmatprep.mubr.bf16.mxu0 0
      %4570 = vmatmul.mubr.bf16.gmra.mrb[0].mxu0 %v4093
      %v4571 = vpop.f32.mrb[0].mxu0
      %v4572 = vadd.f32 0.0, %v4571
      %v4573 = vpop.f32.mrb[0].mxu0
      %v4574 = vpop.f32.mrb[0].mxu0
      %v4575 = vadd.f32 0.0, %v4574
      %v4576 = vpop.f32.mrb[0].mxu0
      %4577 = vmatprep.mubr.bf16.mxu0 0
      %4578 = vmatmul.mubr.bf16.gmra.mrb[0].mxu0 %v4096
      %v4579 = vpop.f32.mrb[0].mxu0
      %v4580 = vadd.f32 0.0, %v4579
      %v4581 = vpop.f32.mrb[0].mxu0
      %v4582 = vpop.f32.mrb[0].mxu0
      %v4583 = vadd.f32 0.0, %v4582
      %v4584 = vpop.f32.mrb[0].mxu0
      %4585 = vmatprep.mubr.bf16.mxu0 0
      %4586 = vmatmul.mubr.bf16.gmra.mrb[0].mxu0 %v4099
      %v4587 = vpop.f32.mrb[0].mxu0
      %v4588 = vadd.f32 0.0, %v4587
      %v4589 = vpop.f32.mrb[0].mxu0
      %v4590 = vpop.f32.mrb[0].mxu0
      %v4591 = vadd.f32 0.0, %v4590
      %v4592 = vpop.f32.mrb[0].mxu0
      %4593 = vmatprep.mubr.bf16.mxu0 0
      %4594 = vmatmul.mubr.bf16.gmra.mrb[0].mxu0 %v4102
      %v4595 = vpop.f32.mrb[0].mxu0
      %v4596 = vadd.f32 0.0, %v4595
      %v4597 = vpop.f32.mrb[0].mxu0
      %v4598 = vpop.f32.mrb[0].mxu0
      %v4599 = vadd.f32 0.0, %v4598
      %v4600 = vpop.f32.mrb[0].mxu0
      %4601 = vmatprep.mubr.bf16.mxu0 0
      %4602 = vmatmul.mubr.bf16.gmra.mrb[0].mxu0 %v4105
      %v4603 = vpop.f32.mrb[0].mxu0
      %v4604 = vadd.f32 0.0, %v4603
      %v4605 = vpop.f32.mrb[0].mxu0
      %v4606 = vpop.f32.mrb[0].mxu0
      %v4607 = vadd.f32 0.0, %v4606
      %v4608 = vpop.f32.mrb[0].mxu0
      %4609 = vmatprep.mubr.bf16.mxu0 0
      %4610 = vmatmul.mubr.bf16.gmra.mrb[0].mxu0 %v4108
      %v4611 = vpop.f32.mrb[0].mxu0
      %v4612 = vadd.f32 0.0, %v4611
      %v4613 = vpop.f32.mrb[0].mxu0
      %v4614 = vpop.f32.mrb[0].mxu0
      %v4615 = vadd.f32 0.0, %v4614
      %v4616 = vpop.f32.mrb[0].mxu0
      %4617 = vmatprep.mubr.bf16.mxu0 0
      %4618 = vmatmul.mubr.bf16.gmra.mrb[0].mxu0 %v4111
      %v4619 = vpop.f32.mrb[0].mxu0
      %v4620 = vadd.f32 0.0, %v4619
      %v4621 = vpop.f32.mrb[0].mxu0
      %v4622 = vpop.f32.mrb[0].mxu0
      %v4623 = vadd.f32 0.0, %v4622
      %v4624 = vpop.f32.mrb[0].mxu0
      %4625 = vmatprep.mubr.bf16.mxu0 0
      %4626 = vmatmul.mubr.bf16.gmra.mrb[0].mxu0 %v4114
      %v4627 = vpop.f32.mrb[0].mxu0
      %v4628 = vadd.f32 0.0, %v4627
      %v4629 = vpop.f32.mrb[0].mxu0
      %v4630 = vpop.f32.mrb[0].mxu0
      %v4631 = vadd.f32 0.0, %v4630
      %v4632 = vpop.f32.mrb[0].mxu0
      %4633 = vmatprep.mubr.bf16.mxu0 0
      %4634 = vmatmul.mubr.bf16.gmra.mrb[0].mxu0 %v4117
      %v4635 = vpop.f32.mrb[0].mxu0
      %v4636 = vadd.f32 0.0, %v4635
      %v4637 = vpop.f32.mrb[0].mxu0
      %v4638 = vpop.f32.mrb[0].mxu0
      %v4639 = vadd.f32 0.0, %v4638
      %v4640 = vpop.f32.mrb[0].mxu0
      %4641 = vmatprep.mubr.bf16.mxu0 0
      %4642 = vmatmul.mubr.bf16.gmra.mrb[0].mxu0 %v4120
      %v4643 = vpop.f32.mrb[0].mxu0
      %v4644 = vadd.f32 0.0, %v4643
      %v4645 = vpop.f32.mrb[0].mxu0
      %v4646 = vpop.f32.mrb[0].mxu0
      %v4647 = vadd.f32 0.0, %v4646
      %v4648 = vpop.f32.mrb[0].mxu0
      %4649 = vmatprep.mubr.bf16.mxu0 0
      %4650 = vmatmul.mubr.bf16.gmra.mrb[0].mxu0 %v4123
      %v4651 = vpop.f32.mrb[0].mxu0
      %v4652 = vadd.f32 0.0, %v4651
      %v4653 = vpop.f32.mrb[0].mxu0
      %v4654 = vpop.f32.mrb[0].mxu0
      %v4655 = vadd.f32 0.0, %v4654
      %v4656 = vpop.f32.mrb[0].mxu0
      %4657 = vmatprep.mubr.bf16.mxu0 0
      %4658 = vmatmul.mubr.bf16.gmra.mrb[0].mxu0 %v4126
      %v4659 = vpop.f32.mrb[0].mxu0
      %v4660 = vadd.f32 0.0, %v4659
      %v4661 = vpop.f32.mrb[0].mxu0
      %v4662 = vpop.f32.mrb[0].mxu0
      %v4663 = vadd.f32 0.0, %v4662
      %v4664 = vpop.f32.mrb[0].mxu0
      %4665 = vmatprep.mubr.bf16.mxu0 0
      %4666 = vmatmul.mubr.bf16.gmra.mrb[0].mxu0 %v4129
      %v4667 = vpop.f32.mrb[0].mxu0
      %v4668 = vadd.f32 0.0, %v4667
      %v4669 = vpop.f32.mrb[0].mxu0
      %v4670 = vpop.f32.mrb[0].mxu0
      %v4671 = vadd.f32 0.0, %v4670
      %v4672 = vpop.f32.mrb[0].mxu0
      %4673 = vmatprep.mubr.bf16.mxu0 0
      %4674 = vmatmul.mubr.bf16.gmra.mrb[0].mxu0 %v4132
      %v4675 = vpop.f32.mrb[0].mxu0
      %v4676 = vadd.f32 0.0, %v4675
      %v4677 = vpop.f32.mrb[0].mxu0
      %v4678 = vpop.f32.mrb[0].mxu0
      %v4679 = vadd.f32 0.0, %v4678
      %v4680 = vpop.f32.mrb[0].mxu0
      %4681 = vdwg.mxu0
      %v4682 = vadd.f32 %v3358, %v4172
      %v4683 = vadd.f32 %v3359, %v4175
      %v4684 = vadd.f32 %v3360, %v4180
      %v4685 = vadd.f32 %v3361, %v4183
      %v4686 = vadd.f32 %v3362, %v4188
      %v4687 = vadd.f32 %v3363, %v4191
      %v4688 = vadd.f32 %v3364, %v4196
      %v4689 = vadd.f32 %v3365, %v4199
      %v4690 = vadd.f32 %v3366, %v4204
      %v4691 = vadd.f32 %v3367, %v4207
      %v4692 = vadd.f32 %v3368, %v4212
      %v4693 = vadd.f32 %v3369, %v4215
      %v4694 = vadd.f32 %v3370, %v4220
      %v4695 = vadd.f32 %v3371, %v4223
      %v4696 = vadd.f32 %v3372, %v4228
      %v4697 = vadd.f32 %v3373, %v4231
      %v4698 = vadd.f32 %v3374, %v4236
      %v4699 = vadd.f32 %v3375, %v4239
      %v4700 = vadd.f32 %v3376, %v4244
      %v4701 = vadd.f32 %v3377, %v4247
      %v4702 = vadd.f32 %v3378, %v4252
      %v4703 = vadd.f32 %v3379, %v4255
      %v4704 = vadd.f32 %v3380, %v4260
      %v4705 = vadd.f32 %v3381, %v4263
      %v4706 = vadd.f32 %v3382, %v4268
      %v4707 = vadd.f32 %v3383, %v4271
      %v4708 = vadd.f32 %v3384, %v4276
      %v4709 = vadd.f32 %v3385, %v4279
      %v4710 = vadd.f32 %v3386, %v4284
      %v4711 = vadd.f32 %v3387, %v4287
      %v4712 = vadd.f32 %v3388, %v4292
      %v4713 = vadd.f32 %v3389, %v4295
      %v4714 = vadd.f32 %v3390, %v4300
      %v4715 = vadd.f32 %v3391, %v4303
      %v4716 = vadd.f32 %v3392, %v4308
      %v4717 = vadd.f32 %v3393, %v4311
      %v4718 = vadd.f32 %v3394, %v4316
      %v4719 = vadd.f32 %v3395, %v4319
      %v4720 = vadd.f32 %v3396, %v4324
      %v4721 = vadd.f32 %v3397, %v4327
      %v4722 = vadd.f32 %v3398, %v4332
      %v4723 = vadd.f32 %v3399, %v4335
      %v4724 = vadd.f32 %v3400, %v4340
      %v4725 = vadd.f32 %v3401, %v4343
      %v4726 = vadd.f32 %v3402, %v4348
      %v4727 = vadd.f32 %v3403, %v4351
      %v4728 = vadd.f32 %v3404, %v4356
      %v4729 = vadd.f32 %v3405, %v4359
      %v4730 = vadd.f32 %v3406, %v4364
      %v4731 = vadd.f32 %v3407, %v4367
      %v4732 = vadd.f32 %v3408, %v4372
      %v4733 = vadd.f32 %v3409, %v4375
      %v4734 = vadd.f32 %v3410, %v4380
      %v4735 = vadd.f32 %v3411, %v4383
      %v4736 = vadd.f32 %v3412, %v4388
      %v4737 = vadd.f32 %v3413, %v4391
      %v4738 = vadd.f32 %v3414, %v4396
      %v4739 = vadd.f32 %v3415, %v4399
      %v4740 = vadd.f32 %v3416, %v4404
      %v4741 = vadd.f32 %v3417, %v4407
      %v4742 = vadd.f32 %v3418, %v4412
      %v4743 = vadd.f32 %v3419, %v4415
      %v4744 = vadd.f32 %v3420, %v4420
      %v4745 = vadd.f32 %v3421, %v4423
      %v4746 = vadd.f32 %v3422, %v4428
      %v4747 = vadd.f32 %v3423, %v4431
      %v4748 = vadd.f32 %v3424, %v4436
      %v4749 = vadd.f32 %v3425, %v4439
      %v4750 = vadd.f32 %v3426, %v4444
      %v4751 = vadd.f32 %v3427, %v4447
      %v4752 = vadd.f32 %v3428, %v4452
      %v4753 = vadd.f32 %v3429, %v4455
      %v4754 = vadd.f32 %v3430, %v4460
      %v4755 = vadd.f32 %v3431, %v4463
      %v4756 = vadd.f32 %v3432, %v4468
      %v4757 = vadd.f32 %v3433, %v4471
      %v4758 = vadd.f32 %v3434, %v4476
      %v4759 = vadd.f32 %v3435, %v4479
      %v4760 = vadd.f32 %v3436, %v4484
      %v4761 = vadd.f32 %v3437, %v4487
      %v4762 = vadd.f32 %v3438, %v4492
      %v4763 = vadd.f32 %v3439, %v4495
      %v4764 = vadd.f32 %v3440, %v4500
      %v4765 = vadd.f32 %v3441, %v4503
      %v4766 = vadd.f32 %v3442, %v4508
      %v4767 = vadd.f32 %v3443, %v4511
      %v4768 = vadd.f32 %v3444, %v4516
      %v4769 = vadd.f32 %v3445, %v4519
      %v4770 = vadd.f32 %v3446, %v4524
      %v4771 = vadd.f32 %v3447, %v4527
      %v4772 = vadd.f32 %v3448, %v4532
      %v4773 = vadd.f32 %v3449, %v4535
      %v4774 = vadd.f32 %v3450, %v4540
      %v4775 = vadd.f32 %v3451, %v4543
      %v4776 = vadd.f32 %v3452, %v4548
      %v4777 = vadd.f32 %v3453, %v4551
      %v4778 = vadd.f32 %v3454, %v4556
      %v4779 = vadd.f32 %v3455, %v4559
      %v4780 = vadd.f32 %v3456, %v4564
      %v4781 = vadd.f32 %v3457, %v4567
      %v4782 = vadd.f32 %v3458, %v4572
      %v4783 = vadd.f32 %v3459, %v4575
      %v4784 = vadd.f32 %v3460, %v4580
      %v4785 = vadd.f32 %v3461, %v4583
      %v4786 = vadd.f32 %v3462, %v4588
      %v4787 = vadd.f32 %v3463, %v4591
      %v4788 = vadd.f32 %v3464, %v4596
      %v4789 = vadd.f32 %v3465, %v4599
      %v4790 = vadd.f32 %v3466, %v4604
      %v4791 = vadd.f32 %v3467, %v4607
      %v4792 = vadd.f32 %v3468, %v4612
      %v4793 = vadd.f32 %v3469, %v4615
      %v4794 = vadd.f32 %v3470, %v4620
      %v4795 = vadd.f32 %v3471, %v4623
      %v4796 = vadd.f32 %v3472, %v4628
      %v4797 = vadd.f32 %v3473, %v4631
      %v4798 = vadd.f32 %v3474, %v4636
      %v4799 = vadd.f32 %v3475, %v4639
      %v4800 = vadd.f32 %v3476, %v4644
      %v4801 = vadd.f32 %v3477, %v4647
      %v4802 = vadd.f32 %v3478, %v4652
      %v4803 = vadd.f32 %v3479, %v4655
      %v4804 = vadd.f32 %v3480, %v4660
      %v4805 = vadd.f32 %v3481, %v4663
      %v4806 = vadd.f32 %v3482, %v4668
      %v4807 = vadd.f32 %v3483, %v4671
      %v4808 = vadd.f32 %v3484, %v4676
      %v4809 = vadd.f32 %v3485, %v4679
      %v4810 = vld [vmem:[%s380 + $0x40] sm:$0xf]
      %v4811 = vld [vmem:[%s380 + $0x44] sm:$0xf]
      %v4812 = vld [vmem:[%s380 + $0x48] sm:$0xf]
      %v4813 = vld [vmem:[%s380 + $0x4c] sm:$0xf]
      %v4814 = vld [vmem:[%s380 + $0x50] sm:$0xf]
      %v4815 = vld [vmem:[%s380 + $0x54] sm:$0xf]
      %v4816 = vld [vmem:[%s380 + $0x58] sm:$0xf]
      %v4817 = vld [vmem:[%s380 + $0x5c] sm:$0xf]
      %v4818 = vld [vmem:[%s380 + $0x60] sm:$0xf]
      %v4819 = vld [vmem:[%s380 + $0x64] sm:$0xf]
      %v4820 = vld [vmem:[%s380 + $0x68] sm:$0xf]
      %v4821 = vld [vmem:[%s380 + $0x6c] sm:$0xf]
      %v4822 = vld [vmem:[%s380 + $0x70] sm:$0xf]
      %v4823 = vld [vmem:[%s380 + $0x74] sm:$0xf]
      %v4824 = vld [vmem:[%s380 + $0x78] sm:$0xf]
      %v4825 = vld [vmem:[%s380 + $0x7c] sm:$0xf]
      %v4826 = vld [vmem:[%s380 + $0x80] sm:$0xf]
      %v4827 = vld [vmem:[%s380 + $0x84] sm:$0xf]
      %v4828 = vld [vmem:[%s380 + $0x88] sm:$0xf]
      %v4829 = vld [vmem:[%s380 + $0x8c] sm:$0xf]
      %v4830 = vld [vmem:[%s380 + $0x90] sm:$0xf]
      %v4831 = vld [vmem:[%s380 + $0x94] sm:$0xf]
      %v4832 = vld [vmem:[%s380 + $0x98] sm:$0xf]
      %v4833 = vld [vmem:[%s380 + $0x9c] sm:$0xf]
      %v4834 = vld [vmem:[%s380 + $0xa0] sm:$0xf]
      %v4835 = vld [vmem:[%s380 + $0xa4] sm:$0xf]
      %v4836 = vld [vmem:[%s380 + $0xa8] sm:$0xf]
      %v4837 = vld [vmem:[%s380 + $0xac] sm:$0xf]
      %v4838 = vld [vmem:[%s380 + $0xb0] sm:$0xf]
      %v4839 = vld [vmem:[%s380 + $0xb4] sm:$0xf]
      %v4840 = vld [vmem:[%s380 + $0xb8] sm:$0xf]
      %v4841 = vld [vmem:[%s380 + $0xbc] sm:$0xf]
      %v4842 = vld [vmem:[%s380 + $0xc0] sm:$0xf]
      %v4843 = vld [vmem:[%s380 + $0xc4] sm:$0xf]
      %v4844 = vld [vmem:[%s380 + $0xc8] sm:$0xf]
      %v4845 = vld [vmem:[%s380 + $0xcc] sm:$0xf]
      %v4846 = vld [vmem:[%s380 + $0xd0] sm:$0xf]
      %v4847 = vld [vmem:[%s380 + $0xd4] sm:$0xf]
      %v4848 = vld [vmem:[%s380 + $0xd8] sm:$0xf]
      %v4849 = vld [vmem:[%s380 + $0xdc] sm:$0xf]
      %v4850 = vld [vmem:[%s380 + $0xe0] sm:$0xf]
      %v4851 = vld [vmem:[%s380 + $0xe4] sm:$0xf]
      %v4852 = vld [vmem:[%s380 + $0xe8] sm:$0xf]
      %v4853 = vld [vmem:[%s380 + $0xec] sm:$0xf]
      %v4854 = vld [vmem:[%s380 + $0xf0] sm:$0xf]
      %v4855 = vld [vmem:[%s380 + $0xf4] sm:$0xf]
      %v4856 = vld [vmem:[%s380 + $0xf8] sm:$0xf]
      %v4857 = vld [vmem:[%s380 + $0xfc] sm:$0xf]
      %v4858 = vld [vmem:[%s380 + $0x100] sm:$0xf]
      %v4859 = vld [vmem:[%s380 + $0x104] sm:$0xf]
      %v4860 = vld [vmem:[%s380 + $0x108] sm:$0xf]
      %v4861 = vld [vmem:[%s380 + $0x10c] sm:$0xf]
      %v4862 = vld [vmem:[%s380 + $0x110] sm:$0xf]
      %v4863 = vld [vmem:[%s380 + $0x114] sm:$0xf]
      %v4864 = vld [vmem:[%s380 + $0x118] sm:$0xf]
      %v4865 = vld [vmem:[%s380 + $0x11c] sm:$0xf]
      %v4866 = vld [vmem:[%s380 + $0x120] sm:$0xf]
      %v4867 = vld [vmem:[%s380 + $0x124] sm:$0xf]
      %v4868 = vld [vmem:[%s380 + $0x128] sm:$0xf]
      %v4869 = vld [vmem:[%s380 + $0x12c] sm:$0xf]
      %v4870 = vld [vmem:[%s380 + $0x130] sm:$0xf]
      %v4871 = vld [vmem:[%s380 + $0x134] sm:$0xf]
      %v4872 = vld [vmem:[%s380 + $0x138] sm:$0xf]
      %v4873 = vld [vmem:[%s380 + $0x13c] sm:$0xf]
      %v4874 = vld [vmem:[%s380 + $0x140] sm:$0xf]
      %v4875 = vld [vmem:[%s380 + $0x144] sm:$0xf]
      %v4876 = vld [vmem:[%s380 + $0x148] sm:$0xf]
      %v4877 = vld [vmem:[%s380 + $0x14c] sm:$0xf]
      %v4878 = vld [vmem:[%s380 + $0x150] sm:$0xf]
      %v4879 = vld [vmem:[%s380 + $0x154] sm:$0xf]
      %v4880 = vld [vmem:[%s380 + $0x158] sm:$0xf]
      %v4881 = vld [vmem:[%s380 + $0x15c] sm:$0xf]
      %v4882 = vld [vmem:[%s380 + $0x160] sm:$0xf]
      %v4883 = vld [vmem:[%s380 + $0x164] sm:$0xf]
      %v4884 = vld [vmem:[%s380 + $0x168] sm:$0xf]
      %v4885 = vld [vmem:[%s380 + $0x16c] sm:$0xf]
      %v4886 = vld [vmem:[%s380 + $0x170] sm:$0xf]
      %v4887 = vld [vmem:[%s380 + $0x174] sm:$0xf]
      %v4888 = vld [vmem:[%s380 + $0x178] sm:$0xf]
      %v4889 = vld [vmem:[%s380 + $0x17c] sm:$0xf]
      %v4890 = vld [vmem:[%s380 + $0x180] sm:$0xf]
      %v4891 = vld [vmem:[%s380 + $0x184] sm:$0xf]
      %v4892 = vld [vmem:[%s380 + $0x188] sm:$0xf]
      %v4893 = vld [vmem:[%s380 + $0x18c] sm:$0xf]
      %v4894 = vld [vmem:[%s380 + $0x190] sm:$0xf]
      %v4895 = vld [vmem:[%s380 + $0x194] sm:$0xf]
      %v4896 = vld [vmem:[%s380 + $0x198] sm:$0xf]
      %v4897 = vld [vmem:[%s380 + $0x19c] sm:$0xf]
      %v4898 = vld [vmem:[%s380 + $0x1a0] sm:$0xf]
      %v4899 = vld [vmem:[%s380 + $0x1a4] sm:$0xf]
      %v4900 = vld [vmem:[%s380 + $0x1a8] sm:$0xf]
      %v4901 = vld [vmem:[%s380 + $0x1ac] sm:$0xf]
      %v4902 = vld [vmem:[%s380 + $0x1b0] sm:$0xf]
      %v4903 = vld [vmem:[%s380 + $0x1b4] sm:$0xf]
      %v4904 = vld [vmem:[%s380 + $0x1b8] sm:$0xf]
      %v4905 = vld [vmem:[%s380 + $0x1bc] sm:$0xf]
      %v4906 = vld [vmem:[%s380 + $0x1c0] sm:$0xf]
      %v4907 = vld [vmem:[%s380 + $0x1c4] sm:$0xf]
      %v4908 = vld [vmem:[%s380 + $0x1c8] sm:$0xf]
      %v4909 = vld [vmem:[%s380 + $0x1cc] sm:$0xf]
      %v4910 = vld [vmem:[%s380 + $0x1d0] sm:$0xf]
      %v4911 = vld [vmem:[%s380 + $0x1d4] sm:$0xf]
      %v4912 = vld [vmem:[%s380 + $0x1d8] sm:$0xf]
      %v4913 = vld [vmem:[%s380 + $0x1dc] sm:$0xf]
      %v4914 = vld [vmem:[%s380 + $0x1e0] sm:$0xf]
      %v4915 = vld [vmem:[%s380 + $0x1e4] sm:$0xf]
      %v4916 = vld [vmem:[%s380 + $0x1e8] sm:$0xf]
      %v4917 = vld [vmem:[%s380 + $0x1ec] sm:$0xf]
      %v4918 = vld [vmem:[%s380 + $0x1f0] sm:$0xf]
      %v4919 = vld [vmem:[%s380 + $0x1f4] sm:$0xf]
      %v4920 = vld [vmem:[%s380 + $0x1f8] sm:$0xf]
      %v4921 = vld [vmem:[%s380 + $0x1fc] sm:$0xf]
      %v4922 = vld [vmem:[%s380 + $0x200] sm:$0xf]
      %v4923 = vld [vmem:[%s380 + $0x204] sm:$0xf]
      %v4924 = vld [vmem:[%s380 + $0x208] sm:$0xf]
      %v4925 = vld [vmem:[%s380 + $0x20c] sm:$0xf]
      %v4926 = vld [vmem:[%s380 + $0x210] sm:$0xf]
      %v4927 = vld [vmem:[%s380 + $0x214] sm:$0xf]
      %v4928 = vld [vmem:[%s380 + $0x218] sm:$0xf]
      %v4929 = vld [vmem:[%s380 + $0x21c] sm:$0xf]
      %v4930 = vld [vmem:[%s380 + $0x220] sm:$0xf]
      %v4931 = vld [vmem:[%s380 + $0x224] sm:$0xf]
      %v4932 = vld [vmem:[%s380 + $0x228] sm:$0xf]
      %v4933 = vld [vmem:[%s380 + $0x22c] sm:$0xf]
      %v4934 = vld [vmem:[%s380 + $0x230] sm:$0xf]
      %v4935 = vld [vmem:[%s380 + $0x234] sm:$0xf]
      %v4936 = vld [vmem:[%s380 + $0x238] sm:$0xf]
      %v4937 = vld [vmem:[%s380 + $0x23c] sm:$0xf]
      %s4938 = scalar_lea.vmem %s1, 32
      %v4939 = vld [vmem:[%s4938] sm:$0xf]
      %v4940 = vld [vmem:[%s4938 + $0x4] sm:$0xf]
      %v5069 = vunpack.c.l.b16 %v4810
      %v5070 = vunpack.c.l.b16 %v4811
      %v5071 = vunpack.c.l.b16 %v4812
      %v5072 = vunpack.c.l.b16 %v4813
      %v5073 = vunpack.c.l.b16 %v4814
      %v5074 = vunpack.c.l.b16 %v4815
      %v5075 = vunpack.c.l.b16 %v4816
      %v5076 = vunpack.c.l.b16 %v4817
      %v5077 = vunpack.c.l.b16 %v4818
      %v5078 = vunpack.c.l.b16 %v4819
      %v5079 = vunpack.c.l.b16 %v4820
      %v5080 = vunpack.c.l.b16 %v4821
      %v5081 = vunpack.c.l.b16 %v4822
      %v5082 = vunpack.c.l.b16 %v4823
      %v5083 = vunpack.c.l.b16 %v4824
      %v5084 = vunpack.c.l.b16 %v4825
      %v5085 = vunpack.c.l.b16 %v4826
      %v5086 = vunpack.c.l.b16 %v4827
      %v5087 = vunpack.c.l.b16 %v4828
      %v5088 = vunpack.c.l.b16 %v4829
      %v5089 = vunpack.c.l.b16 %v4830
      %v5090 = vunpack.c.l.b16 %v4831
      %v5091 = vunpack.c.l.b16 %v4832
      %v5092 = vunpack.c.l.b16 %v4833
      %v5093 = vunpack.c.l.b16 %v4834
      %v5094 = vunpack.c.l.b16 %v4835
      %v5095 = vunpack.c.l.b16 %v4836
      %v5096 = vunpack.c.l.b16 %v4837
      %v5097 = vunpack.c.l.b16 %v4838
      %v5098 = vunpack.c.l.b16 %v4839
      %v5099 = vunpack.c.l.b16 %v4840
      %v5100 = vunpack.c.l.b16 %v4841
      %v5101 = vunpack.c.l.b16 %v4842
      %v5102 = vunpack.c.l.b16 %v4843
      %v5103 = vunpack.c.l.b16 %v4844
      %v5104 = vunpack.c.l.b16 %v4845
      %v5105 = vunpack.c.l.b16 %v4846
      %v5106 = vunpack.c.l.b16 %v4847
      %v5107 = vunpack.c.l.b16 %v4848
      %v5108 = vunpack.c.l.b16 %v4849
      %v5109 = vunpack.c.l.b16 %v4850
      %v5110 = vunpack.c.l.b16 %v4851
      %v5111 = vunpack.c.l.b16 %v4852
      %v5112 = vunpack.c.l.b16 %v4853
      %v5113 = vunpack.c.l.b16 %v4854
      %v5114 = vunpack.c.l.b16 %v4855
      %v5115 = vunpack.c.l.b16 %v4856
      %v5116 = vunpack.c.l.b16 %v4857
      %v5117 = vunpack.c.l.b16 %v4858
      %v5118 = vunpack.c.l.b16 %v4859
      %v5119 = vunpack.c.l.b16 %v4860
      %v5120 = vunpack.c.l.b16 %v4861
      %v5121 = vunpack.c.l.b16 %v4862
      %v5122 = vunpack.c.l.b16 %v4863
      %v5123 = vunpack.c.l.b16 %v4864
      %v5124 = vunpack.c.l.b16 %v4865
      %v5125 = vunpack.c.l.b16 %v4866
      %v5126 = vunpack.c.l.b16 %v4867
      %v5127 = vunpack.c.l.b16 %v4868
      %v5128 = vunpack.c.l.b16 %v4869
      %v5129 = vunpack.c.l.b16 %v4870
      %v5130 = vunpack.c.l.b16 %v4871
      %v5131 = vunpack.c.l.b16 %v4872
      %v5132 = vunpack.c.l.b16 %v4873
      %v5133 = vunpack.c.l.b16 %v4874
      %v5134 = vunpack.c.l.b16 %v4875
      %v5135 = vunpack.c.l.b16 %v4876
      %v5136 = vunpack.c.l.b16 %v4877
      %v5137 = vunpack.c.l.b16 %v4878
      %v5138 = vunpack.c.l.b16 %v4879
      %v5139 = vunpack.c.l.b16 %v4880
      %v5140 = vunpack.c.l.b16 %v4881
      %v5141 = vunpack.c.l.b16 %v4882
      %v5142 = vunpack.c.l.b16 %v4883
      %v5143 = vunpack.c.l.b16 %v4884
      %v5144 = vunpack.c.l.b16 %v4885
      %v5145 = vunpack.c.l.b16 %v4886
      %v5146 = vunpack.c.l.b16 %v4887
      %v5147 = vunpack.c.l.b16 %v4888
      %v5148 = vunpack.c.l.b16 %v4889
      %v5149 = vunpack.c.l.b16 %v4890
      %v5150 = vunpack.c.l.b16 %v4891
      %v5151 = vunpack.c.l.b16 %v4892
      %v5152 = vunpack.c.l.b16 %v4893
      %v5153 = vunpack.c.l.b16 %v4894
      %v5154 = vunpack.c.l.b16 %v4895
      %v5155 = vunpack.c.l.b16 %v4896
      %v5156 = vunpack.c.l.b16 %v4897
      %v5157 = vunpack.c.l.b16 %v4898
      %v5158 = vunpack.c.l.b16 %v4899
      %v5159 = vunpack.c.l.b16 %v4900
      %v5160 = vunpack.c.l.b16 %v4901
      %v5161 = vunpack.c.l.b16 %v4902
      %v5162 = vunpack.c.l.b16 %v4903
      %v5163 = vunpack.c.l.b16 %v4904
      %v5164 = vunpack.c.l.b16 %v4905
      %v5165 = vunpack.c.l.b16 %v4906
      %v5166 = vunpack.c.l.b16 %v4907
      %v5167 = vunpack.c.l.b16 %v4908
      %v5168 = vunpack.c.l.b16 %v4909
      %v5169 = vunpack.c.l.b16 %v4910
      %v5170 = vunpack.c.l.b16 %v4911
      %v5171 = vunpack.c.l.b16 %v4912
      %v5172 = vunpack.c.l.b16 %v4913
      %v5173 = vunpack.c.l.b16 %v4914
      %v5174 = vunpack.c.l.b16 %v4915
      %v5175 = vunpack.c.l.b16 %v4916
      %v5176 = vunpack.c.l.b16 %v4917
      %v5177 = vunpack.c.l.b16 %v4918
      %v5178 = vunpack.c.l.b16 %v4919
      %v5179 = vunpack.c.l.b16 %v4920
      %v5180 = vunpack.c.l.b16 %v4921
      %v5181 = vunpack.c.l.b16 %v4922
      %v5182 = vunpack.c.l.b16 %v4923
      %v5183 = vunpack.c.l.b16 %v4924
      %v5184 = vunpack.c.l.b16 %v4925
      %v5185 = vunpack.c.l.b16 %v4926
      %v5186 = vunpack.c.l.b16 %v4927
      %v5187 = vunpack.c.l.b16 %v4928
      %v5188 = vunpack.c.l.b16 %v4929
      %v5189 = vunpack.c.l.b16 %v4930
      %v5190 = vunpack.c.l.b16 %v4931
      %v5191 = vunpack.c.l.b16 %v4932
      %v5192 = vunpack.c.l.b16 %v4933
      %v5193 = vunpack.c.l.b16 %v4934
      %v5194 = vunpack.c.l.b16 %v4935
      %v5195 = vunpack.c.l.b16 %v4936
      %v5196 = vunpack.c.l.b16 %v4937
      %v5197 = vpack.c.b16 %v5070, %v5069
      %v5198 = vpack.c.b16 %v5072, %v5071
      %v5199 = vpack.c.b16 %v5074, %v5073
      %v5200 = vpack.c.b16 %v5076, %v5075
      %v5201 = vpack.c.b16 %v5078, %v5077
      %v5202 = vpack.c.b16 %v5080, %v5079
      %v5203 = vpack.c.b16 %v5082, %v5081
      %v5204 = vpack.c.b16 %v5084, %v5083
      %v5205 = vpack.c.b16 %v5086, %v5085
      %v5206 = vpack.c.b16 %v5088, %v5087
      %v5207 = vpack.c.b16 %v5090, %v5089
      %v5208 = vpack.c.b16 %v5092, %v5091
      %v5209 = vpack.c.b16 %v5094, %v5093
      %v5210 = vpack.c.b16 %v5096, %v5095
      %v5211 = vpack.c.b16 %v5098, %v5097
      %v5212 = vpack.c.b16 %v5100, %v5099
      %v5213 = vpack.c.b16 %v5102, %v5101
      %v5214 = vpack.c.b16 %v5104, %v5103
      %v5215 = vpack.c.b16 %v5106, %v5105
      %v5216 = vpack.c.b16 %v5108, %v5107
      %v5217 = vpack.c.b16 %v5110, %v5109
      %v5218 = vpack.c.b16 %v5112, %v5111
      %v5219 = vpack.c.b16 %v5114, %v5113
      %v5220 = vpack.c.b16 %v5116, %v5115
      %v5221 = vpack.c.b16 %v5118, %v5117
      %v5222 = vpack.c.b16 %v5120, %v5119
      %v5223 = vpack.c.b16 %v5122, %v5121
      %v5224 = vpack.c.b16 %v5124, %v5123
      %v5225 = vpack.c.b16 %v5126, %v5125
      %v5226 = vpack.c.b16 %v5128, %v5127
      %v5227 = vpack.c.b16 %v5130, %v5129
      %v5228 = vpack.c.b16 %v5132, %v5131
      %v5229 = vpack.c.b16 %v5134, %v5133
      %v5230 = vpack.c.b16 %v5136, %v5135
      %v5231 = vpack.c.b16 %v5138, %v5137
      %v5232 = vpack.c.b16 %v5140, %v5139
      %v5233 = vpack.c.b16 %v5142, %v5141
      %v5234 = vpack.c.b16 %v5144, %v5143
      %v5235 = vpack.c.b16 %v5146, %v5145
      %v5236 = vpack.c.b16 %v5148, %v5147
      %v5237 = vpack.c.b16 %v5150, %v5149
      %v5238 = vpack.c.b16 %v5152, %v5151
      %v5239 = vpack.c.b16 %v5154, %v5153
      %v5240 = vpack.c.b16 %v5156, %v5155
      %v5241 = vpack.c.b16 %v5158, %v5157
      %v5242 = vpack.c.b16 %v5160, %v5159
      %v5243 = vpack.c.b16 %v5162, %v5161
      %v5244 = vpack.c.b16 %v5164, %v5163
      %v5245 = vpack.c.b16 %v5166, %v5165
      %v5246 = vpack.c.b16 %v5168, %v5167
      %v5247 = vpack.c.b16 %v5170, %v5169
      %v5248 = vpack.c.b16 %v5172, %v5171
      %v5249 = vpack.c.b16 %v5174, %v5173
      %v5250 = vpack.c.b16 %v5176, %v5175
      %v5251 = vpack.c.b16 %v5178, %v5177
      %v5252 = vpack.c.b16 %v5180, %v5179
      %v5253 = vpack.c.b16 %v5182, %v5181
      %v5254 = vpack.c.b16 %v5184, %v5183
      %v5255 = vpack.c.b16 %v5186, %v5185
      %v5256 = vpack.c.b16 %v5188, %v5187
      %v5257 = vpack.c.b16 %v5190, %v5189
      %v5258 = vpack.c.b16 %v5192, %v5191
      %v5259 = vpack.c.b16 %v5194, %v5193
      %v5260 = vpack.c.b16 %v5196, %v5195
      %v5263 = vunpack.c.l.b16 %v4939
      %v5264 = vunpack.c.l.b16 %v4940
      %v5265 = vpack.c.b16 %v5264, %v5263
      %v5267 = vsel %vm848, %v5197, 0
      %v5270 = vsel %vm848, %v5198, 0
      %v5273 = vsel %vm848, %v5199, 0
      %v5276 = vsel %vm848, %v5200, 0
      %v5279 = vsel %vm848, %v5201, 0
      %v5282 = vsel %vm848, %v5202, 0
      %v5285 = vsel %vm848, %v5203, 0
      %v5288 = vsel %vm848, %v5204, 0
      %v5291 = vsel %vm848, %v5205, 0
      %v5294 = vsel %vm848, %v5206, 0
      %v5297 = vsel %vm848, %v5207, 0
      %v5300 = vsel %vm848, %v5208, 0
      %v5303 = vsel %vm848, %v5209, 0
      %v5306 = vsel %vm848, %v5210, 0
      %v5309 = vsel %vm848, %v5211, 0
      %v5312 = vsel %vm848, %v5212, 0
      %v5315 = vsel %vm848, %v5213, 0
      %v5318 = vsel %vm848, %v5214, 0
      %v5321 = vsel %vm848, %v5215, 0
      %v5324 = vsel %vm848, %v5216, 0
      %v5327 = vsel %vm848, %v5217, 0
      %v5330 = vsel %vm848, %v5218, 0
      %v5333 = vsel %vm848, %v5219, 0
      %v5336 = vsel %vm848, %v5220, 0
      %v5339 = vsel %vm848, %v5221, 0
      %v5342 = vsel %vm848, %v5222, 0
      %v5345 = vsel %vm848, %v5223, 0
      %v5348 = vsel %vm848, %v5224, 0
      %v5351 = vsel %vm848, %v5225, 0
      %v5354 = vsel %vm848, %v5226, 0
      %v5357 = vsel %vm848, %v5227, 0
      %v5360 = vsel %vm848, %v5228, 0
      %v5363 = vsel %vm848, %v5229, 0
      %v5366 = vsel %vm848, %v5230, 0
      %v5369 = vsel %vm848, %v5231, 0
      %v5372 = vsel %vm848, %v5232, 0
      %v5375 = vsel %vm848, %v5233, 0
      %v5378 = vsel %vm848, %v5234, 0
      %v5381 = vsel %vm848, %v5235, 0
      %v5384 = vsel %vm848, %v5236, 0
      %v5387 = vsel %vm848, %v5237, 0
      %v5390 = vsel %vm848, %v5238, 0
      %v5393 = vsel %vm848, %v5239, 0
      %v5396 = vsel %vm848, %v5240, 0
      %v5399 = vsel %vm848, %v5241, 0
      %v5402 = vsel %vm848, %v5242, 0
      %v5405 = vsel %vm848, %v5243, 0
      %v5408 = vsel %vm848, %v5244, 0
      %v5411 = vsel %vm848, %v5245, 0
      %v5414 = vsel %vm848, %v5246, 0
      %v5417 = vsel %vm848, %v5247, 0
      %v5420 = vsel %vm848, %v5248, 0
      %v5423 = vsel %vm848, %v5249, 0
      %v5426 = vsel %vm848, %v5250, 0
      %v5429 = vsel %vm848, %v5251, 0
      %v5432 = vsel %vm848, %v5252, 0
      %v5435 = vsel %vm848, %v5253, 0
      %v5438 = vsel %vm848, %v5254, 0
      %v5441 = vsel %vm848, %v5255, 0
      %v5444 = vsel %vm848, %v5256, 0
      %v5447 = vsel %vm848, %v5257, 0
      %v5450 = vsel %vm848, %v5258, 0
      %v5453 = vsel %vm848, %v5259, 0
      %v5456 = vsel %vm848, %v5260, 0
      %v5459 = vand.u32 %v5265, %v1044
      %5461 = vmatprep.subr.bf16.mxu0 0
      %5462 = vmatpush1.bf16.msra.mxu0 %v5459
      %5463 = vmatprep.subr.bf16.mxu0 0
      %5464 = vmatpush1.bf16.msra.mxu0 0
      %5465 = vmatprep.subr.bf16.mxu0 0
      %5466 = vmatpush1.bf16.msra.mxu0 0
      %5467 = vmatprep.subr.bf16.mxu0 0
      %5468 = vmatpush1.bf16.msra.mxu0 0
      %5469 = vmatprep.subr.bf16.mxu0 0
      %5470 = vmatpush1.bf16.msra.mxu0 0
      %5471 = vmatprep.subr.bf16.mxu0 0
      %5472 = vmatpush1.bf16.msra.mxu0 0
      %5473 = vmatprep.subr.bf16.mxu0 0
      %5474 = vmatpush1.bf16.msra.mxu0 0
      %5475 = vmatprep.subr.bf16.mxu0 0
      %5476 = vmatpush1.bf16.msra.mxu0 0
      %5477 = vmatprep.subr.bf16.mxu0 0
      %5478 = vmatpush1.bf16.msra.mxu0 0
      %5479 = vmatprep.subr.bf16.mxu0 0
      %5480 = vmatpush1.bf16.msra.mxu0 0
      %5481 = vmatprep.subr.bf16.mxu0 0
      %5482 = vmatpush1.bf16.msra.mxu0 0
      %5483 = vmatprep.subr.bf16.mxu0 0
      %5484 = vmatpush1.bf16.msra.mxu0 0
      %5485 = vmatprep.subr.bf16.mxu0 0
      %5486 = vmatpush1.bf16.msra.mxu0 0
      %5487 = vmatprep.subr.bf16.mxu0 0
      %5488 = vmatpush1.bf16.msra.mxu0 0
      %5489 = vmatprep.subr.bf16.mxu0 0
      %5490 = vmatpush1.bf16.msra.mxu0 0
      %5491 = vmatprep.subr.bf16.mxu0 0
      %5492 = vmatpush1.bf16.msra.mxu0 0
      %5493 = vmatprep.mubr.bf16.mxu0 0
      %5494 = vmatmul.mubr.bf16.gmra.mrb[0].mxu0 %v5267
      %v5495 = vpop.f32.mrb[0].mxu0
      %v5496 = vadd.f32 0.0, %v5495
      %v5497 = vpop.f32.mrb[0].mxu0
      %v5498 = vpop.f32.mrb[0].mxu0
      %v5499 = vadd.f32 0.0, %v5498
      %v5500 = vpop.f32.mrb[0].mxu0
      %5501 = vmatprep.mubr.bf16.mxu0 0
      %5502 = vmatmul.mubr.bf16.gmra.mrb[0].mxu0 %v5270
      %v5503 = vpop.f32.mrb[0].mxu0
      %v5504 = vadd.f32 0.0, %v5503
      %v5505 = vpop.f32.mrb[0].mxu0
      %v5506 = vpop.f32.mrb[0].mxu0
      %v5507 = vadd.f32 0.0, %v5506
      %v5508 = vpop.f32.mrb[0].mxu0
      %5509 = vmatprep.mubr.bf16.mxu0 0
      %5510 = vmatmul.mubr.bf16.gmra.mrb[0].mxu0 %v5273
      %v5511 = vpop.f32.mrb[0].mxu0
      %v5512 = vadd.f32 0.0, %v5511
      %v5513 = vpop.f32.mrb[0].mxu0
      %v5514 = vpop.f32.mrb[0].mxu0
      %v5515 = vadd.f32 0.0, %v5514
      %v5516 = vpop.f32.mrb[0].mxu0
      %5517 = vmatprep.mubr.bf16.mxu0 0
      %5518 = vmatmul.mubr.bf16.gmra.mrb[0].mxu0 %v5276
      %v5519 = vpop.f32.mrb[0].mxu0
      %v5520 = vadd.f32 0.0, %v5519
      %v5521 = vpop.f32.mrb[0].mxu0
      %v5522 = vpop.f32.mrb[0].mxu0
      %v5523 = vadd.f32 0.0, %v5522
      %v5524 = vpop.f32.mrb[0].mxu0
      %5525 = vmatprep.mubr.bf16.mxu0 0
      %5526 = vmatmul.mubr.bf16.gmra.mrb[0].mxu0 %v5279
      %v5527 = vpop.f32.mrb[0].mxu0
      %v5528 = vadd.f32 0.0, %v5527
      %v5529 = vpop.f32.mrb[0].mxu0
      %v5530 = vpop.f32.mrb[0].mxu0
      %v5531 = vadd.f32 0.0, %v5530
      %v5532 = vpop.f32.mrb[0].mxu0
      %5533 = vmatprep.mubr.bf16.mxu0 0
      %5534 = vmatmul.mubr.bf16.gmra.mrb[0].mxu0 %v5282
      %v5535 = vpop.f32.mrb[0].mxu0
      %v5536 = vadd.f32 0.0, %v5535
      %v5537 = vpop.f32.mrb[0].mxu0
      %v5538 = vpop.f32.mrb[0].mxu0
      %v5539 = vadd.f32 0.0, %v5538
      %v5540 = vpop.f32.mrb[0].mxu0
      %5541 = vmatprep.mubr.bf16.mxu0 0
      %5542 = vmatmul.mubr.bf16.gmra.mrb[0].mxu0 %v5285
      %v5543 = vpop.f32.mrb[0].mxu0
      %v5544 = vadd.f32 0.0, %v5543
      %v5545 = vpop.f32.mrb[0].mxu0
      %v5546 = vpop.f32.mrb[0].mxu0
      %v5547 = vadd.f32 0.0, %v5546
      %v5548 = vpop.f32.mrb[0].mxu0
      %5549 = vmatprep.mubr.bf16.mxu0 0
      %5550 = vmatmul.mubr.bf16.gmra.mrb[0].mxu0 %v5288
      %v5551 = vpop.f32.mrb[0].mxu0
      %v5552 = vadd.f32 0.0, %v5551
      %v5553 = vpop.f32.mrb[0].mxu0
      %v5554 = vpop.f32.mrb[0].mxu0
      %v5555 = vadd.f32 0.0, %v5554
      %v5556 = vpop.f32.mrb[0].mxu0
      %5557 = vmatprep.mubr.bf16.mxu0 0
      %5558 = vmatmul.mubr.bf16.gmra.mrb[0].mxu0 %v5291
      %v5559 = vpop.f32.mrb[0].mxu0
      %v5560 = vadd.f32 0.0, %v5559
      %v5561 = vpop.f32.mrb[0].mxu0
      %v5562 = vpop.f32.mrb[0].mxu0
      %v5563 = vadd.f32 0.0, %v5562
      %v5564 = vpop.f32.mrb[0].mxu0
      %5565 = vmatprep.mubr.bf16.mxu0 0
      %5566 = vmatmul.mubr.bf16.gmra.mrb[0].mxu0 %v5294
      %v5567 = vpop.f32.mrb[0].mxu0
      %v5568 = vadd.f32 0.0, %v5567
      %v5569 = vpop.f32.mrb[0].mxu0
      %v5570 = vpop.f32.mrb[0].mxu0
      %v5571 = vadd.f32 0.0, %v5570
      %v5572 = vpop.f32.mrb[0].mxu0
      %5573 = vmatprep.mubr.bf16.mxu0 0
      %5574 = vmatmul.mubr.bf16.gmra.mrb[0].mxu0 %v5297
      %v5575 = vpop.f32.mrb[0].mxu0
      %v5576 = vadd.f32 0.0, %v5575
      %v5577 = vpop.f32.mrb[0].mxu0
      %v5578 = vpop.f32.mrb[0].mxu0
      %v5579 = vadd.f32 0.0, %v5578
      %v5580 = vpop.f32.mrb[0].mxu0
      %5581 = vmatprep.mubr.bf16.mxu0 0
      %5582 = vmatmul.mubr.bf16.gmra.mrb[0].mxu0 %v5300
      %v5583 = vpop.f32.mrb[0].mxu0
      %v5584 = vadd.f32 0.0, %v5583
      %v5585 = vpop.f32.mrb[0].mxu0
      %v5586 = vpop.f32.mrb[0].mxu0
      %v5587 = vadd.f32 0.0, %v5586
      %v5588 = vpop.f32.mrb[0].mxu0
      %5589 = vmatprep.mubr.bf16.mxu0 0
      %5590 = vmatmul.mubr.bf16.gmra.mrb[0].mxu0 %v5303
      %v5591 = vpop.f32.mrb[0].mxu0
      %v5592 = vadd.f32 0.0, %v5591
      %v5593 = vpop.f32.mrb[0].mxu0
      %v5594 = vpop.f32.mrb[0].mxu0
      %v5595 = vadd.f32 0.0, %v5594
      %v5596 = vpop.f32.mrb[0].mxu0
      %5597 = vmatprep.mubr.bf16.mxu0 0
      %5598 = vmatmul.mubr.bf16.gmra.mrb[0].mxu0 %v5306
      %v5599 = vpop.f32.mrb[0].mxu0
      %v5600 = vadd.f32 0.0, %v5599
      %v5601 = vpop.f32.mrb[0].mxu0
      %v5602 = vpop.f32.mrb[0].mxu0
      %v5603 = vadd.f32 0.0, %v5602
      %v5604 = vpop.f32.mrb[0].mxu0
      %5605 = vmatprep.mubr.bf16.mxu0 0
      %5606 = vmatmul.mubr.bf16.gmra.mrb[0].mxu0 %v5309
      %v5607 = vpop.f32.mrb[0].mxu0
      %v5608 = vadd.f32 0.0, %v5607
      %v5609 = vpop.f32.mrb[0].mxu0
      %v5610 = vpop.f32.mrb[0].mxu0
      %v5611 = vadd.f32 0.0, %v5610
      %v5612 = vpop.f32.mrb[0].mxu0
      %5613 = vmatprep.mubr.bf16.mxu0 0
      %5614 = vmatmul.mubr.bf16.gmra.mrb[0].mxu0 %v5312
      %v5615 = vpop.f32.mrb[0].mxu0
      %v5616 = vadd.f32 0.0, %v5615
      %v5617 = vpop.f32.mrb[0].mxu0
      %v5618 = vpop.f32.mrb[0].mxu0
      %v5619 = vadd.f32 0.0, %v5618
      %v5620 = vpop.f32.mrb[0].mxu0
      %5621 = vmatprep.mubr.bf16.mxu0 0
      %5622 = vmatmul.mubr.bf16.gmra.mrb[0].mxu0 %v5315
      %v5623 = vpop.f32.mrb[0].mxu0
      %v5624 = vadd.f32 0.0, %v5623
      %v5625 = vpop.f32.mrb[0].mxu0
      %v5626 = vpop.f32.mrb[0].mxu0
      %v5627 = vadd.f32 0.0, %v5626
      %v5628 = vpop.f32.mrb[0].mxu0
      %5629 = vmatprep.mubr.bf16.mxu0 0
      %5630 = vmatmul.mubr.bf16.gmra.mrb[0].mxu0 %v5318
      %v5631 = vpop.f32.mrb[0].mxu0
      %v5632 = vadd.f32 0.0, %v5631
      %v5633 = vpop.f32.mrb[0].mxu0
      %v5634 = vpop.f32.mrb[0].mxu0
      %v5635 = vadd.f32 0.0, %v5634
      %v5636 = vpop.f32.mrb[0].mxu0
      %5637 = vmatprep.mubr.bf16.mxu0 0
      %5638 = vmatmul.mubr.bf16.gmra.mrb[0].mxu0 %v5321
      %v5639 = vpop.f32.mrb[0].mxu0
      %v5640 = vadd.f32 0.0, %v5639
      %v5641 = vpop.f32.mrb[0].mxu0
      %v5642 = vpop.f32.mrb[0].mxu0
      %v5643 = vadd.f32 0.0, %v5642
      %v5644 = vpop.f32.mrb[0].mxu0
      %5645 = vmatprep.mubr.bf16.mxu0 0
      %5646 = vmatmul.mubr.bf16.gmra.mrb[0].mxu0 %v5324
      %v5647 = vpop.f32.mrb[0].mxu0
      %v5648 = vadd.f32 0.0, %v5647
      %v5649 = vpop.f32.mrb[0].mxu0
      %v5650 = vpop.f32.mrb[0].mxu0
      %v5651 = vadd.f32 0.0, %v5650
      %v5652 = vpop.f32.mrb[0].mxu0
      %5653 = vmatprep.mubr.bf16.mxu0 0
      %5654 = vmatmul.mubr.bf16.gmra.mrb[0].mxu0 %v5327
      %v5655 = vpop.f32.mrb[0].mxu0
      %v5656 = vadd.f32 0.0, %v5655
      %v5657 = vpop.f32.mrb[0].mxu0
      %v5658 = vpop.f32.mrb[0].mxu0
      %v5659 = vadd.f32 0.0, %v5658
      %v5660 = vpop.f32.mrb[0].mxu0
      %5661 = vmatprep.mubr.bf16.mxu0 0
      %5662 = vmatmul.mubr.bf16.gmra.mrb[0].mxu0 %v5330
      %v5663 = vpop.f32.mrb[0].mxu0
      %v5664 = vadd.f32 0.0, %v5663
      %v5665 = vpop.f32.mrb[0].mxu0
      %v5666 = vpop.f32.mrb[0].mxu0
      %v5667 = vadd.f32 0.0, %v5666
      %v5668 = vpop.f32.mrb[0].mxu0
      %5669 = vmatprep.mubr.bf16.mxu0 0
      %5670 = vmatmul.mubr.bf16.gmra.mrb[0].mxu0 %v5333
      %v5671 = vpop.f32.mrb[0].mxu0
      %v5672 = vadd.f32 0.0, %v5671
      %v5673 = vpop.f32.mrb[0].mxu0
      %v5674 = vpop.f32.mrb[0].mxu0
      %v5675 = vadd.f32 0.0, %v5674
      %v5676 = vpop.f32.mrb[0].mxu0
      %5677 = vmatprep.mubr.bf16.mxu0 0
      %5678 = vmatmul.mubr.bf16.gmra.mrb[0].mxu0 %v5336
      %v5679 = vpop.f32.mrb[0].mxu0
      %v5680 = vadd.f32 0.0, %v5679
      %v5681 = vpop.f32.mrb[0].mxu0
      %v5682 = vpop.f32.mrb[0].mxu0
      %v5683 = vadd.f32 0.0, %v5682
      %v5684 = vpop.f32.mrb[0].mxu0
      %5685 = vmatprep.mubr.bf16.mxu0 0
      %5686 = vmatmul.mubr.bf16.gmra.mrb[0].mxu0 %v5339
      %v5687 = vpop.f32.mrb[0].mxu0
      %v5688 = vadd.f32 0.0, %v5687
      %v5689 = vpop.f32.mrb[0].mxu0
      %v5690 = vpop.f32.mrb[0].mxu0
      %v5691 = vadd.f32 0.0, %v5690
      %v5692 = vpop.f32.mrb[0].mxu0
      %5693 = vmatprep.mubr.bf16.mxu0 0
      %5694 = vmatmul.mubr.bf16.gmra.mrb[0].mxu0 %v5342
      %v5695 = vpop.f32.mrb[0].mxu0
      %v5696 = vadd.f32 0.0, %v5695
      %v5697 = vpop.f32.mrb[0].mxu0
      %v5698 = vpop.f32.mrb[0].mxu0
      %v5699 = vadd.f32 0.0, %v5698
      %v5700 = vpop.f32.mrb[0].mxu0
      %5701 = vmatprep.mubr.bf16.mxu0 0
      %5702 = vmatmul.mubr.bf16.gmra.mrb[0].mxu0 %v5345
      %v5703 = vpop.f32.mrb[0].mxu0
      %v5704 = vadd.f32 0.0, %v5703
      %v5705 = vpop.f32.mrb[0].mxu0
      %v5706 = vpop.f32.mrb[0].mxu0
      %v5707 = vadd.f32 0.0, %v5706
      %v5708 = vpop.f32.mrb[0].mxu0
      %5709 = vmatprep.mubr.bf16.mxu0 0
      %5710 = vmatmul.mubr.bf16.gmra.mrb[0].mxu0 %v5348
      %v5711 = vpop.f32.mrb[0].mxu0
      %v5712 = vadd.f32 0.0, %v5711
      %v5713 = vpop.f32.mrb[0].mxu0
      %v5714 = vpop.f32.mrb[0].mxu0
      %v5715 = vadd.f32 0.0, %v5714
      %v5716 = vpop.f32.mrb[0].mxu0
      %5717 = vmatprep.mubr.bf16.mxu0 0
      %5718 = vmatmul.mubr.bf16.gmra.mrb[0].mxu0 %v5351
      %v5719 = vpop.f32.mrb[0].mxu0
      %v5720 = vadd.f32 0.0, %v5719
      %v5721 = vpop.f32.mrb[0].mxu0
      %v5722 = vpop.f32.mrb[0].mxu0
      %v5723 = vadd.f32 0.0, %v5722
      %v5724 = vpop.f32.mrb[0].mxu0
      %5725 = vmatprep.mubr.bf16.mxu0 0
      %5726 = vmatmul.mubr.bf16.gmra.mrb[0].mxu0 %v5354
      %v5727 = vpop.f32.mrb[0].mxu0
      %v5728 = vadd.f32 0.0, %v5727
      %v5729 = vpop.f32.mrb[0].mxu0
      %v5730 = vpop.f32.mrb[0].mxu0
      %v5731 = vadd.f32 0.0, %v5730
      %v5732 = vpop.f32.mrb[0].mxu0
      %5733 = vmatprep.mubr.bf16.mxu0 0
      %5734 = vmatmul.mubr.bf16.gmra.mrb[0].mxu0 %v5357
      %v5735 = vpop.f32.mrb[0].mxu0
      %v5736 = vadd.f32 0.0, %v5735
      %v5737 = vpop.f32.mrb[0].mxu0
      %v5738 = vpop.f32.mrb[0].mxu0
      %v5739 = vadd.f32 0.0, %v5738
      %v5740 = vpop.f32.mrb[0].mxu0
      %5741 = vmatprep.mubr.bf16.mxu0 0
      %5742 = vmatmul.mubr.bf16.gmra.mrb[0].mxu0 %v5360
      %v5743 = vpop.f32.mrb[0].mxu0
      %v5744 = vadd.f32 0.0, %v5743
      %v5745 = vpop.f32.mrb[0].mxu0
      %v5746 = vpop.f32.mrb[0].mxu0
      %v5747 = vadd.f32 0.0, %v5746
      %v5748 = vpop.f32.mrb[0].mxu0
      %5749 = vmatprep.mubr.bf16.mxu0 0
      %5750 = vmatmul.mubr.bf16.gmra.mrb[0].mxu0 %v5363
      %v5751 = vpop.f32.mrb[0].mxu0
      %v5752 = vadd.f32 0.0, %v5751
      %v5753 = vpop.f32.mrb[0].mxu0
      %v5754 = vpop.f32.mrb[0].mxu0
      %v5755 = vadd.f32 0.0, %v5754
      %v5756 = vpop.f32.mrb[0].mxu0
      %5757 = vmatprep.mubr.bf16.mxu0 0
      %5758 = vmatmul.mubr.bf16.gmra.mrb[0].mxu0 %v5366
      %v5759 = vpop.f32.mrb[0].mxu0
      %v5760 = vadd.f32 0.0, %v5759
      %v5761 = vpop.f32.mrb[0].mxu0
      %v5762 = vpop.f32.mrb[0].mxu0
      %v5763 = vadd.f32 0.0, %v5762
      %v5764 = vpop.f32.mrb[0].mxu0
      %5765 = vmatprep.mubr.bf16.mxu0 0
      %5766 = vmatmul.mubr.bf16.gmra.mrb[0].mxu0 %v5369
      %v5767 = vpop.f32.mrb[0].mxu0
      %v5768 = vadd.f32 0.0, %v5767
      %v5769 = vpop.f32.mrb[0].mxu0
      %v5770 = vpop.f32.mrb[0].mxu0
      %v5771 = vadd.f32 0.0, %v5770
      %v5772 = vpop.f32.mrb[0].mxu0
      %5773 = vmatprep.mubr.bf16.mxu0 0
      %5774 = vmatmul.mubr.bf16.gmra.mrb[0].mxu0 %v5372
      %v5775 = vpop.f32.mrb[0].mxu0
      %v5776 = vadd.f32 0.0, %v5775
      %v5777 = vpop.f32.mrb[0].mxu0
      %v5778 = vpop.f32.mrb[0].mxu0
      %v5779 = vadd.f32 0.0, %v5778
      %v5780 = vpop.f32.mrb[0].mxu0
      %5781 = vmatprep.mubr.bf16.mxu0 0
      %5782 = vmatmul.mubr.bf16.gmra.mrb[0].mxu0 %v5375
      %v5783 = vpop.f32.mrb[0].mxu0
      %v5784 = vadd.f32 0.0, %v5783
      %v5785 = vpop.f32.mrb[0].mxu0
      %v5786 = vpop.f32.mrb[0].mxu0
      %v5787 = vadd.f32 0.0, %v5786
      %v5788 = vpop.f32.mrb[0].mxu0
      %5789 = vmatprep.mubr.bf16.mxu0 0
      %5790 = vmatmul.mubr.bf16.gmra.mrb[0].mxu0 %v5378
      %v5791 = vpop.f32.mrb[0].mxu0
      %v5792 = vadd.f32 0.0, %v5791
      %v5793 = vpop.f32.mrb[0].mxu0
      %v5794 = vpop.f32.mrb[0].mxu0
      %v5795 = vadd.f32 0.0, %v5794
      %v5796 = vpop.f32.mrb[0].mxu0
      %5797 = vmatprep.mubr.bf16.mxu0 0
      %5798 = vmatmul.mubr.bf16.gmra.mrb[0].mxu0 %v5381
      %v5799 = vpop.f32.mrb[0].mxu0
      %v5800 = vadd.f32 0.0, %v5799
      %v5801 = vpop.f32.mrb[0].mxu0
      %v5802 = vpop.f32.mrb[0].mxu0
      %v5803 = vadd.f32 0.0, %v5802
      %v5804 = vpop.f32.mrb[0].mxu0
      %5805 = vmatprep.mubr.bf16.mxu0 0
      %5806 = vmatmul.mubr.bf16.gmra.mrb[0].mxu0 %v5384
      %v5807 = vpop.f32.mrb[0].mxu0
      %v5808 = vadd.f32 0.0, %v5807
      %v5809 = vpop.f32.mrb[0].mxu0
      %v5810 = vpop.f32.mrb[0].mxu0
      %v5811 = vadd.f32 0.0, %v5810
      %v5812 = vpop.f32.mrb[0].mxu0
      %5813 = vmatprep.mubr.bf16.mxu0 0
      %5814 = vmatmul.mubr.bf16.gmra.mrb[0].mxu0 %v5387
      %v5815 = vpop.f32.mrb[0].mxu0
      %v5816 = vadd.f32 0.0, %v5815
      %v5817 = vpop.f32.mrb[0].mxu0
      %v5818 = vpop.f32.mrb[0].mxu0
      %v5819 = vadd.f32 0.0, %v5818
      %v5820 = vpop.f32.mrb[0].mxu0
      %5821 = vmatprep.mubr.bf16.mxu0 0
      %5822 = vmatmul.mubr.bf16.gmra.mrb[0].mxu0 %v5390
      %v5823 = vpop.f32.mrb[0].mxu0
      %v5824 = vadd.f32 0.0, %v5823
      %v5825 = vpop.f32.mrb[0].mxu0
      %v5826 = vpop.f32.mrb[0].mxu0
      %v5827 = vadd.f32 0.0, %v5826
      %v5828 = vpop.f32.mrb[0].mxu0
      %5829 = vmatprep.mubr.bf16.mxu0 0
      %5830 = vmatmul.mubr.bf16.gmra.mrb[0].mxu0 %v5393
      %v5831 = vpop.f32.mrb[0].mxu0
      %v5832 = vadd.f32 0.0, %v5831
      %v5833 = vpop.f32.mrb[0].mxu0
      %v5834 = vpop.f32.mrb[0].mxu0
      %v5835 = vadd.f32 0.0, %v5834
      %v5836 = vpop.f32.mrb[0].mxu0
      %5837 = vmatprep.mubr.bf16.mxu0 0
      %5838 = vmatmul.mubr.bf16.gmra.mrb[0].mxu0 %v5396
      %v5839 = vpop.f32.mrb[0].mxu0
      %v5840 = vadd.f32 0.0, %v5839
      %v5841 = vpop.f32.mrb[0].mxu0
      %v5842 = vpop.f32.mrb[0].mxu0
      %v5843 = vadd.f32 0.0, %v5842
      %v5844 = vpop.f32.mrb[0].mxu0
      %5845 = vmatprep.mubr.bf16.mxu0 0
      %5846 = vmatmul.mubr.bf16.gmra.mrb[0].mxu0 %v5399
      %v5847 = vpop.f32.mrb[0].mxu0
      %v5848 = vadd.f32 0.0, %v5847
      %v5849 = vpop.f32.mrb[0].mxu0
      %v5850 = vpop.f32.mrb[0].mxu0
      %v5851 = vadd.f32 0.0, %v5850
      %v5852 = vpop.f32.mrb[0].mxu0
      %5853 = vmatprep.mubr.bf16.mxu0 0
      %5854 = vmatmul.mubr.bf16.gmra.mrb[0].mxu0 %v5402
      %v5855 = vpop.f32.mrb[0].mxu0
      %v5856 = vadd.f32 0.0, %v5855
      %v5857 = vpop.f32.mrb[0].mxu0
      %v5858 = vpop.f32.mrb[0].mxu0
      %v5859 = vadd.f32 0.0, %v5858
      %v5860 = vpop.f32.mrb[0].mxu0
      %5861 = vmatprep.mubr.bf16.mxu0 0
      %5862 = vmatmul.mubr.bf16.gmra.mrb[0].mxu0 %v5405
      %v5863 = vpop.f32.mrb[0].mxu0
      %v5864 = vadd.f32 0.0, %v5863
      %v5865 = vpop.f32.mrb[0].mxu0
      %v5866 = vpop.f32.mrb[0].mxu0
      %v5867 = vadd.f32 0.0, %v5866
      %v5868 = vpop.f32.mrb[0].mxu0
      %5869 = vmatprep.mubr.bf16.mxu0 0
      %5870 = vmatmul.mubr.bf16.gmra.mrb[0].mxu0 %v5408
      %v5871 = vpop.f32.mrb[0].mxu0
      %v5872 = vadd.f32 0.0, %v5871
      %v5873 = vpop.f32.mrb[0].mxu0
      %v5874 = vpop.f32.mrb[0].mxu0
      %v5875 = vadd.f32 0.0, %v5874
      %v5876 = vpop.f32.mrb[0].mxu0
      %5877 = vmatprep.mubr.bf16.mxu0 0
      %5878 = vmatmul.mubr.bf16.gmra.mrb[0].mxu0 %v5411
      %v5879 = vpop.f32.mrb[0].mxu0
      %v5880 = vadd.f32 0.0, %v5879
      %v5881 = vpop.f32.mrb[0].mxu0
      %v5882 = vpop.f32.mrb[0].mxu0
      %v5883 = vadd.f32 0.0, %v5882
      %v5884 = vpop.f32.mrb[0].mxu0
      %5885 = vmatprep.mubr.bf16.mxu0 0
      %5886 = vmatmul.mubr.bf16.gmra.mrb[0].mxu0 %v5414
      %v5887 = vpop.f32.mrb[0].mxu0
      %v5888 = vadd.f32 0.0, %v5887
      %v5889 = vpop.f32.mrb[0].mxu0
      %v5890 = vpop.f32.mrb[0].mxu0
      %v5891 = vadd.f32 0.0, %v5890
      %v5892 = vpop.f32.mrb[0].mxu0
      %5893 = vmatprep.mubr.bf16.mxu0 0
      %5894 = vmatmul.mubr.bf16.gmra.mrb[0].mxu0 %v5417
      %v5895 = vpop.f32.mrb[0].mxu0
      %v5896 = vadd.f32 0.0, %v5895
      %v5897 = vpop.f32.mrb[0].mxu0
      %v5898 = vpop.f32.mrb[0].mxu0
      %v5899 = vadd.f32 0.0, %v5898
      %v5900 = vpop.f32.mrb[0].mxu0
      %5901 = vmatprep.mubr.bf16.mxu0 0
      %5902 = vmatmul.mubr.bf16.gmra.mrb[0].mxu0 %v5420
      %v5903 = vpop.f32.mrb[0].mxu0
      %v5904 = vadd.f32 0.0, %v5903
      %v5905 = vpop.f32.mrb[0].mxu0
      %v5906 = vpop.f32.mrb[0].mxu0
      %v5907 = vadd.f32 0.0, %v5906
      %v5908 = vpop.f32.mrb[0].mxu0
      %5909 = vmatprep.mubr.bf16.mxu0 0
      %5910 = vmatmul.mubr.bf16.gmra.mrb[0].mxu0 %v5423
      %v5911 = vpop.f32.mrb[0].mxu0
      %v5912 = vadd.f32 0.0, %v5911
      %v5913 = vpop.f32.mrb[0].mxu0
      %v5914 = vpop.f32.mrb[0].mxu0
      %v5915 = vadd.f32 0.0, %v5914
      %v5916 = vpop.f32.mrb[0].mxu0
      %5917 = vmatprep.mubr.bf16.mxu0 0
      %5918 = vmatmul.mubr.bf16.gmra.mrb[0].mxu0 %v5426
      %v5919 = vpop.f32.mrb[0].mxu0
      %v5920 = vadd.f32 0.0, %v5919
      %v5921 = vpop.f32.mrb[0].mxu0
      %v5922 = vpop.f32.mrb[0].mxu0
      %v5923 = vadd.f32 0.0, %v5922
      %v5924 = vpop.f32.mrb[0].mxu0
      %5925 = vmatprep.mubr.bf16.mxu0 0
      %5926 = vmatmul.mubr.bf16.gmra.mrb[0].mxu0 %v5429
      %v5927 = vpop.f32.mrb[0].mxu0
      %v5928 = vadd.f32 0.0, %v5927
      %v5929 = vpop.f32.mrb[0].mxu0
      %v5930 = vpop.f32.mrb[0].mxu0
      %v5931 = vadd.f32 0.0, %v5930
      %v5932 = vpop.f32.mrb[0].mxu0
      %5933 = vmatprep.mubr.bf16.mxu0 0
      %5934 = vmatmul.mubr.bf16.gmra.mrb[0].mxu0 %v5432
      %v5935 = vpop.f32.mrb[0].mxu0
      %v5936 = vadd.f32 0.0, %v5935
      %v5937 = vpop.f32.mrb[0].mxu0
      %v5938 = vpop.f32.mrb[0].mxu0
      %v5939 = vadd.f32 0.0, %v5938
      %v5940 = vpop.f32.mrb[0].mxu0
      %5941 = vmatprep.mubr.bf16.mxu0 0
      %5942 = vmatmul.mubr.bf16.gmra.mrb[0].mxu0 %v5435
      %v5943 = vpop.f32.mrb[0].mxu0
      %v5944 = vadd.f32 0.0, %v5943
      %v5945 = vpop.f32.mrb[0].mxu0
      %v5946 = vpop.f32.mrb[0].mxu0
      %v5947 = vadd.f32 0.0, %v5946
      %v5948 = vpop.f32.mrb[0].mxu0
      %5949 = vmatprep.mubr.bf16.mxu0 0
      %5950 = vmatmul.mubr.bf16.gmra.mrb[0].mxu0 %v5438
      %v5951 = vpop.f32.mrb[0].mxu0
      %v5952 = vadd.f32 0.0, %v5951
      %v5953 = vpop.f32.mrb[0].mxu0
      %v5954 = vpop.f32.mrb[0].mxu0
      %v5955 = vadd.f32 0.0, %v5954
      %v5956 = vpop.f32.mrb[0].mxu0
      %5957 = vmatprep.mubr.bf16.mxu0 0
      %5958 = vmatmul.mubr.bf16.gmra.mrb[0].mxu0 %v5441
      %v5959 = vpop.f32.mrb[0].mxu0
      %v5960 = vadd.f32 0.0, %v5959
      %v5961 = vpop.f32.mrb[0].mxu0
      %v5962 = vpop.f32.mrb[0].mxu0
      %v5963 = vadd.f32 0.0, %v5962
      %v5964 = vpop.f32.mrb[0].mxu0
      %5965 = vmatprep.mubr.bf16.mxu0 0
      %5966 = vmatmul.mubr.bf16.gmra.mrb[0].mxu0 %v5444
      %v5967 = vpop.f32.mrb[0].mxu0
      %v5968 = vadd.f32 0.0, %v5967
      %v5969 = vpop.f32.mrb[0].mxu0
      %v5970 = vpop.f32.mrb[0].mxu0
      %v5971 = vadd.f32 0.0, %v5970
      %v5972 = vpop.f32.mrb[0].mxu0
      %5973 = vmatprep.mubr.bf16.mxu0 0
      %5974 = vmatmul.mubr.bf16.gmra.mrb[0].mxu0 %v5447
      %v5975 = vpop.f32.mrb[0].mxu0
      %v5976 = vadd.f32 0.0, %v5975
      %v5977 = vpop.f32.mrb[0].mxu0
      %v5978 = vpop.f32.mrb[0].mxu0
      %v5979 = vadd.f32 0.0, %v5978
      %v5980 = vpop.f32.mrb[0].mxu0
      %5981 = vmatprep.mubr.bf16.mxu0 0
      %5982 = vmatmul.mubr.bf16.gmra.mrb[0].mxu0 %v5450
      %v5983 = vpop.f32.mrb[0].mxu0
      %v5984 = vadd.f32 0.0, %v5983
      %v5985 = vpop.f32.mrb[0].mxu0
      %v5986 = vpop.f32.mrb[0].mxu0
      %v5987 = vadd.f32 0.0, %v5986
      %v5988 = vpop.f32.mrb[0].mxu0
      %5989 = vmatprep.mubr.bf16.mxu0 0
      %5990 = vmatmul.mubr.bf16.gmra.mrb[0].mxu0 %v5453
      %v5991 = vpop.f32.mrb[0].mxu0
      %v5992 = vadd.f32 0.0, %v5991
      %v5993 = vpop.f32.mrb[0].mxu0
      %v5994 = vpop.f32.mrb[0].mxu0
      %v5995 = vadd.f32 0.0, %v5994
      %v5996 = vpop.f32.mrb[0].mxu0
      %5997 = vmatprep.mubr.bf16.mxu0 0
      %5998 = vmatmul.mubr.bf16.gmra.mrb[0].mxu0 %v5456
      %v5999 = vpop.f32.mrb[0].mxu0
      %v6000 = vadd.f32 0.0, %v5999
      %v6001 = vpop.f32.mrb[0].mxu0
      %v6002 = vpop.f32.mrb[0].mxu0
      %v6003 = vadd.f32 0.0, %v6002
      %v6004 = vpop.f32.mrb[0].mxu0
      %6005 = vdwg.mxu0
      %v6006 = vadd.f32 %v4682, %v5496
      %v6007 = vadd.f32 %v4683, %v5499
      %v6008 = vadd.f32 %v4684, %v5504
      %v6009 = vadd.f32 %v4685, %v5507
      %v6010 = vadd.f32 %v4686, %v5512
      %v6011 = vadd.f32 %v4687, %v5515
      %v6012 = vadd.f32 %v4688, %v5520
      %v6013 = vadd.f32 %v4689, %v5523
      %v6014 = vadd.f32 %v4690, %v5528
      %v6015 = vadd.f32 %v4691, %v5531
      %v6016 = vadd.f32 %v4692, %v5536
      %v6017 = vadd.f32 %v4693, %v5539
      %v6018 = vadd.f32 %v4694, %v5544
      %v6019 = vadd.f32 %v4695, %v5547
      %v6020 = vadd.f32 %v4696, %v5552
      %v6021 = vadd.f32 %v4697, %v5555
      %v6022 = vadd.f32 %v4698, %v5560
      %v6023 = vadd.f32 %v4699, %v5563
      %v6024 = vadd.f32 %v4700, %v5568
      %v6025 = vadd.f32 %v4701, %v5571
      %v6026 = vadd.f32 %v4702, %v5576
      %v6027 = vadd.f32 %v4703, %v5579
      %v6028 = vadd.f32 %v4704, %v5584
      %v6029 = vadd.f32 %v4705, %v5587
      %v6030 = vadd.f32 %v4706, %v5592
      %v6031 = vadd.f32 %v4707, %v5595
      %v6032 = vadd.f32 %v4708, %v5600
      %v6033 = vadd.f32 %v4709, %v5603
      %v6034 = vadd.f32 %v4710, %v5608
      %v6035 = vadd.f32 %v4711, %v5611
      %v6036 = vadd.f32 %v4712, %v5616
      %v6037 = vadd.f32 %v4713, %v5619
      %v6038 = vadd.f32 %v4714, %v5624
      %v6039 = vadd.f32 %v4715, %v5627
      %v6040 = vadd.f32 %v4716, %v5632
      %v6041 = vadd.f32 %v4717, %v5635
      %v6042 = vadd.f32 %v4718, %v5640
      %v6043 = vadd.f32 %v4719, %v5643
      %v6044 = vadd.f32 %v4720, %v5648
      %v6045 = vadd.f32 %v4721, %v5651
      %v6046 = vadd.f32 %v4722, %v5656
      %v6047 = vadd.f32 %v4723, %v5659
      %v6048 = vadd.f32 %v4724, %v5664
      %v6049 = vadd.f32 %v4725, %v5667
      %v6050 = vadd.f32 %v4726, %v5672
      %v6051 = vadd.f32 %v4727, %v5675
      %v6052 = vadd.f32 %v4728, %v5680
      %v6053 = vadd.f32 %v4729, %v5683
      %v6054 = vadd.f32 %v4730, %v5688
      %v6055 = vadd.f32 %v4731, %v5691
      %v6056 = vadd.f32 %v4732, %v5696
      %v6057 = vadd.f32 %v4733, %v5699
      %v6058 = vadd.f32 %v4734, %v5704
      %v6059 = vadd.f32 %v4735, %v5707
      %v6060 = vadd.f32 %v4736, %v5712
      %v6061 = vadd.f32 %v4737, %v5715
      %v6062 = vadd.f32 %v4738, %v5720
      %v6063 = vadd.f32 %v4739, %v5723
      %v6064 = vadd.f32 %v4740, %v5728
      %v6065 = vadd.f32 %v4741, %v5731
      %v6066 = vadd.f32 %v4742, %v5736
      %v6067 = vadd.f32 %v4743, %v5739
      %v6068 = vadd.f32 %v4744, %v5744
      %v6069 = vadd.f32 %v4745, %v5747
      %v6070 = vadd.f32 %v4746, %v5752
      %v6071 = vadd.f32 %v4747, %v5755
      %v6072 = vadd.f32 %v4748, %v5760
      %v6073 = vadd.f32 %v4749, %v5763
      %v6074 = vadd.f32 %v4750, %v5768
      %v6075 = vadd.f32 %v4751, %v5771
      %v6076 = vadd.f32 %v4752, %v5776
      %v6077 = vadd.f32 %v4753, %v5779
      %v6078 = vadd.f32 %v4754, %v5784
      %v6079 = vadd.f32 %v4755, %v5787
      %v6080 = vadd.f32 %v4756, %v5792
      %v6081 = vadd.f32 %v4757, %v5795
      %v6082 = vadd.f32 %v4758, %v5800
      %v6083 = vadd.f32 %v4759, %v5803
      %v6084 = vadd.f32 %v4760, %v5808
      %v6085 = vadd.f32 %v4761, %v5811
      %v6086 = vadd.f32 %v4762, %v5816
      %v6087 = vadd.f32 %v4763, %v5819
      %v6088 = vadd.f32 %v4764, %v5824
      %v6089 = vadd.f32 %v4765, %v5827
      %v6090 = vadd.f32 %v4766, %v5832
      %v6091 = vadd.f32 %v4767, %v5835
      %v6092 = vadd.f32 %v4768, %v5840
      %v6093 = vadd.f32 %v4769, %v5843
      %v6094 = vadd.f32 %v4770, %v5848
      %v6095 = vadd.f32 %v4771, %v5851
      %v6096 = vadd.f32 %v4772, %v5856
      %v6097 = vadd.f32 %v4773, %v5859
      %v6098 = vadd.f32 %v4774, %v5864
      %v6099 = vadd.f32 %v4775, %v5867
      %v6100 = vadd.f32 %v4776, %v5872
      %v6101 = vadd.f32 %v4777, %v5875
      %v6102 = vadd.f32 %v4778, %v5880
      %v6103 = vadd.f32 %v4779, %v5883
      %v6104 = vadd.f32 %v4780, %v5888
      %v6105 = vadd.f32 %v4781, %v5891
      %v6106 = vadd.f32 %v4782, %v5896
      %v6107 = vadd.f32 %v4783, %v5899
      %v6108 = vadd.f32 %v4784, %v5904
      %v6109 = vadd.f32 %v4785, %v5907
      %v6110 = vadd.f32 %v4786, %v5912
      %v6111 = vadd.f32 %v4787, %v5915
      %v6112 = vadd.f32 %v4788, %v5920
      %v6113 = vadd.f32 %v4789, %v5923
      %v6114 = vadd.f32 %v4790, %v5928
      %v6115 = vadd.f32 %v4791, %v5931
      %v6116 = vadd.f32 %v4792, %v5936
      %v6117 = vadd.f32 %v4793, %v5939
      %v6118 = vadd.f32 %v4794, %v5944
      %v6119 = vadd.f32 %v4795, %v5947
      %v6120 = vadd.f32 %v4796, %v5952
      %v6121 = vadd.f32 %v4797, %v5955
      %v6122 = vadd.f32 %v4798, %v5960
      %v6123 = vadd.f32 %v4799, %v5963
      %v6124 = vadd.f32 %v4800, %v5968
      %v6125 = vadd.f32 %v4801, %v5971
      %v6126 = vadd.f32 %v4802, %v5976
      %v6127 = vadd.f32 %v4803, %v5979
      %v6128 = vadd.f32 %v4804, %v5984
      %v6129 = vadd.f32 %v4805, %v5987
      %v6130 = vadd.f32 %v4806, %v5992
      %v6131 = vadd.f32 %v4807, %v5995
      %v6132 = vadd.f32 %v4808, %v6000
      %v6133 = vadd.f32 %v4809, %v6003
      %v6134 = vld [vmem:[%s2] sm:$0x1]
      %v6136 = vlaneseq
      %v6137 = vshrl.u32 %v6136, 7
      %v6138 = vsub.s32 0, %v6137
      %v6139 = vrot.slane %v6134, %v6138
      %v6141 = vadd.f32 %v6006, %v6139
      %v6142 = vadd.f32 %v6007, %v6139
      %v6143 = vadd.f32 %v6008, %v6139
      %v6144 = vadd.f32 %v6009, %v6139
      %v6145 = vadd.f32 %v6010, %v6139
      %v6146 = vadd.f32 %v6011, %v6139
      %v6147 = vadd.f32 %v6012, %v6139
      %v6148 = vadd.f32 %v6013, %v6139
      %v6149 = vadd.f32 %v6014, %v6139
      %v6150 = vadd.f32 %v6015, %v6139
      %v6151 = vadd.f32 %v6016, %v6139
      %v6152 = vadd.f32 %v6017, %v6139
      %v6153 = vadd.f32 %v6018, %v6139
      %v6154 = vadd.f32 %v6019, %v6139
      %v6155 = vadd.f32 %v6020, %v6139
      %v6156 = vadd.f32 %v6021, %v6139
      %v6157 = vadd.f32 %v6022, %v6139
      %v6158 = vadd.f32 %v6023, %v6139
      %v6159 = vadd.f32 %v6024, %v6139
      %v6160 = vadd.f32 %v6025, %v6139
      %v6161 = vadd.f32 %v6026, %v6139
      %v6162 = vadd.f32 %v6027, %v6139
      %v6163 = vadd.f32 %v6028, %v6139
      %v6164 = vadd.f32 %v6029, %v6139
      %v6165 = vadd.f32 %v6030, %v6139
      %v6166 = vadd.f32 %v6031, %v6139
      %v6167 = vadd.f32 %v6032, %v6139
      %v6168 = vadd.f32 %v6033, %v6139
      %v6169 = vadd.f32 %v6034, %v6139
      %v6170 = vadd.f32 %v6035, %v6139
      %v6171 = vadd.f32 %v6036, %v6139
      %v6172 = vadd.f32 %v6037, %v6139
      %v6173 = vadd.f32 %v6038, %v6139
      %v6174 = vadd.f32 %v6039, %v6139
      %v6175 = vadd.f32 %v6040, %v6139
      %v6176 = vadd.f32 %v6041, %v6139
      %v6177 = vadd.f32 %v6042, %v6139
      %v6178 = vadd.f32 %v6043, %v6139
      %v6179 = vadd.f32 %v6044, %v6139
      %v6180 = vadd.f32 %v6045, %v6139
      %v6181 = vadd.f32 %v6046, %v6139
      %v6182 = vadd.f32 %v6047, %v6139
      %v6183 = vadd.f32 %v6048, %v6139
      %v6184 = vadd.f32 %v6049, %v6139
      %v6185 = vadd.f32 %v6050, %v6139
      %v6186 = vadd.f32 %v6051, %v6139
      %v6187 = vadd.f32 %v6052, %v6139
      %v6188 = vadd.f32 %v6053, %v6139
      %v6189 = vadd.f32 %v6054, %v6139
      %v6190 = vadd.f32 %v6055, %v6139
      %v6191 = vadd.f32 %v6056, %v6139
      %v6192 = vadd.f32 %v6057, %v6139
      %v6193 = vadd.f32 %v6058, %v6139
      %v6194 = vadd.f32 %v6059, %v6139
      %v6195 = vadd.f32 %v6060, %v6139
      %v6196 = vadd.f32 %v6061, %v6139
      %v6197 = vadd.f32 %v6062, %v6139
      %v6198 = vadd.f32 %v6063, %v6139
      %v6199 = vadd.f32 %v6064, %v6139
      %v6200 = vadd.f32 %v6065, %v6139
      %v6201 = vadd.f32 %v6066, %v6139
      %v6202 = vadd.f32 %v6067, %v6139
      %v6203 = vadd.f32 %v6068, %v6139
      %v6204 = vadd.f32 %v6069, %v6139
      %v6205 = vadd.f32 %v6070, %v6139
      %v6206 = vadd.f32 %v6071, %v6139
      %v6207 = vadd.f32 %v6072, %v6139
      %v6208 = vadd.f32 %v6073, %v6139
      %v6209 = vadd.f32 %v6074, %v6139
      %v6210 = vadd.f32 %v6075, %v6139
      %v6211 = vadd.f32 %v6076, %v6139
      %v6212 = vadd.f32 %v6077, %v6139
      %v6213 = vadd.f32 %v6078, %v6139
      %v6214 = vadd.f32 %v6079, %v6139
      %v6215 = vadd.f32 %v6080, %v6139
      %v6216 = vadd.f32 %v6081, %v6139
      %v6217 = vadd.f32 %v6082, %v6139
      %v6218 = vadd.f32 %v6083, %v6139
      %v6219 = vadd.f32 %v6084, %v6139
      %v6220 = vadd.f32 %v6085, %v6139
      %v6221 = vadd.f32 %v6086, %v6139
      %v6222 = vadd.f32 %v6087, %v6139
      %v6223 = vadd.f32 %v6088, %v6139
      %v6224 = vadd.f32 %v6089, %v6139
      %v6225 = vadd.f32 %v6090, %v6139
      %v6226 = vadd.f32 %v6091, %v6139
      %v6227 = vadd.f32 %v6092, %v6139
      %v6228 = vadd.f32 %v6093, %v6139
      %v6229 = vadd.f32 %v6094, %v6139
      %v6230 = vadd.f32 %v6095, %v6139
      %v6231 = vadd.f32 %v6096, %v6139
      %v6232 = vadd.f32 %v6097, %v6139
      %v6233 = vadd.f32 %v6098, %v6139
      %v6234 = vadd.f32 %v6099, %v6139
      %v6235 = vadd.f32 %v6100, %v6139
      %v6236 = vadd.f32 %v6101, %v6139
      %v6237 = vadd.f32 %v6102, %v6139
      %v6238 = vadd.f32 %v6103, %v6139
      %v6239 = vadd.f32 %v6104, %v6139
      %v6240 = vadd.f32 %v6105, %v6139
      %v6241 = vadd.f32 %v6106, %v6139
      %v6242 = vadd.f32 %v6107, %v6139
      %v6243 = vadd.f32 %v6108, %v6139
      %v6244 = vadd.f32 %v6109, %v6139
      %v6245 = vadd.f32 %v6110, %v6139
      %v6246 = vadd.f32 %v6111, %v6139
      %v6247 = vadd.f32 %v6112, %v6139
      %v6248 = vadd.f32 %v6113, %v6139
      %v6249 = vadd.f32 %v6114, %v6139
      %v6250 = vadd.f32 %v6115, %v6139
      %v6251 = vadd.f32 %v6116, %v6139
      %v6252 = vadd.f32 %v6117, %v6139
      %v6253 = vadd.f32 %v6118, %v6139
      %v6254 = vadd.f32 %v6119, %v6139
      %v6255 = vadd.f32 %v6120, %v6139
      %v6256 = vadd.f32 %v6121, %v6139
      %v6257 = vadd.f32 %v6122, %v6139
      %v6258 = vadd.f32 %v6123, %v6139
      %v6259 = vadd.f32 %v6124, %v6139
      %v6260 = vadd.f32 %v6125, %v6139
      %v6261 = vadd.f32 %v6126, %v6139
      %v6262 = vadd.f32 %v6127, %v6139
      %v6263 = vadd.f32 %v6128, %v6139
      %v6264 = vadd.f32 %v6129, %v6139
      %v6265 = vadd.f32 %v6130, %v6139
      %v6266 = vadd.f32 %v6131, %v6139
      %v6267 = vadd.f32 %v6132, %v6139
      %v6268 = vadd.f32 %v6133, %v6139
      %v6269 = vmax.f32 %v6141, 0.0
      %v6270 = vmax.f32 %v6142, 0.0
      %v6271 = vmax.f32 %v6143, 0.0
      %v6272 = vmax.f32 %v6144, 0.0
      %v6273 = vmax.f32 %v6145, 0.0
      %v6274 = vmax.f32 %v6146, 0.0
      %v6275 = vmax.f32 %v6147, 0.0
      %v6276 = vmax.f32 %v6148, 0.0
      %v6277 = vmax.f32 %v6149, 0.0
      %v6278 = vmax.f32 %v6150, 0.0
      %v6279 = vmax.f32 %v6151, 0.0
      %v6280 = vmax.f32 %v6152, 0.0
      %v6281 = vmax.f32 %v6153, 0.0
      %v6282 = vmax.f32 %v6154, 0.0
      %v6283 = vmax.f32 %v6155, 0.0
      %v6284 = vmax.f32 %v6156, 0.0
      %v6285 = vmax.f32 %v6157, 0.0
      %v6286 = vmax.f32 %v6158, 0.0
      %v6287 = vmax.f32 %v6159, 0.0
      %v6288 = vmax.f32 %v6160, 0.0
      %v6289 = vmax.f32 %v6161, 0.0
      %v6290 = vmax.f32 %v6162, 0.0
      %v6291 = vmax.f32 %v6163, 0.0
      %v6292 = vmax.f32 %v6164, 0.0
      %v6293 = vmax.f32 %v6165, 0.0
      %v6294 = vmax.f32 %v6166, 0.0
      %v6295 = vmax.f32 %v6167, 0.0
      %v6296 = vmax.f32 %v6168, 0.0
      %v6297 = vmax.f32 %v6169, 0.0
      %v6298 = vmax.f32 %v6170, 0.0
      %v6299 = vmax.f32 %v6171, 0.0
      %v6300 = vmax.f32 %v6172, 0.0
      %v6301 = vmax.f32 %v6173, 0.0
      %v6302 = vmax.f32 %v6174, 0.0
      %v6303 = vmax.f32 %v6175, 0.0
      %v6304 = vmax.f32 %v6176, 0.0
      %v6305 = vmax.f32 %v6177, 0.0
      %v6306 = vmax.f32 %v6178, 0.0
      %v6307 = vmax.f32 %v6179, 0.0
      %v6308 = vmax.f32 %v6180, 0.0
      %v6309 = vmax.f32 %v6181, 0.0
      %v6310 = vmax.f32 %v6182, 0.0
      %v6311 = vmax.f32 %v6183, 0.0
      %v6312 = vmax.f32 %v6184, 0.0
      %v6313 = vmax.f32 %v6185, 0.0
      %v6314 = vmax.f32 %v6186, 0.0
      %v6315 = vmax.f32 %v6187, 0.0
      %v6316 = vmax.f32 %v6188, 0.0
      %v6317 = vmax.f32 %v6189, 0.0
      %v6318 = vmax.f32 %v6190, 0.0
      %v6319 = vmax.f32 %v6191, 0.0
      %v6320 = vmax.f32 %v6192, 0.0
      %v6321 = vmax.f32 %v6193, 0.0
      %v6322 = vmax.f32 %v6194, 0.0
      %v6323 = vmax.f32 %v6195, 0.0
      %v6324 = vmax.f32 %v6196, 0.0
      %v6325 = vmax.f32 %v6197, 0.0
      %v6326 = vmax.f32 %v6198, 0.0
      %v6327 = vmax.f32 %v6199, 0.0
      %v6328 = vmax.f32 %v6200, 0.0
      %v6329 = vmax.f32 %v6201, 0.0
      %v6330 = vmax.f32 %v6202, 0.0
      %v6331 = vmax.f32 %v6203, 0.0
      %v6332 = vmax.f32 %v6204, 0.0
      %v6333 = vmax.f32 %v6205, 0.0
      %v6334 = vmax.f32 %v6206, 0.0
      %v6335 = vmax.f32 %v6207, 0.0
      %v6336 = vmax.f32 %v6208, 0.0
      %v6337 = vmax.f32 %v6209, 0.0
      %v6338 = vmax.f32 %v6210, 0.0
      %v6339 = vmax.f32 %v6211, 0.0
      %v6340 = vmax.f32 %v6212, 0.0
      %v6341 = vmax.f32 %v6213, 0.0
      %v6342 = vmax.f32 %v6214, 0.0
      %v6343 = vmax.f32 %v6215, 0.0
      %v6344 = vmax.f32 %v6216, 0.0
      %v6345 = vmax.f32 %v6217, 0.0
      %v6346 = vmax.f32 %v6218, 0.0
      %v6347 = vmax.f32 %v6219, 0.0
      %v6348 = vmax.f32 %v6220, 0.0
      %v6349 = vmax.f32 %v6221, 0.0
      %v6350 = vmax.f32 %v6222, 0.0
      %v6351 = vmax.f32 %v6223, 0.0
      %v6352 = vmax.f32 %v6224, 0.0
      %v6353 = vmax.f32 %v6225, 0.0
      %v6354 = vmax.f32 %v6226, 0.0
      %v6355 = vmax.f32 %v6227, 0.0
      %v6356 = vmax.f32 %v6228, 0.0
      %v6357 = vmax.f32 %v6229, 0.0
      %v6358 = vmax.f32 %v6230, 0.0
      %v6359 = vmax.f32 %v6231, 0.0
      %v6360 = vmax.f32 %v6232, 0.0
      %v6361 = vmax.f32 %v6233, 0.0
      %v6362 = vmax.f32 %v6234, 0.0
      %v6363 = vmax.f32 %v6235, 0.0
      %v6364 = vmax.f32 %v6236, 0.0
      %v6365 = vmax.f32 %v6237, 0.0
      %v6366 = vmax.f32 %v6238, 0.0
      %v6367 = vmax.f32 %v6239, 0.0
      %v6368 = vmax.f32 %v6240, 0.0
      %v6369 = vmax.f32 %v6241, 0.0
      %v6370 = vmax.f32 %v6242, 0.0
      %v6371 = vmax.f32 %v6243, 0.0
      %v6372 = vmax.f32 %v6244, 0.0
      %v6373 = vmax.f32 %v6245, 0.0
      %v6374 = vmax.f32 %v6246, 0.0
      %v6375 = vmax.f32 %v6247, 0.0
      %v6376 = vmax.f32 %v6248, 0.0
      %v6377 = vmax.f32 %v6249, 0.0
      %v6378 = vmax.f32 %v6250, 0.0
      %v6379 = vmax.f32 %v6251, 0.0
      %v6380 = vmax.f32 %v6252, 0.0
      %v6381 = vmax.f32 %v6253, 0.0
      %v6382 = vmax.f32 %v6254, 0.0
      %v6383 = vmax.f32 %v6255, 0.0
      %v6384 = vmax.f32 %v6256, 0.0
      %v6385 = vmax.f32 %v6257, 0.0
      %v6386 = vmax.f32 %v6258, 0.0
      %v6387 = vmax.f32 %v6259, 0.0
      %v6388 = vmax.f32 %v6260, 0.0
      %v6389 = vmax.f32 %v6261, 0.0
      %v6390 = vmax.f32 %v6262, 0.0
      %v6391 = vmax.f32 %v6263, 0.0
      %v6392 = vmax.f32 %v6264, 0.0
      %v6393 = vmax.f32 %v6265, 0.0
      %v6394 = vmax.f32 %v6266, 0.0
      %v6395 = vmax.f32 %v6267, 0.0
      %v6396 = vmax.f32 %v6268, 0.0
      %vm6397 = vcmask 48128
      %6398 = vst.msk [vmem:[#allocation2] sm:$0xff] %vm6397, %v6269
      %6399 = vst.msk [vmem:[#allocation2 + $0x8] sm:$0xff] %vm6397, %v6270
      %6400 = vst.msk [vmem:[#allocation2 + $0x10] sm:$0xff] %vm6397, %v6271
      %6401 = vst.msk [vmem:[#allocation2 + $0x18] sm:$0xff] %vm6397, %v6272
      %6402 = vst.msk [vmem:[#allocation2 + $0x20] sm:$0xff] %vm6397, %v6273
      %6403 = vst.msk [vmem:[#allocation2 + $0x28] sm:$0xff] %vm6397, %v6274
      %6404 = vst.msk [vmem:[#allocation2 + $0x30] sm:$0xff] %vm6397, %v6275
      %6405 = vst.msk [vmem:[#allocation2 + $0x38] sm:$0xff] %vm6397, %v6276
      %6406 = vst.msk [vmem:[#allocation2 + $0x40] sm:$0xff] %vm6397, %v6277
      %6407 = vst.msk [vmem:[#allocation2 + $0x48] sm:$0xff] %vm6397, %v6278
      %6408 = vst.msk [vmem:[#allocation2 + $0x50] sm:$0xff] %vm6397, %v6279
      %6409 = vst.msk [vmem:[#allocation2 + $0x58] sm:$0xff] %vm6397, %v6280
      %6410 = vst.msk [vmem:[#allocation2 + $0x60] sm:$0xff] %vm6397, %v6281
      %6411 = vst.msk [vmem:[#allocation2 + $0x68] sm:$0xff] %vm6397, %v6282
      %6412 = vst.msk [vmem:[#allocation2 + $0x70] sm:$0xff] %vm6397, %v6283
      %6413 = vst.msk [vmem:[#allocation2 + $0x78] sm:$0xff] %vm6397, %v6284
      %6414 = vst.msk [vmem:[#allocation2 + $0x80] sm:$0xff] %vm6397, %v6285
      %6415 = vst.msk [vmem:[#allocation2 + $0x88] sm:$0xff] %vm6397, %v6286
      %6416 = vst.msk [vmem:[#allocation2 + $0x90] sm:$0xff] %vm6397, %v6287
      %6417 = vst.msk [vmem:[#allocation2 + $0x98] sm:$0xff] %vm6397, %v6288
      %6418 = vst.msk [vmem:[#allocation2 + $0xa0] sm:$0xff] %vm6397, %v6289
      %6419 = vst.msk [vmem:[#allocation2 + $0xa8] sm:$0xff] %vm6397, %v6290
      %6420 = vst.msk [vmem:[#allocation2 + $0xb0] sm:$0xff] %vm6397, %v6291
      %6421 = vst.msk [vmem:[#allocation2 + $0xb8] sm:$0xff] %vm6397, %v6292
      %6422 = vst.msk [vmem:[#allocation2 + $0xc0] sm:$0xff] %vm6397, %v6293
      %6423 = vst.msk [vmem:[#allocation2 + $0xc8] sm:$0xff] %vm6397, %v6294
      %6424 = vst.msk [vmem:[#allocation2 + $0xd0] sm:$0xff] %vm6397, %v6295
      %6425 = vst.msk [vmem:[#allocation2 + $0xd8] sm:$0xff] %vm6397, %v6296
      %6426 = vst.msk [vmem:[#allocation2 + $0xe0] sm:$0xff] %vm6397, %v6297
      %6427 = vst.msk [vmem:[#allocation2 + $0xe8] sm:$0xff] %vm6397, %v6298
      %6428 = vst.msk [vmem:[#allocation2 + $0xf0] sm:$0xff] %vm6397, %v6299
      %6429 = vst.msk [vmem:[#allocation2 + $0xf8] sm:$0xff] %vm6397, %v6300
      %6430 = vst.msk [vmem:[#allocation2 + $0x100] sm:$0xff] %vm6397, %v6301
      %6431 = vst.msk [vmem:[#allocation2 + $0x108] sm:$0xff] %vm6397, %v6302
      %6432 = vst.msk [vmem:[#allocation2 + $0x110] sm:$0xff] %vm6397, %v6303
      %6433 = vst.msk [vmem:[#allocation2 + $0x118] sm:$0xff] %vm6397, %v6304
      %6434 = vst.msk [vmem:[#allocation2 + $0x120] sm:$0xff] %vm6397, %v6305
      %6435 = vst.msk [vmem:[#allocation2 + $0x128] sm:$0xff] %vm6397, %v6306
      %6436 = vst.msk [vmem:[#allocation2 + $0x130] sm:$0xff] %vm6397, %v6307
      %6437 = vst.msk [vmem:[#allocation2 + $0x138] sm:$0xff] %vm6397, %v6308
      %6438 = vst.msk [vmem:[#allocation2 + $0x140] sm:$0xff] %vm6397, %v6309
      %6439 = vst.msk [vmem:[#allocation2 + $0x148] sm:$0xff] %vm6397, %v6310
      %6440 = vst.msk [vmem:[#allocation2 + $0x150] sm:$0xff] %vm6397, %v6311
      %6441 = vst.msk [vmem:[#allocation2 + $0x158] sm:$0xff] %vm6397, %v6312
      %6442 = vst.msk [vmem:[#allocation2 + $0x160] sm:$0xff] %vm6397, %v6313
      %6443 = vst.msk [vmem:[#allocation2 + $0x168] sm:$0xff] %vm6397, %v6314
      %6444 = vst.msk [vmem:[#allocation2 + $0x170] sm:$0xff] %vm6397, %v6315
      %6445 = vst.msk [vmem:[#allocation2 + $0x178] sm:$0xff] %vm6397, %v6316
      %6446 = vst.msk [vmem:[#allocation2 + $0x180] sm:$0xff] %vm6397, %v6317
      %6447 = vst.msk [vmem:[#allocation2 + $0x188] sm:$0xff] %vm6397, %v6318
      %6448 = vst.msk [vmem:[#allocation2 + $0x190] sm:$0xff] %vm6397, %v6319
      %6449 = vst.msk [vmem:[#allocation2 + $0x198] sm:$0xff] %vm6397, %v6320
      %6450 = vst.msk [vmem:[#allocation2 + $0x1a0] sm:$0xff] %vm6397, %v6321
      %6451 = vst.msk [vmem:[#allocation2 + $0x1a8] sm:$0xff] %vm6397, %v6322
      %6452 = vst.msk [vmem:[#allocation2 + $0x1b0] sm:$0xff] %vm6397, %v6323
      %6453 = vst.msk [vmem:[#allocation2 + $0x1b8] sm:$0xff] %vm6397, %v6324
      %6454 = vst.msk [vmem:[#allocation2 + $0x1c0] sm:$0xff] %vm6397, %v6325
      %6455 = vst.msk [vmem:[#allocation2 + $0x1c8] sm:$0xff] %vm6397, %v6326
      %6456 = vst.msk [vmem:[#allocation2 + $0x1d0] sm:$0xff] %vm6397, %v6327
      %6457 = vst.msk [vmem:[#allocation2 + $0x1d8] sm:$0xff] %vm6397, %v6328
      %6458 = vst.msk [vmem:[#allocation2 + $0x1e0] sm:$0xff] %vm6397, %v6329
      %6459 = vst.msk [vmem:[#allocation2 + $0x1e8] sm:$0xff] %vm6397, %v6330
      %6460 = vst.msk [vmem:[#allocation2 + $0x1f0] sm:$0xff] %vm6397, %v6331
      %6461 = vst.msk [vmem:[#allocation2 + $0x1f8] sm:$0xff] %vm6397, %v6332
      %6462 = vst.msk [vmem:[#allocation2 + $0x200] sm:$0xff] %vm6397, %v6333
      %6463 = vst.msk [vmem:[#allocation2 + $0x208] sm:$0xff] %vm6397, %v6334
      %6464 = vst.msk [vmem:[#allocation2 + $0x210] sm:$0xff] %vm6397, %v6335
      %6465 = vst.msk [vmem:[#allocation2 + $0x218] sm:$0xff] %vm6397, %v6336
      %6466 = vst.msk [vmem:[#allocation2 + $0x220] sm:$0xff] %vm6397, %v6337
      %6467 = vst.msk [vmem:[#allocation2 + $0x228] sm:$0xff] %vm6397, %v6338
      %6468 = vst.msk [vmem:[#allocation2 + $0x230] sm:$0xff] %vm6397, %v6339
      %6469 = vst.msk [vmem:[#allocation2 + $0x238] sm:$0xff] %vm6397, %v6340
      %6470 = vst.msk [vmem:[#allocation2 + $0x240] sm:$0xff] %vm6397, %v6341
      %6471 = vst.msk [vmem:[#allocation2 + $0x248] sm:$0xff] %vm6397, %v6342
      %6472 = vst.msk [vmem:[#allocation2 + $0x250] sm:$0xff] %vm6397, %v6343
      %6473 = vst.msk [vmem:[#allocation2 + $0x258] sm:$0xff] %vm6397, %v6344
      %6474 = vst.msk [vmem:[#allocation2 + $0x260] sm:$0xff] %vm6397, %v6345
      %6475 = vst.msk [vmem:[#allocation2 + $0x268] sm:$0xff] %vm6397, %v6346
      %6476 = vst.msk [vmem:[#allocation2 + $0x270] sm:$0xff] %vm6397, %v6347
      %6477 = vst.msk [vmem:[#allocation2 + $0x278] sm:$0xff] %vm6397, %v6348
      %6478 = vst.msk [vmem:[#allocation2 + $0x280] sm:$0xff] %vm6397, %v6349
      %6479 = vst.msk [vmem:[#allocation2 + $0x288] sm:$0xff] %vm6397, %v6350
      %6480 = vst.msk [vmem:[#allocation2 + $0x290] sm:$0xff] %vm6397, %v6351
      %6481 = vst.msk [vmem:[#allocation2 + $0x298] sm:$0xff] %vm6397, %v6352
      %6482 = vst.msk [vmem:[#allocation2 + $0x2a0] sm:$0xff] %vm6397, %v6353
      %6483 = vst.msk [vmem:[#allocation2 + $0x2a8] sm:$0xff] %vm6397, %v6354
      %6484 = vst.msk [vmem:[#allocation2 + $0x2b0] sm:$0xff] %vm6397, %v6355
      %6485 = vst.msk [vmem:[#allocation2 + $0x2b8] sm:$0xff] %vm6397, %v6356
      %6486 = vst.msk [vmem:[#allocation2 + $0x2c0] sm:$0xff] %vm6397, %v6357
      %6487 = vst.msk [vmem:[#allocation2 + $0x2c8] sm:$0xff] %vm6397, %v6358
      %6488 = vst.msk [vmem:[#allocation2 + $0x2d0] sm:$0xff] %vm6397, %v6359
      %6489 = vst.msk [vmem:[#allocation2 + $0x2d8] sm:$0xff] %vm6397, %v6360
      %6490 = vst.msk [vmem:[#allocation2 + $0x2e0] sm:$0xff] %vm6397, %v6361
      %6491 = vst.msk [vmem:[#allocation2 + $0x2e8] sm:$0xff] %vm6397, %v6362
      %6492 = vst.msk [vmem:[#allocation2 + $0x2f0] sm:$0xff] %vm6397, %v6363
      %6493 = vst.msk [vmem:[#allocation2 + $0x2f8] sm:$0xff] %vm6397, %v6364
      %6494 = vst.msk [vmem:[#allocation2 + $0x300] sm:$0xff] %vm6397, %v6365
      %6495 = vst.msk [vmem:[#allocation2 + $0x308] sm:$0xff] %vm6397, %v6366
      %6496 = vst.msk [vmem:[#allocation2 + $0x310] sm:$0xff] %vm6397, %v6367
      %6497 = vst.msk [vmem:[#allocation2 + $0x318] sm:$0xff] %vm6397, %v6368
      %6498 = vst.msk [vmem:[#allocation2 + $0x320] sm:$0xff] %vm6397, %v6369
      %6499 = vst.msk [vmem:[#allocation2 + $0x328] sm:$0xff] %vm6397, %v6370
      %6500 = vst.msk [vmem:[#allocation2 + $0x330] sm:$0xff] %vm6397, %v6371
      %6501 = vst.msk [vmem:[#allocation2 + $0x338] sm:$0xff] %vm6397, %v6372
      %6502 = vst.msk [vmem:[#allocation2 + $0x340] sm:$0xff] %vm6397, %v6373
      %6503 = vst.msk [vmem:[#allocation2 + $0x348] sm:$0xff] %vm6397, %v6374
      %6504 = vst.msk [vmem:[#allocation2 + $0x350] sm:$0xff] %vm6397, %v6375
      %6505 = vst.msk [vmem:[#allocation2 + $0x358] sm:$0xff] %vm6397, %v6376
      %6506 = vst.msk [vmem:[#allocation2 + $0x360] sm:$0xff] %vm6397, %v6377
      %6507 = vst.msk [vmem:[#allocation2 + $0x368] sm:$0xff] %vm6397, %v6378
      %6508 = vst.msk [vmem:[#allocation2 + $0x370] sm:$0xff] %vm6397, %v6379
      %6509 = vst.msk [vmem:[#allocation2 + $0x378] sm:$0xff] %vm6397, %v6380
      %6510 = vst.msk [vmem:[#allocation2 + $0x380] sm:$0xff] %vm6397, %v6381
      %6511 = vst.msk [vmem:[#allocation2 + $0x388] sm:$0xff] %vm6397, %v6382
      %6512 = vst.msk [vmem:[#allocation2 + $0x390] sm:$0xff] %vm6397, %v6383
      %6513 = vst.msk [vmem:[#allocation2 + $0x398] sm:$0xff] %vm6397, %v6384
      %6514 = vst.msk [vmem:[#allocation2 + $0x3a0] sm:$0xff] %vm6397, %v6385
      %6515 = vst.msk [vmem:[#allocation2 + $0x3a8] sm:$0xff] %vm6397, %v6386
      %6516 = vst.msk [vmem:[#allocation2 + $0x3b0] sm:$0xff] %vm6397, %v6387
      %6517 = vst.msk [vmem:[#allocation2 + $0x3b8] sm:$0xff] %vm6397, %v6388
      %6518 = vst.msk [vmem:[#allocation2 + $0x3c0] sm:$0xff] %vm6397, %v6389
      %6519 = vst.msk [vmem:[#allocation2 + $0x3c8] sm:$0xff] %vm6397, %v6390
      %6520 = vst.msk [vmem:[#allocation2 + $0x3d0] sm:$0xff] %vm6397, %v6391
      %6521 = vst.msk [vmem:[#allocation2 + $0x3d8] sm:$0xff] %vm6397, %v6392
      %6522 = vst.msk [vmem:[#allocation2 + $0x3e0] sm:$0xff] %vm6397, %v6393
      %6523 = vst.msk [vmem:[#allocation2 + $0x3e8] sm:$0xff] %vm6397, %v6394
      %6524 = vst.msk [vmem:[#allocation2 + $0x3f0] sm:$0xff] %vm6397, %v6395
      %6525 = vst.msk [vmem:[#allocation2 + $0x3f8] sm:$0xff] %vm6397, %v6396
      %v6526 = vld [vmem:[#allocation2] ss:$2 sm:$0xff]
      %s6527 = scalar_lea.vmem [#allocation2], 16
      %v6528 = vld [vmem:[%s6527] ss:$2 sm:$0xff]
      %s6529 = scalar_lea.vmem [#allocation2], 32
      %v6530 = vld [vmem:[%s6529] ss:$2 sm:$0x3]
      %s6531 = scalar_lea.vmem [#allocation2], 1
      %v6532 = vld [vmem:[%s6531] ss:$2 sm:$0xff]
      %s6533 = scalar_lea.vmem [#allocation2], 17
      %v6534 = vld [vmem:[%s6533] ss:$2 sm:$0xff]
      %s6535 = scalar_lea.vmem [#allocation2], 33
      %v6536 = vld [vmem:[%s6535] ss:$2 sm:$0x3]
      %v6537 = vld [vmem:[%s6529] ss:$2 sm:$0xff]
      %s6538 = scalar_lea.vmem [#allocation2], 48
      %v6539 = vld [vmem:[%s6538] ss:$2 sm:$0xff]
      %s6540 = scalar_lea.vmem [#allocation2], 64
      %v6541 = vld [vmem:[%s6540] ss:$2 sm:$0x3]
      %v6542 = vld [vmem:[%s6535] ss:$2 sm:$0xff]
      %s6543 = scalar_lea.vmem [#allocation2], 49
      %v6544 = vld [vmem:[%s6543] ss:$2 sm:$0xff]
      %s6545 = scalar_lea.vmem [#allocation2], 65
      %v6546 = vld [vmem:[%s6545] ss:$2 sm:$0x3]
      %v6547 = vmax.f32 %v6526, %v6532
      %v6548 = vmax.f32 %v6528, %v6534
      %v6549 = vmax.f32 %v6530, %v6536
      %v6550 = vmax.f32 %v6537, %v6542
      %v6551 = vmax.f32 %v6539, %v6544
      %v6552 = vmax.f32 %v6541, %v6546
      %v6553 = vmax.f32 %v6547, %v6550
      %v6554 = vmax.f32 %v6548, %v6551
      %v6555 = vmax.f32 %v6549, %v6552
      %v6558 = vrot.slane %v6553, 1
      %v6559 = vrot.slane %v6554, 1
      %v6560 = vsel %vm1041, %v6558, %v6559
      %6561 = vrot.lane.b32.xlu0 %v6560, 6
      %v6562 = vpop.permute.xlu0 %6561
      %6563 = vrot.lane.b32.xlu0 %v6559, 6
      %v6564 = vpop.permute.xlu0 %6563
      %vm6567 = vcmask 1045504
      %v6568 = vrot.slane %v6553, 2
      %v6569 = vrot.slane %v6554, 2
      %v6570 = vsel %vm6567, %v6568, %v6569
      %6571 = vrot.lane.b32.xlu0 %v6570, 12
      %v6572 = vpop.permute.xlu0 %6571
      %6573 = vrot.lane.b32.xlu0 %v6569, 12
      %v6574 = vpop.permute.xlu0 %6573
      %vm6578 = vcmask 1044480
      %v6579 = vrot.slane %v6553, 3
      %v6580 = vrot.slane %v6554, 3
      %v6581 = vsel %vm6578, %v6579, %v6580
      %v6582 = vrot.slane %v6555, 3
      %v6583 = vsel %vm6578, %v6580, %v6582
      %6584 = vrot.lane.b32.xlu0 %v6581, 18
      %v6585 = vpop.permute.xlu0 %6584
      %6586 = vrot.lane.b32.xlu0 %v6583, 18
      %v6587 = vpop.permute.xlu0 %6586
      %vm6590 = vcmask 1043456
      %v6591 = vrot.slane %v6553, 4
      %v6592 = vrot.slane %v6554, 4
      %v6593 = vsel %vm6590, %v6591, %v6592
      %v6594 = vrot.slane %v6555, 4
      %v6595 = vsel %vm6590, %v6592, %v6594
      %6596 = vrot.lane.b32.xlu0 %v6593, 24
      %v6597 = vpop.permute.xlu0 %6596
      %6598 = vrot.lane.b32.xlu0 %v6595, 24
      %v6599 = vpop.permute.xlu0 %6598
      %v6602 = vsel %vm6397, %v6553, %v6562
      %v6603 = vsel %vm6397, %v6554, %v6564
      %vm6604 = vcmask 97280
      %v6605 = vsel %vm6604, %v6602, %v6572
      %v6606 = vsel %vm6604, %v6603, %v6574
      %vm6607 = vcmask 146432
      %v6608 = vsel %vm6607, %v6605, %v6585
      %v6609 = vsel %vm6607, %v6606, %v6587
      %vm6610 = vcmask 195584
      %v6611 = vsel %vm6610, %v6608, %v6597
      %v6612 = vsel %vm6610, %v6609, %v6599
      %v6613 = vpack.c.bf16 %v6612, %v6611
      %vm6614 = vcmask 243712
      %6615 = vst.msk [vmem:[#allocation3] sm:$0x7f] %vm6614, %v6613
      %v6616 = vld [vmem:[%s6540] ss:$2 sm:$0xff]
      %s6617 = scalar_lea.vmem [#allocation2], 80
      %v6618 = vld [vmem:[%s6617] ss:$2 sm:$0xff]
      %s6619 = scalar_lea.vmem [#allocation2], 96
      %v6620 = vld [vmem:[%s6619] ss:$2 sm:$0x3]
      %v6621 = vld [vmem:[%s6545] ss:$2 sm:$0xff]
      %s6622 = scalar_lea.vmem [#allocation2], 81
      %v6623 = vld [vmem:[%s6622] ss:$2 sm:$0xff]
      %s6624 = scalar_lea.vmem [#allocation2], 97
      %v6625 = vld [vmem:[%s6624] ss:$2 sm:$0x3]
      %v6626 = vld [vmem:[%s6619] ss:$2 sm:$0xff]
      %s6627 = scalar_lea.vmem [#allocation2], 112
      %v6628 = vld [vmem:[%s6627] ss:$2 sm:$0xff]
      %s6629 = scalar_lea.vmem [#allocation2], 128
      %v6630 = vld [vmem:[%s6629] ss:$2 sm:$0x3]
      %v6631 = vld [vmem:[%s6624] ss:$2 sm:$0xff]
      %s6632 = scalar_lea.vmem [#allocation2], 113
      %v6633 = vld [vmem:[%s6632] ss:$2 sm:$0xff]
      %s6634 = scalar_lea.vmem [#allocation2], 129
      %v6635 = vld [vmem:[%s6634] ss:$2 sm:$0x3]
      %v6636 = vmax.f32 %v6616, %v6621
      %v6637 = vmax.f32 %v6618, %v6623
      %v6638 = vmax.f32 %v6620, %v6625
      %v6639 = vmax.f32 %v6626, %v6631
      %v6640 = vmax.f32 %v6628, %v6633
      %v6641 = vmax.f32 %v6630, %v6635
      %v6642 = vmax.f32 %v6636, %v6639
      %v6643 = vmax.f32 %v6637, %v6640
      %v6644 = vmax.f32 %v6638, %v6641
      %v6647 = vrot.slane %v6642, 1
      %v6648 = vrot.slane %v6643, 1
      %v6649 = vsel %vm1041, %v6647, %v6648
      %6650 = vrot.lane.b32.xlu0 %v6649, 6
      %v6651 = vpop.permute.xlu0 %6650
      %6652 = vrot.lane.b32.xlu0 %v6648, 6
      %v6653 = vpop.permute.xlu0 %6652
      %v6656 = vrot.slane %v6642, 2
      %v6657 = vrot.slane %v6643, 2
      %v6658 = vsel %vm6567, %v6656, %v6657
      %6659 = vrot.lane.b32.xlu0 %v6658, 12
      %v6660 = vpop.permute.xlu0 %6659
      %6661 = vrot.lane.b32.xlu0 %v6657, 12
      %v6662 = vpop.permute.xlu0 %6661
      %v6666 = vrot.slane %v6642, 3
      %v6667 = vrot.slane %v6643, 3
      %v6668 = vsel %vm6578, %v6666, %v6667
      %v6669 = vrot.slane %v6644, 3
      %v6670 = vsel %vm6578, %v6667, %v6669
      %6671 = vrot.lane.b32.xlu0 %v6668, 18
      %v6672 = vpop.permute.xlu0 %6671
      %6673 = vrot.lane.b32.xlu0 %v6670, 18
      %v6674 = vpop.permute.xlu0 %6673
      %v6677 = vrot.slane %v6642, 4
      %v6678 = vrot.slane %v6643, 4
      %v6679 = vsel %vm6590, %v6677, %v6678
      %v6680 = vrot.slane %v6644, 4
      %v6681 = vsel %vm6590, %v6678, %v6680
      %6682 = vrot.lane.b32.xlu0 %v6679, 24
      %v6683 = vpop.permute.xlu0 %6682
      %6684 = vrot.lane.b32.xlu0 %v6681, 24
      %v6685 = vpop.permute.xlu0 %6684
      %v6688 = vsel %vm6397, %v6642, %v6651
      %v6689 = vsel %vm6397, %v6643, %v6653
      %v6690 = vsel %vm6604, %v6688, %v6660
      %v6691 = vsel %vm6604, %v6689, %v6662
      %v6692 = vsel %vm6607, %v6690, %v6672
      %v6693 = vsel %vm6607, %v6691, %v6674
      %v6694 = vsel %vm6610, %v6692, %v6683
      %v6695 = vsel %vm6610, %v6693, %v6685
      %v6696 = vpack.c.bf16 %v6695, %v6694
      %v6698 = vrot.slane %v6696, 1
      %vm6700 = vcmask 244743
      %6701 = vst.msk [vmem:[#allocation3] sm:$0x80] %vm6700, %v6698
      %vm6702 = vcmask 242688
      %6703 = vst.msk [vmem:[#allocation3 + $0x8] sm:$0x3f] %vm6702, %v6698
      %v6704 = vld [vmem:[%s6629] ss:$2 sm:$0xff]
      %s6705 = scalar_lea.vmem [#allocation2], 144
      %v6706 = vld [vmem:[%s6705] ss:$2 sm:$0xff]
      %s6707 = scalar_lea.vmem [#allocation2], 160
      %v6708 = vld [vmem:[%s6707] ss:$2 sm:$0x3]
      %v6709 = vld [vmem:[%s6634] ss:$2 sm:$0xff]
      %s6710 = scalar_lea.vmem [#allocation2], 145
      %v6711 = vld [vmem:[%s6710] ss:$2 sm:$0xff]
      %s6712 = scalar_lea.vmem [#allocation2], 161
      %v6713 = vld [vmem:[%s6712] ss:$2 sm:$0x3]
      %v6714 = vld [vmem:[%s6707] ss:$2 sm:$0xff]
      %s6715 = scalar_lea.vmem [#allocation2], 176
      %v6716 = vld [vmem:[%s6715] ss:$2 sm:$0xff]
      %s6717 = scalar_lea.vmem [#allocation2], 192
      %v6718 = vld [vmem:[%s6717] ss:$2 sm:$0x3]
      %v6719 = vld [vmem:[%s6712] ss:$2 sm:$0xff]
      %s6720 = scalar_lea.vmem [#allocation2], 177
      %v6721 = vld [vmem:[%s6720] ss:$2 sm:$0xff]
      %s6722 = scalar_lea.vmem [#allocation2], 193
      %v6723 = vld [vmem:[%s6722] ss:$2 sm:$0x3]
      %v6724 = vmax.f32 %v6704, %v6709
      %v6725 = vmax.f32 %v6706, %v6711
      %v6726 = vmax.f32 %v6708, %v6713
      %v6727 = vmax.f32 %v6714, %v6719
      %v6728 = vmax.f32 %v6716, %v6721
      %v6729 = vmax.f32 %v6718, %v6723
      %v6730 = vmax.f32 %v6724, %v6727
      %v6731 = vmax.f32 %v6725, %v6728
      %v6732 = vmax.f32 %v6726, %v6729
      %v6735 = vrot.slane %v6730, 1
      %v6736 = vrot.slane %v6731, 1
      %v6737 = vsel %vm1041, %v6735, %v6736
      %6738 = vrot.lane.b32.xlu0 %v6737, 6
      %v6739 = vpop.permute.xlu0 %6738
      %6740 = vrot.lane.b32.xlu0 %v6736, 6
      %v6741 = vpop.permute.xlu0 %6740
      %v6744 = vrot.slane %v6730, 2
      %v6745 = vrot.slane %v6731, 2
      %v6746 = vsel %vm6567, %v6744, %v6745
      %6747 = vrot.lane.b32.xlu0 %v6746, 12
      %v6748 = vpop.permute.xlu0 %6747
      %6749 = vrot.lane.b32.xlu0 %v6745, 12
      %v6750 = vpop.permute.xlu0 %6749
      %v6754 = vrot.slane %v6730, 3
      %v6755 = vrot.slane %v6731, 3
      %v6756 = vsel %vm6578, %v6754, %v6755
      %v6757 = vrot.slane %v6732, 3
      %v6758 = vsel %vm6578, %v6755, %v6757
      %6759 = vrot.lane.b32.xlu0 %v6756, 18
      %v6760 = vpop.permute.xlu0 %6759
      %6761 = vrot.lane.b32.xlu0 %v6758, 18
      %v6762 = vpop.permute.xlu0 %6761
      %v6765 = vrot.slane %v6730, 4
      %v6766 = vrot.slane %v6731, 4
      %v6767 = vsel %vm6590, %v6765, %v6766
      %v6768 = vrot.slane %v6732, 4
      %v6769 = vsel %vm6590, %v6766, %v6768
      %6770 = vrot.lane.b32.xlu0 %v6767, 24
      %v6771 = vpop.permute.xlu0 %6770
      %6772 = vrot.lane.b32.xlu0 %v6769, 24
      %v6773 = vpop.permute.xlu0 %6772
      %v6776 = vsel %vm6397, %v6730, %v6739
      %v6777 = vsel %vm6397, %v6731, %v6741
      %v6778 = vsel %vm6604, %v6776, %v6748
      %v6779 = vsel %vm6604, %v6777, %v6750
      %v6780 = vsel %vm6607, %v6778, %v6760
      %v6781 = vsel %vm6607, %v6779, %v6762
      %v6782 = vsel %vm6610, %v6780, %v6771
      %v6783 = vsel %vm6610, %v6781, %v6773
      %v6784 = vpack.c.bf16 %v6783, %v6782
      %v6786 = vrot.slane %v6784, 2
      %vm6788 = vcmask 244742
      %6789 = vst.msk [vmem:[#allocation3 + $0x8] sm:$0xc0] %vm6788, %v6786
      %vm6790 = vcmask 241664
      %6791 = vst.msk [vmem:[#allocation3 + $0x10] sm:$0x1f] %vm6790, %v6786
      %v6792 = vld [vmem:[%s6717] ss:$2 sm:$0xff]
      %s6793 = scalar_lea.vmem [#allocation2], 208
      %v6794 = vld [vmem:[%s6793] ss:$2 sm:$0xff]
      %s6795 = scalar_lea.vmem [#allocation2], 224
      %v6796 = vld [vmem:[%s6795] ss:$2 sm:$0x3]
      %v6797 = vld [vmem:[%s6722] ss:$2 sm:$0xff]
      %s6798 = scalar_lea.vmem [#allocation2], 209
      %v6799 = vld [vmem:[%s6798] ss:$2 sm:$0xff]
      %s6800 = scalar_lea.vmem [#allocation2], 225
      %v6801 = vld [vmem:[%s6800] ss:$2 sm:$0x3]
      %v6802 = vld [vmem:[%s6795] ss:$2 sm:$0xff]
      %s6803 = scalar_lea.vmem [#allocation2], 240
      %v6804 = vld [vmem:[%s6803] ss:$2 sm:$0xff]
      %s6805 = scalar_lea.vmem [#allocation2], 256
      %v6806 = vld [vmem:[%s6805] ss:$2 sm:$0x3]
      %v6807 = vld [vmem:[%s6800] ss:$2 sm:$0xff]
      %s6808 = scalar_lea.vmem [#allocation2], 241
      %v6809 = vld [vmem:[%s6808] ss:$2 sm:$0xff]
      %s6810 = scalar_lea.vmem [#allocation2], 257
      %v6811 = vld [vmem:[%s6810] ss:$2 sm:$0x3]
      %v6812 = vmax.f32 %v6792, %v6797
      %v6813 = vmax.f32 %v6794, %v6799
      %v6814 = vmax.f32 %v6796, %v6801
      %v6815 = vmax.f32 %v6802, %v6807
      %v6816 = vmax.f32 %v6804, %v6809
      %v6817 = vmax.f32 %v6806, %v6811
      %v6818 = vmax.f32 %v6812, %v6815
      %v6819 = vmax.f32 %v6813, %v6816
      %v6820 = vmax.f32 %v6814, %v6817
      %v6823 = vrot.slane %v6818, 1
      %v6824 = vrot.slane %v6819, 1
      %v6825 = vsel %vm1041, %v6823, %v6824
      %6826 = vrot.lane.b32.xlu0 %v6825, 6
      %v6827 = vpop.permute.xlu0 %6826
      %6828 = vrot.lane.b32.xlu0 %v6824, 6
      %v6829 = vpop.permute.xlu0 %6828
      %v6832 = vrot.slane %v6818, 2
      %v6833 = vrot.slane %v6819, 2
      %v6834 = vsel %vm6567, %v6832, %v6833
      %6835 = vrot.lane.b32.xlu0 %v6834, 12
      %v6836 = vpop.permute.xlu0 %6835
      %6837 = vrot.lane.b32.xlu0 %v6833, 12
      %v6838 = vpop.permute.xlu0 %6837
      %v6842 = vrot.slane %v6818, 3
      %v6843 = vrot.slane %v6819, 3
      %v6844 = vsel %vm6578, %v6842, %v6843
      %v6845 = vrot.slane %v6820, 3
      %v6846 = vsel %vm6578, %v6843, %v6845
      %6847 = vrot.lane.b32.xlu0 %v6844, 18
      %v6848 = vpop.permute.xlu0 %6847
      %6849 = vrot.lane.b32.xlu0 %v6846, 18
      %v6850 = vpop.permute.xlu0 %6849
      %v6853 = vrot.slane %v6818, 4
      %v6854 = vrot.slane %v6819, 4
      %v6855 = vsel %vm6590, %v6853, %v6854
      %v6856 = vrot.slane %v6820, 4
      %v6857 = vsel %vm6590, %v6854, %v6856
      %6858 = vrot.lane.b32.xlu0 %v6855, 24
      %v6859 = vpop.permute.xlu0 %6858
      %6860 = vrot.lane.b32.xlu0 %v6857, 24
      %v6861 = vpop.permute.xlu0 %6860
      %v6864 = vsel %vm6397, %v6818, %v6827
      %v6865 = vsel %vm6397, %v6819, %v6829
      %v6866 = vsel %vm6604, %v6864, %v6836
      %v6867 = vsel %vm6604, %v6865, %v6838
      %v6868 = vsel %vm6607, %v6866, %v6848
      %v6869 = vsel %vm6607, %v6867, %v6850
      %v6870 = vsel %vm6610, %v6868, %v6859
      %v6871 = vsel %vm6610, %v6869, %v6861
      %v6872 = vpack.c.bf16 %v6871, %v6870
      %v6874 = vrot.slane %v6872, 3
      %vm6876 = vcmask 244741
      %6877 = vst.msk [vmem:[#allocation3 + $0x10] sm:$0xe0] %vm6876, %v6874
      %vm6878 = vcmask 240640
      %6879 = vst.msk [vmem:[#allocation3 + $0x18] sm:$0xf] %vm6878, %v6874
      %v6880 = vld [vmem:[%s6805] ss:$2 sm:$0xff]
      %s6881 = scalar_lea.vmem [#allocation2], 272
      %v6882 = vld [vmem:[%s6881] ss:$2 sm:$0xff]
      %s6883 = scalar_lea.vmem [#allocation2], 288
      %v6884 = vld [vmem:[%s6883] ss:$2 sm:$0x3]
      %v6885 = vld [vmem:[%s6810] ss:$2 sm:$0xff]
      %s6886 = scalar_lea.vmem [#allocation2], 273
      %v6887 = vld [vmem:[%s6886] ss:$2 sm:$0xff]
      %s6888 = scalar_lea.vmem [#allocation2], 289
      %v6889 = vld [vmem:[%s6888] ss:$2 sm:$0x3]
      %v6890 = vld [vmem:[%s6883] ss:$2 sm:$0xff]
      %s6891 = scalar_lea.vmem [#allocation2], 304
      %v6892 = vld [vmem:[%s6891] ss:$2 sm:$0xff]
      %s6893 = scalar_lea.vmem [#allocation2], 320
      %v6894 = vld [vmem:[%s6893] ss:$2 sm:$0x3]
      %v6895 = vld [vmem:[%s6888] ss:$2 sm:$0xff]
      %s6896 = scalar_lea.vmem [#allocation2], 305
      %v6897 = vld [vmem:[%s6896] ss:$2 sm:$0xff]
      %s6898 = scalar_lea.vmem [#allocation2], 321
      %v6899 = vld [vmem:[%s6898] ss:$2 sm:$0x3]
      %v6900 = vmax.f32 %v6880, %v6885
      %v6901 = vmax.f32 %v6882, %v6887
      %v6902 = vmax.f32 %v6884, %v6889
      %v6903 = vmax.f32 %v6890, %v6895
      %v6904 = vmax.f32 %v6892, %v6897
      %v6905 = vmax.f32 %v6894, %v6899
      %v6906 = vmax.f32 %v6900, %v6903
      %v6907 = vmax.f32 %v6901, %v6904
      %v6908 = vmax.f32 %v6902, %v6905
      %v6911 = vrot.slane %v6906, 1
      %v6912 = vrot.slane %v6907, 1
      %v6913 = vsel %vm1041, %v6911, %v6912
      %6914 = vrot.lane.b32.xlu0 %v6913, 6
      %v6915 = vpop.permute.xlu0 %6914
      %6916 = vrot.lane.b32.xlu0 %v6912, 6
      %v6917 = vpop.permute.xlu0 %6916
      %v6920 = vrot.slane %v6906, 2
      %v6921 = vrot.slane %v6907, 2
      %v6922 = vsel %vm6567, %v6920, %v6921
      %6923 = vrot.lane.b32.xlu0 %v6922, 12
      %v6924 = vpop.permute.xlu0 %6923
      %6925 = vrot.lane.b32.xlu0 %v6921, 12
      %v6926 = vpop.permute.xlu0 %6925
      %v6930 = vrot.slane %v6906, 3
      %v6931 = vrot.slane %v6907, 3
      %v6932 = vsel %vm6578, %v6930, %v6931
      %v6933 = vrot.slane %v6908, 3
      %v6934 = vsel %vm6578, %v6931, %v6933
      %6935 = vrot.lane.b32.xlu0 %v6932, 18
      %v6936 = vpop.permute.xlu0 %6935
      %6937 = vrot.lane.b32.xlu0 %v6934, 18
      %v6938 = vpop.permute.xlu0 %6937
      %v6941 = vrot.slane %v6906, 4
      %v6942 = vrot.slane %v6907, 4
      %v6943 = vsel %vm6590, %v6941, %v6942
      %v6944 = vrot.slane %v6908, 4
      %v6945 = vsel %vm6590, %v6942, %v6944
      %6946 = vrot.lane.b32.xlu0 %v6943, 24
      %v6947 = vpop.permute.xlu0 %6946
      %6948 = vrot.lane.b32.xlu0 %v6945, 24
      %v6949 = vpop.permute.xlu0 %6948
      %v6952 = vsel %vm6397, %v6906, %v6915
      %v6953 = vsel %vm6397, %v6907, %v6917
      %v6954 = vsel %vm6604, %v6952, %v6924
      %v6955 = vsel %vm6604, %v6953, %v6926
      %v6956 = vsel %vm6607, %v6954, %v6936
      %v6957 = vsel %vm6607, %v6955, %v6938
      %v6958 = vsel %vm6610, %v6956, %v6947
      %v6959 = vsel %vm6610, %v6957, %v6949
      %v6960 = vpack.c.bf16 %v6959, %v6958
      %v6962 = vrot.slane %v6960, 4
      %vm6964 = vcmask 244740
      %6965 = vst.msk [vmem:[#allocation3 + $0x18] sm:$0xf0] %vm6964, %v6962
      %vm6966 = vcmask 239616
      %6967 = vst.msk [vmem:[#allocation3 + $0x20] sm:$0x7] %vm6966, %v6962
      %v6968 = vld [vmem:[%s6893] ss:$2 sm:$0xff]
      %s6969 = scalar_lea.vmem [#allocation2], 336
      %v6970 = vld [vmem:[%s6969] ss:$2 sm:$0xff]
      %s6971 = scalar_lea.vmem [#allocation2], 352
      %v6972 = vld [vmem:[%s6971] ss:$2 sm:$0x3]
      %v6973 = vld [vmem:[%s6898] ss:$2 sm:$0xff]
      %s6974 = scalar_lea.vmem [#allocation2], 337
      %v6975 = vld [vmem:[%s6974] ss:$2 sm:$0xff]
      %s6976 = scalar_lea.vmem [#allocation2], 353
      %v6977 = vld [vmem:[%s6976] ss:$2 sm:$0x3]
      %v6978 = vld [vmem:[%s6971] ss:$2 sm:$0xff]
      %s6979 = scalar_lea.vmem [#allocation2], 368
      %v6980 = vld [vmem:[%s6979] ss:$2 sm:$0xff]
      %s6981 = scalar_lea.vmem [#allocation2], 384
      %v6982 = vld [vmem:[%s6981] ss:$2 sm:$0x3]
      %v6983 = vld [vmem:[%s6976] ss:$2 sm:$0xff]
      %s6984 = scalar_lea.vmem [#allocation2], 369
      %v6985 = vld [vmem:[%s6984] ss:$2 sm:$0xff]
      %s6986 = scalar_lea.vmem [#allocation2], 385
      %v6987 = vld [vmem:[%s6986] ss:$2 sm:$0x3]
      %v6988 = vmax.f32 %v6968, %v6973
      %v6989 = vmax.f32 %v6970, %v6975
      %v6990 = vmax.f32 %v6972, %v6977
      %v6991 = vmax.f32 %v6978, %v6983
      %v6992 = vmax.f32 %v6980, %v6985
      %v6993 = vmax.f32 %v6982, %v6987
      %v6994 = vmax.f32 %v6988, %v6991
      %v6995 = vmax.f32 %v6989, %v6992
      %v6996 = vmax.f32 %v6990, %v6993
      %v6999 = vrot.slane %v6994, 1
      %v7000 = vrot.slane %v6995, 1
      %v7001 = vsel %vm1041, %v6999, %v7000
      %7002 = vrot.lane.b32.xlu0 %v7001, 6
      %v7003 = vpop.permute.xlu0 %7002
      %7004 = vrot.lane.b32.xlu0 %v7000, 6
      %v7005 = vpop.permute.xlu0 %7004
      %v7008 = vrot.slane %v6994, 2
      %v7009 = vrot.slane %v6995, 2
      %v7010 = vsel %vm6567, %v7008, %v7009
      %7011 = vrot.lane.b32.xlu0 %v7010, 12
      %v7012 = vpop.permute.xlu0 %7011
      %7013 = vrot.lane.b32.xlu0 %v7009, 12
      %v7014 = vpop.permute.xlu0 %7013
      %v7018 = vrot.slane %v6994, 3
      %v7019 = vrot.slane %v6995, 3
      %v7020 = vsel %vm6578, %v7018, %v7019
      %v7021 = vrot.slane %v6996, 3
      %v7022 = vsel %vm6578, %v7019, %v7021
      %7023 = vrot.lane.b32.xlu0 %v7020, 18
      %v7024 = vpop.permute.xlu0 %7023
      %7025 = vrot.lane.b32.xlu0 %v7022, 18
      %v7026 = vpop.permute.xlu0 %7025
      %v7029 = vrot.slane %v6994, 4
      %v7030 = vrot.slane %v6995, 4
      %v7031 = vsel %vm6590, %v7029, %v7030
      %v7032 = vrot.slane %v6996, 4
      %v7033 = vsel %vm6590, %v7030, %v7032
      %7034 = vrot.lane.b32.xlu0 %v7031, 24
      %v7035 = vpop.permute.xlu0 %7034
      %7036 = vrot.lane.b32.xlu0 %v7033, 24
      %v7037 = vpop.permute.xlu0 %7036
      %v7040 = vsel %vm6397, %v6994, %v7003
      %v7041 = vsel %vm6397, %v6995, %v7005
      %v7042 = vsel %vm6604, %v7040, %v7012
      %v7043 = vsel %vm6604, %v7041, %v7014
      %v7044 = vsel %vm6607, %v7042, %v7024
      %v7045 = vsel %vm6607, %v7043, %v7026
      %v7046 = vsel %vm6610, %v7044, %v7035
      %v7047 = vsel %vm6610, %v7045, %v7037
      %v7048 = vpack.c.bf16 %v7047, %v7046
      %v7050 = vrot.slane %v7048, 5
      %vm7052 = vcmask 244739
      %7053 = vst.msk [vmem:[#allocation3 + $0x20] sm:$0xf8] %vm7052, %v7050
      %vm7054 = vcmask 238592
      %7055 = vst.msk [vmem:[#allocation3 + $0x28] sm:$0x3] %vm7054, %v7050
      %v7056 = vld [vmem:[%s6981] ss:$2 sm:$0xff]
      %s7057 = scalar_lea.vmem [#allocation2], 400
      %v7058 = vld [vmem:[%s7057] ss:$2 sm:$0xff]
      %s7059 = scalar_lea.vmem [#allocation2], 416
      %v7060 = vld [vmem:[%s7059] ss:$2 sm:$0x3]
      %v7061 = vld [vmem:[%s6986] ss:$2 sm:$0xff]
      %s7062 = scalar_lea.vmem [#allocation2], 401
      %v7063 = vld [vmem:[%s7062] ss:$2 sm:$0xff]
      %s7064 = scalar_lea.vmem [#allocation2], 417
      %v7065 = vld [vmem:[%s7064] ss:$2 sm:$0x3]
      %v7066 = vld [vmem:[%s7059] ss:$2 sm:$0xff]
      %s7067 = scalar_lea.vmem [#allocation2], 432
      %v7068 = vld [vmem:[%s7067] ss:$2 sm:$0xff]
      %s7069 = scalar_lea.vmem [#allocation2], 448
      %v7070 = vld [vmem:[%s7069] ss:$2 sm:$0x3]
      %v7071 = vld [vmem:[%s7064] ss:$2 sm:$0xff]
      %s7072 = scalar_lea.vmem [#allocation2], 433
      %v7073 = vld [vmem:[%s7072] ss:$2 sm:$0xff]
      %s7074 = scalar_lea.vmem [#allocation2], 449
      %v7075 = vld [vmem:[%s7074] ss:$2 sm:$0x3]
      %v7076 = vmax.f32 %v7056, %v7061
      %v7077 = vmax.f32 %v7058, %v7063
      %v7078 = vmax.f32 %v7060, %v7065
      %v7079 = vmax.f32 %v7066, %v7071
      %v7080 = vmax.f32 %v7068, %v7073
      %v7081 = vmax.f32 %v7070, %v7075
      %v7082 = vmax.f32 %v7076, %v7079
      %v7083 = vmax.f32 %v7077, %v7080
      %v7084 = vmax.f32 %v7078, %v7081
      %v7087 = vrot.slane %v7082, 1
      %v7088 = vrot.slane %v7083, 1
      %v7089 = vsel %vm1041, %v7087, %v7088
      %7090 = vrot.lane.b32.xlu0 %v7089, 6
      %v7091 = vpop.permute.xlu0 %7090
      %7092 = vrot.lane.b32.xlu0 %v7088, 6
      %v7093 = vpop.permute.xlu0 %7092
      %v7096 = vrot.slane %v7082, 2
      %v7097 = vrot.slane %v7083, 2
      %v7098 = vsel %vm6567, %v7096, %v7097
      %7099 = vrot.lane.b32.xlu0 %v7098, 12
      %v7100 = vpop.permute.xlu0 %7099
      %7101 = vrot.lane.b32.xlu0 %v7097, 12
      %v7102 = vpop.permute.xlu0 %7101
      %v7106 = vrot.slane %v7082, 3
      %v7107 = vrot.slane %v7083, 3
      %v7108 = vsel %vm6578, %v7106, %v7107
      %v7109 = vrot.slane %v7084, 3
      %v7110 = vsel %vm6578, %v7107, %v7109
      %7111 = vrot.lane.b32.xlu0 %v7108, 18
      %v7112 = vpop.permute.xlu0 %7111
      %7113 = vrot.lane.b32.xlu0 %v7110, 18
      %v7114 = vpop.permute.xlu0 %7113
      %v7117 = vrot.slane %v7082, 4
      %v7118 = vrot.slane %v7083, 4
      %v7119 = vsel %vm6590, %v7117, %v7118
      %v7120 = vrot.slane %v7084, 4
      %v7121 = vsel %vm6590, %v7118, %v7120
      %7122 = vrot.lane.b32.xlu0 %v7119, 24
      %v7123 = vpop.permute.xlu0 %7122
      %7124 = vrot.lane.b32.xlu0 %v7121, 24
      %v7125 = vpop.permute.xlu0 %7124
      %v7128 = vsel %vm6397, %v7082, %v7091
      %v7129 = vsel %vm6397, %v7083, %v7093
      %v7130 = vsel %vm6604, %v7128, %v7100
      %v7131 = vsel %vm6604, %v7129, %v7102
      %v7132 = vsel %vm6607, %v7130, %v7112
      %v7133 = vsel %vm6607, %v7131, %v7114
      %v7134 = vsel %vm6610, %v7132, %v7123
      %v7135 = vsel %vm6610, %v7133, %v7125
      %v7136 = vpack.c.bf16 %v7135, %v7134
      %v7138 = vrot.slane %v7136, 6
      %vm7140 = vcmask 244738
      %7141 = vst.msk [vmem:[#allocation3 + $0x28] sm:$0xfc] %vm7140, %v7138
      %vm7142 = vcmask 237568
      %7143 = vst.msk [vmem:[#allocation3 + $0x30] sm:$0x1] %vm7142, %v7138
      %v7144 = vld [vmem:[%s7069] ss:$2 sm:$0xff]
      %s7145 = scalar_lea.vmem [#allocation2], 464
      %v7146 = vld [vmem:[%s7145] ss:$2 sm:$0xff]
      %s7147 = scalar_lea.vmem [#allocation2], 480
      %v7148 = vld [vmem:[%s7147] ss:$2 sm:$0x3]
      %v7149 = vld [vmem:[%s7074] ss:$2 sm:$0xff]
      %s7150 = scalar_lea.vmem [#allocation2], 465
      %v7151 = vld [vmem:[%s7150] ss:$2 sm:$0xff]
      %s7152 = scalar_lea.vmem [#allocation2], 481
      %v7153 = vld [vmem:[%s7152] ss:$2 sm:$0x3]
      %v7154 = vld [vmem:[%s7147] ss:$2 sm:$0xff]
      %s7155 = scalar_lea.vmem [#allocation2], 496
      %v7156 = vld [vmem:[%s7155] ss:$2 sm:$0xff]
      %s7157 = scalar_lea.vmem [#allocation2], 512
      %v7158 = vld [vmem:[%s7157] ss:$2 sm:$0x3]
      %v7159 = vld [vmem:[%s7152] ss:$2 sm:$0xff]
      %s7160 = scalar_lea.vmem [#allocation2], 497
      %v7161 = vld [vmem:[%s7160] ss:$2 sm:$0xff]
      %s7162 = scalar_lea.vmem [#allocation2], 513
      %v7163 = vld [vmem:[%s7162] ss:$2 sm:$0x3]
      %v7164 = vmax.f32 %v7144, %v7149
      %v7165 = vmax.f32 %v7146, %v7151
      %v7166 = vmax.f32 %v7148, %v7153
      %v7167 = vmax.f32 %v7154, %v7159
      %v7168 = vmax.f32 %v7156, %v7161
      %v7169 = vmax.f32 %v7158, %v7163
      %v7170 = vmax.f32 %v7164, %v7167
      %v7171 = vmax.f32 %v7165, %v7168
      %v7172 = vmax.f32 %v7166, %v7169
      %v7175 = vrot.slane %v7170, 1
      %v7176 = vrot.slane %v7171, 1
      %v7177 = vsel %vm1041, %v7175, %v7176
      %7178 = vrot.lane.b32.xlu0 %v7177, 6
      %v7179 = vpop.permute.xlu0 %7178
      %7180 = vrot.lane.b32.xlu0 %v7176, 6
      %v7181 = vpop.permute.xlu0 %7180
      %v7184 = vrot.slane %v7170, 2
      %v7185 = vrot.slane %v7171, 2
      %v7186 = vsel %vm6567, %v7184, %v7185
      %7187 = vrot.lane.b32.xlu0 %v7186, 12
      %v7188 = vpop.permute.xlu0 %7187
      %7189 = vrot.lane.b32.xlu0 %v7185, 12
      %v7190 = vpop.permute.xlu0 %7189
      %v7194 = vrot.slane %v7170, 3
      %v7195 = vrot.slane %v7171, 3
      %v7196 = vsel %vm6578, %v7194, %v7195
      %v7197 = vrot.slane %v7172, 3
      %v7198 = vsel %vm6578, %v7195, %v7197
      %7199 = vrot.lane.b32.xlu0 %v7196, 18
      %v7200 = vpop.permute.xlu0 %7199
      %7201 = vrot.lane.b32.xlu0 %v7198, 18
      %v7202 = vpop.permute.xlu0 %7201
      %v7205 = vrot.slane %v7170, 4
      %v7206 = vrot.slane %v7171, 4
      %v7207 = vsel %vm6590, %v7205, %v7206
      %v7208 = vrot.slane %v7172, 4
      %v7209 = vsel %vm6590, %v7206, %v7208
      %7210 = vrot.lane.b32.xlu0 %v7207, 24
      %v7211 = vpop.permute.xlu0 %7210
      %7212 = vrot.lane.b32.xlu0 %v7209, 24
      %v7213 = vpop.permute.xlu0 %7212
      %v7216 = vsel %vm6397, %v7170, %v7179
      %v7217 = vsel %vm6397, %v7171, %v7181
      %v7218 = vsel %vm6604, %v7216, %v7188
      %v7219 = vsel %vm6604, %v7217, %v7190
      %v7220 = vsel %vm6607, %v7218, %v7200
      %v7221 = vsel %vm6607, %v7219, %v7202
      %v7222 = vsel %vm6610, %v7220, %v7211
      %v7223 = vsel %vm6610, %v7221, %v7213
      %v7224 = vpack.c.bf16 %v7223, %v7222
      %v7226 = vrot.slane %v7224, 7
      %vm7228 = vcmask 244737
      %7229 = vst.msk [vmem:[#allocation3 + $0x30] sm:$0xfe] %vm7228, %v7226
      %v7230 = vld [vmem:[%s7157] ss:$2 sm:$0xff]
      %s7231 = scalar_lea.vmem [#allocation2], 528
      %v7232 = vld [vmem:[%s7231] ss:$2 sm:$0xff]
      %s7233 = scalar_lea.vmem [#allocation2], 544
      %v7234 = vld [vmem:[%s7233] ss:$2 sm:$0x3]
      %v7235 = vld [vmem:[%s7162] ss:$2 sm:$0xff]
      %s7236 = scalar_lea.vmem [#allocation2], 529
      %v7237 = vld [vmem:[%s7236] ss:$2 sm:$0xff]
      %s7238 = scalar_lea.vmem [#allocation2], 545
      %v7239 = vld [vmem:[%s7238] ss:$2 sm:$0x3]
      %v7240 = vld [vmem:[%s7233] ss:$2 sm:$0xff]
      %s7241 = scalar_lea.vmem [#allocation2], 560
      %v7242 = vld [vmem:[%s7241] ss:$2 sm:$0xff]
      %s7243 = scalar_lea.vmem [#allocation2], 576
      %v7244 = vld [vmem:[%s7243] ss:$2 sm:$0x3]
      %v7245 = vld [vmem:[%s7238] ss:$2 sm:$0xff]
      %s7246 = scalar_lea.vmem [#allocation2], 561
      %v7247 = vld [vmem:[%s7246] ss:$2 sm:$0xff]
      %s7248 = scalar_lea.vmem [#allocation2], 577
      %v7249 = vld [vmem:[%s7248] ss:$2 sm:$0x3]
      %v7250 = vmax.f32 %v7230, %v7235
      %v7251 = vmax.f32 %v7232, %v7237
      %v7252 = vmax.f32 %v7234, %v7239
      %v7253 = vmax.f32 %v7240, %v7245
      %v7254 = vmax.f32 %v7242, %v7247
      %v7255 = vmax.f32 %v7244, %v7249
      %v7256 = vmax.f32 %v7250, %v7253
      %v7257 = vmax.f32 %v7251, %v7254
      %v7258 = vmax.f32 %v7252, %v7255
      %v7261 = vrot.slane %v7256, 1
      %v7262 = vrot.slane %v7257, 1
      %v7263 = vsel %vm1041, %v7261, %v7262
      %7264 = vrot.lane.b32.xlu0 %v7263, 6
      %v7265 = vpop.permute.xlu0 %7264
      %7266 = vrot.lane.b32.xlu0 %v7262, 6
      %v7267 = vpop.permute.xlu0 %7266
      %v7270 = vrot.slane %v7256, 2
      %v7271 = vrot.slane %v7257, 2
      %v7272 = vsel %vm6567, %v7270, %v7271
      %7273 = vrot.lane.b32.xlu0 %v7272, 12
      %v7274 = vpop.permute.xlu0 %7273
      %7275 = vrot.lane.b32.xlu0 %v7271, 12
      %v7276 = vpop.permute.xlu0 %7275
      %v7280 = vrot.slane %v7256, 3
      %v7281 = vrot.slane %v7257, 3
      %v7282 = vsel %vm6578, %v7280, %v7281
      %v7283 = vrot.slane %v7258, 3
      %v7284 = vsel %vm6578, %v7281, %v7283
      %7285 = vrot.lane.b32.xlu0 %v7282, 18
      %v7286 = vpop.permute.xlu0 %7285
      %7287 = vrot.lane.b32.xlu0 %v7284, 18
      %v7288 = vpop.permute.xlu0 %7287
      %v7291 = vrot.slane %v7256, 4
      %v7292 = vrot.slane %v7257, 4
      %v7293 = vsel %vm6590, %v7291, %v7292
      %v7294 = vrot.slane %v7258, 4
      %v7295 = vsel %vm6590, %v7292, %v7294
      %7296 = vrot.lane.b32.xlu0 %v7293, 24
      %v7297 = vpop.permute.xlu0 %7296
      %7298 = vrot.lane.b32.xlu0 %v7295, 24
      %v7299 = vpop.permute.xlu0 %7298
      %v7302 = vsel %vm6397, %v7256, %v7265
      %v7303 = vsel %vm6397, %v7257, %v7267
      %v7304 = vsel %vm6604, %v7302, %v7274
      %v7305 = vsel %vm6604, %v7303, %v7276
      %v7306 = vsel %vm6607, %v7304, %v7286
      %v7307 = vsel %vm6607, %v7305, %v7288
      %v7308 = vsel %vm6610, %v7306, %v7297
      %v7309 = vsel %vm6610, %v7307, %v7299
      %v7310 = vpack.c.bf16 %v7309, %v7308
      %7311 = vst.msk [vmem:[#allocation3 + $0x38] sm:$0x7f] %vm6614, %v7310
      %v7312 = vld [vmem:[%s7243] ss:$2 sm:$0xff]
      %s7313 = scalar_lea.vmem [#allocation2], 592
      %v7314 = vld [vmem:[%s7313] ss:$2 sm:$0xff]
      %s7315 = scalar_lea.vmem [#allocation2], 608
      %v7316 = vld [vmem:[%s7315] ss:$2 sm:$0x3]
      %v7317 = vld [vmem:[%s7248] ss:$2 sm:$0xff]
      %s7318 = scalar_lea.vmem [#allocation2], 593
      %v7319 = vld [vmem:[%s7318] ss:$2 sm:$0xff]
      %s7320 = scalar_lea.vmem [#allocation2], 609
      %v7321 = vld [vmem:[%s7320] ss:$2 sm:$0x3]
      %v7322 = vld [vmem:[%s7315] ss:$2 sm:$0xff]
      %s7323 = scalar_lea.vmem [#allocation2], 624
      %v7324 = vld [vmem:[%s7323] ss:$2 sm:$0xff]
      %s7325 = scalar_lea.vmem [#allocation2], 640
      %v7326 = vld [vmem:[%s7325] ss:$2 sm:$0x3]
      %v7327 = vld [vmem:[%s7320] ss:$2 sm:$0xff]
      %s7328 = scalar_lea.vmem [#allocation2], 625
      %v7329 = vld [vmem:[%s7328] ss:$2 sm:$0xff]
      %s7330 = scalar_lea.vmem [#allocation2], 641
      %v7331 = vld [vmem:[%s7330] ss:$2 sm:$0x3]
      %v7332 = vmax.f32 %v7312, %v7317
      %v7333 = vmax.f32 %v7314, %v7319
      %v7334 = vmax.f32 %v7316, %v7321
      %v7335 = vmax.f32 %v7322, %v7327
      %v7336 = vmax.f32 %v7324, %v7329
      %v7337 = vmax.f32 %v7326, %v7331
      %v7338 = vmax.f32 %v7332, %v7335
      %v7339 = vmax.f32 %v7333, %v7336
      %v7340 = vmax.f32 %v7334, %v7337
      %v7343 = vrot.slane %v7338, 1
      %v7344 = vrot.slane %v7339, 1
      %v7345 = vsel %vm1041, %v7343, %v7344
      %7346 = vrot.lane.b32.xlu0 %v7345, 6
      %v7347 = vpop.permute.xlu0 %7346
      %7348 = vrot.lane.b32.xlu0 %v7344, 6
      %v7349 = vpop.permute.xlu0 %7348
      %v7352 = vrot.slane %v7338, 2
      %v7353 = vrot.slane %v7339, 2
      %v7354 = vsel %vm6567, %v7352, %v7353
      %7355 = vrot.lane.b32.xlu0 %v7354, 12
      %v7356 = vpop.permute.xlu0 %7355
      %7357 = vrot.lane.b32.xlu0 %v7353, 12
      %v7358 = vpop.permute.xlu0 %7357
      %v7362 = vrot.slane %v7338, 3
      %v7363 = vrot.slane %v7339, 3
      %v7364 = vsel %vm6578, %v7362, %v7363
      %v7365 = vrot.slane %v7340, 3
      %v7366 = vsel %vm6578, %v7363, %v7365
      %7367 = vrot.lane.b32.xlu0 %v7364, 18
      %v7368 = vpop.permute.xlu0 %7367
      %7369 = vrot.lane.b32.xlu0 %v7366, 18
      %v7370 = vpop.permute.xlu0 %7369
      %v7373 = vrot.slane %v7338, 4
      %v7374 = vrot.slane %v7339, 4
      %v7375 = vsel %vm6590, %v7373, %v7374
      %v7376 = vrot.slane %v7340, 4
      %v7377 = vsel %vm6590, %v7374, %v7376
      %7378 = vrot.lane.b32.xlu0 %v7375, 24
      %v7379 = vpop.permute.xlu0 %7378
      %7380 = vrot.lane.b32.xlu0 %v7377, 24
      %v7381 = vpop.permute.xlu0 %7380
      %v7384 = vsel %vm6397, %v7338, %v7347
      %v7385 = vsel %vm6397, %v7339, %v7349
      %v7386 = vsel %vm6604, %v7384, %v7356
      %v7387 = vsel %vm6604, %v7385, %v7358
      %v7388 = vsel %vm6607, %v7386, %v7368
      %v7389 = vsel %vm6607, %v7387, %v7370
      %v7390 = vsel %vm6610, %v7388, %v7379
      %v7391 = vsel %vm6610, %v7389, %v7381
      %v7392 = vpack.c.bf16 %v7391, %v7390
      %v7394 = vrot.slane %v7392, 1
      %7396 = vst.msk [vmem:[#allocation3 + $0x38] sm:$0x80] %vm6700, %v7394
      %7397 = vst.msk [vmem:[#allocation3 + $0x40] sm:$0x3f] %vm6702, %v7394
      %v7398 = vld [vmem:[%s7325] ss:$2 sm:$0xff]
      %s7399 = scalar_lea.vmem [#allocation2], 656
      %v7400 = vld [vmem:[%s7399] ss:$2 sm:$0xff]
      %s7401 = scalar_lea.vmem [#allocation2], 672
      %v7402 = vld [vmem:[%s7401] ss:$2 sm:$0x3]
      %v7403 = vld [vmem:[%s7330] ss:$2 sm:$0xff]
      %s7404 = scalar_lea.vmem [#allocation2], 657
      %v7405 = vld [vmem:[%s7404] ss:$2 sm:$0xff]
      %s7406 = scalar_lea.vmem [#allocation2], 673
      %v7407 = vld [vmem:[%s7406] ss:$2 sm:$0x3]
      %v7408 = vld [vmem:[%s7401] ss:$2 sm:$0xff]
      %s7409 = scalar_lea.vmem [#allocation2], 688
      %v7410 = vld [vmem:[%s7409] ss:$2 sm:$0xff]
      %s7411 = scalar_lea.vmem [#allocation2], 704
      %v7412 = vld [vmem:[%s7411] ss:$2 sm:$0x3]
      %v7413 = vld [vmem:[%s7406] ss:$2 sm:$0xff]
      %s7414 = scalar_lea.vmem [#allocation2], 689
      %v7415 = vld [vmem:[%s7414] ss:$2 sm:$0xff]
      %s7416 = scalar_lea.vmem [#allocation2], 705
      %v7417 = vld [vmem:[%s7416] ss:$2 sm:$0x3]
      %v7418 = vmax.f32 %v7398, %v7403
      %v7419 = vmax.f32 %v7400, %v7405
      %v7420 = vmax.f32 %v7402, %v7407
      %v7421 = vmax.f32 %v7408, %v7413
      %v7422 = vmax.f32 %v7410, %v7415
      %v7423 = vmax.f32 %v7412, %v7417
      %v7424 = vmax.f32 %v7418, %v7421
      %v7425 = vmax.f32 %v7419, %v7422
      %v7426 = vmax.f32 %v7420, %v7423
      %v7429 = vrot.slane %v7424, 1
      %v7430 = vrot.slane %v7425, 1
      %v7431 = vsel %vm1041, %v7429, %v7430
      %7432 = vrot.lane.b32.xlu0 %v7431, 6
      %v7433 = vpop.permute.xlu0 %7432
      %7434 = vrot.lane.b32.xlu0 %v7430, 6
      %v7435 = vpop.permute.xlu0 %7434
      %v7438 = vrot.slane %v7424, 2
      %v7439 = vrot.slane %v7425, 2
      %v7440 = vsel %vm6567, %v7438, %v7439
      %7441 = vrot.lane.b32.xlu0 %v7440, 12
      %v7442 = vpop.permute.xlu0 %7441
      %7443 = vrot.lane.b32.xlu0 %v7439, 12
      %v7444 = vpop.permute.xlu0 %7443
      %v7448 = vrot.slane %v7424, 3
      %v7449 = vrot.slane %v7425, 3
      %v7450 = vsel %vm6578, %v7448, %v7449
      %v7451 = vrot.slane %v7426, 3
      %v7452 = vsel %vm6578, %v7449, %v7451
      %7453 = vrot.lane.b32.xlu0 %v7450, 18
      %v7454 = vpop.permute.xlu0 %7453
      %7455 = vrot.lane.b32.xlu0 %v7452, 18
      %v7456 = vpop.permute.xlu0 %7455
      %v7459 = vrot.slane %v7424, 4
      %v7460 = vrot.slane %v7425, 4
      %v7461 = vsel %vm6590, %v7459, %v7460
      %v7462 = vrot.slane %v7426, 4
      %v7463 = vsel %vm6590, %v7460, %v7462
      %7464 = vrot.lane.b32.xlu0 %v7461, 24
      %v7465 = vpop.permute.xlu0 %7464
      %7466 = vrot.lane.b32.xlu0 %v7463, 24
      %v7467 = vpop.permute.xlu0 %7466
      %v7470 = vsel %vm6397, %v7424, %v7433
      %v7471 = vsel %vm6397, %v7425, %v7435
      %v7472 = vsel %vm6604, %v7470, %v7442
      %v7473 = vsel %vm6604, %v7471, %v7444
      %v7474 = vsel %vm6607, %v7472, %v7454
      %v7475 = vsel %vm6607, %v7473, %v7456
      %v7476 = vsel %vm6610, %v7474, %v7465
      %v7477 = vsel %vm6610, %v7475, %v7467
      %v7478 = vpack.c.bf16 %v7477, %v7476
      %v7480 = vrot.slane %v7478, 2
      %7482 = vst.msk [vmem:[#allocation3 + $0x40] sm:$0xc0] %vm6788, %v7480
      %7483 = vst.msk [vmem:[#allocation3 + $0x48] sm:$0x1f] %vm6790, %v7480
      %v7484 = vld [vmem:[%s7411] ss:$2 sm:$0xff]
      %s7485 = scalar_lea.vmem [#allocation2], 720
      %v7486 = vld [vmem:[%s7485] ss:$2 sm:$0xff]
      %s7487 = scalar_lea.vmem [#allocation2], 736
      %v7488 = vld [vmem:[%s7487] ss:$2 sm:$0x3]
      %v7489 = vld [vmem:[%s7416] ss:$2 sm:$0xff]
      %s7490 = scalar_lea.vmem [#allocation2], 721
      %v7491 = vld [vmem:[%s7490] ss:$2 sm:$0xff]
      %s7492 = scalar_lea.vmem [#allocation2], 737
      %v7493 = vld [vmem:[%s7492] ss:$2 sm:$0x3]
      %v7494 = vld [vmem:[%s7487] ss:$2 sm:$0xff]
      %s7495 = scalar_lea.vmem [#allocation2], 752
      %v7496 = vld [vmem:[%s7495] ss:$2 sm:$0xff]
      %s7497 = scalar_lea.vmem [#allocation2], 768
      %v7498 = vld [vmem:[%s7497] ss:$2 sm:$0x3]
      %v7499 = vld [vmem:[%s7492] ss:$2 sm:$0xff]
      %s7500 = scalar_lea.vmem [#allocation2], 753
      %v7501 = vld [vmem:[%s7500] ss:$2 sm:$0xff]
      %s7502 = scalar_lea.vmem [#allocation2], 769
      %v7503 = vld [vmem:[%s7502] ss:$2 sm:$0x3]
      %v7504 = vmax.f32 %v7484, %v7489
      %v7505 = vmax.f32 %v7486, %v7491
      %v7506 = vmax.f32 %v7488, %v7493
      %v7507 = vmax.f32 %v7494, %v7499
      %v7508 = vmax.f32 %v7496, %v7501
      %v7509 = vmax.f32 %v7498, %v7503
      %v7510 = vmax.f32 %v7504, %v7507
      %v7511 = vmax.f32 %v7505, %v7508
      %v7512 = vmax.f32 %v7506, %v7509
      %v7515 = vrot.slane %v7510, 1
      %v7516 = vrot.slane %v7511, 1
      %v7517 = vsel %vm1041, %v7515, %v7516
      %7518 = vrot.lane.b32.xlu0 %v7517, 6
      %v7519 = vpop.permute.xlu0 %7518
      %7520 = vrot.lane.b32.xlu0 %v7516, 6
      %v7521 = vpop.permute.xlu0 %7520
      %v7524 = vrot.slane %v7510, 2
      %v7525 = vrot.slane %v7511, 2
      %v7526 = vsel %vm6567, %v7524, %v7525
      %7527 = vrot.lane.b32.xlu0 %v7526, 12
      %v7528 = vpop.permute.xlu0 %7527
      %7529 = vrot.lane.b32.xlu0 %v7525, 12
      %v7530 = vpop.permute.xlu0 %7529
      %v7534 = vrot.slane %v7510, 3
      %v7535 = vrot.slane %v7511, 3
      %v7536 = vsel %vm6578, %v7534, %v7535
      %v7537 = vrot.slane %v7512, 3
      %v7538 = vsel %vm6578, %v7535, %v7537
      %7539 = vrot.lane.b32.xlu0 %v7536, 18
      %v7540 = vpop.permute.xlu0 %7539
      %7541 = vrot.lane.b32.xlu0 %v7538, 18
      %v7542 = vpop.permute.xlu0 %7541
      %v7545 = vrot.slane %v7510, 4
      %v7546 = vrot.slane %v7511, 4
      %v7547 = vsel %vm6590, %v7545, %v7546
      %v7548 = vrot.slane %v7512, 4
      %v7549 = vsel %vm6590, %v7546, %v7548
      %7550 = vrot.lane.b32.xlu0 %v7547, 24
      %v7551 = vpop.permute.xlu0 %7550
      %7552 = vrot.lane.b32.xlu0 %v7549, 24
      %v7553 = vpop.permute.xlu0 %7552
      %v7556 = vsel %vm6397, %v7510, %v7519
      %v7557 = vsel %vm6397, %v7511, %v7521
      %v7558 = vsel %vm6604, %v7556, %v7528
      %v7559 = vsel %vm6604, %v7557, %v7530
      %v7560 = vsel %vm6607, %v7558, %v7540
      %v7561 = vsel %vm6607, %v7559, %v7542
      %v7562 = vsel %vm6610, %v7560, %v7551
      %v7563 = vsel %vm6610, %v7561, %v7553
      %v7564 = vpack.c.bf16 %v7563, %v7562
      %v7566 = vrot.slane %v7564, 3
      %7568 = vst.msk [vmem:[#allocation3 + $0x48] sm:$0xe0] %vm6876, %v7566
      %7569 = vst.msk [vmem:[#allocation3 + $0x50] sm:$0xf] %vm6878, %v7566
      %v7570 = vld [vmem:[%s7497] ss:$2 sm:$0xff]
      %s7571 = scalar_lea.vmem [#allocation2], 784
      %v7572 = vld [vmem:[%s7571] ss:$2 sm:$0xff]
      %s7573 = scalar_lea.vmem [#allocation2], 800
      %v7574 = vld [vmem:[%s7573] ss:$2 sm:$0x3]
      %v7575 = vld [vmem:[%s7502] ss:$2 sm:$0xff]
      %s7576 = scalar_lea.vmem [#allocation2], 785
      %v7577 = vld [vmem:[%s7576] ss:$2 sm:$0xff]
      %s7578 = scalar_lea.vmem [#allocation2], 801
      %v7579 = vld [vmem:[%s7578] ss:$2 sm:$0x3]
      %v7580 = vld [vmem:[%s7573] ss:$2 sm:$0xff]
      %s7581 = scalar_lea.vmem [#allocation2], 816
      %v7582 = vld [vmem:[%s7581] ss:$2 sm:$0xff]
      %s7583 = scalar_lea.vmem [#allocation2], 832
      %v7584 = vld [vmem:[%s7583] ss:$2 sm:$0x3]
      %v7585 = vld [vmem:[%s7578] ss:$2 sm:$0xff]
      %s7586 = scalar_lea.vmem [#allocation2], 817
      %v7587 = vld [vmem:[%s7586] ss:$2 sm:$0xff]
      %s7588 = scalar_lea.vmem [#allocation2], 833
      %v7589 = vld [vmem:[%s7588] ss:$2 sm:$0x3]
      %v7590 = vmax.f32 %v7570, %v7575
      %v7591 = vmax.f32 %v7572, %v7577
      %v7592 = vmax.f32 %v7574, %v7579
      %v7593 = vmax.f32 %v7580, %v7585
      %v7594 = vmax.f32 %v7582, %v7587
      %v7595 = vmax.f32 %v7584, %v7589
      %v7596 = vmax.f32 %v7590, %v7593
      %v7597 = vmax.f32 %v7591, %v7594
      %v7598 = vmax.f32 %v7592, %v7595
      %v7601 = vrot.slane %v7596, 1
      %v7602 = vrot.slane %v7597, 1
      %v7603 = vsel %vm1041, %v7601, %v7602
      %7604 = vrot.lane.b32.xlu0 %v7603, 6
      %v7605 = vpop.permute.xlu0 %7604
      %7606 = vrot.lane.b32.xlu0 %v7602, 6
      %v7607 = vpop.permute.xlu0 %7606
      %v7610 = vrot.slane %v7596, 2
      %v7611 = vrot.slane %v7597, 2
      %v7612 = vsel %vm6567, %v7610, %v7611
      %7613 = vrot.lane.b32.xlu0 %v7612, 12
      %v7614 = vpop.permute.xlu0 %7613
      %7615 = vrot.lane.b32.xlu0 %v7611, 12
      %v7616 = vpop.permute.xlu0 %7615
      %v7620 = vrot.slane %v7596, 3
      %v7621 = vrot.slane %v7597, 3
      %v7622 = vsel %vm6578, %v7620, %v7621
      %v7623 = vrot.slane %v7598, 3
      %v7624 = vsel %vm6578, %v7621, %v7623
      %7625 = vrot.lane.b32.xlu0 %v7622, 18
      %v7626 = vpop.permute.xlu0 %7625
      %7627 = vrot.lane.b32.xlu0 %v7624, 18
      %v7628 = vpop.permute.xlu0 %7627
      %v7631 = vrot.slane %v7596, 4
      %v7632 = vrot.slane %v7597, 4
      %v7633 = vsel %vm6590, %v7631, %v7632
      %v7634 = vrot.slane %v7598, 4
      %v7635 = vsel %vm6590, %v7632, %v7634
      %7636 = vrot.lane.b32.xlu0 %v7633, 24
      %v7637 = vpop.permute.xlu0 %7636
      %7638 = vrot.lane.b32.xlu0 %v7635, 24
      %v7639 = vpop.permute.xlu0 %7638
      %v7642 = vsel %vm6397, %v7596, %v7605
      %v7643 = vsel %vm6397, %v7597, %v7607
      %v7644 = vsel %vm6604, %v7642, %v7614
      %v7645 = vsel %vm6604, %v7643, %v7616
      %v7646 = vsel %vm6607, %v7644, %v7626
      %v7647 = vsel %vm6607, %v7645, %v7628
      %v7648 = vsel %vm6610, %v7646, %v7637
      %v7649 = vsel %vm6610, %v7647, %v7639
      %v7650 = vpack.c.bf16 %v7649, %v7648
      %v7652 = vrot.slane %v7650, 4
      %7654 = vst.msk [vmem:[#allocation3 + $0x50] sm:$0xf0] %vm6964, %v7652
      %7655 = vst.msk [vmem:[#allocation3 + $0x58] sm:$0x7] %vm6966, %v7652
      %v7656 = vld [vmem:[%s7583] ss:$2 sm:$0xff]
      %s7657 = scalar_lea.vmem [#allocation2], 848
      %v7658 = vld [vmem:[%s7657] ss:$2 sm:$0xff]
      %s7659 = scalar_lea.vmem [#allocation2], 864
      %v7660 = vld [vmem:[%s7659] ss:$2 sm:$0x3]
      %v7661 = vld [vmem:[%s7588] ss:$2 sm:$0xff]
      %s7662 = scalar_lea.vmem [#allocation2], 849
      %v7663 = vld [vmem:[%s7662] ss:$2 sm:$0xff]
      %s7664 = scalar_lea.vmem [#allocation2], 865
      %v7665 = vld [vmem:[%s7664] ss:$2 sm:$0x3]
      %v7666 = vld [vmem:[%s7659] ss:$2 sm:$0xff]
      %s7667 = scalar_lea.vmem [#allocation2], 880
      %v7668 = vld [vmem:[%s7667] ss:$2 sm:$0xff]
      %s7669 = scalar_lea.vmem [#allocation2], 896
      %v7670 = vld [vmem:[%s7669] ss:$2 sm:$0x3]
      %v7671 = vld [vmem:[%s7664] ss:$2 sm:$0xff]
      %s7672 = scalar_lea.vmem [#allocation2], 881
      %v7673 = vld [vmem:[%s7672] ss:$2 sm:$0xff]
      %s7674 = scalar_lea.vmem [#allocation2], 897
      %v7675 = vld [vmem:[%s7674] ss:$2 sm:$0x3]
      %v7676 = vmax.f32 %v7656, %v7661
      %v7677 = vmax.f32 %v7658, %v7663
      %v7678 = vmax.f32 %v7660, %v7665
      %v7679 = vmax.f32 %v7666, %v7671
      %v7680 = vmax.f32 %v7668, %v7673
      %v7681 = vmax.f32 %v7670, %v7675
      %v7682 = vmax.f32 %v7676, %v7679
      %v7683 = vmax.f32 %v7677, %v7680
      %v7684 = vmax.f32 %v7678, %v7681
      %v7687 = vrot.slane %v7682, 1
      %v7688 = vrot.slane %v7683, 1
      %v7689 = vsel %vm1041, %v7687, %v7688
      %7690 = vrot.lane.b32.xlu0 %v7689, 6
      %v7691 = vpop.permute.xlu0 %7690
      %7692 = vrot.lane.b32.xlu0 %v7688, 6
      %v7693 = vpop.permute.xlu0 %7692
      %v7696 = vrot.slane %v7682, 2
      %v7697 = vrot.slane %v7683, 2
      %v7698 = vsel %vm6567, %v7696, %v7697
      %7699 = vrot.lane.b32.xlu0 %v7698, 12
      %v7700 = vpop.permute.xlu0 %7699
      %7701 = vrot.lane.b32.xlu0 %v7697, 12
      %v7702 = vpop.permute.xlu0 %7701
      %v7706 = vrot.slane %v7682, 3
      %v7707 = vrot.slane %v7683, 3
      %v7708 = vsel %vm6578, %v7706, %v7707
      %v7709 = vrot.slane %v7684, 3
      %v7710 = vsel %vm6578, %v7707, %v7709
      %7711 = vrot.lane.b32.xlu0 %v7708, 18
      %v7712 = vpop.permute.xlu0 %7711
      %7713 = vrot.lane.b32.xlu0 %v7710, 18
      %v7714 = vpop.permute.xlu0 %7713
      %v7717 = vrot.slane %v7682, 4
      %v7718 = vrot.slane %v7683, 4
      %v7719 = vsel %vm6590, %v7717, %v7718
      %v7720 = vrot.slane %v7684, 4
      %v7721 = vsel %vm6590, %v7718, %v7720
      %7722 = vrot.lane.b32.xlu0 %v7719, 24
      %v7723 = vpop.permute.xlu0 %7722
      %7724 = vrot.lane.b32.xlu0 %v7721, 24
      %v7725 = vpop.permute.xlu0 %7724
      %v7728 = vsel %vm6397, %v7682, %v7691
      %v7729 = vsel %vm6397, %v7683, %v7693
      %v7730 = vsel %vm6604, %v7728, %v7700
      %v7731 = vsel %vm6604, %v7729, %v7702
      %v7732 = vsel %vm6607, %v7730, %v7712
      %v7733 = vsel %vm6607, %v7731, %v7714
      %v7734 = vsel %vm6610, %v7732, %v7723
      %v7735 = vsel %vm6610, %v7733, %v7725
      %v7736 = vpack.c.bf16 %v7735, %v7734
      %v7738 = vrot.slane %v7736, 5
      %7740 = vst.msk [vmem:[#allocation3 + $0x58] sm:$0xf8] %vm7052, %v7738
      %7741 = vst.msk [vmem:[#allocation3 + $0x60] sm:$0x3] %vm7054, %v7738
      %7742 = vst.msk [vmem:[#allocation3 + $0x60] sm:$0xfc] %vm7140, 0
      %vm7743 = vcmask 244736
      %7744 = vst.msk [vmem:[#allocation3 + $0x68] sm:$0xff] %vm7743, 0
      %7745 = vst.msk [vmem:[#allocation3 + $0x70] sm:$0xff] %vm7743, 0
      %7746 = vst.msk [vmem:[#allocation3 + $0x78] sm:$0xff] %vm7743, 0
      %v7747 = vld [vmem:[#allocation3] sm:$0xff]
      %v7748 = vld [vmem:[#allocation3 + $0x8] sm:$0xff]
      %v7749 = vld [vmem:[#allocation3 + $0x10] sm:$0xff]
      %v7750 = vld [vmem:[#allocation3 + $0x18] sm:$0xff]
      %v7751 = vld [vmem:[#allocation3 + $0x20] sm:$0xff]
      %v7752 = vld [vmem:[#allocation3 + $0x28] sm:$0xff]
      %v7753 = vld [vmem:[#allocation3 + $0x30] sm:$0xff]
      %v7754 = vld [vmem:[#allocation3 + $0x38] sm:$0xff]
      %v7755 = vld [vmem:[#allocation3 + $0x40] sm:$0xff]
      %v7756 = vld [vmem:[#allocation3 + $0x48] sm:$0xff]
      %v7757 = vld [vmem:[#allocation3 + $0x50] sm:$0xff]
      %v7758 = vld [vmem:[#allocation3 + $0x58] sm:$0xff]
      %v7759 = vld [vmem:[#allocation3 + $0x60] sm:$0xf]
      %v7760 = vld [vmem:[%s3] sm:$0xf]
      %v7761 = vld [vmem:[%s3 + $0x4] sm:$0xf]
      %v7762 = vld [vmem:[%s3 + $0x8] sm:$0xf]
      %v7763 = vld [vmem:[%s3 + $0xc] sm:$0x7]
      %v7764 = vld [vmem:[#allocation3] sm:$0x80]
      %v7765 = vld [vmem:[#allocation3 + $0x60] sm:$0xff]
      %v7766 = vld [vmem:[#allocation3 + $0x68] sm:$0x7]
      %s7767 = scalar_lea.vmem %s3, 16
      %v7768 = vld [vmem:[%s7767] sm:$0xf]
      %v7769 = vld [vmem:[%s7767 + $0x4] sm:$0xf]
      %v7770 = vld [vmem:[%s7767 + $0x8] sm:$0xf]
      %v7771 = vld [vmem:[%s7767 + $0xc] sm:$0x7]
      %vm7786 = vcmask 1040384
      %v7787 = vrot.slane %v7764, 7
      %v7788 = vrot.slane %v7748, 7
      %v7789 = vsel %vm7786, %v7787, %v7788
      %v7790 = vrot.slane %v7749, 7
      %v7791 = vsel %vm7786, %v7788, %v7790
      %v7792 = vrot.slane %v7750, 7
      %v7793 = vsel %vm7786, %v7790, %v7792
      %v7794 = vrot.slane %v7751, 7
      %v7795 = vsel %vm7786, %v7792, %v7794
      %v7796 = vrot.slane %v7752, 7
      %v7797 = vsel %vm7786, %v7794, %v7796
      %v7798 = vrot.slane %v7753, 7
      %v7799 = vsel %vm7786, %v7796, %v7798
      %v7800 = vrot.slane %v7754, 7
      %v7801 = vsel %vm7786, %v7798, %v7800
      %v7802 = vrot.slane %v7755, 7
      %v7803 = vsel %vm7786, %v7800, %v7802
      %v7804 = vrot.slane %v7756, 7
      %v7805 = vsel %vm7786, %v7802, %v7804
      %v7806 = vrot.slane %v7757, 7
      %v7807 = vsel %vm7786, %v7804, %v7806
      %v7808 = vrot.slane %v7758, 7
      %v7809 = vsel %vm7786, %v7806, %v7808
      %v7810 = vrot.slane %v7765, 7
      %v7811 = vsel %vm7786, %v7808, %v7810
      %v7812 = vrot.slane %v7766, 7
      %v7813 = vsel %vm7786, %v7810, %v7812
      %v7818 = vunpack.c.l.b16 %v7768
      %v7819 = vunpack.c.l.b16 %v7769
      %v7820 = vunpack.c.l.b16 %v7770
      %v7821 = vunpack.c.l.b16 %v7771
      %v7822 = vpack.c.b16 %v7819, %v7818
      %v7823 = vpack.c.b16 %v7821, %v7820
      %v7826 = vsel %vm7743, %v7789, 0
      %v7829 = vsel %vm7743, %v7791, 0
      %v7832 = vsel %vm7743, %v7793, 0
      %v7835 = vsel %vm7743, %v7795, 0
      %v7838 = vsel %vm7743, %v7797, 0
      %v7841 = vsel %vm7743, %v7799, 0
      %v7844 = vsel %vm7743, %v7801, 0
      %v7847 = vsel %vm7743, %v7803, 0
      %v7850 = vsel %vm7743, %v7805, 0
      %v7853 = vsel %vm7743, %v7807, 0
      %v7856 = vsel %vm7743, %v7809, 0
      %v7859 = vsel %vm7743, %v7811, 0
      %v7862 = vsel %vm7743, %v7813, 0
      %v7865 = vsel %vm1041, %v7823, 0
      %7867 = vmatprep.subr.bf16.mxu0 0
      %7868 = vmatpush1.bf16.msra.mxu0 %v7822
      %7869 = vmatprep.subr.bf16.mxu0 0
      %7870 = vmatpush1.bf16.msra.mxu0 %v7865
      %7871 = vmatprep.subr.bf16.mxu0 0
      %7872 = vmatpush1.bf16.msra.mxu0 0
      %7873 = vmatprep.subr.bf16.mxu0 0
      %7874 = vmatpush1.bf16.msra.mxu0 0
      %7875 = vmatprep.subr.bf16.mxu0 0
      %7876 = vmatpush1.bf16.msra.mxu0 0
      %7877 = vmatprep.subr.bf16.mxu0 0
      %7878 = vmatpush1.bf16.msra.mxu0 0
      %7879 = vmatprep.subr.bf16.mxu0 0
      %7880 = vmatpush1.bf16.msra.mxu0 0
      %7881 = vmatprep.subr.bf16.mxu0 0
      %7882 = vmatpush1.bf16.msra.mxu0 0
      %7883 = vmatprep.subr.bf16.mxu0 0
      %7884 = vmatpush1.bf16.msra.mxu0 0
      %7885 = vmatprep.subr.bf16.mxu0 0
      %7886 = vmatpush1.bf16.msra.mxu0 0
      %7887 = vmatprep.subr.bf16.mxu0 0
      %7888 = vmatpush1.bf16.msra.mxu0 0
      %7889 = vmatprep.subr.bf16.mxu0 0
      %7890 = vmatpush1.bf16.msra.mxu0 0
      %7891 = vmatprep.subr.bf16.mxu0 0
      %7892 = vmatpush1.bf16.msra.mxu0 0
      %7893 = vmatprep.subr.bf16.mxu0 0
      %7894 = vmatpush1.bf16.msra.mxu0 0
      %7895 = vmatprep.subr.bf16.mxu0 0
      %7896 = vmatpush1.bf16.msra.mxu0 0
      %7897 = vmatprep.subr.bf16.mxu0 0
      %7898 = vmatpush1.bf16.msra.mxu0 0
      %7899 = vmatprep.mubr.bf16.mxu0 0
      %7900 = vmatmul.mubr.bf16.gmra.mrb[0].mxu0 %v7826
      %v7901 = vpop.f32.mrb[0].mxu0
      %v7902 = vadd.f32 0.0, %v7901
      %v7903 = vpop.f32.mrb[0].mxu0
      %v7904 = vpop.f32.mrb[0].mxu0
      %v7905 = vadd.f32 0.0, %v7904
      %v7906 = vpop.f32.mrb[0].mxu0
      %7907 = vmatprep.mubr.bf16.mxu0 0
      %7908 = vmatmul.mubr.bf16.gmra.mrb[0].mxu0 %v7829
      %v7909 = vpop.f32.mrb[0].mxu0
      %v7910 = vadd.f32 0.0, %v7909
      %v7911 = vpop.f32.mrb[0].mxu0
      %v7912 = vpop.f32.mrb[0].mxu0
      %v7913 = vadd.f32 0.0, %v7912
      %v7914 = vpop.f32.mrb[0].mxu0
      %7915 = vmatprep.mubr.bf16.mxu0 0
      %7916 = vmatmul.mubr.bf16.gmra.mrb[0].mxu0 %v7832
      %v7917 = vpop.f32.mrb[0].mxu0
      %v7918 = vadd.f32 0.0, %v7917
      %v7919 = vpop.f32.mrb[0].mxu0
      %v7920 = vpop.f32.mrb[0].mxu0
      %v7921 = vadd.f32 0.0, %v7920
      %v7922 = vpop.f32.mrb[0].mxu0
      %7923 = vmatprep.mubr.bf16.mxu0 0
      %7924 = vmatmul.mubr.bf16.gmra.mrb[0].mxu0 %v7835
      %v7925 = vpop.f32.mrb[0].mxu0
      %v7926 = vadd.f32 0.0, %v7925
      %v7927 = vpop.f32.mrb[0].mxu0
      %v7928 = vpop.f32.mrb[0].mxu0
      %v7929 = vadd.f32 0.0, %v7928
      %v7930 = vpop.f32.mrb[0].mxu0
      %7931 = vmatprep.mubr.bf16.mxu0 0
      %7932 = vmatmul.mubr.bf16.gmra.mrb[0].mxu0 %v7838
      %v7933 = vpop.f32.mrb[0].mxu0
      %v7934 = vadd.f32 0.0, %v7933
      %v7935 = vpop.f32.mrb[0].mxu0
      %v7936 = vpop.f32.mrb[0].mxu0
      %v7937 = vadd.f32 0.0, %v7936
      %v7938 = vpop.f32.mrb[0].mxu0
      %7939 = vmatprep.mubr.bf16.mxu0 0
      %7940 = vmatmul.mubr.bf16.gmra.mrb[0].mxu0 %v7841
      %v7941 = vpop.f32.mrb[0].mxu0
      %v7942 = vadd.f32 0.0, %v7941
      %v7943 = vpop.f32.mrb[0].mxu0
      %v7944 = vpop.f32.mrb[0].mxu0
      %v7945 = vadd.f32 0.0, %v7944
      %v7946 = vpop.f32.mrb[0].mxu0
      %7947 = vmatprep.mubr.bf16.mxu0 0
      %7948 = vmatmul.mubr.bf16.gmra.mrb[0].mxu0 %v7844
      %v7949 = vpop.f32.mrb[0].mxu0
      %v7950 = vadd.f32 0.0, %v7949
      %v7951 = vpop.f32.mrb[0].mxu0
      %v7952 = vpop.f32.mrb[0].mxu0
      %v7953 = vadd.f32 0.0, %v7952
      %v7954 = vpop.f32.mrb[0].mxu0
      %7955 = vmatprep.mubr.bf16.mxu0 0
      %7956 = vmatmul.mubr.bf16.gmra.mrb[0].mxu0 %v7847
      %v7957 = vpop.f32.mrb[0].mxu0
      %v7958 = vadd.f32 0.0, %v7957
      %v7959 = vpop.f32.mrb[0].mxu0
      %v7960 = vpop.f32.mrb[0].mxu0
      %v7961 = vadd.f32 0.0, %v7960
      %v7962 = vpop.f32.mrb[0].mxu0
      %7963 = vmatprep.mubr.bf16.mxu0 0
      %7964 = vmatmul.mubr.bf16.gmra.mrb[0].mxu0 %v7850
      %v7965 = vpop.f32.mrb[0].mxu0
      %v7966 = vadd.f32 0.0, %v7965
      %v7967 = vpop.f32.mrb[0].mxu0
      %v7968 = vpop.f32.mrb[0].mxu0
      %v7969 = vadd.f32 0.0, %v7968
      %v7970 = vpop.f32.mrb[0].mxu0
      %7971 = vmatprep.mubr.bf16.mxu0 0
      %7972 = vmatmul.mubr.bf16.gmra.mrb[0].mxu0 %v7853
      %v7973 = vpop.f32.mrb[0].mxu0
      %v7974 = vadd.f32 0.0, %v7973
      %v7975 = vpop.f32.mrb[0].mxu0
      %v7976 = vpop.f32.mrb[0].mxu0
      %v7977 = vadd.f32 0.0, %v7976
      %v7978 = vpop.f32.mrb[0].mxu0
      %7979 = vmatprep.mubr.bf16.mxu0 0
      %7980 = vmatmul.mubr.bf16.gmra.mrb[0].mxu0 %v7856
      %v7981 = vpop.f32.mrb[0].mxu0
      %v7982 = vadd.f32 0.0, %v7981
      %v7983 = vpop.f32.mrb[0].mxu0
      %v7984 = vpop.f32.mrb[0].mxu0
      %v7985 = vadd.f32 0.0, %v7984
      %v7986 = vpop.f32.mrb[0].mxu0
      %7987 = vmatprep.mubr.bf16.mxu0 0
      %7988 = vmatmul.mubr.bf16.gmra.mrb[0].mxu0 %v7859
      %v7989 = vpop.f32.mrb[0].mxu0
      %v7990 = vadd.f32 0.0, %v7989
      %v7991 = vpop.f32.mrb[0].mxu0
      %v7992 = vpop.f32.mrb[0].mxu0
      %v7993 = vadd.f32 0.0, %v7992
      %v7994 = vpop.f32.mrb[0].mxu0
      %7995 = vmatprep.mubr.bf16.mxu0 0
      %7996 = vmatmul.mubr.bf16.gmra.mrb[0].mxu0 %v7862
      %v7997 = vpop.f32.mrb[0].mxu0
      %v7998 = vadd.f32 0.0, %v7997
      %v7999 = vpop.f32.mrb[0].mxu0
      %v8000 = vpop.f32.mrb[0].mxu0
      %v8001 = vpop.f32.mrb[0].mxu0
      %8002 = vdwg.mxu0
      %v8007 = vunpack.c.l.b16 %v7760
      %v8008 = vunpack.c.l.b16 %v7761
      %v8009 = vunpack.c.l.b16 %v7762
      %v8010 = vunpack.c.l.b16 %v7763
      %v8011 = vpack.c.b16 %v8008, %v8007
      %v8012 = vpack.c.b16 %v8010, %v8009
      %v8015 = vsel %vm7743, %v7747, 0
      %v8018 = vsel %vm7743, %v7748, 0
      %v8021 = vsel %vm7743, %v7749, 0
      %v8024 = vsel %vm7743, %v7750, 0
      %v8027 = vsel %vm7743, %v7751, 0
      %v8030 = vsel %vm7743, %v7752, 0
      %v8033 = vsel %vm7743, %v7753, 0
      %v8036 = vsel %vm7743, %v7754, 0
      %v8039 = vsel %vm7743, %v7755, 0
      %v8042 = vsel %vm7743, %v7756, 0
      %v8045 = vsel %vm7743, %v7757, 0
      %v8048 = vsel %vm7743, %v7758, 0
      %v8051 = vsel %vm7743, %v7759, 0
      %v8054 = vsel %vm1041, %v8012, 0
      %8056 = vmatprep.subr.bf16.mxu0 0
      %8057 = vmatpush1.bf16.msra.mxu0 %v8011
      %8058 = vmatprep.subr.bf16.mxu0 0
      %8059 = vmatpush1.bf16.msra.mxu0 %v8054
      %8060 = vmatprep.subr.bf16.mxu0 0
      %8061 = vmatpush1.bf16.msra.mxu0 0
      %8062 = vmatprep.subr.bf16.mxu0 0
      %8063 = vmatpush1.bf16.msra.mxu0 0
      %8064 = vmatprep.subr.bf16.mxu0 0
      %8065 = vmatpush1.bf16.msra.mxu0 0
      %8066 = vmatprep.subr.bf16.mxu0 0
      %8067 = vmatpush1.bf16.msra.mxu0 0
      %8068 = vmatprep.subr.bf16.mxu0 0
      %8069 = vmatpush1.bf16.msra.mxu0 0
      %8070 = vmatprep.subr.bf16.mxu0 0
      %8071 = vmatpush1.bf16.msra.mxu0 0
      %8072 = vmatprep.subr.bf16.mxu0 0
      %8073 = vmatpush1.bf16.msra.mxu0 0
      %8074 = vmatprep.subr.bf16.mxu0 0
      %8075 = vmatpush1.bf16.msra.mxu0 0
      %8076 = vmatprep.subr.bf16.mxu0 0
      %8077 = vmatpush1.bf16.msra.mxu0 0
      %8078 = vmatprep.subr.bf16.mxu0 0
      %8079 = vmatpush1.bf16.msra.mxu0 0
      %8080 = vmatprep.subr.bf16.mxu0 0
      %8081 = vmatpush1.bf16.msra.mxu0 0
      %8082 = vmatprep.subr.bf16.mxu0 0
      %8083 = vmatpush1.bf16.msra.mxu0 0
      %8084 = vmatprep.subr.bf16.mxu0 0
      %8085 = vmatpush1.bf16.msra.mxu0 0
      %8086 = vmatprep.subr.bf16.mxu0 0
      %8087 = vmatpush1.bf16.msra.mxu0 0
      %8088 = vmatprep.mubr.bf16.mxu0 0
      %8089 = vmatmul.mubr.bf16.gmra.mrb[0].mxu0 %v8015
      %v8090 = vpop.f32.mrb[0].mxu0
      %v8091 = vadd.f32 %v7902, %v8090
      %v8092 = vpop.f32.mrb[0].mxu0
      %v8093 = vpop.f32.mrb[0].mxu0
      %v8094 = vadd.f32 %v7905, %v8093
      %v8095 = vpop.f32.mrb[0].mxu0
      %8096 = vmatprep.mubr.bf16.mxu0 0
      %8097 = vmatmul.mubr.bf16.gmra.mrb[0].mxu0 %v8018
      %v8098 = vpop.f32.mrb[0].mxu0
      %v8099 = vadd.f32 %v7910, %v8098
      %v8100 = vpop.f32.mrb[0].mxu0
      %v8101 = vpop.f32.mrb[0].mxu0
      %v8102 = vadd.f32 %v7913, %v8101
      %v8103 = vpop.f32.mrb[0].mxu0
      %8104 = vmatprep.mubr.bf16.mxu0 0
      %8105 = vmatmul.mubr.bf16.gmra.mrb[0].mxu0 %v8021
      %v8106 = vpop.f32.mrb[0].mxu0
      %v8107 = vadd.f32 %v7918, %v8106
      %v8108 = vpop.f32.mrb[0].mxu0
      %v8109 = vpop.f32.mrb[0].mxu0
      %v8110 = vadd.f32 %v7921, %v8109
      %v8111 = vpop.f32.mrb[0].mxu0
      %8112 = vmatprep.mubr.bf16.mxu0 0
      %8113 = vmatmul.mubr.bf16.gmra.mrb[0].mxu0 %v8024
      %v8114 = vpop.f32.mrb[0].mxu0
      %v8115 = vadd.f32 %v7926, %v8114
      %v8116 = vpop.f32.mrb[0].mxu0
      %v8117 = vpop.f32.mrb[0].mxu0
      %v8118 = vadd.f32 %v7929, %v8117
      %v8119 = vpop.f32.mrb[0].mxu0
      %8120 = vmatprep.mubr.bf16.mxu0 0
      %8121 = vmatmul.mubr.bf16.gmra.mrb[0].mxu0 %v8027
      %v8122 = vpop.f32.mrb[0].mxu0
      %v8123 = vadd.f32 %v7934, %v8122
      %v8124 = vpop.f32.mrb[0].mxu0
      %v8125 = vpop.f32.mrb[0].mxu0
      %v8126 = vadd.f32 %v7937, %v8125
      %v8127 = vpop.f32.mrb[0].mxu0
      %8128 = vmatprep.mubr.bf16.mxu0 0
      %8129 = vmatmul.mubr.bf16.gmra.mrb[0].mxu0 %v8030
      %v8130 = vpop.f32.mrb[0].mxu0
      %v8131 = vadd.f32 %v7942, %v8130
      %v8132 = vpop.f32.mrb[0].mxu0
      %v8133 = vpop.f32.mrb[0].mxu0
      %v8134 = vadd.f32 %v7945, %v8133
      %v8135 = vpop.f32.mrb[0].mxu0
      %8136 = vmatprep.mubr.bf16.mxu0 0
      %8137 = vmatmul.mubr.bf16.gmra.mrb[0].mxu0 %v8033
      %v8138 = vpop.f32.mrb[0].mxu0
      %v8139 = vadd.f32 %v7950, %v8138
      %v8140 = vpop.f32.mrb[0].mxu0
      %v8141 = vpop.f32.mrb[0].mxu0
      %v8142 = vadd.f32 %v7953, %v8141
      %v8143 = vpop.f32.mrb[0].mxu0
      %8144 = vmatprep.mubr.bf16.mxu0 0
      %8145 = vmatmul.mubr.bf16.gmra.mrb[0].mxu0 %v8036
      %v8146 = vpop.f32.mrb[0].mxu0
      %v8147 = vadd.f32 %v7958, %v8146
      %v8148 = vpop.f32.mrb[0].mxu0
      %v8149 = vpop.f32.mrb[0].mxu0
      %v8150 = vadd.f32 %v7961, %v8149
      %v8151 = vpop.f32.mrb[0].mxu0
      %8152 = vmatprep.mubr.bf16.mxu0 0
      %8153 = vmatmul.mubr.bf16.gmra.mrb[0].mxu0 %v8039
      %v8154 = vpop.f32.mrb[0].mxu0
      %v8155 = vadd.f32 %v7966, %v8154
      %v8156 = vpop.f32.mrb[0].mxu0
      %v8157 = vpop.f32.mrb[0].mxu0
      %v8158 = vadd.f32 %v7969, %v8157
      %v8159 = vpop.f32.mrb[0].mxu0
      %8160 = vmatprep.mubr.bf16.mxu0 0
      %8161 = vmatmul.mubr.bf16.gmra.mrb[0].mxu0 %v8042
      %v8162 = vpop.f32.mrb[0].mxu0
      %v8163 = vadd.f32 %v7974, %v8162
      %v8164 = vpop.f32.mrb[0].mxu0
      %v8165 = vpop.f32.mrb[0].mxu0
      %v8166 = vadd.f32 %v7977, %v8165
      %v8167 = vpop.f32.mrb[0].mxu0
      %8168 = vmatprep.mubr.bf16.mxu0 0
      %8169 = vmatmul.mubr.bf16.gmra.mrb[0].mxu0 %v8045
      %v8170 = vpop.f32.mrb[0].mxu0
      %v8171 = vadd.f32 %v7982, %v8170
      %v8172 = vpop.f32.mrb[0].mxu0
      %v8173 = vpop.f32.mrb[0].mxu0
      %v8174 = vadd.f32 %v7985, %v8173
      %v8175 = vpop.f32.mrb[0].mxu0
      %8176 = vmatprep.mubr.bf16.mxu0 0
      %8177 = vmatmul.mubr.bf16.gmra.mrb[0].mxu0 %v8048
      %v8178 = vpop.f32.mrb[0].mxu0
      %v8179 = vadd.f32 %v7990, %v8178
      %v8180 = vpop.f32.mrb[0].mxu0
      %v8181 = vpop.f32.mrb[0].mxu0
      %v8182 = vadd.f32 %v7993, %v8181
      %v8183 = vpop.f32.mrb[0].mxu0
      %8184 = vmatprep.mubr.bf16.mxu0 0
      %8185 = vmatmul.mubr.bf16.gmra.mrb[0].mxu0 %v8051
      %v8186 = vpop.f32.mrb[0].mxu0
      %v8187 = vadd.f32 %v7998, %v8186
      %v8188 = vpop.f32.mrb[0].mxu0
      %v8189 = vpop.f32.mrb[0].mxu0
      %v8190 = vpop.f32.mrb[0].mxu0
      %8191 = vdwg.mxu0
      %v8192 = vld [vmem:[#allocation3 + $0x8] sm:$0xc0]
      %v8193 = vld [vmem:[#allocation3 + $0x10] sm:$0xff]
      %v8194 = vld [vmem:[#allocation3 + $0x18] sm:$0xff]
      %v8195 = vld [vmem:[#allocation3 + $0x20] sm:$0xff]
      %v8196 = vld [vmem:[#allocation3 + $0x28] sm:$0xff]
      %v8197 = vld [vmem:[#allocation3 + $0x30] sm:$0xff]
      %v8198 = vld [vmem:[#allocation3 + $0x38] sm:$0xff]
      %v8199 = vld [vmem:[#allocation3 + $0x40] sm:$0xff]
      %v8200 = vld [vmem:[#allocation3 + $0x48] sm:$0xff]
      %v8201 = vld [vmem:[#allocation3 + $0x50] sm:$0xff]
      %v8202 = vld [vmem:[#allocation3 + $0x58] sm:$0xff]
      %v8203 = vld [vmem:[#allocation3 + $0x60] sm:$0xff]
      %v8204 = vld [vmem:[#allocation3 + $0x68] sm:$0xff]
      %v8205 = vld [vmem:[#allocation3 + $0x70] sm:$0x3]
      %s8206 = scalar_lea.vmem %s3, 32
      %v8207 = vld [vmem:[%s8206] sm:$0xf]
      %v8208 = vld [vmem:[%s8206 + $0x4] sm:$0xf]
      %v8209 = vld [vmem:[%s8206 + $0x8] sm:$0xf]
      %v8210 = vld [vmem:[%s8206 + $0xc] sm:$0x7]
      %vm8225 = vcmask 1041408
      %v8226 = vrot.slane %v8192, 6
      %v8227 = vrot.slane %v8193, 6
      %v8228 = vsel %vm8225, %v8226, %v8227
      %v8229 = vrot.slane %v8194, 6
      %v8230 = vsel %vm8225, %v8227, %v8229
      %v8231 = vrot.slane %v8195, 6
      %v8232 = vsel %vm8225, %v8229, %v8231
      %v8233 = vrot.slane %v8196, 6
      %v8234 = vsel %vm8225, %v8231, %v8233
      %v8235 = vrot.slane %v8197, 6
      %v8236 = vsel %vm8225, %v8233, %v8235
      %v8237 = vrot.slane %v8198, 6
      %v8238 = vsel %vm8225, %v8235, %v8237
      %v8239 = vrot.slane %v8199, 6
      %v8240 = vsel %vm8225, %v8237, %v8239
      %v8241 = vrot.slane %v8200, 6
      %v8242 = vsel %vm8225, %v8239, %v8241
      %v8243 = vrot.slane %v8201, 6
      %v8244 = vsel %vm8225, %v8241, %v8243
      %v8245 = vrot.slane %v8202, 6
      %v8246 = vsel %vm8225, %v8243, %v8245
      %v8247 = vrot.slane %v8203, 6
      %v8248 = vsel %vm8225, %v8245, %v8247
      %v8249 = vrot.slane %v8204, 6
      %v8250 = vsel %vm8225, %v8247, %v8249
      %v8251 = vrot.slane %v8205, 6
      %v8252 = vsel %vm8225, %v8249, %v8251
      %v8257 = vunpack.c.l.b16 %v8207
      %v8258 = vunpack.c.l.b16 %v8208
      %v8259 = vunpack.c.l.b16 %v8209
      %v8260 = vunpack.c.l.b16 %v8210
      %v8261 = vpack.c.b16 %v8258, %v8257
      %v8262 = vpack.c.b16 %v8260, %v8259
      %v8265 = vsel %vm7743, %v8228, 0
      %v8268 = vsel %vm7743, %v8230, 0
      %v8271 = vsel %vm7743, %v8232, 0
      %v8274 = vsel %vm7743, %v8234, 0
      %v8277 = vsel %vm7743, %v8236, 0
      %v8280 = vsel %vm7743, %v8238, 0
      %v8283 = vsel %vm7743, %v8240, 0
      %v8286 = vsel %vm7743, %v8242, 0
      %v8289 = vsel %vm7743, %v8244, 0
      %v8292 = vsel %vm7743, %v8246, 0
      %v8295 = vsel %vm7743, %v8248, 0
      %v8298 = vsel %vm7743, %v8250, 0
      %v8301 = vsel %vm7743, %v8252, 0
      %v8304 = vsel %vm1041, %v8262, 0
      %8306 = vmatprep.subr.bf16.mxu0 0
      %8307 = vmatpush1.bf16.msra.mxu0 %v8261
      %8308 = vmatprep.subr.bf16.mxu0 0
      %8309 = vmatpush1.bf16.msra.mxu0 %v8304
      %8310 = vmatprep.subr.bf16.mxu0 0
      %8311 = vmatpush1.bf16.msra.mxu0 0
      %8312 = vmatprep.subr.bf16.mxu0 0
      %8313 = vmatpush1.bf16.msra.mxu0 0
      %8314 = vmatprep.subr.bf16.mxu0 0
      %8315 = vmatpush1.bf16.msra.mxu0 0
      %8316 = vmatprep.subr.bf16.mxu0 0
      %8317 = vmatpush1.bf16.msra.mxu0 0
      %8318 = vmatprep.subr.bf16.mxu0 0
      %8319 = vmatpush1.bf16.msra.mxu0 0
      %8320 = vmatprep.subr.bf16.mxu0 0
      %8321 = vmatpush1.bf16.msra.mxu0 0
      %8322 = vmatprep.subr.bf16.mxu0 0
      %8323 = vmatpush1.bf16.msra.mxu0 0
      %8324 = vmatprep.subr.bf16.mxu0 0
      %8325 = vmatpush1.bf16.msra.mxu0 0
      %8326 = vmatprep.subr.bf16.mxu0 0
      %8327 = vmatpush1.bf16.msra.mxu0 0
      %8328 = vmatprep.subr.bf16.mxu0 0
      %8329 = vmatpush1.bf16.msra.mxu0 0
      %8330 = vmatprep.subr.bf16.mxu0 0
      %8331 = vmatpush1.bf16.msra.mxu0 0
      %8332 = vmatprep.subr.bf16.mxu0 0
      %8333 = vmatpush1.bf16.msra.mxu0 0
      %8334 = vmatprep.subr.bf16.mxu0 0
      %8335 = vmatpush1.bf16.msra.mxu0 0
      %8336 = vmatprep.subr.bf16.mxu0 0
      %8337 = vmatpush1.bf16.msra.mxu0 0
      %8338 = vmatprep.mubr.bf16.mxu0 0
      %8339 = vmatmul.mubr.bf16.gmra.mrb[0].mxu0 %v8265
      %v8340 = vpop.f32.mrb[0].mxu0
      %v8341 = vadd.f32 0.0, %v8340
      %v8342 = vpop.f32.mrb[0].mxu0
      %v8343 = vpop.f32.mrb[0].mxu0
      %v8344 = vadd.f32 0.0, %v8343
      %v8345 = vpop.f32.mrb[0].mxu0
      %8346 = vmatprep.mubr.bf16.mxu0 0
      %8347 = vmatmul.mubr.bf16.gmra.mrb[0].mxu0 %v8268
      %v8348 = vpop.f32.mrb[0].mxu0
      %v8349 = vadd.f32 0.0, %v8348
      %v8350 = vpop.f32.mrb[0].mxu0
      %v8351 = vpop.f32.mrb[0].mxu0
      %v8352 = vadd.f32 0.0, %v8351
      %v8353 = vpop.f32.mrb[0].mxu0
      %8354 = vmatprep.mubr.bf16.mxu0 0
      %8355 = vmatmul.mubr.bf16.gmra.mrb[0].mxu0 %v8271
      %v8356 = vpop.f32.mrb[0].mxu0
      %v8357 = vadd.f32 0.0, %v8356
      %v8358 = vpop.f32.mrb[0].mxu0
      %v8359 = vpop.f32.mrb[0].mxu0
      %v8360 = vadd.f32 0.0, %v8359
      %v8361 = vpop.f32.mrb[0].mxu0
      %8362 = vmatprep.mubr.bf16.mxu0 0
      %8363 = vmatmul.mubr.bf16.gmra.mrb[0].mxu0 %v8274
      %v8364 = vpop.f32.mrb[0].mxu0
      %v8365 = vadd.f32 0.0, %v8364
      %v8366 = vpop.f32.mrb[0].mxu0
      %v8367 = vpop.f32.mrb[0].mxu0
      %v8368 = vadd.f32 0.0, %v8367
      %v8369 = vpop.f32.mrb[0].mxu0
      %8370 = vmatprep.mubr.bf16.mxu0 0
      %8371 = vmatmul.mubr.bf16.gmra.mrb[0].mxu0 %v8277
      %v8372 = vpop.f32.mrb[0].mxu0
      %v8373 = vadd.f32 0.0, %v8372
      %v8374 = vpop.f32.mrb[0].mxu0
      %v8375 = vpop.f32.mrb[0].mxu0
      %v8376 = vadd.f32 0.0, %v8375
      %v8377 = vpop.f32.mrb[0].mxu0
      %8378 = vmatprep.mubr.bf16.mxu0 0
      %8379 = vmatmul.mubr.bf16.gmra.mrb[0].mxu0 %v8280
      %v8380 = vpop.f32.mrb[0].mxu0
      %v8381 = vadd.f32 0.0, %v8380
      %v8382 = vpop.f32.mrb[0].mxu0
      %v8383 = vpop.f32.mrb[0].mxu0
      %v8384 = vadd.f32 0.0, %v8383
      %v8385 = vpop.f32.mrb[0].mxu0
      %8386 = vmatprep.mubr.bf16.mxu0 0
      %8387 = vmatmul.mubr.bf16.gmra.mrb[0].mxu0 %v8283
      %v8388 = vpop.f32.mrb[0].mxu0
      %v8389 = vadd.f32 0.0, %v8388
      %v8390 = vpop.f32.mrb[0].mxu0
      %v8391 = vpop.f32.mrb[0].mxu0
      %v8392 = vadd.f32 0.0, %v8391
      %v8393 = vpop.f32.mrb[0].mxu0
      %8394 = vmatprep.mubr.bf16.mxu0 0
      %8395 = vmatmul.mubr.bf16.gmra.mrb[0].mxu0 %v8286
      %v8396 = vpop.f32.mrb[0].mxu0
      %v8397 = vadd.f32 0.0, %v8396
      %v8398 = vpop.f32.mrb[0].mxu0
      %v8399 = vpop.f32.mrb[0].mxu0
      %v8400 = vadd.f32 0.0, %v8399
      %v8401 = vpop.f32.mrb[0].mxu0
      %8402 = vmatprep.mubr.bf16.mxu0 0
      %8403 = vmatmul.mubr.bf16.gmra.mrb[0].mxu0 %v8289
      %v8404 = vpop.f32.mrb[0].mxu0
      %v8405 = vadd.f32 0.0, %v8404
      %v8406 = vpop.f32.mrb[0].mxu0
      %v8407 = vpop.f32.mrb[0].mxu0
      %v8408 = vadd.f32 0.0, %v8407
      %v8409 = vpop.f32.mrb[0].mxu0
      %8410 = vmatprep.mubr.bf16.mxu0 0
      %8411 = vmatmul.mubr.bf16.gmra.mrb[0].mxu0 %v8292
      %v8412 = vpop.f32.mrb[0].mxu0
      %v8413 = vadd.f32 0.0, %v8412
      %v8414 = vpop.f32.mrb[0].mxu0
      %v8415 = vpop.f32.mrb[0].mxu0
      %v8416 = vadd.f32 0.0, %v8415
      %v8417 = vpop.f32.mrb[0].mxu0
      %8418 = vmatprep.mubr.bf16.mxu0 0
      %8419 = vmatmul.mubr.bf16.gmra.mrb[0].mxu0 %v8295
      %v8420 = vpop.f32.mrb[0].mxu0
      %v8421 = vadd.f32 0.0, %v8420
      %v8422 = vpop.f32.mrb[0].mxu0
      %v8423 = vpop.f32.mrb[0].mxu0
      %v8424 = vadd.f32 0.0, %v8423
      %v8425 = vpop.f32.mrb[0].mxu0
      %8426 = vmatprep.mubr.bf16.mxu0 0
      %8427 = vmatmul.mubr.bf16.gmra.mrb[0].mxu0 %v8298
      %v8428 = vpop.f32.mrb[0].mxu0
      %v8429 = vadd.f32 0.0, %v8428
      %v8430 = vpop.f32.mrb[0].mxu0
      %v8431 = vpop.f32.mrb[0].mxu0
      %v8432 = vadd.f32 0.0, %v8431
      %v8433 = vpop.f32.mrb[0].mxu0
      %8434 = vmatprep.mubr.bf16.mxu0 0
      %8435 = vmatmul.mubr.bf16.gmra.mrb[0].mxu0 %v8301
      %v8436 = vpop.f32.mrb[0].mxu0
      %v8437 = vadd.f32 0.0, %v8436
      %v8438 = vpop.f32.mrb[0].mxu0
      %v8439 = vpop.f32.mrb[0].mxu0
      %v8440 = vpop.f32.mrb[0].mxu0
      %8441 = vdwg.mxu0
      %v8442 = vadd.f32 %v8091, %v8341
      %v8443 = vadd.f32 %v8094, %v8344
      %v8444 = vadd.f32 %v8099, %v8349
      %v8445 = vadd.f32 %v8102, %v8352
      %v8446 = vadd.f32 %v8107, %v8357
      %v8447 = vadd.f32 %v8110, %v8360
      %v8448 = vadd.f32 %v8115, %v8365
      %v8449 = vadd.f32 %v8118, %v8368
      %v8450 = vadd.f32 %v8123, %v8373
      %v8451 = vadd.f32 %v8126, %v8376
      %v8452 = vadd.f32 %v8131, %v8381
      %v8453 = vadd.f32 %v8134, %v8384
      %v8454 = vadd.f32 %v8139, %v8389
      %v8455 = vadd.f32 %v8142, %v8392
      %v8456 = vadd.f32 %v8147, %v8397
      %v8457 = vadd.f32 %v8150, %v8400
      %v8458 = vadd.f32 %v8155, %v8405
      %v8459 = vadd.f32 %v8158, %v8408
      %v8460 = vadd.f32 %v8163, %v8413
      %v8461 = vadd.f32 %v8166, %v8416
      %v8462 = vadd.f32 %v8171, %v8421
      %v8463 = vadd.f32 %v8174, %v8424
      %v8464 = vadd.f32 %v8179, %v8429
      %v8465 = vadd.f32 %v8182, %v8432
      %v8466 = vadd.f32 %v8187, %v8437
      %v8467 = vld [vmem:[#allocation3 + $0x10] sm:$0xe0]
      %v8468 = vld [vmem:[#allocation3 + $0x18] sm:$0xff]
      %v8469 = vld [vmem:[#allocation3 + $0x20] sm:$0xff]
      %v8470 = vld [vmem:[#allocation3 + $0x28] sm:$0xff]
      %v8471 = vld [vmem:[#allocation3 + $0x30] sm:$0xff]
      %v8472 = vld [vmem:[#allocation3 + $0x38] sm:$0xff]
      %v8473 = vld [vmem:[#allocation3 + $0x40] sm:$0xff]
      %v8474 = vld [vmem:[#allocation3 + $0x48] sm:$0xff]
      %v8475 = vld [vmem:[#allocation3 + $0x50] sm:$0xff]
      %v8476 = vld [vmem:[#allocation3 + $0x58] sm:$0xff]
      %v8477 = vld [vmem:[#allocation3 + $0x60] sm:$0xff]
      %v8478 = vld [vmem:[#allocation3 + $0x68] sm:$0xff]
      %v8479 = vld [vmem:[#allocation3 + $0x70] sm:$0xff]
      %v8480 = vld [vmem:[#allocation3 + $0x78] sm:$0x1]
      %s8481 = scalar_lea.vmem %s3, 48
      %v8482 = vld [vmem:[%s8481] sm:$0xf]
      %v8483 = vld [vmem:[%s8481 + $0x4] sm:$0xf]
      %v8484 = vld [vmem:[%s8481 + $0x8] sm:$0xf]
      %v8485 = vld [vmem:[%s8481 + $0xc] sm:$0x7]
      %vm8500 = vcmask 1042432
      %v8501 = vrot.slane %v8467, 5
      %v8502 = vrot.slane %v8468, 5
      %v8503 = vsel %vm8500, %v8501, %v8502
      %v8504 = vrot.slane %v8469, 5
      %v8505 = vsel %vm8500, %v8502, %v8504
      %v8506 = vrot.slane %v8470, 5
      %v8507 = vsel %vm8500, %v8504, %v8506
      %v8508 = vrot.slane %v8471, 5
      %v8509 = vsel %vm8500, %v8506, %v8508
      %v8510 = vrot.slane %v8472, 5
      %v8511 = vsel %vm8500, %v8508, %v8510
      %v8512 = vrot.slane %v8473, 5
      %v8513 = vsel %vm8500, %v8510, %v8512
      %v8514 = vrot.slane %v8474, 5
      %v8515 = vsel %vm8500, %v8512, %v8514
      %v8516 = vrot.slane %v8475, 5
      %v8517 = vsel %vm8500, %v8514, %v8516
      %v8518 = vrot.slane %v8476, 5
      %v8519 = vsel %vm8500, %v8516, %v8518
      %v8520 = vrot.slane %v8477, 5
      %v8521 = vsel %vm8500, %v8518, %v8520
      %v8522 = vrot.slane %v8478, 5
      %v8523 = vsel %vm8500, %v8520, %v8522
      %v8524 = vrot.slane %v8479, 5
      %v8525 = vsel %vm8500, %v8522, %v8524
      %v8526 = vrot.slane %v8480, 5
      %v8527 = vsel %vm8500, %v8524, %v8526
      %v8532 = vunpack.c.l.b16 %v8482
      %v8533 = vunpack.c.l.b16 %v8483
      %v8534 = vunpack.c.l.b16 %v8484
      %v8535 = vunpack.c.l.b16 %v8485
      %v8536 = vpack.c.b16 %v8533, %v8532
      %v8537 = vpack.c.b16 %v8535, %v8534
      %v8540 = vsel %vm7743, %v8503, 0
      %v8543 = vsel %vm7743, %v8505, 0
      %v8546 = vsel %vm7743, %v8507, 0
      %v8549 = vsel %vm7743, %v8509, 0
      %v8552 = vsel %vm7743, %v8511, 0
      %v8555 = vsel %vm7743, %v8513, 0
      %v8558 = vsel %vm7743, %v8515, 0
      %v8561 = vsel %vm7743, %v8517, 0
      %v8564 = vsel %vm7743, %v8519, 0
      %v8567 = vsel %vm7743, %v8521, 0
      %v8570 = vsel %vm7743, %v8523, 0
      %v8573 = vsel %vm7743, %v8525, 0
      %v8576 = vsel %vm7743, %v8527, 0
      %v8579 = vsel %vm1041, %v8537, 0
      %8581 = vmatprep.subr.bf16.mxu0 0
      %8582 = vmatpush1.bf16.msra.mxu0 %v8536
      %8583 = vmatprep.subr.bf16.mxu0 0
      %8584 = vmatpush1.bf16.msra.mxu0 %v8579
      %8585 = vmatprep.subr.bf16.mxu0 0
      %8586 = vmatpush1.bf16.msra.mxu0 0
      %8587 = vmatprep.subr.bf16.mxu0 0
      %8588 = vmatpush1.bf16.msra.mxu0 0
      %8589 = vmatprep.subr.bf16.mxu0 0
      %8590 = vmatpush1.bf16.msra.mxu0 0
      %8591 = vmatprep.subr.bf16.mxu0 0
      %8592 = vmatpush1.bf16.msra.mxu0 0
      %8593 = vmatprep.subr.bf16.mxu0 0
      %8594 = vmatpush1.bf16.msra.mxu0 0
      %8595 = vmatprep.subr.bf16.mxu0 0
      %8596 = vmatpush1.bf16.msra.mxu0 0
      %8597 = vmatprep.subr.bf16.mxu0 0
      %8598 = vmatpush1.bf16.msra.mxu0 0
      %8599 = vmatprep.subr.bf16.mxu0 0
      %8600 = vmatpush1.bf16.msra.mxu0 0
      %8601 = vmatprep.subr.bf16.mxu0 0
      %8602 = vmatpush1.bf16.msra.mxu0 0
      %8603 = vmatprep.subr.bf16.mxu0 0
      %8604 = vmatpush1.bf16.msra.mxu0 0
      %8605 = vmatprep.subr.bf16.mxu0 0
      %8606 = vmatpush1.bf16.msra.mxu0 0
      %8607 = vmatprep.subr.bf16.mxu0 0
      %8608 = vmatpush1.bf16.msra.mxu0 0
      %8609 = vmatprep.subr.bf16.mxu0 0
      %8610 = vmatpush1.bf16.msra.mxu0 0
      %8611 = vmatprep.subr.bf16.mxu0 0
      %8612 = vmatpush1.bf16.msra.mxu0 0
      %8613 = vmatprep.mubr.bf16.mxu0 0
      %8614 = vmatmul.mubr.bf16.gmra.mrb[0].mxu0 %v8540
      %v8615 = vpop.f32.mrb[0].mxu0
      %v8616 = vadd.f32 0.0, %v8615
      %v8617 = vpop.f32.mrb[0].mxu0
      %v8618 = vpop.f32.mrb[0].mxu0
      %v8619 = vadd.f32 0.0, %v8618
      %v8620 = vpop.f32.mrb[0].mxu0
      %8621 = vmatprep.mubr.bf16.mxu0 0
      %8622 = vmatmul.mubr.bf16.gmra.mrb[0].mxu0 %v8543
      %v8623 = vpop.f32.mrb[0].mxu0
      %v8624 = vadd.f32 0.0, %v8623
      %v8625 = vpop.f32.mrb[0].mxu0
      %v8626 = vpop.f32.mrb[0].mxu0
      %v8627 = vadd.f32 0.0, %v8626
      %v8628 = vpop.f32.mrb[0].mxu0
      %8629 = vmatprep.mubr.bf16.mxu0 0
      %8630 = vmatmul.mubr.bf16.gmra.mrb[0].mxu0 %v8546
      %v8631 = vpop.f32.mrb[0].mxu0
      %v8632 = vadd.f32 0.0, %v8631
      %v8633 = vpop.f32.mrb[0].mxu0
      %v8634 = vpop.f32.mrb[0].mxu0
      %v8635 = vadd.f32 0.0, %v8634
      %v8636 = vpop.f32.mrb[0].mxu0
      %8637 = vmatprep.mubr.bf16.mxu0 0
      %8638 = vmatmul.mubr.bf16.gmra.mrb[0].mxu0 %v8549
      %v8639 = vpop.f32.mrb[0].mxu0
      %v8640 = vadd.f32 0.0, %v8639
      %v8641 = vpop.f32.mrb[0].mxu0
      %v8642 = vpop.f32.mrb[0].mxu0
      %v8643 = vadd.f32 0.0, %v8642
      %v8644 = vpop.f32.mrb[0].mxu0
      %8645 = vmatprep.mubr.bf16.mxu0 0
      %8646 = vmatmul.mubr.bf16.gmra.mrb[0].mxu0 %v8552
      %v8647 = vpop.f32.mrb[0].mxu0
      %v8648 = vadd.f32 0.0, %v8647
      %v8649 = vpop.f32.mrb[0].mxu0
      %v8650 = vpop.f32.mrb[0].mxu0
      %v8651 = vadd.f32 0.0, %v8650
      %v8652 = vpop.f32.mrb[0].mxu0
      %8653 = vmatprep.mubr.bf16.mxu0 0
      %8654 = vmatmul.mubr.bf16.gmra.mrb[0].mxu0 %v8555
      %v8655 = vpop.f32.mrb[0].mxu0
      %v8656 = vadd.f32 0.0, %v8655
      %v8657 = vpop.f32.mrb[0].mxu0
      %v8658 = vpop.f32.mrb[0].mxu0
      %v8659 = vadd.f32 0.0, %v8658
      %v8660 = vpop.f32.mrb[0].mxu0
      %8661 = vmatprep.mubr.bf16.mxu0 0
      %8662 = vmatmul.mubr.bf16.gmra.mrb[0].mxu0 %v8558
      %v8663 = vpop.f32.mrb[0].mxu0
      %v8664 = vadd.f32 0.0, %v8663
      %v8665 = vpop.f32.mrb[0].mxu0
      %v8666 = vpop.f32.mrb[0].mxu0
      %v8667 = vadd.f32 0.0, %v8666
      %v8668 = vpop.f32.mrb[0].mxu0
      %8669 = vmatprep.mubr.bf16.mxu0 0
      %8670 = vmatmul.mubr.bf16.gmra.mrb[0].mxu0 %v8561
      %v8671 = vpop.f32.mrb[0].mxu0
      %v8672 = vadd.f32 0.0, %v8671
      %v8673 = vpop.f32.mrb[0].mxu0
      %v8674 = vpop.f32.mrb[0].mxu0
      %v8675 = vadd.f32 0.0, %v8674
      %v8676 = vpop.f32.mrb[0].mxu0
      %8677 = vmatprep.mubr.bf16.mxu0 0
      %8678 = vmatmul.mubr.bf16.gmra.mrb[0].mxu0 %v8564
      %v8679 = vpop.f32.mrb[0].mxu0
      %v8680 = vadd.f32 0.0, %v8679
      %v8681 = vpop.f32.mrb[0].mxu0
      %v8682 = vpop.f32.mrb[0].mxu0
      %v8683 = vadd.f32 0.0, %v8682
      %v8684 = vpop.f32.mrb[0].mxu0
      %8685 = vmatprep.mubr.bf16.mxu0 0
      %8686 = vmatmul.mubr.bf16.gmra.mrb[0].mxu0 %v8567
      %v8687 = vpop.f32.mrb[0].mxu0
      %v8688 = vadd.f32 0.0, %v8687
      %v8689 = vpop.f32.mrb[0].mxu0
      %v8690 = vpop.f32.mrb[0].mxu0
      %v8691 = vadd.f32 0.0, %v8690
      %v8692 = vpop.f32.mrb[0].mxu0
      %8693 = vmatprep.mubr.bf16.mxu0 0
      %8694 = vmatmul.mubr.bf16.gmra.mrb[0].mxu0 %v8570
      %v8695 = vpop.f32.mrb[0].mxu0
      %v8696 = vadd.f32 0.0, %v8695
      %v8697 = vpop.f32.mrb[0].mxu0
      %v8698 = vpop.f32.mrb[0].mxu0
      %v8699 = vadd.f32 0.0, %v8698
      %v8700 = vpop.f32.mrb[0].mxu0
      %8701 = vmatprep.mubr.bf16.mxu0 0
      %8702 = vmatmul.mubr.bf16.gmra.mrb[0].mxu0 %v8573
      %v8703 = vpop.f32.mrb[0].mxu0
      %v8704 = vadd.f32 0.0, %v8703
      %v8705 = vpop.f32.mrb[0].mxu0
      %v8706 = vpop.f32.mrb[0].mxu0
      %v8707 = vadd.f32 0.0, %v8706
      %v8708 = vpop.f32.mrb[0].mxu0
      %8709 = vmatprep.mubr.bf16.mxu0 0
      %8710 = vmatmul.mubr.bf16.gmra.mrb[0].mxu0 %v8576
      %v8711 = vpop.f32.mrb[0].mxu0
      %v8712 = vadd.f32 0.0, %v8711
      %v8713 = vpop.f32.mrb[0].mxu0
      %v8714 = vpop.f32.mrb[0].mxu0
      %v8715 = vpop.f32.mrb[0].mxu0
      %8716 = vdwg.mxu0
      %v8717 = vadd.f32 %v8442, %v8616
      %v8718 = vadd.f32 %v8443, %v8619
      %v8719 = vadd.f32 %v8444, %v8624
      %v8720 = vadd.f32 %v8445, %v8627
      %v8721 = vadd.f32 %v8446, %v8632
      %v8722 = vadd.f32 %v8447, %v8635
      %v8723 = vadd.f32 %v8448, %v8640
      %v8724 = vadd.f32 %v8449, %v8643
      %v8725 = vadd.f32 %v8450, %v8648
      %v8726 = vadd.f32 %v8451, %v8651
      %v8727 = vadd.f32 %v8452, %v8656
      %v8728 = vadd.f32 %v8453, %v8659
      %v8729 = vadd.f32 %v8454, %v8664
      %v8730 = vadd.f32 %v8455, %v8667
      %v8731 = vadd.f32 %v8456, %v8672
      %v8732 = vadd.f32 %v8457, %v8675
      %v8733 = vadd.f32 %v8458, %v8680
      %v8734 = vadd.f32 %v8459, %v8683
      %v8735 = vadd.f32 %v8460, %v8688
      %v8736 = vadd.f32 %v8461, %v8691
      %v8737 = vadd.f32 %v8462, %v8696
      %v8738 = vadd.f32 %v8463, %v8699
      %v8739 = vadd.f32 %v8464, %v8704
      %v8740 = vadd.f32 %v8465, %v8707
      %v8741 = vadd.f32 %v8466, %v8712
      %v8742 = vld [vmem:[#allocation3 + $0x18] sm:$0xf0]
      %v8743 = vld [vmem:[#allocation3 + $0x78] sm:$0xff]
      %s8744 = scalar_lea.vmem %s3, 64
      %v8745 = vld [vmem:[%s8744] sm:$0xf]
      %v8746 = vld [vmem:[%s8744 + $0x4] sm:$0xf]
      %v8747 = vld [vmem:[%s8744 + $0x8] sm:$0xf]
      %v8748 = vld [vmem:[%s8744 + $0xc] sm:$0x7]
      %vm8751 = vcmask 1043456
      %v8752 = vrot.slane %v8742, 4
      %v8753 = vrot.slane %v8469, 4
      %v8754 = vsel %vm8751, %v8752, %v8753
      %v8755 = vrot.slane %v8470, 4
      %v8756 = vsel %vm8751, %v8753, %v8755
      %v8757 = vrot.slane %v8471, 4
      %v8758 = vsel %vm8751, %v8755, %v8757
      %v8759 = vrot.slane %v8472, 4
      %v8760 = vsel %vm8751, %v8757, %v8759
      %v8761 = vrot.slane %v8473, 4
      %v8762 = vsel %vm8751, %v8759, %v8761
      %v8763 = vrot.slane %v8474, 4
      %v8764 = vsel %vm8751, %v8761, %v8763
      %v8765 = vrot.slane %v8475, 4
      %v8766 = vsel %vm8751, %v8763, %v8765
      %v8767 = vrot.slane %v8476, 4
      %v8768 = vsel %vm8751, %v8765, %v8767
      %v8769 = vrot.slane %v8477, 4
      %v8770 = vsel %vm8751, %v8767, %v8769
      %v8771 = vrot.slane %v8478, 4
      %v8772 = vsel %vm8751, %v8769, %v8771
      %v8773 = vrot.slane %v8479, 4
      %v8774 = vsel %vm8751, %v8771, %v8773
      %v8775 = vrot.slane %v8743, 4
      %v8776 = vsel %vm8751, %v8773, %v8775
      %v8781 = vunpack.c.l.b16 %v8745
      %v8782 = vunpack.c.l.b16 %v8746
      %v8783 = vunpack.c.l.b16 %v8747
      %v8784 = vunpack.c.l.b16 %v8748
      %v8785 = vpack.c.b16 %v8782, %v8781
      %v8786 = vpack.c.b16 %v8784, %v8783
      %v8789 = vsel %vm7743, %v8754, 0
      %v8792 = vsel %vm7743, %v8756, 0
      %v8795 = vsel %vm7743, %v8758, 0
      %v8798 = vsel %vm7743, %v8760, 0
      %v8801 = vsel %vm7743, %v8762, 0
      %v8804 = vsel %vm7743, %v8764, 0
      %v8807 = vsel %vm7743, %v8766, 0
      %v8810 = vsel %vm7743, %v8768, 0
      %v8813 = vsel %vm7743, %v8770, 0
      %v8816 = vsel %vm7743, %v8772, 0
      %v8819 = vsel %vm7743, %v8774, 0
      %v8822 = vsel %vm7743, %v8776, 0
      %v8825 = vsel %vm7743, %v8775, 0
      %v8828 = vsel %vm1041, %v8786, 0
      %8830 = vmatprep.subr.bf16.mxu0 0
      %8831 = vmatpush1.bf16.msra.mxu0 %v8785
      %8832 = vmatprep.subr.bf16.mxu0 0
      %8833 = vmatpush1.bf16.msra.mxu0 %v8828
      %8834 = vmatprep.subr.bf16.mxu0 0
      %8835 = vmatpush1.bf16.msra.mxu0 0
      %8836 = vmatprep.subr.bf16.mxu0 0
      %8837 = vmatpush1.bf16.msra.mxu0 0
      %8838 = vmatprep.subr.bf16.mxu0 0
      %8839 = vmatpush1.bf16.msra.mxu0 0
      %8840 = vmatprep.subr.bf16.mxu0 0
      %8841 = vmatpush1.bf16.msra.mxu0 0
      %8842 = vmatprep.subr.bf16.mxu0 0
      %8843 = vmatpush1.bf16.msra.mxu0 0
      %8844 = vmatprep.subr.bf16.mxu0 0
      %8845 = vmatpush1.bf16.msra.mxu0 0
      %8846 = vmatprep.subr.bf16.mxu0 0
      %8847 = vmatpush1.bf16.msra.mxu0 0
      %8848 = vmatprep.subr.bf16.mxu0 0
      %8849 = vmatpush1.bf16.msra.mxu0 0
      %8850 = vmatprep.subr.bf16.mxu0 0
      %8851 = vmatpush1.bf16.msra.mxu0 0
      %8852 = vmatprep.subr.bf16.mxu0 0
      %8853 = vmatpush1.bf16.msra.mxu0 0
      %8854 = vmatprep.subr.bf16.mxu0 0
      %8855 = vmatpush1.bf16.msra.mxu0 0
      %8856 = vmatprep.subr.bf16.mxu0 0
      %8857 = vmatpush1.bf16.msra.mxu0 0
      %8858 = vmatprep.subr.bf16.mxu0 0
      %8859 = vmatpush1.bf16.msra.mxu0 0
      %8860 = vmatprep.subr.bf16.mxu0 0
      %8861 = vmatpush1.bf16.msra.mxu0 0
      %8862 = vmatprep.mubr.bf16.mxu0 0
      %8863 = vmatmul.mubr.bf16.gmra.mrb[0].mxu0 %v8789
      %v8864 = vpop.f32.mrb[0].mxu0
      %v8865 = vadd.f32 0.0, %v8864
      %v8866 = vpop.f32.mrb[0].mxu0
      %v8867 = vpop.f32.mrb[0].mxu0
      %v8868 = vadd.f32 0.0, %v8867
      %v8869 = vpop.f32.mrb[0].mxu0
      %8870 = vmatprep.mubr.bf16.mxu0 0
      %8871 = vmatmul.mubr.bf16.gmra.mrb[0].mxu0 %v8792
      %v8872 = vpop.f32.mrb[0].mxu0
      %v8873 = vadd.f32 0.0, %v8872
      %v8874 = vpop.f32.mrb[0].mxu0
      %v8875 = vpop.f32.mrb[0].mxu0
      %v8876 = vadd.f32 0.0, %v8875
      %v8877 = vpop.f32.mrb[0].mxu0
      %8878 = vmatprep.mubr.bf16.mxu0 0
      %8879 = vmatmul.mubr.bf16.gmra.mrb[0].mxu0 %v8795
      %v8880 = vpop.f32.mrb[0].mxu0
      %v8881 = vadd.f32 0.0, %v8880
      %v8882 = vpop.f32.mrb[0].mxu0
      %v8883 = vpop.f32.mrb[0].mxu0
      %v8884 = vadd.f32 0.0, %v8883
      %v8885 = vpop.f32.mrb[0].mxu0
      %8886 = vmatprep.mubr.bf16.mxu0 0
      %8887 = vmatmul.mubr.bf16.gmra.mrb[0].mxu0 %v8798
      %v8888 = vpop.f32.mrb[0].mxu0
      %v8889 = vadd.f32 0.0, %v8888
      %v8890 = vpop.f32.mrb[0].mxu0
      %v8891 = vpop.f32.mrb[0].mxu0
      %v8892 = vadd.f32 0.0, %v8891
      %v8893 = vpop.f32.mrb[0].mxu0
      %8894 = vmatprep.mubr.bf16.mxu0 0
      %8895 = vmatmul.mubr.bf16.gmra.mrb[0].mxu0 %v8801
      %v8896 = vpop.f32.mrb[0].mxu0
      %v8897 = vadd.f32 0.0, %v8896
      %v8898 = vpop.f32.mrb[0].mxu0
      %v8899 = vpop.f32.mrb[0].mxu0
      %v8900 = vadd.f32 0.0, %v8899
      %v8901 = vpop.f32.mrb[0].mxu0
      %8902 = vmatprep.mubr.bf16.mxu0 0
      %8903 = vmatmul.mubr.bf16.gmra.mrb[0].mxu0 %v8804
      %v8904 = vpop.f32.mrb[0].mxu0
      %v8905 = vadd.f32 0.0, %v8904
      %v8906 = vpop.f32.mrb[0].mxu0
      %v8907 = vpop.f32.mrb[0].mxu0
      %v8908 = vadd.f32 0.0, %v8907
      %v8909 = vpop.f32.mrb[0].mxu0
      %8910 = vmatprep.mubr.bf16.mxu0 0
      %8911 = vmatmul.mubr.bf16.gmra.mrb[0].mxu0 %v8807
      %v8912 = vpop.f32.mrb[0].mxu0
      %v8913 = vadd.f32 0.0, %v8912
      %v8914 = vpop.f32.mrb[0].mxu0
      %v8915 = vpop.f32.mrb[0].mxu0
      %v8916 = vadd.f32 0.0, %v8915
      %v8917 = vpop.f32.mrb[0].mxu0
      %8918 = vmatprep.mubr.bf16.mxu0 0
      %8919 = vmatmul.mubr.bf16.gmra.mrb[0].mxu0 %v8810
      %v8920 = vpop.f32.mrb[0].mxu0
      %v8921 = vadd.f32 0.0, %v8920
      %v8922 = vpop.f32.mrb[0].mxu0
      %v8923 = vpop.f32.mrb[0].mxu0
      %v8924 = vadd.f32 0.0, %v8923
      %v8925 = vpop.f32.mrb[0].mxu0
      %8926 = vmatprep.mubr.bf16.mxu0 0
      %8927 = vmatmul.mubr.bf16.gmra.mrb[0].mxu0 %v8813
      %v8928 = vpop.f32.mrb[0].mxu0
      %v8929 = vadd.f32 0.0, %v8928
      %v8930 = vpop.f32.mrb[0].mxu0
      %v8931 = vpop.f32.mrb[0].mxu0
      %v8932 = vadd.f32 0.0, %v8931
      %v8933 = vpop.f32.mrb[0].mxu0
      %8934 = vmatprep.mubr.bf16.mxu0 0
      %8935 = vmatmul.mubr.bf16.gmra.mrb[0].mxu0 %v8816
      %v8936 = vpop.f32.mrb[0].mxu0
      %v8937 = vadd.f32 0.0, %v8936
      %v8938 = vpop.f32.mrb[0].mxu0
      %v8939 = vpop.f32.mrb[0].mxu0
      %v8940 = vadd.f32 0.0, %v8939
      %v8941 = vpop.f32.mrb[0].mxu0
      %8942 = vmatprep.mubr.bf16.mxu0 0
      %8943 = vmatmul.mubr.bf16.gmra.mrb[0].mxu0 %v8819
      %v8944 = vpop.f32.mrb[0].mxu0
      %v8945 = vadd.f32 0.0, %v8944
      %v8946 = vpop.f32.mrb[0].mxu0
      %v8947 = vpop.f32.mrb[0].mxu0
      %v8948 = vadd.f32 0.0, %v8947
      %v8949 = vpop.f32.mrb[0].mxu0
      %8950 = vmatprep.mubr.bf16.mxu0 0
      %8951 = vmatmul.mubr.bf16.gmra.mrb[0].mxu0 %v8822
      %v8952 = vpop.f32.mrb[0].mxu0
      %v8953 = vadd.f32 0.0, %v8952
      %v8954 = vpop.f32.mrb[0].mxu0
      %v8955 = vpop.f32.mrb[0].mxu0
      %v8956 = vadd.f32 0.0, %v8955
      %v8957 = vpop.f32.mrb[0].mxu0
      %8958 = vmatprep.mubr.bf16.mxu0 0
      %8959 = vmatmul.mubr.bf16.gmra.mrb[0].mxu0 %v8825
      %v8960 = vpop.f32.mrb[0].mxu0
      %v8961 = vadd.f32 0.0, %v8960
      %v8962 = vpop.f32.mrb[0].mxu0
      %v8963 = vpop.f32.mrb[0].mxu0
      %v8964 = vpop.f32.mrb[0].mxu0
      %8965 = vdwg.mxu0
      %v8966 = vadd.f32 %v8717, %v8865
      %v8967 = vadd.f32 %v8718, %v8868
      %v8968 = vadd.f32 %v8719, %v8873
      %v8969 = vadd.f32 %v8720, %v8876
      %v8970 = vadd.f32 %v8721, %v8881
      %v8971 = vadd.f32 %v8722, %v8884
      %v8972 = vadd.f32 %v8723, %v8889
      %v8973 = vadd.f32 %v8724, %v8892
      %v8974 = vadd.f32 %v8725, %v8897
      %v8975 = vadd.f32 %v8726, %v8900
      %v8976 = vadd.f32 %v8727, %v8905
      %v8977 = vadd.f32 %v8728, %v8908
      %v8978 = vadd.f32 %v8729, %v8913
      %v8979 = vadd.f32 %v8730, %v8916
      %v8980 = vadd.f32 %v8731, %v8921
      %v8981 = vadd.f32 %v8732, %v8924
      %v8982 = vadd.f32 %v8733, %v8929
      %v8983 = vadd.f32 %v8734, %v8932
      %v8984 = vadd.f32 %v8735, %v8937
      %v8985 = vadd.f32 %v8736, %v8940
      %v8986 = vadd.f32 %v8737, %v8945
      %v8987 = vadd.f32 %v8738, %v8948
      %v8988 = vadd.f32 %v8739, %v8953
      %v8989 = vadd.f32 %v8740, %v8956
      %v8990 = vadd.f32 %v8741, %v8961
      %v8991 = vld [vmem:[%s4] sm:$0x1]
      %v8993 = vlaneseq
      %v8994 = vshrl.u32 %v8993, 7
      %v8995 = vsub.s32 0, %v8994
      %v8996 = vrot.slane %v8991, %v8995
      %v8998 = vadd.f32 %v8966, %v8996
      %v8999 = vadd.f32 %v8967, %v8996
      %v9000 = vadd.f32 %v8968, %v8996
      %v9001 = vadd.f32 %v8969, %v8996
      %v9002 = vadd.f32 %v8970, %v8996
      %v9003 = vadd.f32 %v8971, %v8996
      %v9004 = vadd.f32 %v8972, %v8996
      %v9005 = vadd.f32 %v8973, %v8996
      %v9006 = vadd.f32 %v8974, %v8996
      %v9007 = vadd.f32 %v8975, %v8996
      %v9008 = vadd.f32 %v8976, %v8996
      %v9009 = vadd.f32 %v8977, %v8996
      %v9010 = vadd.f32 %v8978, %v8996
      %v9011 = vadd.f32 %v8979, %v8996
      %v9012 = vadd.f32 %v8980, %v8996
      %v9013 = vadd.f32 %v8981, %v8996
      %v9014 = vadd.f32 %v8982, %v8996
      %v9015 = vadd.f32 %v8983, %v8996
      %v9016 = vadd.f32 %v8984, %v8996
      %v9017 = vadd.f32 %v8985, %v8996
      %v9018 = vadd.f32 %v8986, %v8996
      %v9019 = vadd.f32 %v8987, %v8996
      %v9020 = vadd.f32 %v8988, %v8996
      %v9021 = vadd.f32 %v8989, %v8996
      %v9022 = vadd.f32 %v8990, %v8996
      %v9023 = vmax.f32 %v8998, 0.0
      %v9024 = vmax.f32 %v8999, 0.0
      %v9025 = vmax.f32 %v9000, 0.0
      %v9026 = vmax.f32 %v9001, 0.0
      %v9027 = vmax.f32 %v9002, 0.0
      %v9028 = vmax.f32 %v9003, 0.0
      %v9029 = vmax.f32 %v9004, 0.0
      %v9030 = vmax.f32 %v9005, 0.0
      %v9031 = vmax.f32 %v9006, 0.0
      %v9032 = vmax.f32 %v9007, 0.0
      %v9033 = vmax.f32 %v9008, 0.0
      %v9034 = vmax.f32 %v9009, 0.0
      %v9035 = vmax.f32 %v9010, 0.0
      %v9036 = vmax.f32 %v9011, 0.0
      %v9037 = vmax.f32 %v9012, 0.0
      %v9038 = vmax.f32 %v9013, 0.0
      %v9039 = vmax.f32 %v9014, 0.0
      %v9040 = vmax.f32 %v9015, 0.0
      %v9041 = vmax.f32 %v9016, 0.0
      %v9042 = vmax.f32 %v9017, 0.0
      %v9043 = vmax.f32 %v9018, 0.0
      %v9044 = vmax.f32 %v9019, 0.0
      %v9045 = vmax.f32 %v9020, 0.0
      %v9046 = vmax.f32 %v9021, 0.0
      %v9047 = vmax.f32 %v9022, 0.0
      %vm9048 = vcmask 130048
      %9049 = vst.msk [vmem:[#allocation4] sm:$0xff] %vm9048, %v9023
      %9050 = vst.msk [vmem:[#allocation4 + $0x8] sm:$0xff] %vm9048, %v9024
      %9051 = vst.msk [vmem:[#allocation4 + $0x10] sm:$0xff] %vm9048, %v9025
      %9052 = vst.msk [vmem:[#allocation4 + $0x18] sm:$0xff] %vm9048, %v9026
      %9053 = vst.msk [vmem:[#allocation4 + $0x20] sm:$0xff] %vm9048, %v9027
      %9054 = vst.msk [vmem:[#allocation4 + $0x28] sm:$0xff] %vm9048, %v9028
      %9055 = vst.msk [vmem:[#allocation4 + $0x30] sm:$0xff] %vm9048, %v9029
      %9056 = vst.msk [vmem:[#allocation4 + $0x38] sm:$0xff] %vm9048, %v9030
      %9057 = vst.msk [vmem:[#allocation4 + $0x40] sm:$0xff] %vm9048, %v9031
      %9058 = vst.msk [vmem:[#allocation4 + $0x48] sm:$0xff] %vm9048, %v9032
      %9059 = vst.msk [vmem:[#allocation4 + $0x50] sm:$0xff] %vm9048, %v9033
      %9060 = vst.msk [vmem:[#allocation4 + $0x58] sm:$0xff] %vm9048, %v9034
      %9061 = vst.msk [vmem:[#allocation4 + $0x60] sm:$0xff] %vm9048, %v9035
      %9062 = vst.msk [vmem:[#allocation4 + $0x68] sm:$0xff] %vm9048, %v9036
      %9063 = vst.msk [vmem:[#allocation4 + $0x70] sm:$0xff] %vm9048, %v9037
      %9064 = vst.msk [vmem:[#allocation4 + $0x78] sm:$0xff] %vm9048, %v9038
      %9065 = vst.msk [vmem:[#allocation4 + $0x80] sm:$0xff] %vm9048, %v9039
      %9066 = vst.msk [vmem:[#allocation4 + $0x88] sm:$0xff] %vm9048, %v9040
      %9067 = vst.msk [vmem:[#allocation4 + $0x90] sm:$0xff] %vm9048, %v9041
      %9068 = vst.msk [vmem:[#allocation4 + $0x98] sm:$0xff] %vm9048, %v9042
      %9069 = vst.msk [vmem:[#allocation4 + $0xa0] sm:$0xff] %vm9048, %v9043
      %9070 = vst.msk [vmem:[#allocation4 + $0xa8] sm:$0xff] %vm9048, %v9044
      %9071 = vst.msk [vmem:[#allocation4 + $0xb0] sm:$0xff] %vm9048, %v9045
      %9072 = vst.msk [vmem:[#allocation4 + $0xb8] sm:$0xff] %vm9048, %v9046
      %9073 = vst.msk [vmem:[#allocation4 + $0xc0] sm:$0xff] %vm9048, %v9047
      %v9074 = vld [vmem:[#allocation4] ss:$2 sm:$0x1f]
      %s9075 = scalar_lea.vmem [#allocation4], 1
      %v9076 = vld [vmem:[%s9075] ss:$2 sm:$0x1f]
      %s9077 = scalar_lea.vmem [#allocation4], 14
      %v9078 = vld [vmem:[%s9077] ss:$2 sm:$0x1f]
      %s9079 = scalar_lea.vmem [#allocation4], 15
      %v9080 = vld [vmem:[%s9079] ss:$2 sm:$0x1f]
      %v9081 = vmax.f32 %v9074, %v9076
      %v9082 = vmax.f32 %v9078, %v9080
      %v9083 = vmax.f32 %v9081, %v9082
      %v9085 = vrot.slane %v9083, 1
      %9086 = vrot.lane.b32.xlu0 %v9085, 16
      %v9087 = vpop.permute.xlu0 %9086
      %v9089 = vrot.slane %v9083, 2
      %9090 = vrot.lane.b32.xlu0 %v9089, 32
      %v9091 = vpop.permute.xlu0 %9090
      %v9093 = vrot.slane %v9083, 3
      %9094 = vrot.lane.b32.xlu0 %v9093, 48
      %v9095 = vpop.permute.xlu0 %9094
      %v9097 = vrot.slane %v9083, 4
      %9098 = vrot.lane.b32.xlu0 %v9097, 64
      %v9099 = vpop.permute.xlu0 %9098
      %v9101 = vsel %vm9048, %v9083, %v9087
      %vm9102 = vcmask 261120
      %v9103 = vsel %vm9102, %v9101, %v9091
      %vm9104 = vcmask 392192
      %v9105 = vsel %vm9104, %v9103, %v9095
      %vm9106 = vcmask 523264
      %v9107 = vsel %vm9106, %v9105, %v9099
      %v9108 = vpack.c.bf16 %v9107, %v9107
      %v9109 = vld [vmem:[%s5] sm:$0xf]
      %v9110 = vld [vmem:[%s5 + $0x4] sm:$0xf]
      %v9111 = vld [vmem:[%s5 + $0x8] sm:$0xf]
      %v9112 = vld [vmem:[%s5 + $0xc] sm:$0xf]
      %v9113 = vld [vmem:[%s5 + $0x10] sm:$0xf]
      %v9114 = vld [vmem:[%s5 + $0x14] sm:$0xf]
      %v9115 = vld [vmem:[%s5 + $0x18] sm:$0xf]
      %v9116 = vld [vmem:[%s5 + $0x1c] sm:$0xf]
      %v9117 = vld [vmem:[%s5 + $0x20] sm:$0xf]
      %v9118 = vld [vmem:[%s5 + $0x24] sm:$0xf]
      %s9119 = scalar_lea.vmem [#allocation4], 28
      %v9120 = vld [vmem:[%s9119] ss:$2 sm:$0x1f]
      %s9121 = scalar_lea.vmem [#allocation4], 29
      %v9122 = vld [vmem:[%s9121] ss:$2 sm:$0x1f]
      %s9123 = scalar_lea.vmem [#allocation4], 42
      %v9124 = vld [vmem:[%s9123] ss:$2 sm:$0x1f]
      %s9125 = scalar_lea.vmem [#allocation4], 43
      %v9126 = vld [vmem:[%s9125] ss:$2 sm:$0x1f]
      %v9127 = vmax.f32 %v9120, %v9122
      %v9128 = vmax.f32 %v9124, %v9126
      %v9129 = vmax.f32 %v9127, %v9128
      %v9131 = vrot.slane %v9129, 1
      %9132 = vrot.lane.b32.xlu0 %v9131, 16
      %v9133 = vpop.permute.xlu0 %9132
      %v9135 = vrot.slane %v9129, 2
      %9136 = vrot.lane.b32.xlu0 %v9135, 32
      %v9137 = vpop.permute.xlu0 %9136
      %v9139 = vrot.slane %v9129, 3
      %9140 = vrot.lane.b32.xlu0 %v9139, 48
      %v9141 = vpop.permute.xlu0 %9140
      %v9143 = vrot.slane %v9129, 4
      %9144 = vrot.lane.b32.xlu0 %v9143, 64
      %v9145 = vpop.permute.xlu0 %9144
      %v9147 = vsel %vm9048, %v9129, %v9133
      %v9148 = vsel %vm9102, %v9147, %v9137
      %v9149 = vsel %vm9104, %v9148, %v9141
      %v9150 = vsel %vm9106, %v9149, %v9145
      %v9151 = vpack.c.bf16 %v9150, %v9150
      %s9152 = scalar_lea.vmem %s5, 40
      %v9153 = vld [vmem:[%s9152] sm:$0xf]
      %v9154 = vld [vmem:[%s9152 + $0x4] sm:$0xf]
      %v9155 = vld [vmem:[%s9152 + $0x8] sm:$0xf]
      %v9156 = vld [vmem:[%s9152 + $0xc] sm:$0xf]
      %v9157 = vld [vmem:[%s9152 + $0x10] sm:$0xf]
      %v9158 = vld [vmem:[%s9152 + $0x14] sm:$0xf]
      %v9159 = vld [vmem:[%s9152 + $0x18] sm:$0xf]
      %v9160 = vld [vmem:[%s9152 + $0x1c] sm:$0xf]
      %v9161 = vld [vmem:[%s9152 + $0x20] sm:$0xf]
      %v9162 = vld [vmem:[%s9152 + $0x24] sm:$0xf]
      %v9173 = vunpack.c.l.b16 %v9153
      %v9174 = vunpack.c.l.b16 %v9154
      %v9175 = vunpack.c.l.b16 %v9155
      %v9176 = vunpack.c.l.b16 %v9156
      %v9177 = vunpack.c.l.b16 %v9157
      %v9178 = vunpack.c.l.b16 %v9158
      %v9179 = vunpack.c.l.b16 %v9159
      %v9180 = vunpack.c.l.b16 %v9160
      %v9181 = vunpack.c.l.b16 %v9161
      %v9182 = vunpack.c.l.b16 %v9162
      %v9183 = vpack.c.b16 %v9174, %v9173
      %v9184 = vpack.c.b16 %v9176, %v9175
      %v9185 = vpack.c.b16 %v9178, %v9177
      %v9186 = vpack.c.b16 %v9180, %v9179
      %v9187 = vpack.c.b16 %v9182, %v9181
      %vm9193 = vcmask 654336
      %v9195 = vsel %vm9193, %v9151, 0
      %9197 = vmatprep.subr.bf16.mxu0 0
      %9198 = vmatpush1.bf16.msra.mxu0 %v9183
      %9199 = vmatprep.subr.bf16.mxu0 0
      %9200 = vmatpush1.bf16.msra.mxu0 %v9184
      %9201 = vmatprep.subr.bf16.mxu0 0
      %9202 = vmatpush1.bf16.msra.mxu0 %v9185
      %9203 = vmatprep.subr.bf16.mxu0 0
      %9204 = vmatpush1.bf16.msra.mxu0 %v9186
      %9205 = vmatprep.subr.bf16.mxu0 0
      %9206 = vmatpush1.bf16.msra.mxu0 %v9187
      %9207 = vmatprep.subr.bf16.mxu0 0
      %9208 = vmatpush1.bf16.msra.mxu0 0
      %9209 = vmatprep.subr.bf16.mxu0 0
      %9210 = vmatpush1.bf16.msra.mxu0 0
      %9211 = vmatprep.subr.bf16.mxu0 0
      %9212 = vmatpush1.bf16.msra.mxu0 0
      %9213 = vmatprep.subr.bf16.mxu0 0
      %9214 = vmatpush1.bf16.msra.mxu0 0
      %9215 = vmatprep.subr.bf16.mxu0 0
      %9216 = vmatpush1.bf16.msra.mxu0 0
      %9217 = vmatprep.subr.bf16.mxu0 0
      %9218 = vmatpush1.bf16.msra.mxu0 0
      %9219 = vmatprep.subr.bf16.mxu0 0
      %9220 = vmatpush1.bf16.msra.mxu0 0
      %9221 = vmatprep.subr.bf16.mxu0 0
      %9222 = vmatpush1.bf16.msra.mxu0 0
      %9223 = vmatprep.subr.bf16.mxu0 0
      %9224 = vmatpush1.bf16.msra.mxu0 0
      %9225 = vmatprep.subr.bf16.mxu0 0
      %9226 = vmatpush1.bf16.msra.mxu0 0
      %9227 = vmatprep.subr.bf16.mxu0 0
      %9228 = vmatpush1.bf16.msra.mxu0 0
      %9229 = vmatprep.mubr.bf16.mxu0 0
      %9230 = vmatmul.mubr.bf16.gmra.mrb[0].mxu0 %v9195
      %v9231 = vpop.f32.mrb[0].mxu0
      %v9232 = vadd.f32 0.0, %v9231
      %v9233 = vpop.f32.mrb[0].mxu0
      %v9234 = vpop.f32.mrb[0].mxu0
      %v9235 = vpop.f32.mrb[0].mxu0
      %9236 = vdwg.mxu0
      %v9247 = vunpack.c.l.b16 %v9109
      %v9248 = vunpack.c.l.b16 %v9110
      %v9249 = vunpack.c.l.b16 %v9111
      %v9250 = vunpack.c.l.b16 %v9112
      %v9251 = vunpack.c.l.b16 %v9113
      %v9252 = vunpack.c.l.b16 %v9114
      %v9253 = vunpack.c.l.b16 %v9115
      %v9254 = vunpack.c.l.b16 %v9116
      %v9255 = vunpack.c.l.b16 %v9117
      %v9256 = vunpack.c.l.b16 %v9118
      %v9257 = vpack.c.b16 %v9248, %v9247
      %v9258 = vpack.c.b16 %v9250, %v9249
      %v9259 = vpack.c.b16 %v9252, %v9251
      %v9260 = vpack.c.b16 %v9254, %v9253
      %v9261 = vpack.c.b16 %v9256, %v9255
      %v9268 = vsel %vm9193, %v9108, 0
      %9270 = vmatprep.subr.bf16.mxu0 0
      %9271 = vmatpush1.bf16.msra.mxu0 %v9257
      %9272 = vmatprep.subr.bf16.mxu0 0
      %9273 = vmatpush1.bf16.msra.mxu0 %v9258
      %9274 = vmatprep.subr.bf16.mxu0 0
      %9275 = vmatpush1.bf16.msra.mxu0 %v9259
      %9276 = vmatprep.subr.bf16.mxu0 0
      %9277 = vmatpush1.bf16.msra.mxu0 %v9260
      %9278 = vmatprep.subr.bf16.mxu0 0
      %9279 = vmatpush1.bf16.msra.mxu0 %v9261
      %9280 = vmatprep.subr.bf16.mxu0 0
      %9281 = vmatpush1.bf16.msra.mxu0 0
      %9282 = vmatprep.subr.bf16.mxu0 0
      %9283 = vmatpush1.bf16.msra.mxu0 0
      %9284 = vmatprep.subr.bf16.mxu0 0
      %9285 = vmatpush1.bf16.msra.mxu0 0
      %9286 = vmatprep.subr.bf16.mxu0 0
      %9287 = vmatpush1.bf16.msra.mxu0 0
      %9288 = vmatprep.subr.bf16.mxu0 0
      %9289 = vmatpush1.bf16.msra.mxu0 0
      %9290 = vmatprep.subr.bf16.mxu0 0
      %9291 = vmatpush1.bf16.msra.mxu0 0
      %9292 = vmatprep.subr.bf16.mxu0 0
      %9293 = vmatpush1.bf16.msra.mxu0 0
      %9294 = vmatprep.subr.bf16.mxu0 0
      %9295 = vmatpush1.bf16.msra.mxu0 0
      %9296 = vmatprep.subr.bf16.mxu0 0
      %9297 = vmatpush1.bf16.msra.mxu0 0
      %9298 = vmatprep.subr.bf16.mxu0 0
      %9299 = vmatpush1.bf16.msra.mxu0 0
      %9300 = vmatprep.subr.bf16.mxu0 0
      %9301 = vmatpush1.bf16.msra.mxu0 0
      %9302 = vmatprep.mubr.bf16.mxu0 0
      %9303 = vmatmul.mubr.bf16.gmra.mrb[0].mxu0 %v9268
      %v9304 = vpop.f32.mrb[0].mxu0
      %v9305 = vadd.f32 %v9232, %v9304
      %v9306 = vpop.f32.mrb[0].mxu0
      %v9307 = vpop.f32.mrb[0].mxu0
      %v9308 = vpop.f32.mrb[0].mxu0
      %9309 = vdwg.mxu0
      %s9310 = scalar_lea.vmem [#allocation4], 56
      %v9311 = vld [vmem:[%s9310] ss:$2 sm:$0x1f]
      %s9312 = scalar_lea.vmem [#allocation4], 57
      %v9313 = vld [vmem:[%s9312] ss:$2 sm:$0x1f]
      %s9314 = scalar_lea.vmem [#allocation4], 70
      %v9315 = vld [vmem:[%s9314] ss:$2 sm:$0x1f]
      %s9316 = scalar_lea.vmem [#allocation4], 71
      %v9317 = vld [vmem:[%s9316] ss:$2 sm:$0x1f]
      %v9318 = vmax.f32 %v9311, %v9313
      %v9319 = vmax.f32 %v9315, %v9317
      %v9320 = vmax.f32 %v9318, %v9319
      %v9322 = vrot.slane %v9320, 1
      %9323 = vrot.lane.b32.xlu0 %v9322, 16
      %v9324 = vpop.permute.xlu0 %9323
      %v9326 = vrot.slane %v9320, 2
      %9327 = vrot.lane.b32.xlu0 %v9326, 32
      %v9328 = vpop.permute.xlu0 %9327
      %v9330 = vrot.slane %v9320, 3
      %9331 = vrot.lane.b32.xlu0 %v9330, 48
      %v9332 = vpop.permute.xlu0 %9331
      %v9334 = vrot.slane %v9320, 4
      %9335 = vrot.lane.b32.xlu0 %v9334, 64
      %v9336 = vpop.permute.xlu0 %9335
      %v9338 = vsel %vm9048, %v9320, %v9324
      %v9339 = vsel %vm9102, %v9338, %v9328
      %v9340 = vsel %vm9104, %v9339, %v9332
      %v9341 = vsel %vm9106, %v9340, %v9336
      %v9342 = vpack.c.bf16 %v9341, %v9341
      %s9343 = scalar_lea.vmem %s5, 80
      %v9344 = vld [vmem:[%s9343] sm:$0xf]
      %v9345 = vld [vmem:[%s9343 + $0x4] sm:$0xf]
      %v9346 = vld [vmem:[%s9343 + $0x8] sm:$0xf]
      %v9347 = vld [vmem:[%s9343 + $0xc] sm:$0xf]
      %v9348 = vld [vmem:[%s9343 + $0x10] sm:$0xf]
      %v9349 = vld [vmem:[%s9343 + $0x14] sm:$0xf]
      %v9350 = vld [vmem:[%s9343 + $0x18] sm:$0xf]
      %v9351 = vld [vmem:[%s9343 + $0x1c] sm:$0xf]
      %v9352 = vld [vmem:[%s9343 + $0x20] sm:$0xf]
      %v9353 = vld [vmem:[%s9343 + $0x24] sm:$0xf]
      %v9364 = vunpack.c.l.b16 %v9344
      %v9365 = vunpack.c.l.b16 %v9345
      %v9366 = vunpack.c.l.b16 %v9346
      %v9367 = vunpack.c.l.b16 %v9347
      %v9368 = vunpack.c.l.b16 %v9348
      %v9369 = vunpack.c.l.b16 %v9349
      %v9370 = vunpack.c.l.b16 %v9350
      %v9371 = vunpack.c.l.b16 %v9351
      %v9372 = vunpack.c.l.b16 %v9352
      %v9373 = vunpack.c.l.b16 %v9353
      %v9374 = vpack.c.b16 %v9365, %v9364
      %v9375 = vpack.c.b16 %v9367, %v9366
      %v9376 = vpack.c.b16 %v9369, %v9368
      %v9377 = vpack.c.b16 %v9371, %v9370
      %v9378 = vpack.c.b16 %v9373, %v9372
      %v9385 = vsel %vm9193, %v9342, 0
      %9387 = vmatprep.subr.bf16.mxu0 0
      %9388 = vmatpush1.bf16.msra.mxu0 %v9374
      %9389 = vmatprep.subr.bf16.mxu0 0
      %9390 = vmatpush1.bf16.msra.mxu0 %v9375
      %9391 = vmatprep.subr.bf16.mxu0 0
      %9392 = vmatpush1.bf16.msra.mxu0 %v9376
      %9393 = vmatprep.subr.bf16.mxu0 0
      %9394 = vmatpush1.bf16.msra.mxu0 %v9377
      %9395 = vmatprep.subr.bf16.mxu0 0
      %9396 = vmatpush1.bf16.msra.mxu0 %v9378
      %9397 = vmatprep.subr.bf16.mxu0 0
      %9398 = vmatpush1.bf16.msra.mxu0 0
      %9399 = vmatprep.subr.bf16.mxu0 0
      %9400 = vmatpush1.bf16.msra.mxu0 0
      %9401 = vmatprep.subr.bf16.mxu0 0
      %9402 = vmatpush1.bf16.msra.mxu0 0
      %9403 = vmatprep.subr.bf16.mxu0 0
      %9404 = vmatpush1.bf16.msra.mxu0 0
      %9405 = vmatprep.subr.bf16.mxu0 0
      %9406 = vmatpush1.bf16.msra.mxu0 0
      %9407 = vmatprep.subr.bf16.mxu0 0
      %9408 = vmatpush1.bf16.msra.mxu0 0
      %9409 = vmatprep.subr.bf16.mxu0 0
      %9410 = vmatpush1.bf16.msra.mxu0 0
      %9411 = vmatprep.subr.bf16.mxu0 0
      %9412 = vmatpush1.bf16.msra.mxu0 0
      %9413 = vmatprep.subr.bf16.mxu0 0
      %9414 = vmatpush1.bf16.msra.mxu0 0
      %9415 = vmatprep.subr.bf16.mxu0 0
      %9416 = vmatpush1.bf16.msra.mxu0 0
      %9417 = vmatprep.subr.bf16.mxu0 0
      %9418 = vmatpush1.bf16.msra.mxu0 0
      %9419 = vmatprep.mubr.bf16.mxu0 0
      %9420 = vmatmul.mubr.bf16.gmra.mrb[0].mxu0 %v9385
      %v9421 = vpop.f32.mrb[0].mxu0
      %v9422 = vadd.f32 0.0, %v9421
      %v9423 = vpop.f32.mrb[0].mxu0
      %v9424 = vpop.f32.mrb[0].mxu0
      %v9425 = vpop.f32.mrb[0].mxu0
      %9426 = vdwg.mxu0
      %v9427 = vadd.f32 %v9305, %v9422
      %s9428 = scalar_lea.vmem [#allocation4], 84
      %v9429 = vld [vmem:[%s9428] ss:$2 sm:$0x1f]
      %s9430 = scalar_lea.vmem [#allocation4], 85
      %v9431 = vld [vmem:[%s9430] ss:$2 sm:$0x1f]
      %s9432 = scalar_lea.vmem [#allocation4], 98
      %v9433 = vld [vmem:[%s9432] ss:$2 sm:$0x1f]
      %s9434 = scalar_lea.vmem [#allocation4], 99
      %v9435 = vld [vmem:[%s9434] ss:$2 sm:$0x1f]
      %v9436 = vmax.f32 %v9429, %v9431
      %v9437 = vmax.f32 %v9433, %v9435
      %v9438 = vmax.f32 %v9436, %v9437
      %v9440 = vrot.slane %v9438, 1
      %9441 = vrot.lane.b32.xlu0 %v9440, 16
      %v9442 = vpop.permute.xlu0 %9441
      %v9444 = vrot.slane %v9438, 2
      %9445 = vrot.lane.b32.xlu0 %v9444, 32
      %v9446 = vpop.permute.xlu0 %9445
      %v9448 = vrot.slane %v9438, 3
      %9449 = vrot.lane.b32.xlu0 %v9448, 48
      %v9450 = vpop.permute.xlu0 %9449
      %v9452 = vrot.slane %v9438, 4
      %9453 = vrot.lane.b32.xlu0 %v9452, 64
      %v9454 = vpop.permute.xlu0 %9453
      %v9456 = vsel %vm9048, %v9438, %v9442
      %v9457 = vsel %vm9102, %v9456, %v9446
      %v9458 = vsel %vm9104, %v9457, %v9450
      %v9459 = vsel %vm9106, %v9458, %v9454
      %v9460 = vpack.c.bf16 %v9459, %v9459
      %s9461 = scalar_lea.vmem %s5, 120
      %v9462 = vld [vmem:[%s9461] sm:$0xf]
      %v9463 = vld [vmem:[%s9461 + $0x4] sm:$0xf]
      %v9464 = vld [vmem:[%s9461 + $0x8] sm:$0xf]
      %v9465 = vld [vmem:[%s9461 + $0xc] sm:$0xf]
      %v9466 = vld [vmem:[%s9461 + $0x10] sm:$0xf]
      %v9467 = vld [vmem:[%s9461 + $0x14] sm:$0xf]
      %v9468 = vld [vmem:[%s9461 + $0x18] sm:$0xf]
      %v9469 = vld [vmem:[%s9461 + $0x1c] sm:$0xf]
      %v9470 = vld [vmem:[%s9461 + $0x20] sm:$0xf]
      %v9471 = vld [vmem:[%s9461 + $0x24] sm:$0xf]
      %v9482 = vunpack.c.l.b16 %v9462
      %v9483 = vunpack.c.l.b16 %v9463
      %v9484 = vunpack.c.l.b16 %v9464
      %v9485 = vunpack.c.l.b16 %v9465
      %v9486 = vunpack.c.l.b16 %v9466
      %v9487 = vunpack.c.l.b16 %v9467
      %v9488 = vunpack.c.l.b16 %v9468
      %v9489 = vunpack.c.l.b16 %v9469
      %v9490 = vunpack.c.l.b16 %v9470
      %v9491 = vunpack.c.l.b16 %v9471
      %v9492 = vpack.c.b16 %v9483, %v9482
      %v9493 = vpack.c.b16 %v9485, %v9484
      %v9494 = vpack.c.b16 %v9487, %v9486
      %v9495 = vpack.c.b16 %v9489, %v9488
      %v9496 = vpack.c.b16 %v9491, %v9490
      %v9503 = vsel %vm9193, %v9460, 0
      %9505 = vmatprep.subr.bf16.mxu0 0
      %9506 = vmatpush1.bf16.msra.mxu0 %v9492
      %9507 = vmatprep.subr.bf16.mxu0 0
      %9508 = vmatpush1.bf16.msra.mxu0 %v9493
      %9509 = vmatprep.subr.bf16.mxu0 0
      %9510 = vmatpush1.bf16.msra.mxu0 %v9494
      %9511 = vmatprep.subr.bf16.mxu0 0
      %9512 = vmatpush1.bf16.msra.mxu0 %v9495
      %9513 = vmatprep.subr.bf16.mxu0 0
      %9514 = vmatpush1.bf16.msra.mxu0 %v9496
      %9515 = vmatprep.subr.bf16.mxu0 0
      %9516 = vmatpush1.bf16.msra.mxu0 0
      %9517 = vmatprep.subr.bf16.mxu0 0
      %9518 = vmatpush1.bf16.msra.mxu0 0
      %9519 = vmatprep.subr.bf16.mxu0 0
      %9520 = vmatpush1.bf16.msra.mxu0 0
      %9521 = vmatprep.subr.bf16.mxu0 0
      %9522 = vmatpush1.bf16.msra.mxu0 0
      %9523 = vmatprep.subr.bf16.mxu0 0
      %9524 = vmatpush1.bf16.msra.mxu0 0
      %9525 = vmatprep.subr.bf16.mxu0 0
      %9526 = vmatpush1.bf16.msra.mxu0 0
      %9527 = vmatprep.subr.bf16.mxu0 0
      %9528 = vmatpush1.bf16.msra.mxu0 0
      %9529 = vmatprep.subr.bf16.mxu0 0
      %9530 = vmatpush1.bf16.msra.mxu0 0
      %9531 = vmatprep.subr.bf16.mxu0 0
      %9532 = vmatpush1.bf16.msra.mxu0 0
      %9533 = vmatprep.subr.bf16.mxu0 0
      %9534 = vmatpush1.bf16.msra.mxu0 0
      %9535 = vmatprep.subr.bf16.mxu0 0
      %9536 = vmatpush1.bf16.msra.mxu0 0
      %9537 = vmatprep.mubr.bf16.mxu0 0
      %9538 = vmatmul.mubr.bf16.gmra.mrb[0].mxu0 %v9503
      %v9539 = vpop.f32.mrb[0].mxu0
      %v9540 = vadd.f32 0.0, %v9539
      %v9541 = vpop.f32.mrb[0].mxu0
      %v9542 = vpop.f32.mrb[0].mxu0
      %v9543 = vpop.f32.mrb[0].mxu0
      %9544 = vdwg.mxu0
      %v9545 = vadd.f32 %v9427, %v9540
      %s9546 = scalar_lea.vmem [#allocation4], 112
      %v9547 = vld [vmem:[%s9546] ss:$2 sm:$0x1f]
      %s9548 = scalar_lea.vmem [#allocation4], 113
      %v9549 = vld [vmem:[%s9548] ss:$2 sm:$0x1f]
      %s9550 = scalar_lea.vmem [#allocation4], 126
      %v9551 = vld [vmem:[%s9550] ss:$2 sm:$0x1f]
      %s9552 = scalar_lea.vmem [#allocation4], 127
      %v9553 = vld [vmem:[%s9552] ss:$2 sm:$0x1f]
      %v9554 = vmax.f32 %v9547, %v9549
      %v9555 = vmax.f32 %v9551, %v9553
      %v9556 = vmax.f32 %v9554, %v9555
      %v9558 = vrot.slane %v9556, 1
      %9559 = vrot.lane.b32.xlu0 %v9558, 16
      %v9560 = vpop.permute.xlu0 %9559
      %v9562 = vrot.slane %v9556, 2
      %9563 = vrot.lane.b32.xlu0 %v9562, 32
      %v9564 = vpop.permute.xlu0 %9563
      %v9566 = vrot.slane %v9556, 3
      %9567 = vrot.lane.b32.xlu0 %v9566, 48
      %v9568 = vpop.permute.xlu0 %9567
      %v9570 = vrot.slane %v9556, 4
      %9571 = vrot.lane.b32.xlu0 %v9570, 64
      %v9572 = vpop.permute.xlu0 %9571
      %v9574 = vsel %vm9048, %v9556, %v9560
      %v9575 = vsel %vm9102, %v9574, %v9564
      %v9576 = vsel %vm9104, %v9575, %v9568
      %v9577 = vsel %vm9106, %v9576, %v9572
      %v9578 = vpack.c.bf16 %v9577, %v9577
      %s9579 = scalar_lea.vmem %s5, 160
      %v9580 = vld [vmem:[%s9579] sm:$0xf]
      %v9581 = vld [vmem:[%s9579 + $0x4] sm:$0xf]
      %v9582 = vld [vmem:[%s9579 + $0x8] sm:$0xf]
      %v9583 = vld [vmem:[%s9579 + $0xc] sm:$0xf]
      %v9584 = vld [vmem:[%s9579 + $0x10] sm:$0xf]
      %v9585 = vld [vmem:[%s9579 + $0x14] sm:$0xf]
      %v9586 = vld [vmem:[%s9579 + $0x18] sm:$0xf]
      %v9587 = vld [vmem:[%s9579 + $0x1c] sm:$0xf]
      %v9588 = vld [vmem:[%s9579 + $0x20] sm:$0xf]
      %v9589 = vld [vmem:[%s9579 + $0x24] sm:$0xf]
      %v9600 = vunpack.c.l.b16 %v9580
      %v9601 = vunpack.c.l.b16 %v9581
      %v9602 = vunpack.c.l.b16 %v9582
      %v9603 = vunpack.c.l.b16 %v9583
      %v9604 = vunpack.c.l.b16 %v9584
      %v9605 = vunpack.c.l.b16 %v9585
      %v9606 = vunpack.c.l.b16 %v9586
      %v9607 = vunpack.c.l.b16 %v9587
      %v9608 = vunpack.c.l.b16 %v9588
      %v9609 = vunpack.c.l.b16 %v9589
      %v9610 = vpack.c.b16 %v9601, %v9600
      %v9611 = vpack.c.b16 %v9603, %v9602
      %v9612 = vpack.c.b16 %v9605, %v9604
      %v9613 = vpack.c.b16 %v9607, %v9606
      %v9614 = vpack.c.b16 %v9609, %v9608
      %v9621 = vsel %vm9193, %v9578, 0
      %9623 = vmatprep.subr.bf16.mxu0 0
      %9624 = vmatpush1.bf16.msra.mxu0 %v9610
      %9625 = vmatprep.subr.bf16.mxu0 0
      %9626 = vmatpush1.bf16.msra.mxu0 %v9611
      %9627 = vmatprep.subr.bf16.mxu0 0
      %9628 = vmatpush1.bf16.msra.mxu0 %v9612
      %9629 = vmatprep.subr.bf16.mxu0 0
      %9630 = vmatpush1.bf16.msra.mxu0 %v9613
      %9631 = vmatprep.subr.bf16.mxu0 0
      %9632 = vmatpush1.bf16.msra.mxu0 %v9614
      %9633 = vmatprep.subr.bf16.mxu0 0
      %9634 = vmatpush1.bf16.msra.mxu0 0
      %9635 = vmatprep.subr.bf16.mxu0 0
      %9636 = vmatpush1.bf16.msra.mxu0 0
      %9637 = vmatprep.subr.bf16.mxu0 0
      %9638 = vmatpush1.bf16.msra.mxu0 0
      %9639 = vmatprep.subr.bf16.mxu0 0
      %9640 = vmatpush1.bf16.msra.mxu0 0
      %9641 = vmatprep.subr.bf16.mxu0 0
      %9642 = vmatpush1.bf16.msra.mxu0 0
      %9643 = vmatprep.subr.bf16.mxu0 0
      %9644 = vmatpush1.bf16.msra.mxu0 0
      %9645 = vmatprep.subr.bf16.mxu0 0
      %9646 = vmatpush1.bf16.msra.mxu0 0
      %9647 = vmatprep.subr.bf16.mxu0 0
      %9648 = vmatpush1.bf16.msra.mxu0 0
      %9649 = vmatprep.subr.bf16.mxu0 0
      %9650 = vmatpush1.bf16.msra.mxu0 0
      %9651 = vmatprep.subr.bf16.mxu0 0
      %9652 = vmatpush1.bf16.msra.mxu0 0
      %9653 = vmatprep.subr.bf16.mxu0 0
      %9654 = vmatpush1.bf16.msra.mxu0 0
      %9655 = vmatprep.mubr.bf16.mxu0 0
      %9656 = vmatmul.mubr.bf16.gmra.mrb[0].mxu0 %v9621
      %v9657 = vpop.f32.mrb[0].mxu0
      %v9658 = vadd.f32 0.0, %v9657
      %v9659 = vpop.f32.mrb[0].mxu0
      %v9660 = vpop.f32.mrb[0].mxu0
      %v9661 = vpop.f32.mrb[0].mxu0
      %9662 = vdwg.mxu0
      %v9663 = vadd.f32 %v9545, %v9658
      %v9664 = vld [vmem:[%s6] sm:$0x1]
      %v9665 = vadd.f32 %v9663, %v9664
      %v9666 = vmax.f32 %v9665, 0.0
      %v9667 = vpack.c.bf16 %v9666, %v9666
      %v9668 = vld [vmem:[%s7] sm:$0xf]
      %v9669 = vld [vmem:[%s7 + $0x4] sm:$0xf]
      %v9670 = vld [vmem:[%s7 + $0x8] sm:$0xf]
      %v9671 = vld [vmem:[%s7 + $0xc] sm:$0xf]
      %v9672 = vld [vmem:[%s7 + $0x10] sm:$0xf]
      %v9673 = vld [vmem:[%s7 + $0x14] sm:$0xf]
      %v9674 = vld [vmem:[%s7 + $0x18] sm:$0xf]
      %v9675 = vld [vmem:[%s7 + $0x1c] sm:$0xf]
      %v9676 = vld [vmem:[%s7 + $0x20] sm:$0xf]
      %v9677 = vld [vmem:[%s7 + $0x24] sm:$0xf]
      %v9678 = vld [vmem:[%s7 + $0x28] sm:$0xf]
      %v9679 = vld [vmem:[%s7 + $0x2c] sm:$0xf]
      %v9680 = vld [vmem:[%s7 + $0x30] sm:$0xf]
      %v9681 = vld [vmem:[%s7 + $0x34] sm:$0xf]
      %v9682 = vld [vmem:[%s7 + $0x38] sm:$0xf]
      %v9683 = vld [vmem:[%s8] sm:$0x1]
      %v9699 = vunpack.c.l.b16 %v9668
      %v9700 = vunpack.c.l.b16 %v9669
      %v9701 = vunpack.c.l.b16 %v9670
      %v9702 = vunpack.c.l.b16 %v9671
      %v9703 = vunpack.c.l.b16 %v9672
      %v9704 = vunpack.c.l.b16 %v9673
      %v9705 = vunpack.c.l.b16 %v9674
      %v9706 = vunpack.c.l.b16 %v9675
      %v9707 = vunpack.c.l.b16 %v9676
      %v9708 = vunpack.c.l.b16 %v9677
      %v9709 = vunpack.c.l.b16 %v9678
      %v9710 = vunpack.c.l.b16 %v9679
      %v9711 = vunpack.c.l.b16 %v9680
      %v9712 = vunpack.c.l.b16 %v9681
      %v9713 = vunpack.c.l.b16 %v9682
      %v9714 = vpack.c.b16 %v9700, %v9699
      %v9715 = vpack.c.b16 %v9702, %v9701
      %v9716 = vpack.c.b16 %v9704, %v9703
      %v9717 = vpack.c.b16 %v9706, %v9705
      %v9718 = vpack.c.b16 %v9708, %v9707
      %v9719 = vpack.c.b16 %v9710, %v9709
      %v9720 = vpack.c.b16 %v9712, %v9711
      %v9721 = vpack.c.b16 %v9713, %v9713
      %vm9729 = vcmask 982016
      %v9731 = vsel %vm9729, %v9667, 0
      %v9734 = vsel %vm6590, %v9721, 0
      %9736 = vmatprep.subr.bf16.mxu0 0
      %9737 = vmatpush1.bf16.msra.mxu0 %v9714
      %9738 = vmatprep.subr.bf16.mxu0 0
      %9739 = vmatpush1.bf16.msra.mxu0 %v9715
      %9740 = vmatprep.subr.bf16.mxu0 0
      %9741 = vmatpush1.bf16.msra.mxu0 %v9716
      %9742 = vmatprep.subr.bf16.mxu0 0
      %9743 = vmatpush1.bf16.msra.mxu0 %v9717
      %9744 = vmatprep.subr.bf16.mxu0 0
      %9745 = vmatpush1.bf16.msra.mxu0 %v9718
      %9746 = vmatprep.subr.bf16.mxu0 0
      %9747 = vmatpush1.bf16.msra.mxu0 %v9719
      %9748 = vmatprep.subr.bf16.mxu0 0
      %9749 = vmatpush1.bf16.msra.mxu0 %v9720
      %9750 = vmatprep.subr.bf16.mxu0 0
      %9751 = vmatpush1.bf16.msra.mxu0 %v9734
      %9752 = vmatprep.subr.bf16.mxu0 0
      %9753 = vmatpush1.bf16.msra.mxu0 0
      %9754 = vmatprep.subr.bf16.mxu0 0
      %9755 = vmatpush1.bf16.msra.mxu0 0
      %9756 = vmatprep.subr.bf16.mxu0 0
      %9757 = vmatpush1.bf16.msra.mxu0 0
      %9758 = vmatprep.subr.bf16.mxu0 0
      %9759 = vmatpush1.bf16.msra.mxu0 0
      %9760 = vmatprep.subr.bf16.mxu0 0
      %9761 = vmatpush1.bf16.msra.mxu0 0
      %9762 = vmatprep.subr.bf16.mxu0 0
      %9763 = vmatpush1.bf16.msra.mxu0 0
      %9764 = vmatprep.subr.bf16.mxu0 0
      %9765 = vmatpush1.bf16.msra.mxu0 0
      %9766 = vmatprep.subr.bf16.mxu0 0
      %9767 = vmatpush1.bf16.msra.mxu0 0
      %9768 = vmatprep.mubr.bf16.mxu0 0
      %9769 = vmatmul.mubr.bf16.gmra.mrb[0].mxu0 %v9731
      %v9770 = vpop.f32.mrb[0].mxu0
      %v9771 = vadd.f32 %v9683, %v9770
      %v9772 = vpop.f32.mrb[0].mxu0
      %v9773 = vpop.f32.mrb[0].mxu0
      %v9774 = vpop.f32.mrb[0].mxu0
      %9775 = vdwg.mxu0
      %v9776 = vmax.f32 %v9771, 0.0
      %v9777 = vpack.c.bf16 %v9776, %v9776
      %v9778 = vld [vmem:[%s9] sm:$0xf]
      %v9779 = vld [vmem:[%s9 + $0x4] sm:$0xf]
      %v9780 = vld [vmem:[%s9 + $0x8] sm:$0xf]
      %v9781 = vld [vmem:[%s9 + $0xc] sm:$0xf]
      %v9782 = vld [vmem:[%s9 + $0x10] sm:$0xf]
      %v9783 = vld [vmem:[%s9 + $0x14] sm:$0xf]
      %v9784 = vld [vmem:[%s9 + $0x18] sm:$0xf]
      %v9785 = vld [vmem:[%s9 + $0x1c] sm:$0xf]
      %v9786 = vld [vmem:[%s9 + $0x20] sm:$0xf]
      %v9787 = vld [vmem:[%s9 + $0x24] sm:$0xf]
      %v9788 = vld [vmem:[%s9 + $0x28] sm:$0x3]
      %v9789 = vld [vmem:[%s10] sm:$0x1]
      %v9801 = vunpack.c.l.b16 %v9778
      %v9802 = vunpack.c.l.b16 %v9779
      %v9803 = vunpack.c.l.b16 %v9780
      %v9804 = vunpack.c.l.b16 %v9781
      %v9805 = vunpack.c.l.b16 %v9782
      %v9806 = vunpack.c.l.b16 %v9783
      %v9807 = vunpack.c.l.b16 %v9784
      %v9808 = vunpack.c.l.b16 %v9785
      %v9809 = vunpack.c.l.b16 %v9786
      %v9810 = vunpack.c.l.b16 %v9787
      %v9811 = vunpack.c.l.b16 %v9788
      %v9812 = vpack.c.b16 %v9802, %v9801
      %v9813 = vpack.c.b16 %v9804, %v9803
      %v9814 = vpack.c.b16 %v9806, %v9805
      %v9815 = vpack.c.b16 %v9808, %v9807
      %v9816 = vpack.c.b16 %v9810, %v9809
      %v9817 = vpack.c.b16 %v9811, %v9811
      %vm9823 = vcmask 687104
      %v9825 = vsel %vm9823, %v9777, 0
      %vm9827 = vcmask 1041408
      %v9829 = vsel %vm9827, %v9817, 0
      %9831 = vmatprep.subr.bf16.mxu0 0
      %9832 = vmatpush1.bf16.msra.mxu0 %v9812
      %9833 = vmatprep.subr.bf16.mxu0 0
      %9834 = vmatpush1.bf16.msra.mxu0 %v9813
      %9835 = vmatprep.subr.bf16.mxu0 0
      %9836 = vmatpush1.bf16.msra.mxu0 %v9814
      %9837 = vmatprep.subr.bf16.mxu0 0
      %9838 = vmatpush1.bf16.msra.mxu0 %v9815
      %9839 = vmatprep.subr.bf16.mxu0 0
      %9840 = vmatpush1.bf16.msra.mxu0 %v9816
      %9841 = vmatprep.subr.bf16.mxu0 0
      %9842 = vmatpush1.bf16.msra.mxu0 %v9829
      %9843 = vmatprep.subr.bf16.mxu0 0
      %9844 = vmatpush1.bf16.msra.mxu0 0
      %9845 = vmatprep.subr.bf16.mxu0 0
      %9846 = vmatpush1.bf16.msra.mxu0 0
      %9847 = vmatprep.subr.bf16.mxu0 0
      %9848 = vmatpush1.bf16.msra.mxu0 0
      %9849 = vmatprep.subr.bf16.mxu0 0
      %9850 = vmatpush1.bf16.msra.mxu0 0
      %9851 = vmatprep.subr.bf16.mxu0 0
      %9852 = vmatpush1.bf16.msra.mxu0 0
      %9853 = vmatprep.subr.bf16.mxu0 0
      %9854 = vmatpush1.bf16.msra.mxu0 0
      %9855 = vmatprep.subr.bf16.mxu0 0
      %9856 = vmatpush1.bf16.msra.mxu0 0
      %9857 = vmatprep.subr.bf16.mxu0 0
      %9858 = vmatpush1.bf16.msra.mxu0 0
      %9859 = vmatprep.subr.bf16.mxu0 0
      %9860 = vmatpush1.bf16.msra.mxu0 0
      %9861 = vmatprep.subr.bf16.mxu0 0
      %9862 = vmatpush1.bf16.msra.mxu0 0
      %9863 = vmatprep.mubr.bf16.mxu0 0
      %9864 = vmatmul.mubr.bf16.gmra.mrb[0].mxu0 %v9825
      %v9865 = vpop.f32.mrb[0].mxu0
      %v9866 = vadd.f32 %v9789, %v9865
      %v9867 = vpop.f32.mrb[0].mxu0
      %v9868 = vpop.f32.mrb[0].mxu0
      %v9869 = vpop.f32.mrb[0].mxu0
      %9870 = vdwg.mxu0
      %v9871 = vlaneseq
      %v9872 = vshrl.u32 %v9871, 7
      %v9873 = vsub.s32 0, %v9872
      %v9874 = vrot.slane %v9866, %v9873
      %9875 = vst [vmem:[%s384] sm:$0xff] %v9874
      %p9876 = scmp.lt.s32.totalorder %s22, 1
      %s9877 = scalar_select %p9876, %s22, 1
      %s9878 = smul.addr %s9877, 8
      %s9879 = scalar_lea.vmem %s11, %s9878
      // Predicated region
      $region65: #{lenet_forward.1} parent=63 // pred_check
        %p9880 = pneg %p276
      $region66: #{lenet_forward.1} parent=63 // pred_check_branch
        %9882 = sbr.rel (%p9880) target = $region68
      $region67: #{lenet_forward.1} parent=63 // pred_region
        _
      $region68: #{lenet_forward.1} parent=63 // pred_fallthru
        _
    $region64: #{lenet_forward.1} parent=5 // pred_fallthru
      _
    %p9883 = scmp.le.s32.totalorder 2, %s17
    // Predicated region
    $region69: #{lenet_forward.1} parent=5 // pred_check
      %p9884 = pneg %p9883
    $region70: #{lenet_forward.1} parent=5 // pred_check_branch
      %9886 = sbr.rel (%p9884) target = $region72
    $region71: #{lenet_forward.1} parent=5 // pred_region
      %s9887 = ssub.s32 %s17, 2
      // Predicated region
      $region73: #{lenet_forward.1} parent=71 // pred_check
        %p9888 = pneg %p282
      $region74: #{lenet_forward.1} parent=71 // pred_check_branch
        %9890 = sbr.rel (%p9888) target = $region76
      $region75: #{lenet_forward.1} parent=71 // pred_region
        %p9891 = scmp.lt.s32.totalorder %s23, 1
        %s9892 = scalar_select %p9891, %s23, 1
        %s9893 = smul.addr %s9892, 8
        %s9894 = scalar_lea.vmem %s11, %s9893
      $region76: #{lenet_forward.1} parent=71 // pred_fallthru
        _
    $region72: #{lenet_forward.1} parent=5 // pred_fallthru
      _
  $region6: #{lenet_forward.1} parent=0 // loop_footer
    %s21 = sadd.s32 1, %s17
  $region7: #{lenet_forward.1} parent=0 // loop_footer_branch
    %16 = sbr.rel target = $region3
  $region8: #{lenet_forward.1} parent=0 // loop_exit
    _

</llo_original>
